<compile_context>
chip_gen: v7x
topology: tpu7x:2x2x1
jax: 0.10.0
libtpu: 0.0.40
codegen_flags: <defaults>
</compile_context>

<pallas_src>
import numpy as np
import jax
import jax.numpy as jnp
from jax import lax
from jax.experimental import pallas as pl
from jax.experimental.pallas import tpu as pltpu

# ----------------------------- config ---------------------------------------
IMG = 32
PATCH = 4
IN_CH = 3
EMBED = 32
DEPTHS = (2, 2)
HEADS = (2, 4)
WINDOW = 4
MLP_RATIO = 2.0
BATCH = 2
OUT_DIMS = 1

NEG_INF = -1e9  # cross-window mask; exp() underflows to exactly 0


# ------------------------ in-kernel value helpers ----------------------------
def _mm(a, w16):
    """f32 (or bf16) activations @ bf16 weights -> f32 accumulation on the MXU."""
    return jnp.dot(a.astype(jnp.bfloat16), w16, preferred_element_type=jnp.float32)


def _ln(x, g, b, eps=1e-5):
    """LayerNorm in f32 (v5e VPU/EUP have no bf16 path)."""
    mean = jnp.mean(x, axis=-1, keepdims=True)
    xc = x - mean
    var = jnp.mean(xc * xc, axis=-1, keepdims=True)
    return xc * lax.rsqrt(var + eps) * g + b


# --------------------------- fused forward kernel ----------------------------
def make_fused_forward_kernel(H0):
    dims = [EMBED * (2 ** i) for i in range(len(DEPTHS))]

    def swin_block(x, refs, num_heads, head_dim):
        (bias_ref, n1g, n1b, qkvw, qkvb, pjw, pjb,
         n2g, n2b, f1w, f1b, f2w, f2b) = refs
        C = num_heads * head_dim

        # ---------------- attention branch --------------------------------
        xn = _ln(x, n1g[...], n1b[...])
        # scale (head_dim**-0.5) is pre-folded into the q columns of qkv_w/qkv_b
        qkv = _mm(xn, qkvw[...]) + qkvb[...]               # (T, 3C) f32
        qkv16 = qkv.astype(jnp.bfloat16)                   # cast ONCE, slice per head
        heads_out = []
        # TODO(synk): at real swin_large_384 scale batch the heads into one
        # dot_general (head batch dim) and tile per window; the Python head loop
        # with K=16 contractions underfills the 256-wide MXU on v6e/v7x.
        for h in range(num_heads):
            q = qkv16[:, h * head_dim:(h + 1) * head_dim]
            k = qkv16[:, C + h * head_dim:C + (h + 1) * head_dim]
            v = qkv16[:, 2 * C + h * head_dim:2 * C + (h + 1) * head_dim]
            # q @ k^T contracting last dims (no transpose materialization)
            s = lax.dot_general(q, k, (((1,), (1,)), ((), ())),
                                preferred_element_type=jnp.float32)
            # windowing / shift-mask live entirely in the precomputed bias
            s = s + bias_ref[h].astype(jnp.float32)        # (T, T)
            s = s - jnp.max(s, axis=-1, keepdims=True)
            p = jnp.exp(s)
            p = p * pl.reciprocal(jnp.sum(p, axis=-1, keepdims=True), approx=True)
            heads_out.append(jnp.dot(p.astype(jnp.bfloat16), v,
                                     preferred_element_type=jnp.float32))
        attn = jnp.concatenate(heads_out, axis=-1)         # (T, C) f32
        attn = _mm(attn, pjw[...]) + pjb[...]              # single output projection
        x = x + attn                                       # residual 1 (in VMEM)

        # ---------------- MLP branch ---------------------------------------
        y = _ln(x, n2g[...], n2b[...])
        y = _mm(y, f1w[...]) + f1b[...]
        # TODO(synk): PyTorch nn.GELU uses exact erf; tanh approximation used
        # because erf has no Mosaic lowering (~1e-3-level divergence).
        y = jax.nn.gelu(y, approximate=True)
        y = _mm(y, f2w[...]) + f2b[...]
        return x + y                                       # residual 2

    def kernel(*args):
        refs = list(args[:-1])
        o_ref = args[-1]
        cur = [0]

        def take(n):
            out = refs[cur[0]:cur[0] + n]
            cur[0] += n
            return out

        # ---- patch embed (4x4 stride-4 conv as matmul) + norm + abs pos ----
        xp_ref, pw, pb, pg, pbn, pos = take(6)
        x = _mm(xp_ref[...], pw[...]) + pb[...]            # (L0, EMBED)
        x = _ln(x, pg[...], pbn[...])
        x = x + pos[...]        # ape: zeros == timm default (absolute_pos_embed=None)
        # pos_drop: p=0.0 / eval -> identity

        # ---- stages -----------------------------------------------------------
        for si, depth in enumerate(DEPTHS):
            C = dims[si]
            nH = HEADS[si]
            hd = C // nH
            for _ in range(depth):
                x = swin_block(x, take(13), nH, hd)
            if si < len(DEPTHS) - 1:
                # patch merging fused in-kernel: static 0/1 selection matmuls
                # reproduce x[0::2,0::2] / x[1::2,0::2] / x[0::2,1::2] / x[1::2,1::2]
                msel, dsg, dsb, dsw = take(4)
                sel = msel[...]                            # (4, L/4, L) bf16
                x16 = x.astype(jnp.bfloat16)
                parts = [jnp.dot(sel[k], x16, preferred_element_type=jnp.float32)
                         for k in range(4)]
                xm = jnp.concatenate(parts, axis=-1)       # (L/4, 4C)
                xm = _ln(xm, dsg[...], dsb[...])
                x = _mm(xm, dsw[...])                      # bias-free reduction

        # ---- tail: norm + avgpool(tokens) + fc head (dropout: eval identity) ---
        tg, tb, fw, fb = take(4)
        x = _ln(x, tg[...], tb[...])
        feat = jnp.mean(x, axis=0, keepdims=True)          # (1, C_final)
        o_ref[...] = _mm(feat, fw[...]) + fb[...]          # (1, OUT_DIMS)

    return kernel


# ---------------- static attention-bias precompute (parameter prep) ----------
def relative_position_index(ws):
    coords = np.stack(np.meshgrid(np.arange(ws), np.arange(ws), indexing="ij"))
    flat = coords.reshape(2, -1)
    rel = (flat[:, :, None] - flat[:, None, :]).transpose(1, 2, 0).astype(np.int64)
    rel[:, :, 0] += ws - 1
    rel[:, :, 1] += ws - 1
    rel[:, :, 0] *= 2 * ws - 1
    return rel.sum(-1)                                     # (N, N)


def shift_attn_mask(H, W, ws, shift):
    img_mask = np.zeros((1, H, W, 1), np.float32)
    cnt = 0
    for hs in (slice(0, -ws), slice(-ws, -shift), slice(-shift, None)):
        for wsl in (slice(0, -ws), slice(-ws, -shift), slice(-shift, None)):
            img_mask[:, hs, wsl, :] = cnt
            cnt += 1
    m = img_mask.reshape(1, H // ws, ws, W // ws, ws, 1)
    m = m.transpose(0, 1, 3, 2, 4, 5).reshape(-1, ws * ws)
    attn_mask = m[:, None, :] - m[:, :, None]
    return np.where(attn_mask != 0, -100.0, 0.0).astype(np.float32)  # (nW, N, N)


def build_attn_bias(rel_table, ws, H, W, shift, num_heads):
    """(heads, L, L) bf16 additive bias encoding the (shifted) window partition:
    same-window pairs get the relative-position bias (+ -100 shift mask),
    everything else gets -1e9 (exp -> exactly 0).  Per-image (batch handled by
    the grid), so no cross-batch padding."""
    N = ws * ws
    L = H * W
    nW = (H // ws) * (W // ws)
    rel = np.asarray(rel_table)[relative_position_index(ws).reshape(-1)]
    rel = rel.reshape(N, N, num_heads).transpose(2, 0, 1)  # (heads, N, N)
    wb = np.broadcast_to(rel[None], (nW, num_heads, N, N)).copy()
    if shift > 0:
        wb += shift_attn_mask(H, W, ws, shift)[:, None, :, :]
    # original token (r, c) lands at rolled position ((r-shift)%H, (c-shift)%W)
    rr = (np.arange(H)[:, None] - shift) % H
    cc = (np.arange(W)[None, :] - shift) % W
    win = ((rr // ws) * (W // ws) + (cc // ws)).reshape(L)  # window id per token
    idx = ((rr % ws) * ws + (cc % ws)).reshape(L)           # in-window id per token
    full = np.full((num_heads, L, L), NEG_INF, np.float32)
    for h in range(num_heads):
        for p in range(L):
            same = np.nonzero(win == win[p])[0]
            full[h, p, same] = wb[win[p], h, idx[p], idx[same]]
    assert np.all(np.any(full > NEG_INF / 2, axis=-1)), "row fully masked"
    return jnp.asarray(full, dtype=jnp.bfloat16)


def build_merge_sel(H):
    """(4, (H/2)^2, H^2) one-hot matrices reproducing PatchMerging's neighbor
    gather (x0..x3 ordering of the timm implementation) via matmul."""
    W = H
    Hh, Wh = H // 2, W // 2
    sel = np.zeros((4, Hh * Wh, H * W), np.float32)
    for i in range(Hh):
        for j in range(Wh):
            p = i * Wh + j
            sel[0, p, (2 * i) * W + 2 * j] = 1.0       # x[0::2, 0::2]
            sel[1, p, (2 * i + 1) * W + 2 * j] = 1.0   # x[1::2, 0::2]
            sel[2, p, (2 * i) * W + 2 * j + 1] = 1.0   # x[0::2, 1::2]
            sel[3, p, (2 * i + 1) * W + 2 * j + 1] = 1.0  # x[1::2, 1::2]
    return jnp.asarray(sel, jnp.bfloat16)


# ------------------------------ XLA glue --------------------------------------
def patch_extract(img):
    """(B,C,H,W) -> (B, L0, C*P*P) per-patch vectors (conv-as-matmul layout)."""
    B, C, H, W = img.shape
    Gh, Gw = H // PATCH, W // PATCH
    x = img.reshape(B, C, Gh, PATCH, Gw, PATCH).transpose(0, 2, 4, 1, 3, 5)
    return x.reshape(B, Gh * Gw, C * PATCH * PATCH), Gh


# ------------------------------ forward ----------------------------------------
def flatten_params(params):
    pe = params["patch_embed"]
    flat = [pe["proj_w"], pe["proj_b"], pe["norm_g"], pe["norm_b"],
            params["pos_embed"]]
    for si, depth in enumerate(DEPTHS):
        layer = params["layers"][si]
        for bi in range(depth):
            bp = layer["blocks"][bi]
            flat += [bp["attn_bias"], bp["norm1_g"], bp["norm1_b"],
                     bp["qkv_w"], bp["qkv_b"], bp["proj_w"], bp["proj_b"],
                     bp["norm2_g"], bp["norm2_b"],
                     bp["fc1_w"], bp["fc1_b"], bp["fc2_w"], bp["fc2_b"]]
        if si < len(DEPTHS) - 1:
            dp = layer["downsample"]
            flat += [dp["merge_sel"], dp["norm_g"], dp["norm_b"], dp["red_w"]]
    flat += [params["norm_g"], params["norm_b"], params["fc_w"], params["fc_b"]]
    return flat


def _rep_spec(a):
    """Replicated (batch-invariant) operand: full-array block, same index every
    grid step -> DMA'd once, resident in VMEM for all programs."""
    nd = a.ndim
    return pl.BlockSpec(a.shape, lambda b, _nd=nd: (0,) * _nd)


def swin_forward(image, params):
    B = image.shape[0]
    xp, H0 = patch_extract(image)
    L0 = H0 * H0
    PD = IN_CH * PATCH * PATCH
    flat = flatten_params(params)
    kernel = make_fused_forward_kernel(H0)

    in_specs = [pl.BlockSpec((None, L0, PD), lambda b: (b, 0, 0))]
    in_specs += [_rep_spec(a) for a in flat]
    out_spec = pl.BlockSpec((None, 1, OUT_DIMS), lambda b: (b, 0, 0))

    out = pl.pallas_call(
        kernel,
        out_shape=jax.ShapeDtypeStruct((B, 1, OUT_DIMS), jnp.float32),
        grid=(B,),
        in_specs=in_specs,
        out_specs=out_spec,
        compiler_params=pltpu.CompilerParams(
            dimension_semantics=("parallel",)),   # v7x: shard batch across TCs
    )(xp, *flat)
    return out.reshape(B, OUT_DIMS)


# ------------------------------ params init -----------------------------------
def init_params(key):
    keys = iter(jax.random.split(key, 256))

    def nrm(shape, scale=0.02):
        return (scale * jax.random.normal(next(keys), shape)).astype(jnp.float32)

    def w16(x):
        return x.astype(jnp.bfloat16)

    H0 = IMG // PATCH
    L0 = H0 * H0
    patch_dim = IN_CH * PATCH * PATCH

    params = {}
    params["patch_embed"] = {
        "proj_w": w16(nrm((patch_dim, EMBED))),
        "proj_b": jnp.zeros((1, EMBED), jnp.float32),
        "norm_g": jnp.ones((1, EMBED), jnp.float32),
        "norm_b": jnp.zeros((1, EMBED), jnp.float32),
    }
    # timm default for this encoder is ape=False (absolute_pos_embed is None);
    # zeros reproduce that exactly while keeping the forward_features code path.
    params["pos_embed"] = jnp.zeros((L0, EMBED), jnp.float32)

    dims = [EMBED * (2 ** i) for i in range(len(DEPTHS))]
    Hs = H0
    layers = []
    for si, depth in enumerate(DEPTHS):
        C = dims[si]
        nH = HEADS[si]
        hd = C // nH
        hidden = int(C * MLP_RATIO)
        ws = min(WINDOW, Hs)
        blocks = []
        for bi in range(depth):
            shift = 0 if (bi % 2 == 0 or ws >= Hs) else ws // 2
            rel_table = nrm(((2 * ws - 1) ** 2, nH))
            # fold the attention scale head_dim**-0.5 into the q columns
            scale = hd ** -0.5
            qkv_w = nrm((C, 3 * C))
            qkv_w = qkv_w.at[:, :C].multiply(scale)
            qkv_b = jnp.zeros((1, 3 * C), jnp.float32)
            qkv_b = qkv_b.at[:, :C].multiply(scale)   # no-op for zero bias; kept for generality
            blk = {
                # hoisted out of the forward pass: dense bf16 additive bias encoding
                # relative-position bias + (shifted) window mask, per image.
                "attn_bias": build_attn_bias(rel_table, ws, Hs, Hs, shift, nH),
                "norm1_g": jnp.ones((1, C), jnp.float32),
                "norm1_b": jnp.zeros((1, C), jnp.float32),
                "qkv_w": w16(qkv_w),
                "qkv_b": qkv_b,
                "proj_w": w16(nrm((C, C))),
                "proj_b": jnp.zeros((1, C), jnp.float32),
                "norm2_g": jnp.ones((1, C), jnp.float32),
                "norm2_b": jnp.zeros((1, C), jnp.float32),
                "fc1_w": w16(nrm((C, hidden))),
                "fc1_b": jnp.zeros((1, hidden), jnp.float32),
                "fc2_w": w16(nrm((hidden, C))),
                "fc2_b": jnp.zeros((1, C), jnp.float32),
            }
            blocks.append(blk)
        layer = {"blocks": blocks}
        if si < len(DEPTHS) - 1:
            layer["downsample"] = {
                "merge_sel": build_merge_sel(Hs),
                "norm_g": jnp.ones((1, 4 * C), jnp.float32),
                "norm_b": jnp.zeros((1, 4 * C), jnp.float32),
                "red_w": w16(nrm((4 * C, 2 * C))),
            }
        layers.append(layer)
        Hs //= 2
    params["layers"] = layers

    nf = dims[-1]
    params["norm_g"] = jnp.ones((1, nf), jnp.float32)
    params["norm_b"] = jnp.zeros((1, nf), jnp.float32)
    params["fc_w"] = w16(nrm((nf, OUT_DIMS)))
    params["fc_b"] = jnp.zeros((1, OUT_DIMS), jnp.float32)
    return params


# --------------------------------- main ----------------------------------------
if __name__ == "__main__":
    root = jax.random.PRNGKey(0)
    k_img, k_par = jax.random.split(root)
    image = jax.random.normal(k_img, (BATCH, IN_CH, IMG, IMG), dtype=jnp.float32)
    params = init_params(k_par)

    out = jax.jit(swin_forward)(image, params)
    out = jax.block_until_ready(out)
    assert out.shape == (BATCH, OUT_DIMS)
    assert bool(jnp.all(jnp.isfinite(out)))
    print("KERNEL_OK")
</pallas_src>

<mosaic_0001>
module attributes {stable_mosaic.version = 11 : i64} {
  func.func @kernel(%arg0: i32, %arg1: memref<1x64x48xf32, #tpu.memory_space<vmem>>, %arg2: memref<48x32xbf16, #tpu.memory_space<vmem>>, %arg3: memref<1x32xf32, #tpu.memory_space<vmem>>, %arg4: memref<1x32xf32, #tpu.memory_space<vmem>>, %arg5: memref<1x32xf32, #tpu.memory_space<vmem>>, %arg6: memref<64x32xf32, #tpu.memory_space<vmem>>, %arg7: memref<2x64x64xbf16, #tpu.memory_space<vmem>>, %arg8: memref<1x32xf32, #tpu.memory_space<vmem>>, %arg9: memref<1x32xf32, #tpu.memory_space<vmem>>, %arg10: memref<32x96xbf16, #tpu.memory_space<vmem>>, %arg11: memref<1x96xf32, #tpu.memory_space<vmem>>, %arg12: memref<32x32xbf16, #tpu.memory_space<vmem>>, %arg13: memref<1x32xf32, #tpu.memory_space<vmem>>, %arg14: memref<1x32xf32, #tpu.memory_space<vmem>>, %arg15: memref<1x32xf32, #tpu.memory_space<vmem>>, %arg16: memref<32x64xbf16, #tpu.memory_space<vmem>>, %arg17: memref<1x64xf32, #tpu.memory_space<vmem>>, %arg18: memref<64x32xbf16, #tpu.memory_space<vmem>>, %arg19: memref<1x32xf32, #tpu.memory_space<vmem>>, %arg20: memref<2x64x64xbf16, #tpu.memory_space<vmem>>, %arg21: memref<1x32xf32, #tpu.memory_space<vmem>>, %arg22: memref<1x32xf32, #tpu.memory_space<vmem>>, %arg23: memref<32x96xbf16, #tpu.memory_space<vmem>>, %arg24: memref<1x96xf32, #tpu.memory_space<vmem>>, %arg25: memref<32x32xbf16, #tpu.memory_space<vmem>>, %arg26: memref<1x32xf32, #tpu.memory_space<vmem>>, %arg27: memref<1x32xf32, #tpu.memory_space<vmem>>, %arg28: memref<1x32xf32, #tpu.memory_space<vmem>>, %arg29: memref<32x64xbf16, #tpu.memory_space<vmem>>, %arg30: memref<1x64xf32, #tpu.memory_space<vmem>>, %arg31: memref<64x32xbf16, #tpu.memory_space<vmem>>, %arg32: memref<1x32xf32, #tpu.memory_space<vmem>>, %arg33: memref<4x16x64xbf16, #tpu.memory_space<vmem>>, %arg34: memref<1x128xf32, #tpu.memory_space<vmem>>, %arg35: memref<1x128xf32, #tpu.memory_space<vmem>>, %arg36: memref<128x64xbf16, #tpu.memory_space<vmem>>, %arg37: memref<4x16x16xbf16, #tpu.memory_space<vmem>>, %arg38: memref<1x64xf32, #tpu.memory_space<vmem>>, %arg39: memref<1x64xf32, #tpu.memory_space<vmem>>, %arg40: memref<64x192xbf16, #tpu.memory_space<vmem>>, %arg41: memref<1x192xf32, #tpu.memory_space<vmem>>, %arg42: memref<64x64xbf16, #tpu.memory_space<vmem>>, %arg43: memref<1x64xf32, #tpu.memory_space<vmem>>, %arg44: memref<1x64xf32, #tpu.memory_space<vmem>>, %arg45: memref<1x64xf32, #tpu.memory_space<vmem>>, %arg46: memref<64x128xbf16, #tpu.memory_space<vmem>>, %arg47: memref<1x128xf32, #tpu.memory_space<vmem>>, %arg48: memref<128x64xbf16, #tpu.memory_space<vmem>>, %arg49: memref<1x64xf32, #tpu.memory_space<vmem>>, %arg50: memref<4x16x16xbf16, #tpu.memory_space<vmem>>, %arg51: memref<1x64xf32, #tpu.memory_space<vmem>>, %arg52: memref<1x64xf32, #tpu.memory_space<vmem>>, %arg53: memref<64x192xbf16, #tpu.memory_space<vmem>>, %arg54: memref<1x192xf32, #tpu.memory_space<vmem>>, %arg55: memref<64x64xbf16, #tpu.memory_space<vmem>>, %arg56: memref<1x64xf32, #tpu.memory_space<vmem>>, %arg57: memref<1x64xf32, #tpu.memory_space<vmem>>, %arg58: memref<1x64xf32, #tpu.memory_space<vmem>>, %arg59: memref<64x128xbf16, #tpu.memory_space<vmem>>, %arg60: memref<1x128xf32, #tpu.memory_space<vmem>>, %arg61: memref<128x64xbf16, #tpu.memory_space<vmem>>, %arg62: memref<1x64xf32, #tpu.memory_space<vmem>>, %arg63: memref<1x64xf32, #tpu.memory_space<vmem>>, %arg64: memref<1x64xf32, #tpu.memory_space<vmem>>, %arg65: memref<64x1xbf16, #tpu.memory_space<vmem>>, %arg66: memref<1x1xf32, #tpu.memory_space<vmem>>, %arg67: memref<1x1x1xf32, #tpu.memory_space<vmem>>) attributes {dimension_semantics = [#tpu.dimension_semantics<parallel>], iteration_bounds = array<i64: 2>, scalar_prefetch = 0 : i64, scratch_operands = 0 : i64, tpu.core_type = #tpu.core_type<tc>, window_params = [{transform_indices = @transform_0, window_bounds = array<i64: 1, 64, 48>}, {pipeline_mode = #tpu.pipeline_mode<synchronous>, transform_indices = @transform_1, window_bounds = array<i64: 48, 32>}, {pipeline_mode = #tpu.pipeline_mode<synchronous>, transform_indices = @transform_2, window_bounds = array<i64: 1, 32>}, {pipeline_mode = #tpu.pipeline_mode<synchronous>, transform_indices = @transform_3, window_bounds = array<i64: 1, 32>}, {pipeline_mode = #tpu.pipeline_mode<synchronous>, transform_indices = @transform_4, window_bounds = array<i64: 1, 32>}, {pipeline_mode = #tpu.pipeline_mode<synchronous>, transform_indices = @transform_5, window_bounds = array<i64: 64, 32>}, {pipeline_mode = #tpu.pipeline_mode<synchronous>, transform_indices = @transform_6, window_bounds = array<i64: 2, 64, 64>}, {pipeline_mode = #tpu.pipeline_mode<synchronous>, transform_indices = @transform_7, window_bounds = array<i64: 1, 32>}, {pipeline_mode = #tpu.pipeline_mode<synchronous>, transform_indices = @transform_8, window_bounds = array<i64: 1, 32>}, {pipeline_mode = #tpu.pipeline_mode<synchronous>, transform_indices = @transform_9, window_bounds = array<i64: 32, 96>}, {pipeline_mode = #tpu.pipeline_mode<synchronous>, transform_indices = @transform_10, window_bounds = array<i64: 1, 96>}, {pipeline_mode = #tpu.pipeline_mode<synchronous>, transform_indices = @transform_11, window_bounds = array<i64: 32, 32>}, {pipeline_mode = #tpu.pipeline_mode<synchronous>, transform_indices = @transform_12, window_bounds = array<i64: 1, 32>}, {pipeline_mode = #tpu.pipeline_mode<synchronous>, transform_indices = @transform_13, window_bounds = array<i64: 1, 32>}, {pipeline_mode = #tpu.pipeline_mode<synchronous>, transform_indices = @transform_14, window_bounds = array<i64: 1, 32>}, {pipeline_mode = #tpu.pipeline_mode<synchronous>, transform_indices = @transform_15, window_bounds = array<i64: 32, 64>}, {pipeline_mode = #tpu.pipeline_mode<synchronous>, transform_indices = @transform_16, window_bounds = array<i64: 1, 64>}, {pipeline_mode = #tpu.pipeline_mode<synchronous>, transform_indices = @transform_17, window_bounds = array<i64: 64, 32>}, {pipeline_mode = #tpu.pipeline_mode<synchronous>, transform_indices = @transform_18, window_bounds = array<i64: 1, 32>}, {pipeline_mode = #tpu.pipeline_mode<synchronous>, transform_indices = @transform_19, window_bounds = array<i64: 2, 64, 64>}, {pipeline_mode = #tpu.pipeline_mode<synchronous>, transform_indices = @transform_20, window_bounds = array<i64: 1, 32>}, {pipeline_mode = #tpu.pipeline_mode<synchronous>, transform_indices = @transform_21, window_bounds = array<i64: 1, 32>}, {pipeline_mode = #tpu.pipeline_mode<synchronous>, transform_indices = @transform_22, window_bounds = array<i64: 32, 96>}, {pipeline_mode = #tpu.pipeline_mode<synchronous>, transform_indices = @transform_23, window_bounds = array<i64: 1, 96>}, {pipeline_mode = #tpu.pipeline_mode<synchronous>, transform_indices = @transform_24, window_bounds = array<i64: 32, 32>}, {pipeline_mode = #tpu.pipeline_mode<synchronous>, transform_indices = @transform_25, window_bounds = array<i64: 1, 32>}, {pipeline_mode = #tpu.pipeline_mode<synchronous>, transform_indices = @transform_26, window_bounds = array<i64: 1, 32>}, {pipeline_mode = #tpu.pipeline_mode<synchronous>, transform_indices = @transform_27, window_bounds = array<i64: 1, 32>}, {pipeline_mode = #tpu.pipeline_mode<synchronous>, transform_indices = @transform_28, window_bounds = array<i64: 32, 64>}, {pipeline_mode = #tpu.pipeline_mode<synchronous>, transform_indices = @transform_29, window_bounds = array<i64: 1, 64>}, {pipeline_mode = #tpu.pipeline_mode<synchronous>, transform_indices = @transform_30, window_bounds = array<i64: 64, 32>}, {pipeline_mode = #tpu.pipeline_mode<synchronous>, transform_indices = @transform_31, window_bounds = array<i64: 1, 32>}, {pipeline_mode = #tpu.pipeline_mode<synchronous>, transform_indices = @transform_32, window_bounds = array<i64: 4, 16, 64>}, {pipeline_mode = #tpu.pipeline_mode<synchronous>, transform_indices = @transform_33, window_bounds = array<i64: 1, 128>}, {pipeline_mode = #tpu.pipeline_mode<synchronous>, transform_indices = @transform_34, window_bounds = array<i64: 1, 128>}, {pipeline_mode = #tpu.pipeline_mode<synchronous>, transform_indices = @transform_35, window_bounds = array<i64: 128, 64>}, {pipeline_mode = #tpu.pipeline_mode<synchronous>, transform_indices = @transform_36, window_bounds = array<i64: 4, 16, 16>}, {pipeline_mode = #tpu.pipeline_mode<synchronous>, transform_indices = @transform_37, window_bounds = array<i64: 1, 64>}, {pipeline_mode = #tpu.pipeline_mode<synchronous>, transform_indices = @transform_38, window_bounds = array<i64: 1, 64>}, {pipeline_mode = #tpu.pipeline_mode<synchronous>, transform_indices = @transform_39, window_bounds = array<i64: 64, 192>}, {pipeline_mode = #tpu.pipeline_mode<synchronous>, transform_indices = @transform_40, window_bounds = array<i64: 1, 192>}, {pipeline_mode = #tpu.pipeline_mode<synchronous>, transform_indices = @transform_41, window_bounds = array<i64: 64, 64>}, {pipeline_mode = #tpu.pipeline_mode<synchronous>, transform_indices = @transform_42, window_bounds = array<i64: 1, 64>}, {pipeline_mode = #tpu.pipeline_mode<synchronous>, transform_indices = @transform_43, window_bounds = array<i64: 1, 64>}, {pipeline_mode = #tpu.pipeline_mode<synchronous>, transform_indices = @transform_44, window_bounds = array<i64: 1, 64>}, {pipeline_mode = #tpu.pipeline_mode<synchronous>, transform_indices = @transform_45, window_bounds = array<i64: 64, 128>}, {pipeline_mode = #tpu.pipeline_mode<synchronous>, transform_indices = @transform_46, window_bounds = array<i64: 1, 128>}, {pipeline_mode = #tpu.pipeline_mode<synchronous>, transform_indices = @transform_47, window_bounds = array<i64: 128, 64>}, {pipeline_mode = #tpu.pipeline_mode<synchronous>, transform_indices = @transform_48, window_bounds = array<i64: 1, 64>}, {pipeline_mode = #tpu.pipeline_mode<synchronous>, transform_indices = @transform_49, window_bounds = array<i64: 4, 16, 16>}, {pipeline_mode = #tpu.pipeline_mode<synchronous>, transform_indices = @transform_50, window_bounds = array<i64: 1, 64>}, {pipeline_mode = #tpu.pipeline_mode<synchronous>, transform_indices = @transform_51, window_bounds = array<i64: 1, 64>}, {pipeline_mode = #tpu.pipeline_mode<synchronous>, transform_indices = @transform_52, window_bounds = array<i64: 64, 192>}, {pipeline_mode = #tpu.pipeline_mode<synchronous>, transform_indices = @transform_53, window_bounds = array<i64: 1, 192>}, {pipeline_mode = #tpu.pipeline_mode<synchronous>, transform_indices = @transform_54, window_bounds = array<i64: 64, 64>}, {pipeline_mode = #tpu.pipeline_mode<synchronous>, transform_indices = @transform_55, window_bounds = array<i64: 1, 64>}, {pipeline_mode = #tpu.pipeline_mode<synchronous>, transform_indices = @transform_56, window_bounds = array<i64: 1, 64>}, {pipeline_mode = #tpu.pipeline_mode<synchronous>, transform_indices = @transform_57, window_bounds = array<i64: 1, 64>}, {pipeline_mode = #tpu.pipeline_mode<synchronous>, transform_indices = @transform_58, window_bounds = array<i64: 64, 128>}, {pipeline_mode = #tpu.pipeline_mode<synchronous>, transform_indices = @transform_59, window_bounds = array<i64: 1, 128>}, {pipeline_mode = #tpu.pipeline_mode<synchronous>, transform_indices = @transform_60, window_bounds = array<i64: 128, 64>}, {pipeline_mode = #tpu.pipeline_mode<synchronous>, transform_indices = @transform_61, window_bounds = array<i64: 1, 64>}, {pipeline_mode = #tpu.pipeline_mode<synchronous>, transform_indices = @transform_62, window_bounds = array<i64: 1, 64>}, {pipeline_mode = #tpu.pipeline_mode<synchronous>, transform_indices = @transform_63, window_bounds = array<i64: 1, 64>}, {pipeline_mode = #tpu.pipeline_mode<synchronous>, transform_indices = @transform_64, window_bounds = array<i64: 64, 1>}, {pipeline_mode = #tpu.pipeline_mode<synchronous>, transform_indices = @transform_65, window_bounds = array<i64: 1, 1>}, {transform_indices = @transform_66, window_bounds = array<i64: 1, 1, 1>}]} {
    %c0 = arith.constant 0 : index
    %c0_0 = arith.constant 0 : index
    %c0_1 = arith.constant 0 : index
    %0 = vector.load %arg1[%c0, %c0_0, %c0_1] : memref<1x64x48xf32, #tpu.memory_space<vmem>>, vector<1x64x48xf32>
    %1 = vector.shape_cast %0 : vector<1x64x48xf32> to vector<64x48xf32>
    %c0_2 = arith.constant 0 : index
    %c0_3 = arith.constant 0 : index
    %2 = vector.load %arg2[%c0_2, %c0_3] : memref<48x32xbf16, #tpu.memory_space<vmem>>, vector<48x32xbf16>
    %3 = arith.truncf %1 : vector<64x48xf32> to vector<64x48xbf16>
    %cst = arith.constant dense<0.000000e+00> : vector<64x32xf32>
    %4 = tpu.matmul %3, %2, %cst {dimension_numbers = #tpu.dot_dimension_numbers<[1], [0], [0], [1], [0, 0, 1, 1], [], []>} : vector<64x48xbf16>, vector<48x32xbf16>, vector<64x32xf32> -> vector<64x32xf32>
    %c0_4 = arith.constant 0 : index
    %c0_5 = arith.constant 0 : index
    %5 = vector.load %arg3[%c0_4, %c0_5] : memref<1x32xf32, #tpu.memory_space<vmem>>, vector<1x32xf32>
    %6 = vector.broadcast %5 : vector<1x32xf32> to vector<64x32xf32>
    %7 = arith.addf %4, %6 : vector<64x32xf32>
    %c0_6 = arith.constant 0 : index
    %c0_7 = arith.constant 0 : index
    %8 = vector.load %arg4[%c0_6, %c0_7] : memref<1x32xf32, #tpu.memory_space<vmem>>, vector<1x32xf32>
    %c0_8 = arith.constant 0 : index
    %c0_9 = arith.constant 0 : index
    %9 = vector.load %arg5[%c0_8, %c0_9] : memref<1x32xf32, #tpu.memory_space<vmem>>, vector<1x32xf32>
    %cst_10 = arith.constant dense<0.000000e+00> : vector<64xf32>
    %10 = vector.multi_reduction <add>, %7, %cst_10 [1] : vector<64x32xf32> to vector<64xf32>
    %11 = vector.shape_cast %10 : vector<64xf32> to vector<64x1xf32>
    %cst_11 = arith.constant 3.200000e+01 : f32
    %12 = vector.broadcast %cst_11 : f32 to vector<64x1xf32>
    %13 = arith.divf %11, %12 : vector<64x1xf32>
    %14 = vector.broadcast %13 : vector<64x1xf32> to vector<64x32xf32>
    %15 = arith.subf %7, %14 : vector<64x32xf32>
    %16 = arith.mulf %15, %15 : vector<64x32xf32>
    %cst_12 = arith.constant dense<0.000000e+00> : vector<64xf32>
    %17 = vector.multi_reduction <add>, %16, %cst_12 [1] : vector<64x32xf32> to vector<64xf32>
    %18 = vector.shape_cast %17 : vector<64xf32> to vector<64x1xf32>
    %cst_13 = arith.constant 3.200000e+01 : f32
    %19 = vector.broadcast %cst_13 : f32 to vector<64x1xf32>
    %20 = arith.divf %18, %19 : vector<64x1xf32>
    %cst_14 = arith.constant 9.99999974E-6 : f32
    %21 = vector.broadcast %cst_14 : f32 to vector<64x1xf32>
    %22 = arith.addf %20, %21 : vector<64x1xf32>
    %23 = math.rsqrt %22 : vector<64x1xf32>
    %24 = vector.broadcast %23 : vector<64x1xf32> to vector<64x32xf32>
    %25 = arith.mulf %15, %24 : vector<64x32xf32>
    %26 = vector.broadcast %8 : vector<1x32xf32> to vector<64x32xf32>
    %27 = arith.mulf %25, %26 : vector<64x32xf32>
    %28 = vector.broadcast %9 : vector<1x32xf32> to vector<64x32xf32>
    %29 = arith.addf %27, %28 : vector<64x32xf32>
    %c0_15 = arith.constant 0 : index
    %c0_16 = arith.constant 0 : index
    %30 = vector.load %arg6[%c0_15, %c0_16] : memref<64x32xf32, #tpu.memory_space<vmem>>, vector<64x32xf32>
    %31 = arith.addf %29, %30 : vector<64x32xf32>
    %c0_17 = arith.constant 0 : index
    %c0_18 = arith.constant 0 : index
    %32 = vector.load %arg8[%c0_17, %c0_18] : memref<1x32xf32, #tpu.memory_space<vmem>>, vector<1x32xf32>
    %c0_19 = arith.constant 0 : index
    %c0_20 = arith.constant 0 : index
    %33 = vector.load %arg9[%c0_19, %c0_20] : memref<1x32xf32, #tpu.memory_space<vmem>>, vector<1x32xf32>
    %cst_21 = arith.constant dense<0.000000e+00> : vector<64xf32>
    %34 = vector.multi_reduction <add>, %31, %cst_21 [1] : vector<64x32xf32> to vector<64xf32>
    %35 = vector.shape_cast %34 : vector<64xf32> to vector<64x1xf32>
    %cst_22 = arith.constant 3.200000e+01 : f32
    %36 = vector.broadcast %cst_22 : f32 to vector<64x1xf32>
    %37 = arith.divf %35, %36 : vector<64x1xf32>
    %38 = vector.broadcast %37 : vector<64x1xf32> to vector<64x32xf32>
    %39 = arith.subf %31, %38 : vector<64x32xf32>
    %40 = arith.mulf %39, %39 : vector<64x32xf32>
    %cst_23 = arith.constant dense<0.000000e+00> : vector<64xf32>
    %41 = vector.multi_reduction <add>, %40, %cst_23 [1] : vector<64x32xf32> to vector<64xf32>
    %42 = vector.shape_cast %41 : vector<64xf32> to vector<64x1xf32>
    %cst_24 = arith.constant 3.200000e+01 : f32
    %43 = vector.broadcast %cst_24 : f32 to vector<64x1xf32>
    %44 = arith.divf %42, %43 : vector<64x1xf32>
    %cst_25 = arith.constant 9.99999974E-6 : f32
    %45 = vector.broadcast %cst_25 : f32 to vector<64x1xf32>
    %46 = arith.addf %44, %45 : vector<64x1xf32>
    %47 = math.rsqrt %46 : vector<64x1xf32>
    %48 = vector.broadcast %47 : vector<64x1xf32> to vector<64x32xf32>
    %49 = arith.mulf %39, %48 : vector<64x32xf32>
    %50 = vector.broadcast %32 : vector<1x32xf32> to vector<64x32xf32>
    %51 = arith.mulf %49, %50 : vector<64x32xf32>
    %52 = vector.broadcast %33 : vector<1x32xf32> to vector<64x32xf32>
    %53 = arith.addf %51, %52 : vector<64x32xf32>
    %c0_26 = arith.constant 0 : index
    %c0_27 = arith.constant 0 : index
    %54 = vector.load %arg10[%c0_26, %c0_27] : memref<32x96xbf16, #tpu.memory_space<vmem>>, vector<32x96xbf16>
    %55 = arith.truncf %53 : vector<64x32xf32> to vector<64x32xbf16>
    %cst_28 = arith.constant dense<0.000000e+00> : vector<64x96xf32>
    %56 = tpu.matmul %55, %54, %cst_28 {dimension_numbers = #tpu.dot_dimension_numbers<[1], [0], [0], [1], [0, 0, 1, 1], [], []>} : vector<64x32xbf16>, vector<32x96xbf16>, vector<64x96xf32> -> vector<64x96xf32>
    %c0_29 = arith.constant 0 : index
    %c0_30 = arith.constant 0 : index
    %57 = vector.load %arg11[%c0_29, %c0_30] : memref<1x96xf32, #tpu.memory_space<vmem>>, vector<1x96xf32>
    %58 = vector.broadcast %57 : vector<1x96xf32> to vector<64x96xf32>
    %59 = arith.addf %56, %58 : vector<64x96xf32>
    %60 = arith.truncf %59 : vector<64x96xf32> to vector<64x96xbf16>
    %61 = vector.extract_strided_slice %60 {offsets = [0, 0], sizes = [64, 16], strides = [1, 1]} : vector<64x96xbf16> to vector<64x16xbf16>
    %62 = vector.extract_strided_slice %60 {offsets = [0, 32], sizes = [64, 16], strides = [1, 1]} : vector<64x96xbf16> to vector<64x16xbf16>
    %63 = vector.extract_strided_slice %60 {offsets = [0, 64], sizes = [64, 16], strides = [1, 1]} : vector<64x96xbf16> to vector<64x16xbf16>
    %cst_31 = arith.constant dense<0.000000e+00> : vector<64x64xf32>
    %64 = tpu.matmul %61, %62, %cst_31 {dimension_numbers = #tpu.dot_dimension_numbers<[1], [1], [0], [0], [0, 0, 1, 0], [], []>} : vector<64x16xbf16>, vector<64x16xbf16>, vector<64x64xf32> -> vector<64x64xf32>
    %c0_32 = arith.constant 0 : index
    %c0_33 = arith.constant 0 : index
    %c0_34 = arith.constant 0 : index
    %65 = vector.load %arg7[%c0_32, %c0_33, %c0_34] : memref<2x64x64xbf16, #tpu.memory_space<vmem>>, vector<1x64x64xbf16>
    %66 = vector.shape_cast %65 : vector<1x64x64xbf16> to vector<64x64xbf16>
    %67 = arith.extf %66 : vector<64x64xbf16> to vector<64x64xf32>
    %68 = arith.addf %64, %67 : vector<64x64xf32>
    %cst_35 = arith.constant dense<0xFF800000> : vector<64xf32>
    %69 = vector.multi_reduction <maximumf>, %68, %cst_35 [1] : vector<64x64xf32> to vector<64xf32>
    %70 = vector.shape_cast %69 : vector<64xf32> to vector<64x1xf32>
    %71 = vector.broadcast %70 : vector<64x1xf32> to vector<64x64xf32>
    %72 = arith.subf %68, %71 : vector<64x64xf32>
    %73 = math.exp %72 : vector<64x64xf32>
    %cst_36 = arith.constant dense<0.000000e+00> : vector<64xf32>
    %74 = vector.multi_reduction <add>, %73, %cst_36 [1] : vector<64x64xf32> to vector<64xf32>
    %75 = vector.shape_cast %74 : vector<64xf32> to vector<64x1xf32>
    %76 = tpu.reciprocal %75 {approx = true} : vector<64x1xf32> -> vector<64x1xf32>
    %77 = vector.broadcast %76 : vector<64x1xf32> to vector<64x64xf32>
    %78 = arith.mulf %73, %77 : vector<64x64xf32>
    %79 = arith.truncf %78 : vector<64x64xf32> to vector<64x64xbf16>
    %cst_37 = arith.constant dense<0.000000e+00> : vector<64x16xf32>
    %80 = tpu.matmul %79, %63, %cst_37 {dimension_numbers = #tpu.dot_dimension_numbers<[1], [0], [0], [1], [0, 0, 1, 1], [], []>} : vector<64x64xbf16>, vector<64x16xbf16>, vector<64x16xf32> -> vector<64x16xf32>
    %81 = vector.extract_strided_slice %60 {offsets = [0, 16], sizes = [64, 16], strides = [1, 1]} : vector<64x96xbf16> to vector<64x16xbf16>
    %82 = vector.extract_strided_slice %60 {offsets = [0, 48], sizes = [64, 16], strides = [1, 1]} : vector<64x96xbf16> to vector<64x16xbf16>
    %83 = vector.extract_strided_slice %60 {offsets = [0, 80], sizes = [64, 16], strides = [1, 1]} : vector<64x96xbf16> to vector<64x16xbf16>
    %cst_38 = arith.constant dense<0.000000e+00> : vector<64x64xf32>
    %84 = tpu.matmul %81, %82, %cst_38 {dimension_numbers = #tpu.dot_dimension_numbers<[1], [1], [0], [0], [0, 0, 1, 0], [], []>} : vector<64x16xbf16>, vector<64x16xbf16>, vector<64x64xf32> -> vector<64x64xf32>
    %c1 = arith.constant 1 : index
    %c0_39 = arith.constant 0 : index
    %c0_40 = arith.constant 0 : index
    %85 = vector.load %arg7[%c1, %c0_39, %c0_40] : memref<2x64x64xbf16, #tpu.memory_space<vmem>>, vector<1x64x64xbf16>
    %86 = vector.shape_cast %85 : vector<1x64x64xbf16> to vector<64x64xbf16>
    %87 = arith.extf %86 : vector<64x64xbf16> to vector<64x64xf32>
    %88 = arith.addf %84, %87 : vector<64x64xf32>
    %cst_41 = arith.constant dense<0xFF800000> : vector<64xf32>
    %89 = vector.multi_reduction <maximumf>, %88, %cst_41 [1] : vector<64x64xf32> to vector<64xf32>
    %90 = vector.shape_cast %89 : vector<64xf32> to vector<64x1xf32>
    %91 = vector.broadcast %90 : vector<64x1xf32> to vector<64x64xf32>
    %92 = arith.subf %88, %91 : vector<64x64xf32>
    %93 = math.exp %92 : vector<64x64xf32>
    %cst_42 = arith.constant dense<0.000000e+00> : vector<64xf32>
    %94 = vector.multi_reduction <add>, %93, %cst_42 [1] : vector<64x64xf32> to vector<64xf32>
    %95 = vector.shape_cast %94 : vector<64xf32> to vector<64x1xf32>
    %96 = tpu.reciprocal %95 {approx = true} : vector<64x1xf32> -> vector<64x1xf32>
    %97 = vector.broadcast %96 : vector<64x1xf32> to vector<64x64xf32>
    %98 = arith.mulf %93, %97 : vector<64x64xf32>
    %99 = arith.truncf %98 : vector<64x64xf32> to vector<64x64xbf16>
    %cst_43 = arith.constant dense<0.000000e+00> : vector<64x16xf32>
    %100 = tpu.matmul %99, %83, %cst_43 {dimension_numbers = #tpu.dot_dimension_numbers<[1], [0], [0], [1], [0, 0, 1, 1], [], []>} : vector<64x64xbf16>, vector<64x16xbf16>, vector<64x16xf32> -> vector<64x16xf32>
    %101 = tpu.concatenate %80, %100 in 1 : vector<64x16xf32>, vector<64x16xf32> -> vector<64x32xf32>
    %c0_44 = arith.constant 0 : index
    %c0_45 = arith.constant 0 : index
    %102 = vector.load %arg12[%c0_44, %c0_45] : memref<32x32xbf16, #tpu.memory_space<vmem>>, vector<32x32xbf16>
    %103 = arith.truncf %101 : vector<64x32xf32> to vector<64x32xbf16>
    %cst_46 = arith.constant dense<0.000000e+00> : vector<64x32xf32>
    %104 = tpu.matmul %103, %102, %cst_46 {dimension_numbers = #tpu.dot_dimension_numbers<[1], [0], [0], [1], [0, 0, 1, 1], [], []>} : vector<64x32xbf16>, vector<32x32xbf16>, vector<64x32xf32> -> vector<64x32xf32>
    %c0_47 = arith.constant 0 : index
    %c0_48 = arith.constant 0 : index
    %105 = vector.load %arg13[%c0_47, %c0_48] : memref<1x32xf32, #tpu.memory_space<vmem>>, vector<1x32xf32>
    %106 = vector.broadcast %105 : vector<1x32xf32> to vector<64x32xf32>
    %107 = arith.addf %104, %106 : vector<64x32xf32>
    %108 = arith.addf %31, %107 : vector<64x32xf32>
    %c0_49 = arith.constant 0 : index
    %c0_50 = arith.constant 0 : index
    %109 = vector.load %arg14[%c0_49, %c0_50] : memref<1x32xf32, #tpu.memory_space<vmem>>, vector<1x32xf32>
    %c0_51 = arith.constant 0 : index
    %c0_52 = arith.constant 0 : index
    %110 = vector.load %arg15[%c0_51, %c0_52] : memref<1x32xf32, #tpu.memory_space<vmem>>, vector<1x32xf32>
    %cst_53 = arith.constant dense<0.000000e+00> : vector<64xf32>
    %111 = vector.multi_reduction <add>, %108, %cst_53 [1] : vector<64x32xf32> to vector<64xf32>
    %112 = vector.shape_cast %111 : vector<64xf32> to vector<64x1xf32>
    %cst_54 = arith.constant 3.200000e+01 : f32
    %113 = vector.broadcast %cst_54 : f32 to vector<64x1xf32>
    %114 = arith.divf %112, %113 : vector<64x1xf32>
    %115 = vector.broadcast %114 : vector<64x1xf32> to vector<64x32xf32>
    %116 = arith.subf %108, %115 : vector<64x32xf32>
    %117 = arith.mulf %116, %116 : vector<64x32xf32>
    %cst_55 = arith.constant dense<0.000000e+00> : vector<64xf32>
    %118 = vector.multi_reduction <add>, %117, %cst_55 [1] : vector<64x32xf32> to vector<64xf32>
    %119 = vector.shape_cast %118 : vector<64xf32> to vector<64x1xf32>
    %cst_56 = arith.constant 3.200000e+01 : f32
    %120 = vector.broadcast %cst_56 : f32 to vector<64x1xf32>
    %121 = arith.divf %119, %120 : vector<64x1xf32>
    %cst_57 = arith.constant 9.99999974E-6 : f32
    %122 = vector.broadcast %cst_57 : f32 to vector<64x1xf32>
    %123 = arith.addf %121, %122 : vector<64x1xf32>
    %124 = math.rsqrt %123 : vector<64x1xf32>
    %125 = vector.broadcast %124 : vector<64x1xf32> to vector<64x32xf32>
    %126 = arith.mulf %116, %125 : vector<64x32xf32>
    %127 = vector.broadcast %109 : vector<1x32xf32> to vector<64x32xf32>
    %128 = arith.mulf %126, %127 : vector<64x32xf32>
    %129 = vector.broadcast %110 : vector<1x32xf32> to vector<64x32xf32>
    %130 = arith.addf %128, %129 : vector<64x32xf32>
    %c0_58 = arith.constant 0 : index
    %c0_59 = arith.constant 0 : index
    %131 = vector.load %arg16[%c0_58, %c0_59] : memref<32x64xbf16, #tpu.memory_space<vmem>>, vector<32x64xbf16>
    %132 = arith.truncf %130 : vector<64x32xf32> to vector<64x32xbf16>
    %cst_60 = arith.constant dense<0.000000e+00> : vector<64x64xf32>
    %133 = tpu.matmul %132, %131, %cst_60 {dimension_numbers = #tpu.dot_dimension_numbers<[1], [0], [0], [1], [0, 0, 1, 1], [], []>} : vector<64x32xbf16>, vector<32x64xbf16>, vector<64x64xf32> -> vector<64x64xf32>
    %c0_61 = arith.constant 0 : index
    %c0_62 = arith.constant 0 : index
    %134 = vector.load %arg17[%c0_61, %c0_62] : memref<1x64xf32, #tpu.memory_space<vmem>>, vector<1x64xf32>
    %135 = vector.broadcast %134 : vector<1x64xf32> to vector<64x64xf32>
    %136 = arith.addf %133, %135 : vector<64x64xf32>
    %137 = arith.mulf %136, %136 : vector<64x64xf32>
    %138 = arith.mulf %136, %137 : vector<64x64xf32>
    %cst_63 = arith.constant 4.471500e-02 : f32
    %139 = vector.broadcast %cst_63 : f32 to vector<64x64xf32>
    %140 = arith.mulf %139, %138 : vector<64x64xf32>
    %141 = arith.addf %136, %140 : vector<64x64xf32>
    %cst_64 = arith.constant 0.797884583 : f32
    %142 = vector.broadcast %cst_64 : f32 to vector<64x64xf32>
    %143 = arith.mulf %142, %141 : vector<64x64xf32>
    %144 = math.tanh %143 : vector<64x64xf32>
    %cst_65 = arith.constant 1.000000e+00 : f32
    %145 = vector.broadcast %cst_65 : f32 to vector<64x64xf32>
    %146 = arith.addf %145, %144 : vector<64x64xf32>
    %cst_66 = arith.constant 5.000000e-01 : f32
    %147 = vector.broadcast %cst_66 : f32 to vector<64x64xf32>
    %148 = arith.mulf %147, %146 : vector<64x64xf32>
    %149 = arith.mulf %136, %148 : vector<64x64xf32>
    %c0_67 = arith.constant 0 : index
    %c0_68 = arith.constant 0 : index
    %150 = vector.load %arg18[%c0_67, %c0_68] : memref<64x32xbf16, #tpu.memory_space<vmem>>, vector<64x32xbf16>
    %151 = arith.truncf %149 : vector<64x64xf32> to vector<64x64xbf16>
    %cst_69 = arith.constant dense<0.000000e+00> : vector<64x32xf32>
    %152 = tpu.matmul %151, %150, %cst_69 {dimension_numbers = #tpu.dot_dimension_numbers<[1], [0], [0], [1], [0, 0, 1, 1], [], []>} : vector<64x64xbf16>, vector<64x32xbf16>, vector<64x32xf32> -> vector<64x32xf32>
    %c0_70 = arith.constant 0 : index
    %c0_71 = arith.constant 0 : index
    %153 = vector.load %arg19[%c0_70, %c0_71] : memref<1x32xf32, #tpu.memory_space<vmem>>, vector<1x32xf32>
    %154 = vector.broadcast %153 : vector<1x32xf32> to vector<64x32xf32>
    %155 = arith.addf %152, %154 : vector<64x32xf32>
    %156 = arith.addf %108, %155 : vector<64x32xf32>
    %c0_72 = arith.constant 0 : index
    %c0_73 = arith.constant 0 : index
    %157 = vector.load %arg21[%c0_72, %c0_73] : memref<1x32xf32, #tpu.memory_space<vmem>>, vector<1x32xf32>
    %c0_74 = arith.constant 0 : index
    %c0_75 = arith.constant 0 : index
    %158 = vector.load %arg22[%c0_74, %c0_75] : memref<1x32xf32, #tpu.memory_space<vmem>>, vector<1x32xf32>
    %cst_76 = arith.constant dense<0.000000e+00> : vector<64xf32>
    %159 = vector.multi_reduction <add>, %156, %cst_76 [1] : vector<64x32xf32> to vector<64xf32>
    %160 = vector.shape_cast %159 : vector<64xf32> to vector<64x1xf32>
    %cst_77 = arith.constant 3.200000e+01 : f32
    %161 = vector.broadcast %cst_77 : f32 to vector<64x1xf32>
    %162 = arith.divf %160, %161 : vector<64x1xf32>
    %163 = vector.broadcast %162 : vector<64x1xf32> to vector<64x32xf32>
    %164 = arith.subf %156, %163 : vector<64x32xf32>
    %165 = arith.mulf %164, %164 : vector<64x32xf32>
    %cst_78 = arith.constant dense<0.000000e+00> : vector<64xf32>
    %166 = vector.multi_reduction <add>, %165, %cst_78 [1] : vector<64x32xf32> to vector<64xf32>
    %167 = vector.shape_cast %166 : vector<64xf32> to vector<64x1xf32>
    %cst_79 = arith.constant 3.200000e+01 : f32
    %168 = vector.broadcast %cst_79 : f32 to vector<64x1xf32>
    %169 = arith.divf %167, %168 : vector<64x1xf32>
    %cst_80 = arith.constant 9.99999974E-6 : f32
    %170 = vector.broadcast %cst_80 : f32 to vector<64x1xf32>
    %171 = arith.addf %169, %170 : vector<64x1xf32>
    %172 = math.rsqrt %171 : vector<64x1xf32>
    %173 = vector.broadcast %172 : vector<64x1xf32> to vector<64x32xf32>
    %174 = arith.mulf %164, %173 : vector<64x32xf32>
    %175 = vector.broadcast %157 : vector<1x32xf32> to vector<64x32xf32>
    %176 = arith.mulf %174, %175 : vector<64x32xf32>
    %177 = vector.broadcast %158 : vector<1x32xf32> to vector<64x32xf32>
    %178 = arith.addf %176, %177 : vector<64x32xf32>
    %c0_81 = arith.constant 0 : index
    %c0_82 = arith.constant 0 : index
    %179 = vector.load %arg23[%c0_81, %c0_82] : memref<32x96xbf16, #tpu.memory_space<vmem>>, vector<32x96xbf16>
    %180 = arith.truncf %178 : vector<64x32xf32> to vector<64x32xbf16>
    %cst_83 = arith.constant dense<0.000000e+00> : vector<64x96xf32>
    %181 = tpu.matmul %180, %179, %cst_83 {dimension_numbers = #tpu.dot_dimension_numbers<[1], [0], [0], [1], [0, 0, 1, 1], [], []>} : vector<64x32xbf16>, vector<32x96xbf16>, vector<64x96xf32> -> vector<64x96xf32>
    %c0_84 = arith.constant 0 : index
    %c0_85 = arith.constant 0 : index
    %182 = vector.load %arg24[%c0_84, %c0_85] : memref<1x96xf32, #tpu.memory_space<vmem>>, vector<1x96xf32>
    %183 = vector.broadcast %182 : vector<1x96xf32> to vector<64x96xf32>
    %184 = arith.addf %181, %183 : vector<64x96xf32>
    %185 = arith.truncf %184 : vector<64x96xf32> to vector<64x96xbf16>
    %186 = vector.extract_strided_slice %185 {offsets = [0, 0], sizes = [64, 16], strides = [1, 1]} : vector<64x96xbf16> to vector<64x16xbf16>
    %187 = vector.extract_strided_slice %185 {offsets = [0, 32], sizes = [64, 16], strides = [1, 1]} : vector<64x96xbf16> to vector<64x16xbf16>
    %188 = vector.extract_strided_slice %185 {offsets = [0, 64], sizes = [64, 16], strides = [1, 1]} : vector<64x96xbf16> to vector<64x16xbf16>
    %cst_86 = arith.constant dense<0.000000e+00> : vector<64x64xf32>
    %189 = tpu.matmul %186, %187, %cst_86 {dimension_numbers = #tpu.dot_dimension_numbers<[1], [1], [0], [0], [0, 0, 1, 0], [], []>} : vector<64x16xbf16>, vector<64x16xbf16>, vector<64x64xf32> -> vector<64x64xf32>
    %c0_87 = arith.constant 0 : index
    %c0_88 = arith.constant 0 : index
    %c0_89 = arith.constant 0 : index
    %190 = vector.load %arg20[%c0_87, %c0_88, %c0_89] : memref<2x64x64xbf16, #tpu.memory_space<vmem>>, vector<1x64x64xbf16>
    %191 = vector.shape_cast %190 : vector<1x64x64xbf16> to vector<64x64xbf16>
    %192 = arith.extf %191 : vector<64x64xbf16> to vector<64x64xf32>
    %193 = arith.addf %189, %192 : vector<64x64xf32>
    %cst_90 = arith.constant dense<0xFF800000> : vector<64xf32>
    %194 = vector.multi_reduction <maximumf>, %193, %cst_90 [1] : vector<64x64xf32> to vector<64xf32>
    %195 = vector.shape_cast %194 : vector<64xf32> to vector<64x1xf32>
    %196 = vector.broadcast %195 : vector<64x1xf32> to vector<64x64xf32>
    %197 = arith.subf %193, %196 : vector<64x64xf32>
    %198 = math.exp %197 : vector<64x64xf32>
    %cst_91 = arith.constant dense<0.000000e+00> : vector<64xf32>
    %199 = vector.multi_reduction <add>, %198, %cst_91 [1] : vector<64x64xf32> to vector<64xf32>
    %200 = vector.shape_cast %199 : vector<64xf32> to vector<64x1xf32>
    %201 = tpu.reciprocal %200 {approx = true} : vector<64x1xf32> -> vector<64x1xf32>
    %202 = vector.broadcast %201 : vector<64x1xf32> to vector<64x64xf32>
    %203 = arith.mulf %198, %202 : vector<64x64xf32>
    %204 = arith.truncf %203 : vector<64x64xf32> to vector<64x64xbf16>
    %cst_92 = arith.constant dense<0.000000e+00> : vector<64x16xf32>
    %205 = tpu.matmul %204, %188, %cst_92 {dimension_numbers = #tpu.dot_dimension_numbers<[1], [0], [0], [1], [0, 0, 1, 1], [], []>} : vector<64x64xbf16>, vector<64x16xbf16>, vector<64x16xf32> -> vector<64x16xf32>
    %206 = vector.extract_strided_slice %185 {offsets = [0, 16], sizes = [64, 16], strides = [1, 1]} : vector<64x96xbf16> to vector<64x16xbf16>
    %207 = vector.extract_strided_slice %185 {offsets = [0, 48], sizes = [64, 16], strides = [1, 1]} : vector<64x96xbf16> to vector<64x16xbf16>
    %208 = vector.extract_strided_slice %185 {offsets = [0, 80], sizes = [64, 16], strides = [1, 1]} : vector<64x96xbf16> to vector<64x16xbf16>
    %cst_93 = arith.constant dense<0.000000e+00> : vector<64x64xf32>
    %209 = tpu.matmul %206, %207, %cst_93 {dimension_numbers = #tpu.dot_dimension_numbers<[1], [1], [0], [0], [0, 0, 1, 0], [], []>} : vector<64x16xbf16>, vector<64x16xbf16>, vector<64x64xf32> -> vector<64x64xf32>
    %c1_94 = arith.constant 1 : index
    %c0_95 = arith.constant 0 : index
    %c0_96 = arith.constant 0 : index
    %210 = vector.load %arg20[%c1_94, %c0_95, %c0_96] : memref<2x64x64xbf16, #tpu.memory_space<vmem>>, vector<1x64x64xbf16>
    %211 = vector.shape_cast %210 : vector<1x64x64xbf16> to vector<64x64xbf16>
    %212 = arith.extf %211 : vector<64x64xbf16> to vector<64x64xf32>
    %213 = arith.addf %209, %212 : vector<64x64xf32>
    %cst_97 = arith.constant dense<0xFF800000> : vector<64xf32>
    %214 = vector.multi_reduction <maximumf>, %213, %cst_97 [1] : vector<64x64xf32> to vector<64xf32>
    %215 = vector.shape_cast %214 : vector<64xf32> to vector<64x1xf32>
    %216 = vector.broadcast %215 : vector<64x1xf32> to vector<64x64xf32>
    %217 = arith.subf %213, %216 : vector<64x64xf32>
    %218 = math.exp %217 : vector<64x64xf32>
    %cst_98 = arith.constant dense<0.000000e+00> : vector<64xf32>
    %219 = vector.multi_reduction <add>, %218, %cst_98 [1] : vector<64x64xf32> to vector<64xf32>
    %220 = vector.shape_cast %219 : vector<64xf32> to vector<64x1xf32>
    %221 = tpu.reciprocal %220 {approx = true} : vector<64x1xf32> -> vector<64x1xf32>
    %222 = vector.broadcast %221 : vector<64x1xf32> to vector<64x64xf32>
    %223 = arith.mulf %218, %222 : vector<64x64xf32>
    %224 = arith.truncf %223 : vector<64x64xf32> to vector<64x64xbf16>
    %cst_99 = arith.constant dense<0.000000e+00> : vector<64x16xf32>
    %225 = tpu.matmul %224, %208, %cst_99 {dimension_numbers = #tpu.dot_dimension_numbers<[1], [0], [0], [1], [0, 0, 1, 1], [], []>} : vector<64x64xbf16>, vector<64x16xbf16>, vector<64x16xf32> -> vector<64x16xf32>
    %226 = tpu.concatenate %205, %225 in 1 : vector<64x16xf32>, vector<64x16xf32> -> vector<64x32xf32>
    %c0_100 = arith.constant 0 : index
    %c0_101 = arith.constant 0 : index
    %227 = vector.load %arg25[%c0_100, %c0_101] : memref<32x32xbf16, #tpu.memory_space<vmem>>, vector<32x32xbf16>
    %228 = arith.truncf %226 : vector<64x32xf32> to vector<64x32xbf16>
    %cst_102 = arith.constant dense<0.000000e+00> : vector<64x32xf32>
    %229 = tpu.matmul %228, %227, %cst_102 {dimension_numbers = #tpu.dot_dimension_numbers<[1], [0], [0], [1], [0, 0, 1, 1], [], []>} : vector<64x32xbf16>, vector<32x32xbf16>, vector<64x32xf32> -> vector<64x32xf32>
    %c0_103 = arith.constant 0 : index
    %c0_104 = arith.constant 0 : index
    %230 = vector.load %arg26[%c0_103, %c0_104] : memref<1x32xf32, #tpu.memory_space<vmem>>, vector<1x32xf32>
    %231 = vector.broadcast %230 : vector<1x32xf32> to vector<64x32xf32>
    %232 = arith.addf %229, %231 : vector<64x32xf32>
    %233 = arith.addf %156, %232 : vector<64x32xf32>
    %c0_105 = arith.constant 0 : index
    %c0_106 = arith.constant 0 : index
    %234 = vector.load %arg27[%c0_105, %c0_106] : memref<1x32xf32, #tpu.memory_space<vmem>>, vector<1x32xf32>
    %c0_107 = arith.constant 0 : index
    %c0_108 = arith.constant 0 : index
    %235 = vector.load %arg28[%c0_107, %c0_108] : memref<1x32xf32, #tpu.memory_space<vmem>>, vector<1x32xf32>
    %cst_109 = arith.constant dense<0.000000e+00> : vector<64xf32>
    %236 = vector.multi_reduction <add>, %233, %cst_109 [1] : vector<64x32xf32> to vector<64xf32>
    %237 = vector.shape_cast %236 : vector<64xf32> to vector<64x1xf32>
    %cst_110 = arith.constant 3.200000e+01 : f32
    %238 = vector.broadcast %cst_110 : f32 to vector<64x1xf32>
    %239 = arith.divf %237, %238 : vector<64x1xf32>
    %240 = vector.broadcast %239 : vector<64x1xf32> to vector<64x32xf32>
    %241 = arith.subf %233, %240 : vector<64x32xf32>
    %242 = arith.mulf %241, %241 : vector<64x32xf32>
    %cst_111 = arith.constant dense<0.000000e+00> : vector<64xf32>
    %243 = vector.multi_reduction <add>, %242, %cst_111 [1] : vector<64x32xf32> to vector<64xf32>
    %244 = vector.shape_cast %243 : vector<64xf32> to vector<64x1xf32>
    %cst_112 = arith.constant 3.200000e+01 : f32
    %245 = vector.broadcast %cst_112 : f32 to vector<64x1xf32>
    %246 = arith.divf %244, %245 : vector<64x1xf32>
    %cst_113 = arith.constant 9.99999974E-6 : f32
    %247 = vector.broadcast %cst_113 : f32 to vector<64x1xf32>
    %248 = arith.addf %246, %247 : vector<64x1xf32>
    %249 = math.rsqrt %248 : vector<64x1xf32>
    %250 = vector.broadcast %249 : vector<64x1xf32> to vector<64x32xf32>
    %251 = arith.mulf %241, %250 : vector<64x32xf32>
    %252 = vector.broadcast %234 : vector<1x32xf32> to vector<64x32xf32>
    %253 = arith.mulf %251, %252 : vector<64x32xf32>
    %254 = vector.broadcast %235 : vector<1x32xf32> to vector<64x32xf32>
    %255 = arith.addf %253, %254 : vector<64x32xf32>
    %c0_114 = arith.constant 0 : index
    %c0_115 = arith.constant 0 : index
    %256 = vector.load %arg29[%c0_114, %c0_115] : memref<32x64xbf16, #tpu.memory_space<vmem>>, vector<32x64xbf16>
    %257 = arith.truncf %255 : vector<64x32xf32> to vector<64x32xbf16>
    %cst_116 = arith.constant dense<0.000000e+00> : vector<64x64xf32>
    %258 = tpu.matmul %257, %256, %cst_116 {dimension_numbers = #tpu.dot_dimension_numbers<[1], [0], [0], [1], [0, 0, 1, 1], [], []>} : vector<64x32xbf16>, vector<32x64xbf16>, vector<64x64xf32> -> vector<64x64xf32>
    %c0_117 = arith.constant 0 : index
    %c0_118 = arith.constant 0 : index
    %259 = vector.load %arg30[%c0_117, %c0_118] : memref<1x64xf32, #tpu.memory_space<vmem>>, vector<1x64xf32>
    %260 = vector.broadcast %259 : vector<1x64xf32> to vector<64x64xf32>
    %261 = arith.addf %258, %260 : vector<64x64xf32>
    %262 = arith.mulf %261, %261 : vector<64x64xf32>
    %263 = arith.mulf %261, %262 : vector<64x64xf32>
    %cst_119 = arith.constant 4.471500e-02 : f32
    %264 = vector.broadcast %cst_119 : f32 to vector<64x64xf32>
    %265 = arith.mulf %264, %263 : vector<64x64xf32>
    %266 = arith.addf %261, %265 : vector<64x64xf32>
    %cst_120 = arith.constant 0.797884583 : f32
    %267 = vector.broadcast %cst_120 : f32 to vector<64x64xf32>
    %268 = arith.mulf %267, %266 : vector<64x64xf32>
    %269 = math.tanh %268 : vector<64x64xf32>
    %cst_121 = arith.constant 1.000000e+00 : f32
    %270 = vector.broadcast %cst_121 : f32 to vector<64x64xf32>
    %271 = arith.addf %270, %269 : vector<64x64xf32>
    %cst_122 = arith.constant 5.000000e-01 : f32
    %272 = vector.broadcast %cst_122 : f32 to vector<64x64xf32>
    %273 = arith.mulf %272, %271 : vector<64x64xf32>
    %274 = arith.mulf %261, %273 : vector<64x64xf32>
    %c0_123 = arith.constant 0 : index
    %c0_124 = arith.constant 0 : index
    %275 = vector.load %arg31[%c0_123, %c0_124] : memref<64x32xbf16, #tpu.memory_space<vmem>>, vector<64x32xbf16>
    %276 = arith.truncf %274 : vector<64x64xf32> to vector<64x64xbf16>
    %cst_125 = arith.constant dense<0.000000e+00> : vector<64x32xf32>
    %277 = tpu.matmul %276, %275, %cst_125 {dimension_numbers = #tpu.dot_dimension_numbers<[1], [0], [0], [1], [0, 0, 1, 1], [], []>} : vector<64x64xbf16>, vector<64x32xbf16>, vector<64x32xf32> -> vector<64x32xf32>
    %c0_126 = arith.constant 0 : index
    %c0_127 = arith.constant 0 : index
    %278 = vector.load %arg32[%c0_126, %c0_127] : memref<1x32xf32, #tpu.memory_space<vmem>>, vector<1x32xf32>
    %279 = vector.broadcast %278 : vector<1x32xf32> to vector<64x32xf32>
    %280 = arith.addf %277, %279 : vector<64x32xf32>
    %281 = arith.addf %233, %280 : vector<64x32xf32>
    %c0_128 = arith.constant 0 : index
    %c0_129 = arith.constant 0 : index
    %c0_130 = arith.constant 0 : index
    %282 = vector.load %arg33[%c0_128, %c0_129, %c0_130] : memref<4x16x64xbf16, #tpu.memory_space<vmem>>, vector<4x16x64xbf16>
    %283 = arith.truncf %281 : vector<64x32xf32> to vector<64x32xbf16>
    %284 = vector.extract_strided_slice %282 {offsets = [0, 0, 0], sizes = [1, 16, 64], strides = [1, 1, 1]} : vector<4x16x64xbf16> to vector<1x16x64xbf16>
    %285 = vector.shape_cast %284 : vector<1x16x64xbf16> to vector<16x64xbf16>
    %cst_131 = arith.constant dense<0.000000e+00> : vector<16x32xf32>
    %286 = tpu.matmul %285, %283, %cst_131 {dimension_numbers = #tpu.dot_dimension_numbers<[1], [0], [0], [1], [0, 0, 1, 1], [], []>} : vector<16x64xbf16>, vector<64x32xbf16>, vector<16x32xf32> -> vector<16x32xf32>
    %287 = vector.extract_strided_slice %282 {offsets = [1, 0, 0], sizes = [1, 16, 64], strides = [1, 1, 1]} : vector<4x16x64xbf16> to vector<1x16x64xbf16>
    %288 = vector.shape_cast %287 : vector<1x16x64xbf16> to vector<16x64xbf16>
    %cst_132 = arith.constant dense<0.000000e+00> : vector<16x32xf32>
    %289 = tpu.matmul %288, %283, %cst_132 {dimension_numbers = #tpu.dot_dimension_numbers<[1], [0], [0], [1], [0, 0, 1, 1], [], []>} : vector<16x64xbf16>, vector<64x32xbf16>, vector<16x32xf32> -> vector<16x32xf32>
    %290 = vector.extract_strided_slice %282 {offsets = [2, 0, 0], sizes = [1, 16, 64], strides = [1, 1, 1]} : vector<4x16x64xbf16> to vector<1x16x64xbf16>
    %291 = vector.shape_cast %290 : vector<1x16x64xbf16> to vector<16x64xbf16>
    %cst_133 = arith.constant dense<0.000000e+00> : vector<16x32xf32>
    %292 = tpu.matmul %291, %283, %cst_133 {dimension_numbers = #tpu.dot_dimension_numbers<[1], [0], [0], [1], [0, 0, 1, 1], [], []>} : vector<16x64xbf16>, vector<64x32xbf16>, vector<16x32xf32> -> vector<16x32xf32>
    %293 = vector.extract_strided_slice %282 {offsets = [3, 0, 0], sizes = [1, 16, 64], strides = [1, 1, 1]} : vector<4x16x64xbf16> to vector<1x16x64xbf16>
    %294 = vector.shape_cast %293 : vector<1x16x64xbf16> to vector<16x64xbf16>
    %cst_134 = arith.constant dense<0.000000e+00> : vector<16x32xf32>
    %295 = tpu.matmul %294, %283, %cst_134 {dimension_numbers = #tpu.dot_dimension_numbers<[1], [0], [0], [1], [0, 0, 1, 1], [], []>} : vector<16x64xbf16>, vector<64x32xbf16>, vector<16x32xf32> -> vector<16x32xf32>
    %296 = tpu.concatenate %286, %289, %292, %295 in 1 : vector<16x32xf32>, vector<16x32xf32>, vector<16x32xf32>, vector<16x32xf32> -> vector<16x128xf32>
    %c0_135 = arith.constant 0 : index
    %c0_136 = arith.constant 0 : index
    %297 = vector.load %arg34[%c0_135, %c0_136] : memref<1x128xf32, #tpu.memory_space<vmem>>, vector<1x128xf32>
    %c0_137 = arith.constant 0 : index
    %c0_138 = arith.constant 0 : index
    %298 = vector.load %arg35[%c0_137, %c0_138] : memref<1x128xf32, #tpu.memory_space<vmem>>, vector<1x128xf32>
    %cst_139 = arith.constant dense<0.000000e+00> : vector<16xf32>
    %299 = vector.multi_reduction <add>, %296, %cst_139 [1] : vector<16x128xf32> to vector<16xf32>
    %300 = vector.shape_cast %299 : vector<16xf32> to vector<16x1xf32>
    %cst_140 = arith.constant 1.280000e+02 : f32
    %301 = vector.broadcast %cst_140 : f32 to vector<16x1xf32>
    %302 = arith.divf %300, %301 : vector<16x1xf32>
    %303 = vector.broadcast %302 : vector<16x1xf32> to vector<16x128xf32>
    %304 = arith.subf %296, %303 : vector<16x128xf32>
    %305 = arith.mulf %304, %304 : vector<16x128xf32>
    %cst_141 = arith.constant dense<0.000000e+00> : vector<16xf32>
    %306 = vector.multi_reduction <add>, %305, %cst_141 [1] : vector<16x128xf32> to vector<16xf32>
    %307 = vector.shape_cast %306 : vector<16xf32> to vector<16x1xf32>
    %cst_142 = arith.constant 1.280000e+02 : f32
    %308 = vector.broadcast %cst_142 : f32 to vector<16x1xf32>
    %309 = arith.divf %307, %308 : vector<16x1xf32>
    %cst_143 = arith.constant 9.99999974E-6 : f32
    %310 = vector.broadcast %cst_143 : f32 to vector<16x1xf32>
    %311 = arith.addf %309, %310 : vector<16x1xf32>
    %312 = math.rsqrt %311 : vector<16x1xf32>
    %313 = vector.broadcast %312 : vector<16x1xf32> to vector<16x128xf32>
    %314 = arith.mulf %304, %313 : vector<16x128xf32>
    %315 = vector.broadcast %297 : vector<1x128xf32> to vector<16x128xf32>
    %316 = arith.mulf %314, %315 : vector<16x128xf32>
    %317 = vector.broadcast %298 : vector<1x128xf32> to vector<16x128xf32>
    %318 = arith.addf %316, %317 : vector<16x128xf32>
    %c0_144 = arith.constant 0 : index
    %c0_145 = arith.constant 0 : index
    %319 = vector.load %arg36[%c0_144, %c0_145] : memref<128x64xbf16, #tpu.memory_space<vmem>>, vector<128x64xbf16>
    %320 = arith.truncf %318 : vector<16x128xf32> to vector<16x128xbf16>
    %cst_146 = arith.constant dense<0.000000e+00> : vector<16x64xf32>
    %321 = tpu.matmul %320, %319, %cst_146 {dimension_numbers = #tpu.dot_dimension_numbers<[1], [0], [0], [1], [0, 0, 1, 1], [], []>} : vector<16x128xbf16>, vector<128x64xbf16>, vector<16x64xf32> -> vector<16x64xf32>
    %c0_147 = arith.constant 0 : index
    %c0_148 = arith.constant 0 : index
    %322 = vector.load %arg38[%c0_147, %c0_148] : memref<1x64xf32, #tpu.memory_space<vmem>>, vector<1x64xf32>
    %c0_149 = arith.constant 0 : index
    %c0_150 = arith.constant 0 : index
    %323 = vector.load %arg39[%c0_149, %c0_150] : memref<1x64xf32, #tpu.memory_space<vmem>>, vector<1x64xf32>
    %cst_151 = arith.constant dense<0.000000e+00> : vector<16xf32>
    %324 = vector.multi_reduction <add>, %321, %cst_151 [1] : vector<16x64xf32> to vector<16xf32>
    %325 = vector.shape_cast %324 : vector<16xf32> to vector<16x1xf32>
    %cst_152 = arith.constant 6.400000e+01 : f32
    %326 = vector.broadcast %cst_152 : f32 to vector<16x1xf32>
    %327 = arith.divf %325, %326 : vector<16x1xf32>
    %328 = vector.broadcast %327 : vector<16x1xf32> to vector<16x64xf32>
    %329 = arith.subf %321, %328 : vector<16x64xf32>
    %330 = arith.mulf %329, %329 : vector<16x64xf32>
    %cst_153 = arith.constant dense<0.000000e+00> : vector<16xf32>
    %331 = vector.multi_reduction <add>, %330, %cst_153 [1] : vector<16x64xf32> to vector<16xf32>
    %332 = vector.shape_cast %331 : vector<16xf32> to vector<16x1xf32>
    %cst_154 = arith.constant 6.400000e+01 : f32
    %333 = vector.broadcast %cst_154 : f32 to vector<16x1xf32>
    %334 = arith.divf %332, %333 : vector<16x1xf32>
    %cst_155 = arith.constant 9.99999974E-6 : f32
    %335 = vector.broadcast %cst_155 : f32 to vector<16x1xf32>
    %336 = arith.addf %334, %335 : vector<16x1xf32>
    %337 = math.rsqrt %336 : vector<16x1xf32>
    %338 = vector.broadcast %337 : vector<16x1xf32> to vector<16x64xf32>
    %339 = arith.mulf %329, %338 : vector<16x64xf32>
    %340 = vector.broadcast %322 : vector<1x64xf32> to vector<16x64xf32>
    %341 = arith.mulf %339, %340 : vector<16x64xf32>
    %342 = vector.broadcast %323 : vector<1x64xf32> to vector<16x64xf32>
    %343 = arith.addf %341, %342 : vector<16x64xf32>
    %c0_156 = arith.constant 0 : index
    %c0_157 = arith.constant 0 : index
    %344 = vector.load %arg40[%c0_156, %c0_157] : memref<64x192xbf16, #tpu.memory_space<vmem>>, vector<64x192xbf16>
    %345 = arith.truncf %343 : vector<16x64xf32> to vector<16x64xbf16>
    %cst_158 = arith.constant dense<0.000000e+00> : vector<16x192xf32>
    %346 = tpu.matmul %345, %344, %cst_158 {dimension_numbers = #tpu.dot_dimension_numbers<[1], [0], [0], [1], [0, 0, 1, 1], [], []>} : vector<16x64xbf16>, vector<64x192xbf16>, vector<16x192xf32> -> vector<16x192xf32>
    %c0_159 = arith.constant 0 : index
    %c0_160 = arith.constant 0 : index
    %347 = vector.load %arg41[%c0_159, %c0_160] : memref<1x192xf32, #tpu.memory_space<vmem>>, vector<1x192xf32>
    %348 = vector.broadcast %347 : vector<1x192xf32> to vector<16x192xf32>
    %349 = arith.addf %346, %348 : vector<16x192xf32>
    %350 = arith.truncf %349 : vector<16x192xf32> to vector<16x192xbf16>
    %351 = vector.extract_strided_slice %350 {offsets = [0, 0], sizes = [16, 16], strides = [1, 1]} : vector<16x192xbf16> to vector<16x16xbf16>
    %352 = vector.extract_strided_slice %350 {offsets = [0, 64], sizes = [16, 16], strides = [1, 1]} : vector<16x192xbf16> to vector<16x16xbf16>
    %353 = vector.extract_strided_slice %350 {offsets = [0, 128], sizes = [16, 16], strides = [1, 1]} : vector<16x192xbf16> to vector<16x16xbf16>
    %cst_161 = arith.constant dense<0.000000e+00> : vector<16x16xf32>
    %354 = tpu.matmul %351, %352, %cst_161 {dimension_numbers = #tpu.dot_dimension_numbers<[1], [1], [0], [0], [0, 0, 1, 0], [], []>} : vector<16x16xbf16>, vector<16x16xbf16>, vector<16x16xf32> -> vector<16x16xf32>
    %c0_162 = arith.constant 0 : index
    %c0_163 = arith.constant 0 : index
    %c0_164 = arith.constant 0 : index
    %355 = vector.load %arg37[%c0_162, %c0_163, %c0_164] : memref<4x16x16xbf16, #tpu.memory_space<vmem>>, vector<1x16x16xbf16>
    %356 = vector.shape_cast %355 : vector<1x16x16xbf16> to vector<16x16xbf16>
    %357 = arith.extf %356 : vector<16x16xbf16> to vector<16x16xf32>
    %358 = arith.addf %354, %357 : vector<16x16xf32>
    %cst_165 = arith.constant dense<0xFF800000> : vector<16xf32>
    %359 = vector.multi_reduction <maximumf>, %358, %cst_165 [1] : vector<16x16xf32> to vector<16xf32>
    %360 = vector.shape_cast %359 : vector<16xf32> to vector<16x1xf32>
    %361 = vector.broadcast %360 : vector<16x1xf32> to vector<16x16xf32>
    %362 = arith.subf %358, %361 : vector<16x16xf32>
    %363 = math.exp %362 : vector<16x16xf32>
    %cst_166 = arith.constant dense<0.000000e+00> : vector<16xf32>
    %364 = vector.multi_reduction <add>, %363, %cst_166 [1] : vector<16x16xf32> to vector<16xf32>
    %365 = vector.shape_cast %364 : vector<16xf32> to vector<16x1xf32>
    %366 = tpu.reciprocal %365 {approx = true} : vector<16x1xf32> -> vector<16x1xf32>
    %367 = vector.broadcast %366 : vector<16x1xf32> to vector<16x16xf32>
    %368 = arith.mulf %363, %367 : vector<16x16xf32>
    %369 = arith.truncf %368 : vector<16x16xf32> to vector<16x16xbf16>
    %cst_167 = arith.constant dense<0.000000e+00> : vector<16x16xf32>
    %370 = tpu.matmul %369, %353, %cst_167 {dimension_numbers = #tpu.dot_dimension_numbers<[1], [0], [0], [1], [0, 0, 1, 1], [], []>} : vector<16x16xbf16>, vector<16x16xbf16>, vector<16x16xf32> -> vector<16x16xf32>
    %371 = vector.extract_strided_slice %350 {offsets = [0, 16], sizes = [16, 16], strides = [1, 1]} : vector<16x192xbf16> to vector<16x16xbf16>
    %372 = vector.extract_strided_slice %350 {offsets = [0, 80], sizes = [16, 16], strides = [1, 1]} : vector<16x192xbf16> to vector<16x16xbf16>
    %373 = vector.extract_strided_slice %350 {offsets = [0, 144], sizes = [16, 16], strides = [1, 1]} : vector<16x192xbf16> to vector<16x16xbf16>
    %cst_168 = arith.constant dense<0.000000e+00> : vector<16x16xf32>
    %374 = tpu.matmul %371, %372, %cst_168 {dimension_numbers = #tpu.dot_dimension_numbers<[1], [1], [0], [0], [0, 0, 1, 0], [], []>} : vector<16x16xbf16>, vector<16x16xbf16>, vector<16x16xf32> -> vector<16x16xf32>
    %c1_169 = arith.constant 1 : index
    %c0_170 = arith.constant 0 : index
    %c0_171 = arith.constant 0 : index
    %375 = vector.load %arg37[%c1_169, %c0_170, %c0_171] : memref<4x16x16xbf16, #tpu.memory_space<vmem>>, vector<1x16x16xbf16>
    %376 = vector.shape_cast %375 : vector<1x16x16xbf16> to vector<16x16xbf16>
    %377 = arith.extf %376 : vector<16x16xbf16> to vector<16x16xf32>
    %378 = arith.addf %374, %377 : vector<16x16xf32>
    %cst_172 = arith.constant dense<0xFF800000> : vector<16xf32>
    %379 = vector.multi_reduction <maximumf>, %378, %cst_172 [1] : vector<16x16xf32> to vector<16xf32>
    %380 = vector.shape_cast %379 : vector<16xf32> to vector<16x1xf32>
    %381 = vector.broadcast %380 : vector<16x1xf32> to vector<16x16xf32>
    %382 = arith.subf %378, %381 : vector<16x16xf32>
    %383 = math.exp %382 : vector<16x16xf32>
    %cst_173 = arith.constant dense<0.000000e+00> : vector<16xf32>
    %384 = vector.multi_reduction <add>, %383, %cst_173 [1] : vector<16x16xf32> to vector<16xf32>
    %385 = vector.shape_cast %384 : vector<16xf32> to vector<16x1xf32>
    %386 = tpu.reciprocal %385 {approx = true} : vector<16x1xf32> -> vector<16x1xf32>
    %387 = vector.broadcast %386 : vector<16x1xf32> to vector<16x16xf32>
    %388 = arith.mulf %383, %387 : vector<16x16xf32>
    %389 = arith.truncf %388 : vector<16x16xf32> to vector<16x16xbf16>
    %cst_174 = arith.constant dense<0.000000e+00> : vector<16x16xf32>
    %390 = tpu.matmul %389, %373, %cst_174 {dimension_numbers = #tpu.dot_dimension_numbers<[1], [0], [0], [1], [0, 0, 1, 1], [], []>} : vector<16x16xbf16>, vector<16x16xbf16>, vector<16x16xf32> -> vector<16x16xf32>
    %391 = vector.extract_strided_slice %350 {offsets = [0, 32], sizes = [16, 16], strides = [1, 1]} : vector<16x192xbf16> to vector<16x16xbf16>
    %392 = vector.extract_strided_slice %350 {offsets = [0, 96], sizes = [16, 16], strides = [1, 1]} : vector<16x192xbf16> to vector<16x16xbf16>
    %393 = vector.extract_strided_slice %350 {offsets = [0, 160], sizes = [16, 16], strides = [1, 1]} : vector<16x192xbf16> to vector<16x16xbf16>
    %cst_175 = arith.constant dense<0.000000e+00> : vector<16x16xf32>
    %394 = tpu.matmul %391, %392, %cst_175 {dimension_numbers = #tpu.dot_dimension_numbers<[1], [1], [0], [0], [0, 0, 1, 0], [], []>} : vector<16x16xbf16>, vector<16x16xbf16>, vector<16x16xf32> -> vector<16x16xf32>
    %c2 = arith.constant 2 : index
    %c0_176 = arith.constant 0 : index
    %c0_177 = arith.constant 0 : index
    %395 = vector.load %arg37[%c2, %c0_176, %c0_177] : memref<4x16x16xbf16, #tpu.memory_space<vmem>>, vector<1x16x16xbf16>
    %396 = vector.shape_cast %395 : vector<1x16x16xbf16> to vector<16x16xbf16>
    %397 = arith.extf %396 : vector<16x16xbf16> to vector<16x16xf32>
    %398 = arith.addf %394, %397 : vector<16x16xf32>
    %cst_178 = arith.constant dense<0xFF800000> : vector<16xf32>
    %399 = vector.multi_reduction <maximumf>, %398, %cst_178 [1] : vector<16x16xf32> to vector<16xf32>
    %400 = vector.shape_cast %399 : vector<16xf32> to vector<16x1xf32>
    %401 = vector.broadcast %400 : vector<16x1xf32> to vector<16x16xf32>
    %402 = arith.subf %398, %401 : vector<16x16xf32>
    %403 = math.exp %402 : vector<16x16xf32>
    %cst_179 = arith.constant dense<0.000000e+00> : vector<16xf32>
    %404 = vector.multi_reduction <add>, %403, %cst_179 [1] : vector<16x16xf32> to vector<16xf32>
    %405 = vector.shape_cast %404 : vector<16xf32> to vector<16x1xf32>
    %406 = tpu.reciprocal %405 {approx = true} : vector<16x1xf32> -> vector<16x1xf32>
    %407 = vector.broadcast %406 : vector<16x1xf32> to vector<16x16xf32>
    %408 = arith.mulf %403, %407 : vector<16x16xf32>
    %409 = arith.truncf %408 : vector<16x16xf32> to vector<16x16xbf16>
    %cst_180 = arith.constant dense<0.000000e+00> : vector<16x16xf32>
    %410 = tpu.matmul %409, %393, %cst_180 {dimension_numbers = #tpu.dot_dimension_numbers<[1], [0], [0], [1], [0, 0, 1, 1], [], []>} : vector<16x16xbf16>, vector<16x16xbf16>, vector<16x16xf32> -> vector<16x16xf32>
    %411 = vector.extract_strided_slice %350 {offsets = [0, 48], sizes = [16, 16], strides = [1, 1]} : vector<16x192xbf16> to vector<16x16xbf16>
    %412 = vector.extract_strided_slice %350 {offsets = [0, 112], sizes = [16, 16], strides = [1, 1]} : vector<16x192xbf16> to vector<16x16xbf16>
    %413 = vector.extract_strided_slice %350 {offsets = [0, 176], sizes = [16, 16], strides = [1, 1]} : vector<16x192xbf16> to vector<16x16xbf16>
    %cst_181 = arith.constant dense<0.000000e+00> : vector<16x16xf32>
    %414 = tpu.matmul %411, %412, %cst_181 {dimension_numbers = #tpu.dot_dimension_numbers<[1], [1], [0], [0], [0, 0, 1, 0], [], []>} : vector<16x16xbf16>, vector<16x16xbf16>, vector<16x16xf32> -> vector<16x16xf32>
    %c3 = arith.constant 3 : index
    %c0_182 = arith.constant 0 : index
    %c0_183 = arith.constant 0 : index
    %415 = vector.load %arg37[%c3, %c0_182, %c0_183] : memref<4x16x16xbf16, #tpu.memory_space<vmem>>, vector<1x16x16xbf16>
    %416 = vector.shape_cast %415 : vector<1x16x16xbf16> to vector<16x16xbf16>
    %417 = arith.extf %416 : vector<16x16xbf16> to vector<16x16xf32>
    %418 = arith.addf %414, %417 : vector<16x16xf32>
    %cst_184 = arith.constant dense<0xFF800000> : vector<16xf32>
    %419 = vector.multi_reduction <maximumf>, %418, %cst_184 [1] : vector<16x16xf32> to vector<16xf32>
    %420 = vector.shape_cast %419 : vector<16xf32> to vector<16x1xf32>
    %421 = vector.broadcast %420 : vector<16x1xf32> to vector<16x16xf32>
    %422 = arith.subf %418, %421 : vector<16x16xf32>
    %423 = math.exp %422 : vector<16x16xf32>
    %cst_185 = arith.constant dense<0.000000e+00> : vector<16xf32>
    %424 = vector.multi_reduction <add>, %423, %cst_185 [1] : vector<16x16xf32> to vector<16xf32>
    %425 = vector.shape_cast %424 : vector<16xf32> to vector<16x1xf32>
    %426 = tpu.reciprocal %425 {approx = true} : vector<16x1xf32> -> vector<16x1xf32>
    %427 = vector.broadcast %426 : vector<16x1xf32> to vector<16x16xf32>
    %428 = arith.mulf %423, %427 : vector<16x16xf32>
    %429 = arith.truncf %428 : vector<16x16xf32> to vector<16x16xbf16>
    %cst_186 = arith.constant dense<0.000000e+00> : vector<16x16xf32>
    %430 = tpu.matmul %429, %413, %cst_186 {dimension_numbers = #tpu.dot_dimension_numbers<[1], [0], [0], [1], [0, 0, 1, 1], [], []>} : vector<16x16xbf16>, vector<16x16xbf16>, vector<16x16xf32> -> vector<16x16xf32>
    %431 = tpu.concatenate %370, %390, %410, %430 in 1 : vector<16x16xf32>, vector<16x16xf32>, vector<16x16xf32>, vector<16x16xf32> -> vector<16x64xf32>
    %c0_187 = arith.constant 0 : index
    %c0_188 = arith.constant 0 : index
    %432 = vector.load %arg42[%c0_187, %c0_188] : memref<64x64xbf16, #tpu.memory_space<vmem>>, vector<64x64xbf16>
    %433 = arith.truncf %431 : vector<16x64xf32> to vector<16x64xbf16>
    %cst_189 = arith.constant dense<0.000000e+00> : vector<16x64xf32>
    %434 = tpu.matmul %433, %432, %cst_189 {dimension_numbers = #tpu.dot_dimension_numbers<[1], [0], [0], [1], [0, 0, 1, 1], [], []>} : vector<16x64xbf16>, vector<64x64xbf16>, vector<16x64xf32> -> vector<16x64xf32>
    %c0_190 = arith.constant 0 : index
    %c0_191 = arith.constant 0 : index
    %435 = vector.load %arg43[%c0_190, %c0_191] : memref<1x64xf32, #tpu.memory_space<vmem>>, vector<1x64xf32>
    %436 = vector.broadcast %435 : vector<1x64xf32> to vector<16x64xf32>
    %437 = arith.addf %434, %436 : vector<16x64xf32>
    %438 = arith.addf %321, %437 : vector<16x64xf32>
    %c0_192 = arith.constant 0 : index
    %c0_193 = arith.constant 0 : index
    %439 = vector.load %arg44[%c0_192, %c0_193] : memref<1x64xf32, #tpu.memory_space<vmem>>, vector<1x64xf32>
    %c0_194 = arith.constant 0 : index
    %c0_195 = arith.constant 0 : index
    %440 = vector.load %arg45[%c0_194, %c0_195] : memref<1x64xf32, #tpu.memory_space<vmem>>, vector<1x64xf32>
    %cst_196 = arith.constant dense<0.000000e+00> : vector<16xf32>
    %441 = vector.multi_reduction <add>, %438, %cst_196 [1] : vector<16x64xf32> to vector<16xf32>
    %442 = vector.shape_cast %441 : vector<16xf32> to vector<16x1xf32>
    %cst_197 = arith.constant 6.400000e+01 : f32
    %443 = vector.broadcast %cst_197 : f32 to vector<16x1xf32>
    %444 = arith.divf %442, %443 : vector<16x1xf32>
    %445 = vector.broadcast %444 : vector<16x1xf32> to vector<16x64xf32>
    %446 = arith.subf %438, %445 : vector<16x64xf32>
    %447 = arith.mulf %446, %446 : vector<16x64xf32>
    %cst_198 = arith.constant dense<0.000000e+00> : vector<16xf32>
    %448 = vector.multi_reduction <add>, %447, %cst_198 [1] : vector<16x64xf32> to vector<16xf32>
    %449 = vector.shape_cast %448 : vector<16xf32> to vector<16x1xf32>
    %cst_199 = arith.constant 6.400000e+01 : f32
    %450 = vector.broadcast %cst_199 : f32 to vector<16x1xf32>
    %451 = arith.divf %449, %450 : vector<16x1xf32>
    %cst_200 = arith.constant 9.99999974E-6 : f32
    %452 = vector.broadcast %cst_200 : f32 to vector<16x1xf32>
    %453 = arith.addf %451, %452 : vector<16x1xf32>
    %454 = math.rsqrt %453 : vector<16x1xf32>
    %455 = vector.broadcast %454 : vector<16x1xf32> to vector<16x64xf32>
    %456 = arith.mulf %446, %455 : vector<16x64xf32>
    %457 = vector.broadcast %439 : vector<1x64xf32> to vector<16x64xf32>
    %458 = arith.mulf %456, %457 : vector<16x64xf32>
    %459 = vector.broadcast %440 : vector<1x64xf32> to vector<16x64xf32>
    %460 = arith.addf %458, %459 : vector<16x64xf32>
    %c0_201 = arith.constant 0 : index
    %c0_202 = arith.constant 0 : index
    %461 = vector.load %arg46[%c0_201, %c0_202] : memref<64x128xbf16, #tpu.memory_space<vmem>>, vector<64x128xbf16>
    %462 = arith.truncf %460 : vector<16x64xf32> to vector<16x64xbf16>
    %cst_203 = arith.constant dense<0.000000e+00> : vector<16x128xf32>
    %463 = tpu.matmul %462, %461, %cst_203 {dimension_numbers = #tpu.dot_dimension_numbers<[1], [0], [0], [1], [0, 0, 1, 1], [], []>} : vector<16x64xbf16>, vector<64x128xbf16>, vector<16x128xf32> -> vector<16x128xf32>
    %c0_204 = arith.constant 0 : index
    %c0_205 = arith.constant 0 : index
    %464 = vector.load %arg47[%c0_204, %c0_205] : memref<1x128xf32, #tpu.memory_space<vmem>>, vector<1x128xf32>
    %465 = vector.broadcast %464 : vector<1x128xf32> to vector<16x128xf32>
    %466 = arith.addf %463, %465 : vector<16x128xf32>
    %467 = arith.mulf %466, %466 : vector<16x128xf32>
    %468 = arith.mulf %466, %467 : vector<16x128xf32>
    %cst_206 = arith.constant 4.471500e-02 : f32
    %469 = vector.broadcast %cst_206 : f32 to vector<16x128xf32>
    %470 = arith.mulf %469, %468 : vector<16x128xf32>
    %471 = arith.addf %466, %470 : vector<16x128xf32>
    %cst_207 = arith.constant 0.797884583 : f32
    %472 = vector.broadcast %cst_207 : f32 to vector<16x128xf32>
    %473 = arith.mulf %472, %471 : vector<16x128xf32>
    %474 = math.tanh %473 : vector<16x128xf32>
    %cst_208 = arith.constant 1.000000e+00 : f32
    %475 = vector.broadcast %cst_208 : f32 to vector<16x128xf32>
    %476 = arith.addf %475, %474 : vector<16x128xf32>
    %cst_209 = arith.constant 5.000000e-01 : f32
    %477 = vector.broadcast %cst_209 : f32 to vector<16x128xf32>
    %478 = arith.mulf %477, %476 : vector<16x128xf32>
    %479 = arith.mulf %466, %478 : vector<16x128xf32>
    %c0_210 = arith.constant 0 : index
    %c0_211 = arith.constant 0 : index
    %480 = vector.load %arg48[%c0_210, %c0_211] : memref<128x64xbf16, #tpu.memory_space<vmem>>, vector<128x64xbf16>
    %481 = arith.truncf %479 : vector<16x128xf32> to vector<16x128xbf16>
    %cst_212 = arith.constant dense<0.000000e+00> : vector<16x64xf32>
    %482 = tpu.matmul %481, %480, %cst_212 {dimension_numbers = #tpu.dot_dimension_numbers<[1], [0], [0], [1], [0, 0, 1, 1], [], []>} : vector<16x128xbf16>, vector<128x64xbf16>, vector<16x64xf32> -> vector<16x64xf32>
    %c0_213 = arith.constant 0 : index
    %c0_214 = arith.constant 0 : index
    %483 = vector.load %arg49[%c0_213, %c0_214] : memref<1x64xf32, #tpu.memory_space<vmem>>, vector<1x64xf32>
    %484 = vector.broadcast %483 : vector<1x64xf32> to vector<16x64xf32>
    %485 = arith.addf %482, %484 : vector<16x64xf32>
    %486 = arith.addf %438, %485 : vector<16x64xf32>
    %c0_215 = arith.constant 0 : index
    %c0_216 = arith.constant 0 : index
    %487 = vector.load %arg51[%c0_215, %c0_216] : memref<1x64xf32, #tpu.memory_space<vmem>>, vector<1x64xf32>
    %c0_217 = arith.constant 0 : index
    %c0_218 = arith.constant 0 : index
    %488 = vector.load %arg52[%c0_217, %c0_218] : memref<1x64xf32, #tpu.memory_space<vmem>>, vector<1x64xf32>
    %cst_219 = arith.constant dense<0.000000e+00> : vector<16xf32>
    %489 = vector.multi_reduction <add>, %486, %cst_219 [1] : vector<16x64xf32> to vector<16xf32>
    %490 = vector.shape_cast %489 : vector<16xf32> to vector<16x1xf32>
    %cst_220 = arith.constant 6.400000e+01 : f32
    %491 = vector.broadcast %cst_220 : f32 to vector<16x1xf32>
    %492 = arith.divf %490, %491 : vector<16x1xf32>
    %493 = vector.broadcast %492 : vector<16x1xf32> to vector<16x64xf32>
    %494 = arith.subf %486, %493 : vector<16x64xf32>
    %495 = arith.mulf %494, %494 : vector<16x64xf32>
    %cst_221 = arith.constant dense<0.000000e+00> : vector<16xf32>
    %496 = vector.multi_reduction <add>, %495, %cst_221 [1] : vector<16x64xf32> to vector<16xf32>
    %497 = vector.shape_cast %496 : vector<16xf32> to vector<16x1xf32>
    %cst_222 = arith.constant 6.400000e+01 : f32
    %498 = vector.broadcast %cst_222 : f32 to vector<16x1xf32>
    %499 = arith.divf %497, %498 : vector<16x1xf32>
    %cst_223 = arith.constant 9.99999974E-6 : f32
    %500 = vector.broadcast %cst_223 : f32 to vector<16x1xf32>
    %501 = arith.addf %499, %500 : vector<16x1xf32>
    %502 = math.rsqrt %501 : vector<16x1xf32>
    %503 = vector.broadcast %502 : vector<16x1xf32> to vector<16x64xf32>
    %504 = arith.mulf %494, %503 : vector<16x64xf32>
    %505 = vector.broadcast %487 : vector<1x64xf32> to vector<16x64xf32>
    %506 = arith.mulf %504, %505 : vector<16x64xf32>
    %507 = vector.broadcast %488 : vector<1x64xf32> to vector<16x64xf32>
    %508 = arith.addf %506, %507 : vector<16x64xf32>
    %c0_224 = arith.constant 0 : index
    %c0_225 = arith.constant 0 : index
    %509 = vector.load %arg53[%c0_224, %c0_225] : memref<64x192xbf16, #tpu.memory_space<vmem>>, vector<64x192xbf16>
    %510 = arith.truncf %508 : vector<16x64xf32> to vector<16x64xbf16>
    %cst_226 = arith.constant dense<0.000000e+00> : vector<16x192xf32>
    %511 = tpu.matmul %510, %509, %cst_226 {dimension_numbers = #tpu.dot_dimension_numbers<[1], [0], [0], [1], [0, 0, 1, 1], [], []>} : vector<16x64xbf16>, vector<64x192xbf16>, vector<16x192xf32> -> vector<16x192xf32>
    %c0_227 = arith.constant 0 : index
    %c0_228 = arith.constant 0 : index
    %512 = vector.load %arg54[%c0_227, %c0_228] : memref<1x192xf32, #tpu.memory_space<vmem>>, vector<1x192xf32>
    %513 = vector.broadcast %512 : vector<1x192xf32> to vector<16x192xf32>
    %514 = arith.addf %511, %513 : vector<16x192xf32>
    %515 = arith.truncf %514 : vector<16x192xf32> to vector<16x192xbf16>
    %516 = vector.extract_strided_slice %515 {offsets = [0, 0], sizes = [16, 16], strides = [1, 1]} : vector<16x192xbf16> to vector<16x16xbf16>
    %517 = vector.extract_strided_slice %515 {offsets = [0, 64], sizes = [16, 16], strides = [1, 1]} : vector<16x192xbf16> to vector<16x16xbf16>
    %518 = vector.extract_strided_slice %515 {offsets = [0, 128], sizes = [16, 16], strides = [1, 1]} : vector<16x192xbf16> to vector<16x16xbf16>
    %cst_229 = arith.constant dense<0.000000e+00> : vector<16x16xf32>
    %519 = tpu.matmul %516, %517, %cst_229 {dimension_numbers = #tpu.dot_dimension_numbers<[1], [1], [0], [0], [0, 0, 1, 0], [], []>} : vector<16x16xbf16>, vector<16x16xbf16>, vector<16x16xf32> -> vector<16x16xf32>
    %c0_230 = arith.constant 0 : index
    %c0_231 = arith.constant 0 : index
    %c0_232 = arith.constant 0 : index
    %520 = vector.load %arg50[%c0_230, %c0_231, %c0_232] : memref<4x16x16xbf16, #tpu.memory_space<vmem>>, vector<1x16x16xbf16>
    %521 = vector.shape_cast %520 : vector<1x16x16xbf16> to vector<16x16xbf16>
    %522 = arith.extf %521 : vector<16x16xbf16> to vector<16x16xf32>
    %523 = arith.addf %519, %522 : vector<16x16xf32>
    %cst_233 = arith.constant dense<0xFF800000> : vector<16xf32>
    %524 = vector.multi_reduction <maximumf>, %523, %cst_233 [1] : vector<16x16xf32> to vector<16xf32>
    %525 = vector.shape_cast %524 : vector<16xf32> to vector<16x1xf32>
    %526 = vector.broadcast %525 : vector<16x1xf32> to vector<16x16xf32>
    %527 = arith.subf %523, %526 : vector<16x16xf32>
    %528 = math.exp %527 : vector<16x16xf32>
    %cst_234 = arith.constant dense<0.000000e+00> : vector<16xf32>
    %529 = vector.multi_reduction <add>, %528, %cst_234 [1] : vector<16x16xf32> to vector<16xf32>
    %530 = vector.shape_cast %529 : vector<16xf32> to vector<16x1xf32>
    %531 = tpu.reciprocal %530 {approx = true} : vector<16x1xf32> -> vector<16x1xf32>
    %532 = vector.broadcast %531 : vector<16x1xf32> to vector<16x16xf32>
    %533 = arith.mulf %528, %532 : vector<16x16xf32>
    %534 = arith.truncf %533 : vector<16x16xf32> to vector<16x16xbf16>
    %cst_235 = arith.constant dense<0.000000e+00> : vector<16x16xf32>
    %535 = tpu.matmul %534, %518, %cst_235 {dimension_numbers = #tpu.dot_dimension_numbers<[1], [0], [0], [1], [0, 0, 1, 1], [], []>} : vector<16x16xbf16>, vector<16x16xbf16>, vector<16x16xf32> -> vector<16x16xf32>
    %536 = vector.extract_strided_slice %515 {offsets = [0, 16], sizes = [16, 16], strides = [1, 1]} : vector<16x192xbf16> to vector<16x16xbf16>
    %537 = vector.extract_strided_slice %515 {offsets = [0, 80], sizes = [16, 16], strides = [1, 1]} : vector<16x192xbf16> to vector<16x16xbf16>
    %538 = vector.extract_strided_slice %515 {offsets = [0, 144], sizes = [16, 16], strides = [1, 1]} : vector<16x192xbf16> to vector<16x16xbf16>
    %cst_236 = arith.constant dense<0.000000e+00> : vector<16x16xf32>
    %539 = tpu.matmul %536, %537, %cst_236 {dimension_numbers = #tpu.dot_dimension_numbers<[1], [1], [0], [0], [0, 0, 1, 0], [], []>} : vector<16x16xbf16>, vector<16x16xbf16>, vector<16x16xf32> -> vector<16x16xf32>
    %c1_237 = arith.constant 1 : index
    %c0_238 = arith.constant 0 : index
    %c0_239 = arith.constant 0 : index
    %540 = vector.load %arg50[%c1_237, %c0_238, %c0_239] : memref<4x16x16xbf16, #tpu.memory_space<vmem>>, vector<1x16x16xbf16>
    %541 = vector.shape_cast %540 : vector<1x16x16xbf16> to vector<16x16xbf16>
    %542 = arith.extf %541 : vector<16x16xbf16> to vector<16x16xf32>
    %543 = arith.addf %539, %542 : vector<16x16xf32>
    %cst_240 = arith.constant dense<0xFF800000> : vector<16xf32>
    %544 = vector.multi_reduction <maximumf>, %543, %cst_240 [1] : vector<16x16xf32> to vector<16xf32>
    %545 = vector.shape_cast %544 : vector<16xf32> to vector<16x1xf32>
    %546 = vector.broadcast %545 : vector<16x1xf32> to vector<16x16xf32>
    %547 = arith.subf %543, %546 : vector<16x16xf32>
    %548 = math.exp %547 : vector<16x16xf32>
    %cst_241 = arith.constant dense<0.000000e+00> : vector<16xf32>
    %549 = vector.multi_reduction <add>, %548, %cst_241 [1] : vector<16x16xf32> to vector<16xf32>
    %550 = vector.shape_cast %549 : vector<16xf32> to vector<16x1xf32>
    %551 = tpu.reciprocal %550 {approx = true} : vector<16x1xf32> -> vector<16x1xf32>
    %552 = vector.broadcast %551 : vector<16x1xf32> to vector<16x16xf32>
    %553 = arith.mulf %548, %552 : vector<16x16xf32>
    %554 = arith.truncf %553 : vector<16x16xf32> to vector<16x16xbf16>
    %cst_242 = arith.constant dense<0.000000e+00> : vector<16x16xf32>
    %555 = tpu.matmul %554, %538, %cst_242 {dimension_numbers = #tpu.dot_dimension_numbers<[1], [0], [0], [1], [0, 0, 1, 1], [], []>} : vector<16x16xbf16>, vector<16x16xbf16>, vector<16x16xf32> -> vector<16x16xf32>
    %556 = vector.extract_strided_slice %515 {offsets = [0, 32], sizes = [16, 16], strides = [1, 1]} : vector<16x192xbf16> to vector<16x16xbf16>
    %557 = vector.extract_strided_slice %515 {offsets = [0, 96], sizes = [16, 16], strides = [1, 1]} : vector<16x192xbf16> to vector<16x16xbf16>
    %558 = vector.extract_strided_slice %515 {offsets = [0, 160], sizes = [16, 16], strides = [1, 1]} : vector<16x192xbf16> to vector<16x16xbf16>
    %cst_243 = arith.constant dense<0.000000e+00> : vector<16x16xf32>
    %559 = tpu.matmul %556, %557, %cst_243 {dimension_numbers = #tpu.dot_dimension_numbers<[1], [1], [0], [0], [0, 0, 1, 0], [], []>} : vector<16x16xbf16>, vector<16x16xbf16>, vector<16x16xf32> -> vector<16x16xf32>
    %c2_244 = arith.constant 2 : index
    %c0_245 = arith.constant 0 : index
    %c0_246 = arith.constant 0 : index
    %560 = vector.load %arg50[%c2_244, %c0_245, %c0_246] : memref<4x16x16xbf16, #tpu.memory_space<vmem>>, vector<1x16x16xbf16>
    %561 = vector.shape_cast %560 : vector<1x16x16xbf16> to vector<16x16xbf16>
    %562 = arith.extf %561 : vector<16x16xbf16> to vector<16x16xf32>
    %563 = arith.addf %559, %562 : vector<16x16xf32>
    %cst_247 = arith.constant dense<0xFF800000> : vector<16xf32>
    %564 = vector.multi_reduction <maximumf>, %563, %cst_247 [1] : vector<16x16xf32> to vector<16xf32>
    %565 = vector.shape_cast %564 : vector<16xf32> to vector<16x1xf32>
    %566 = vector.broadcast %565 : vector<16x1xf32> to vector<16x16xf32>
    %567 = arith.subf %563, %566 : vector<16x16xf32>
    %568 = math.exp %567 : vector<16x16xf32>
    %cst_248 = arith.constant dense<0.000000e+00> : vector<16xf32>
    %569 = vector.multi_reduction <add>, %568, %cst_248 [1] : vector<16x16xf32> to vector<16xf32>
    %570 = vector.shape_cast %569 : vector<16xf32> to vector<16x1xf32>
    %571 = tpu.reciprocal %570 {approx = true} : vector<16x1xf32> -> vector<16x1xf32>
    %572 = vector.broadcast %571 : vector<16x1xf32> to vector<16x16xf32>
    %573 = arith.mulf %568, %572 : vector<16x16xf32>
    %574 = arith.truncf %573 : vector<16x16xf32> to vector<16x16xbf16>
    %cst_249 = arith.constant dense<0.000000e+00> : vector<16x16xf32>
    %575 = tpu.matmul %574, %558, %cst_249 {dimension_numbers = #tpu.dot_dimension_numbers<[1], [0], [0], [1], [0, 0, 1, 1], [], []>} : vector<16x16xbf16>, vector<16x16xbf16>, vector<16x16xf32> -> vector<16x16xf32>
    %576 = vector.extract_strided_slice %515 {offsets = [0, 48], sizes = [16, 16], strides = [1, 1]} : vector<16x192xbf16> to vector<16x16xbf16>
    %577 = vector.extract_strided_slice %515 {offsets = [0, 112], sizes = [16, 16], strides = [1, 1]} : vector<16x192xbf16> to vector<16x16xbf16>
    %578 = vector.extract_strided_slice %515 {offsets = [0, 176], sizes = [16, 16], strides = [1, 1]} : vector<16x192xbf16> to vector<16x16xbf16>
    %cst_250 = arith.constant dense<0.000000e+00> : vector<16x16xf32>
    %579 = tpu.matmul %576, %577, %cst_250 {dimension_numbers = #tpu.dot_dimension_numbers<[1], [1], [0], [0], [0, 0, 1, 0], [], []>} : vector<16x16xbf16>, vector<16x16xbf16>, vector<16x16xf32> -> vector<16x16xf32>
    %c3_251 = arith.constant 3 : index
    %c0_252 = arith.constant 0 : index
    %c0_253 = arith.constant 0 : index
    %580 = vector.load %arg50[%c3_251, %c0_252, %c0_253] : memref<4x16x16xbf16, #tpu.memory_space<vmem>>, vector<1x16x16xbf16>
    %581 = vector.shape_cast %580 : vector<1x16x16xbf16> to vector<16x16xbf16>
    %582 = arith.extf %581 : vector<16x16xbf16> to vector<16x16xf32>
    %583 = arith.addf %579, %582 : vector<16x16xf32>
    %cst_254 = arith.constant dense<0xFF800000> : vector<16xf32>
    %584 = vector.multi_reduction <maximumf>, %583, %cst_254 [1] : vector<16x16xf32> to vector<16xf32>
    %585 = vector.shape_cast %584 : vector<16xf32> to vector<16x1xf32>
    %586 = vector.broadcast %585 : vector<16x1xf32> to vector<16x16xf32>
    %587 = arith.subf %583, %586 : vector<16x16xf32>
    %588 = math.exp %587 : vector<16x16xf32>
    %cst_255 = arith.constant dense<0.000000e+00> : vector<16xf32>
    %589 = vector.multi_reduction <add>, %588, %cst_255 [1] : vector<16x16xf32> to vector<16xf32>
    %590 = vector.shape_cast %589 : vector<16xf32> to vector<16x1xf32>
    %591 = tpu.reciprocal %590 {approx = true} : vector<16x1xf32> -> vector<16x1xf32>
    %592 = vector.broadcast %591 : vector<16x1xf32> to vector<16x16xf32>
    %593 = arith.mulf %588, %592 : vector<16x16xf32>
    %594 = arith.truncf %593 : vector<16x16xf32> to vector<16x16xbf16>
    %cst_256 = arith.constant dense<0.000000e+00> : vector<16x16xf32>
    %595 = tpu.matmul %594, %578, %cst_256 {dimension_numbers = #tpu.dot_dimension_numbers<[1], [0], [0], [1], [0, 0, 1, 1], [], []>} : vector<16x16xbf16>, vector<16x16xbf16>, vector<16x16xf32> -> vector<16x16xf32>
    %596 = tpu.concatenate %535, %555, %575, %595 in 1 : vector<16x16xf32>, vector<16x16xf32>, vector<16x16xf32>, vector<16x16xf32> -> vector<16x64xf32>
    %c0_257 = arith.constant 0 : index
    %c0_258 = arith.constant 0 : index
    %597 = vector.load %arg55[%c0_257, %c0_258] : memref<64x64xbf16, #tpu.memory_space<vmem>>, vector<64x64xbf16>
    %598 = arith.truncf %596 : vector<16x64xf32> to vector<16x64xbf16>
    %cst_259 = arith.constant dense<0.000000e+00> : vector<16x64xf32>
    %599 = tpu.matmul %598, %597, %cst_259 {dimension_numbers = #tpu.dot_dimension_numbers<[1], [0], [0], [1], [0, 0, 1, 1], [], []>} : vector<16x64xbf16>, vector<64x64xbf16>, vector<16x64xf32> -> vector<16x64xf32>
    %c0_260 = arith.constant 0 : index
    %c0_261 = arith.constant 0 : index
    %600 = vector.load %arg56[%c0_260, %c0_261] : memref<1x64xf32, #tpu.memory_space<vmem>>, vector<1x64xf32>
    %601 = vector.broadcast %600 : vector<1x64xf32> to vector<16x64xf32>
    %602 = arith.addf %599, %601 : vector<16x64xf32>
    %603 = arith.addf %486, %602 : vector<16x64xf32>
    %c0_262 = arith.constant 0 : index
    %c0_263 = arith.constant 0 : index
    %604 = vector.load %arg57[%c0_262, %c0_263] : memref<1x64xf32, #tpu.memory_space<vmem>>, vector<1x64xf32>
    %c0_264 = arith.constant 0 : index
    %c0_265 = arith.constant 0 : index
    %605 = vector.load %arg58[%c0_264, %c0_265] : memref<1x64xf32, #tpu.memory_space<vmem>>, vector<1x64xf32>
    %cst_266 = arith.constant dense<0.000000e+00> : vector<16xf32>
    %606 = vector.multi_reduction <add>, %603, %cst_266 [1] : vector<16x64xf32> to vector<16xf32>
    %607 = vector.shape_cast %606 : vector<16xf32> to vector<16x1xf32>
    %cst_267 = arith.constant 6.400000e+01 : f32
    %608 = vector.broadcast %cst_267 : f32 to vector<16x1xf32>
    %609 = arith.divf %607, %608 : vector<16x1xf32>
    %610 = vector.broadcast %609 : vector<16x1xf32> to vector<16x64xf32>
    %611 = arith.subf %603, %610 : vector<16x64xf32>
    %612 = arith.mulf %611, %611 : vector<16x64xf32>
    %cst_268 = arith.constant dense<0.000000e+00> : vector<16xf32>
    %613 = vector.multi_reduction <add>, %612, %cst_268 [1] : vector<16x64xf32> to vector<16xf32>
    %614 = vector.shape_cast %613 : vector<16xf32> to vector<16x1xf32>
    %cst_269 = arith.constant 6.400000e+01 : f32
    %615 = vector.broadcast %cst_269 : f32 to vector<16x1xf32>
    %616 = arith.divf %614, %615 : vector<16x1xf32>
    %cst_270 = arith.constant 9.99999974E-6 : f32
    %617 = vector.broadcast %cst_270 : f32 to vector<16x1xf32>
    %618 = arith.addf %616, %617 : vector<16x1xf32>
    %619 = math.rsqrt %618 : vector<16x1xf32>
    %620 = vector.broadcast %619 : vector<16x1xf32> to vector<16x64xf32>
    %621 = arith.mulf %611, %620 : vector<16x64xf32>
    %622 = vector.broadcast %604 : vector<1x64xf32> to vector<16x64xf32>
    %623 = arith.mulf %621, %622 : vector<16x64xf32>
    %624 = vector.broadcast %605 : vector<1x64xf32> to vector<16x64xf32>
    %625 = arith.addf %623, %624 : vector<16x64xf32>
    %c0_271 = arith.constant 0 : index
    %c0_272 = arith.constant 0 : index
    %626 = vector.load %arg59[%c0_271, %c0_272] : memref<64x128xbf16, #tpu.memory_space<vmem>>, vector<64x128xbf16>
    %627 = arith.truncf %625 : vector<16x64xf32> to vector<16x64xbf16>
    %cst_273 = arith.constant dense<0.000000e+00> : vector<16x128xf32>
    %628 = tpu.matmul %627, %626, %cst_273 {dimension_numbers = #tpu.dot_dimension_numbers<[1], [0], [0], [1], [0, 0, 1, 1], [], []>} : vector<16x64xbf16>, vector<64x128xbf16>, vector<16x128xf32> -> vector<16x128xf32>
    %c0_274 = arith.constant 0 : index
    %c0_275 = arith.constant 0 : index
    %629 = vector.load %arg60[%c0_274, %c0_275] : memref<1x128xf32, #tpu.memory_space<vmem>>, vector<1x128xf32>
    %630 = vector.broadcast %629 : vector<1x128xf32> to vector<16x128xf32>
    %631 = arith.addf %628, %630 : vector<16x128xf32>
    %632 = arith.mulf %631, %631 : vector<16x128xf32>
    %633 = arith.mulf %631, %632 : vector<16x128xf32>
    %cst_276 = arith.constant 4.471500e-02 : f32
    %634 = vector.broadcast %cst_276 : f32 to vector<16x128xf32>
    %635 = arith.mulf %634, %633 : vector<16x128xf32>
    %636 = arith.addf %631, %635 : vector<16x128xf32>
    %cst_277 = arith.constant 0.797884583 : f32
    %637 = vector.broadcast %cst_277 : f32 to vector<16x128xf32>
    %638 = arith.mulf %637, %636 : vector<16x128xf32>
    %639 = math.tanh %638 : vector<16x128xf32>
    %cst_278 = arith.constant 1.000000e+00 : f32
    %640 = vector.broadcast %cst_278 : f32 to vector<16x128xf32>
    %641 = arith.addf %640, %639 : vector<16x128xf32>
    %cst_279 = arith.constant 5.000000e-01 : f32
    %642 = vector.broadcast %cst_279 : f32 to vector<16x128xf32>
    %643 = arith.mulf %642, %641 : vector<16x128xf32>
    %644 = arith.mulf %631, %643 : vector<16x128xf32>
    %c0_280 = arith.constant 0 : index
    %c0_281 = arith.constant 0 : index
    %645 = vector.load %arg61[%c0_280, %c0_281] : memref<128x64xbf16, #tpu.memory_space<vmem>>, vector<128x64xbf16>
    %646 = arith.truncf %644 : vector<16x128xf32> to vector<16x128xbf16>
    %cst_282 = arith.constant dense<0.000000e+00> : vector<16x64xf32>
    %647 = tpu.matmul %646, %645, %cst_282 {dimension_numbers = #tpu.dot_dimension_numbers<[1], [0], [0], [1], [0, 0, 1, 1], [], []>} : vector<16x128xbf16>, vector<128x64xbf16>, vector<16x64xf32> -> vector<16x64xf32>
    %c0_283 = arith.constant 0 : index
    %c0_284 = arith.constant 0 : index
    %648 = vector.load %arg62[%c0_283, %c0_284] : memref<1x64xf32, #tpu.memory_space<vmem>>, vector<1x64xf32>
    %649 = vector.broadcast %648 : vector<1x64xf32> to vector<16x64xf32>
    %650 = arith.addf %647, %649 : vector<16x64xf32>
    %651 = arith.addf %603, %650 : vector<16x64xf32>
    %c0_285 = arith.constant 0 : index
    %c0_286 = arith.constant 0 : index
    %652 = vector.load %arg63[%c0_285, %c0_286] : memref<1x64xf32, #tpu.memory_space<vmem>>, vector<1x64xf32>
    %c0_287 = arith.constant 0 : index
    %c0_288 = arith.constant 0 : index
    %653 = vector.load %arg64[%c0_287, %c0_288] : memref<1x64xf32, #tpu.memory_space<vmem>>, vector<1x64xf32>
    %cst_289 = arith.constant dense<0.000000e+00> : vector<16xf32>
    %654 = vector.multi_reduction <add>, %651, %cst_289 [1] : vector<16x64xf32> to vector<16xf32>
    %655 = vector.shape_cast %654 : vector<16xf32> to vector<16x1xf32>
    %cst_290 = arith.constant 6.400000e+01 : f32
    %656 = vector.broadcast %cst_290 : f32 to vector<16x1xf32>
    %657 = arith.divf %655, %656 : vector<16x1xf32>
    %658 = vector.broadcast %657 : vector<16x1xf32> to vector<16x64xf32>
    %659 = arith.subf %651, %658 : vector<16x64xf32>
    %660 = arith.mulf %659, %659 : vector<16x64xf32>
    %cst_291 = arith.constant dense<0.000000e+00> : vector<16xf32>
    %661 = vector.multi_reduction <add>, %660, %cst_291 [1] : vector<16x64xf32> to vector<16xf32>
    %662 = vector.shape_cast %661 : vector<16xf32> to vector<16x1xf32>
    %cst_292 = arith.constant 6.400000e+01 : f32
    %663 = vector.broadcast %cst_292 : f32 to vector<16x1xf32>
    %664 = arith.divf %662, %663 : vector<16x1xf32>
    %cst_293 = arith.constant 9.99999974E-6 : f32
    %665 = vector.broadcast %cst_293 : f32 to vector<16x1xf32>
    %666 = arith.addf %664, %665 : vector<16x1xf32>
    %667 = math.rsqrt %666 : vector<16x1xf32>
    %668 = vector.broadcast %667 : vector<16x1xf32> to vector<16x64xf32>
    %669 = arith.mulf %659, %668 : vector<16x64xf32>
    %670 = vector.broadcast %652 : vector<1x64xf32> to vector<16x64xf32>
    %671 = arith.mulf %669, %670 : vector<16x64xf32>
    %672 = vector.broadcast %653 : vector<1x64xf32> to vector<16x64xf32>
    %673 = arith.addf %671, %672 : vector<16x64xf32>
    %cst_294 = arith.constant dense<0.000000e+00> : vector<64xf32>
    %674 = vector.multi_reduction <add>, %673, %cst_294 [0] : vector<16x64xf32> to vector<64xf32>
    %675 = vector.shape_cast %674 : vector<64xf32> to vector<1x64xf32>
    %cst_295 = arith.constant 1.600000e+01 : f32
    %676 = vector.broadcast %cst_295 : f32 to vector<1x64xf32>
    %677 = arith.divf %675, %676 : vector<1x64xf32>
    %c0_296 = arith.constant 0 : index
    %c0_297 = arith.constant 0 : index
    %678 = vector.load %arg65[%c0_296, %c0_297] : memref<64x1xbf16, #tpu.memory_space<vmem>>, vector<64x1xbf16>
    %679 = arith.truncf %677 : vector<1x64xf32> to vector<1x64xbf16>
    %cst_298 = arith.constant dense<0.000000e+00> : vector<1x1xf32>
    %680 = tpu.matmul %679, %678, %cst_298 {dimension_numbers = #tpu.dot_dimension_numbers<[1], [0], [0], [1], [0, 0, 1, 1], [], []>} : vector<1x64xbf16>, vector<64x1xbf16>, vector<1x1xf32> -> vector<1x1xf32>
    %c0_299 = arith.constant 0 : index
    %c0_300 = arith.constant 0 : index
    %681 = vector.load %arg66[%c0_299, %c0_300] : memref<1x1xf32, #tpu.memory_space<vmem>>, vector<1x1xf32>
    %682 = arith.addf %680, %681 : vector<1x1xf32>
    %c0_301 = arith.constant 0 : index
    %c0_302 = arith.constant 0 : index
    %c0_303 = arith.constant 0 : index
    %683 = vector.load %arg67[%c0_301, %c0_302, %c0_303] : memref<1x1x1xf32, #tpu.memory_space<vmem>>, vector<1x1x1xf32>
    %684 = vector.shape_cast %683 : vector<1x1x1xf32> to vector<1x1xf32>
    %685 = vector.shape_cast %682 : vector<1x1xf32> to vector<1x1x1xf32>
    tpu.vector_store %arg67[%c0_301, %c0_302, %c0_303], %685 {strides = array<i32>} : memref<1x1x1xf32, #tpu.memory_space<vmem>>, vector<1x1x1xf32>,
    return
  }
  func.func @transform_0(%arg0: i32) -> (i32, i32, i32) {
    %c0_i32 = arith.constant 0 : i32
    %c0_i32_0 = arith.constant 0 : i32
    %c0_i32_1 = arith.constant 0 : i32
    return %arg0, %c0_i32, %c0_i32_0 : i32, i32, i32
  }
  func.func @transform_1(%arg0: i32) -> (i32, i32) {
    %c0_i32 = arith.constant 0 : i32
    %c0_i32_0 = arith.constant 0 : i32
    %c0_i32_1 = arith.constant 0 : i32
    return %c0_i32, %c0_i32_0 : i32, i32
  }
  func.func @transform_2(%arg0: i32) -> (i32, i32) {
    %c0_i32 = arith.constant 0 : i32
    %c0_i32_0 = arith.constant 0 : i32
    %c0_i32_1 = arith.constant 0 : i32
    return %c0_i32, %c0_i32_0 : i32, i32
  }
  func.func @transform_3(%arg0: i32) -> (i32, i32) {
    %c0_i32 = arith.constant 0 : i32
    %c0_i32_0 = arith.constant 0 : i32
    %c0_i32_1 = arith.constant 0 : i32
    return %c0_i32, %c0_i32_0 : i32, i32
  }
  func.func @transform_4(%arg0: i32) -> (i32, i32) {
    %c0_i32 = arith.constant 0 : i32
    %c0_i32_0 = arith.constant 0 : i32
    %c0_i32_1 = arith.constant 0 : i32
    return %c0_i32, %c0_i32_0 : i32, i32
  }
  func.func @transform_5(%arg0: i32) -> (i32, i32) {
    %c0_i32 = arith.constant 0 : i32
    %c0_i32_0 = arith.constant 0 : i32
    %c0_i32_1 = arith.constant 0 : i32
    return %c0_i32, %c0_i32_0 : i32, i32
  }
  func.func @transform_6(%arg0: i32) -> (i32, i32, i32) {
    %c0_i32 = arith.constant 0 : i32
    %c0_i32_0 = arith.constant 0 : i32
    %c0_i32_1 = arith.constant 0 : i32
    %c0_i32_2 = arith.constant 0 : i32
    return %c0_i32, %c0_i32_0, %c0_i32_1 : i32, i32, i32
  }
  func.func @transform_7(%arg0: i32) -> (i32, i32) {
    %c0_i32 = arith.constant 0 : i32
    %c0_i32_0 = arith.constant 0 : i32
    %c0_i32_1 = arith.constant 0 : i32
    return %c0_i32, %c0_i32_0 : i32, i32
  }
  func.func @transform_8(%arg0: i32) -> (i32, i32) {
    %c0_i32 = arith.constant 0 : i32
    %c0_i32_0 = arith.constant 0 : i32
    %c0_i32_1 = arith.constant 0 : i32
    return %c0_i32, %c0_i32_0 : i32, i32
  }
  func.func @transform_9(%arg0: i32) -> (i32, i32) {
    %c0_i32 = arith.constant 0 : i32
    %c0_i32_0 = arith.constant 0 : i32
    %c0_i32_1 = arith.constant 0 : i32
    return %c0_i32, %c0_i32_0 : i32, i32
  }
  func.func @transform_10(%arg0: i32) -> (i32, i32) {
    %c0_i32 = arith.constant 0 : i32
    %c0_i32_0 = arith.constant 0 : i32
    %c0_i32_1 = arith.constant 0 : i32
    return %c0_i32, %c0_i32_0 : i32, i32
  }
  func.func @transform_11(%arg0: i32) -> (i32, i32) {
    %c0_i32 = arith.constant 0 : i32
    %c0_i32_0 = arith.constant 0 : i32
    %c0_i32_1 = arith.constant 0 : i32
    return %c0_i32, %c0_i32_0 : i32, i32
  }
  func.func @transform_12(%arg0: i32) -> (i32, i32) {
    %c0_i32 = arith.constant 0 : i32
    %c0_i32_0 = arith.constant 0 : i32
    %c0_i32_1 = arith.constant 0 : i32
    return %c0_i32, %c0_i32_0 : i32, i32
  }
  func.func @transform_13(%arg0: i32) -> (i32, i32) {
    %c0_i32 = arith.constant 0 : i32
    %c0_i32_0 = arith.constant 0 : i32
    %c0_i32_1 = arith.constant 0 : i32
    return %c0_i32, %c0_i32_0 : i32, i32
  }
  func.func @transform_14(%arg0: i32) -> (i32, i32) {
    %c0_i32 = arith.constant 0 : i32
    %c0_i32_0 = arith.constant 0 : i32
    %c0_i32_1 = arith.constant 0 : i32
    return %c0_i32, %c0_i32_0 : i32, i32
  }
  func.func @transform_15(%arg0: i32) -> (i32, i32) {
    %c0_i32 = arith.constant 0 : i32
    %c0_i32_0 = arith.constant 0 : i32
    %c0_i32_1 = arith.constant 0 : i32
    return %c0_i32, %c0_i32_0 : i32, i32
  }
  func.func @transform_16(%arg0: i32) -> (i32, i32) {
    %c0_i32 = arith.constant 0 : i32
    %c0_i32_0 = arith.constant 0 : i32
    %c0_i32_1 = arith.constant 0 : i32
    return %c0_i32, %c0_i32_0 : i32, i32
  }
  func.func @transform_17(%arg0: i32) -> (i32, i32) {
    %c0_i32 = arith.constant 0 : i32
    %c0_i32_0 = arith.constant 0 : i32
    %c0_i32_1 = arith.constant 0 : i32
    return %c0_i32, %c0_i32_0 : i32, i32
  }
  func.func @transform_18(%arg0: i32) -> (i32, i32) {
    %c0_i32 = arith.constant 0 : i32
    %c0_i32_0 = arith.constant 0 : i32
    %c0_i32_1 = arith.constant 0 : i32
    return %c0_i32, %c0_i32_0 : i32, i32
  }
  func.func @transform_19(%arg0: i32) -> (i32, i32, i32) {
    %c0_i32 = arith.constant 0 : i32
    %c0_i32_0 = arith.constant 0 : i32
    %c0_i32_1 = arith.constant 0 : i32
    %c0_i32_2 = arith.constant 0 : i32
    return %c0_i32, %c0_i32_0, %c0_i32_1 : i32, i32, i32
  }
  func.func @transform_20(%arg0: i32) -> (i32, i32) {
    %c0_i32 = arith.constant 0 : i32
    %c0_i32_0 = arith.constant 0 : i32
    %c0_i32_1 = arith.constant 0 : i32
    return %c0_i32, %c0_i32_0 : i32, i32
  }
  func.func @transform_21(%arg0: i32) -> (i32, i32) {
    %c0_i32 = arith.constant 0 : i32
    %c0_i32_0 = arith.constant 0 : i32
    %c0_i32_1 = arith.constant 0 : i32
    return %c0_i32, %c0_i32_0 : i32, i32
  }
  func.func @transform_22(%arg0: i32) -> (i32, i32) {
    %c0_i32 = arith.constant 0 : i32
    %c0_i32_0 = arith.constant 0 : i32
    %c0_i32_1 = arith.constant 0 : i32
    return %c0_i32, %c0_i32_0 : i32, i32
  }
  func.func @transform_23(%arg0: i32) -> (i32, i32) {
    %c0_i32 = arith.constant 0 : i32
    %c0_i32_0 = arith.constant 0 : i32
    %c0_i32_1 = arith.constant 0 : i32
    return %c0_i32, %c0_i32_0 : i32, i32
  }
  func.func @transform_24(%arg0: i32) -> (i32, i32) {
    %c0_i32 = arith.constant 0 : i32
    %c0_i32_0 = arith.constant 0 : i32
    %c0_i32_1 = arith.constant 0 : i32
    return %c0_i32, %c0_i32_0 : i32, i32
  }
  func.func @transform_25(%arg0: i32) -> (i32, i32) {
    %c0_i32 = arith.constant 0 : i32
    %c0_i32_0 = arith.constant 0 : i32
    %c0_i32_1 = arith.constant 0 : i32
    return %c0_i32, %c0_i32_0 : i32, i32
  }
  func.func @transform_26(%arg0: i32) -> (i32, i32) {
    %c0_i32 = arith.constant 0 : i32
    %c0_i32_0 = arith.constant 0 : i32
    %c0_i32_1 = arith.constant 0 : i32
    return %c0_i32, %c0_i32_0 : i32, i32
  }
  func.func @transform_27(%arg0: i32) -> (i32, i32) {
    %c0_i32 = arith.constant 0 : i32
    %c0_i32_0 = arith.constant 0 : i32
    %c0_i32_1 = arith.constant 0 : i32
    return %c0_i32, %c0_i32_0 : i32, i32
  }
  func.func @transform_28(%arg0: i32) -> (i32, i32) {
    %c0_i32 = arith.constant 0 : i32
    %c0_i32_0 = arith.constant 0 : i32
    %c0_i32_1 = arith.constant 0 : i32
    return %c0_i32, %c0_i32_0 : i32, i32
  }
  func.func @transform_29(%arg0: i32) -> (i32, i32) {
    %c0_i32 = arith.constant 0 : i32
    %c0_i32_0 = arith.constant 0 : i32
    %c0_i32_1 = arith.constant 0 : i32
    return %c0_i32, %c0_i32_0 : i32, i32
  }
  func.func @transform_30(%arg0: i32) -> (i32, i32) {
    %c0_i32 = arith.constant 0 : i32
    %c0_i32_0 = arith.constant 0 : i32
    %c0_i32_1 = arith.constant 0 : i32
    return %c0_i32, %c0_i32_0 : i32, i32
  }
  func.func @transform_31(%arg0: i32) -> (i32, i32) {
    %c0_i32 = arith.constant 0 : i32
    %c0_i32_0 = arith.constant 0 : i32
    %c0_i32_1 = arith.constant 0 : i32
    return %c0_i32, %c0_i32_0 : i32, i32
  }
  func.func @transform_32(%arg0: i32) -> (i32, i32, i32) {
    %c0_i32 = arith.constant 0 : i32
    %c0_i32_0 = arith.constant 0 : i32
    %c0_i32_1 = arith.constant 0 : i32
    %c0_i32_2 = arith.constant 0 : i32
    return %c0_i32, %c0_i32_0, %c0_i32_1 : i32, i32, i32
  }
  func.func @transform_33(%arg0: i32) -> (i32, i32) {
    %c0_i32 = arith.constant 0 : i32
    %c0_i32_0 = arith.constant 0 : i32
    %c0_i32_1 = arith.constant 0 : i32
    return %c0_i32, %c0_i32_0 : i32, i32
  }
  func.func @transform_34(%arg0: i32) -> (i32, i32) {
    %c0_i32 = arith.constant 0 : i32
    %c0_i32_0 = arith.constant 0 : i32
    %c0_i32_1 = arith.constant 0 : i32
    return %c0_i32, %c0_i32_0 : i32, i32
  }
  func.func @transform_35(%arg0: i32) -> (i32, i32) {
    %c0_i32 = arith.constant 0 : i32
    %c0_i32_0 = arith.constant 0 : i32
    %c0_i32_1 = arith.constant 0 : i32
    return %c0_i32, %c0_i32_0 : i32, i32
  }
  func.func @transform_36(%arg0: i32) -> (i32, i32, i32) {
    %c0_i32 = arith.constant 0 : i32
    %c0_i32_0 = arith.constant 0 : i32
    %c0_i32_1 = arith.constant 0 : i32
    %c0_i32_2 = arith.constant 0 : i32
    return %c0_i32, %c0_i32_0, %c0_i32_1 : i32, i32, i32
  }
  func.func @transform_37(%arg0: i32) -> (i32, i32) {
    %c0_i32 = arith.constant 0 : i32
    %c0_i32_0 = arith.constant 0 : i32
    %c0_i32_1 = arith.constant 0 : i32
    return %c0_i32, %c0_i32_0 : i32, i32
  }
  func.func @transform_38(%arg0: i32) -> (i32, i32) {
    %c0_i32 = arith.constant 0 : i32
    %c0_i32_0 = arith.constant 0 : i32
    %c0_i32_1 = arith.constant 0 : i32
    return %c0_i32, %c0_i32_0 : i32, i32
  }
  func.func @transform_39(%arg0: i32) -> (i32, i32) {
    %c0_i32 = arith.constant 0 : i32
    %c0_i32_0 = arith.constant 0 : i32
    %c0_i32_1 = arith.constant 0 : i32
    return %c0_i32, %c0_i32_0 : i32, i32
  }
  func.func @transform_40(%arg0: i32) -> (i32, i32) {
    %c0_i32 = arith.constant 0 : i32
    %c0_i32_0 = arith.constant 0 : i32
    %c0_i32_1 = arith.constant 0 : i32
    return %c0_i32, %c0_i32_0 : i32, i32
  }
  func.func @transform_41(%arg0: i32) -> (i32, i32) {
    %c0_i32 = arith.constant 0 : i32
    %c0_i32_0 = arith.constant 0 : i32
    %c0_i32_1 = arith.constant 0 : i32
    return %c0_i32, %c0_i32_0 : i32, i32
  }
  func.func @transform_42(%arg0: i32) -> (i32, i32) {
    %c0_i32 = arith.constant 0 : i32
    %c0_i32_0 = arith.constant 0 : i32
    %c0_i32_1 = arith.constant 0 : i32
    return %c0_i32, %c0_i32_0 : i32, i32
  }
  func.func @transform_43(%arg0: i32) -> (i32, i32) {
    %c0_i32 = arith.constant 0 : i32
    %c0_i32_0 = arith.constant 0 : i32
    %c0_i32_1 = arith.constant 0 : i32
    return %c0_i32, %c0_i32_0 : i32, i32
  }
  func.func @transform_44(%arg0: i32) -> (i32, i32) {
    %c0_i32 = arith.constant 0 : i32
    %c0_i32_0 = arith.constant 0 : i32
    %c0_i32_1 = arith.constant 0 : i32
    return %c0_i32, %c0_i32_0 : i32, i32
  }
  func.func @transform_45(%arg0: i32) -> (i32, i32) {
    %c0_i32 = arith.constant 0 : i32
    %c0_i32_0 = arith.constant 0 : i32
    %c0_i32_1 = arith.constant 0 : i32
    return %c0_i32, %c0_i32_0 : i32, i32
  }
  func.func @transform_46(%arg0: i32) -> (i32, i32) {
    %c0_i32 = arith.constant 0 : i32
    %c0_i32_0 = arith.constant 0 : i32
    %c0_i32_1 = arith.constant 0 : i32
    return %c0_i32, %c0_i32_0 : i32, i32
  }
  func.func @transform_47(%arg0: i32) -> (i32, i32) {
    %c0_i32 = arith.constant 0 : i32
    %c0_i32_0 = arith.constant 0 : i32
    %c0_i32_1 = arith.constant 0 : i32
    return %c0_i32, %c0_i32_0 : i32, i32
  }
  func.func @transform_48(%arg0: i32) -> (i32, i32) {
    %c0_i32 = arith.constant 0 : i32
    %c0_i32_0 = arith.constant 0 : i32
    %c0_i32_1 = arith.constant 0 : i32
    return %c0_i32, %c0_i32_0 : i32, i32
  }
  func.func @transform_49(%arg0: i32) -> (i32, i32, i32) {
    %c0_i32 = arith.constant 0 : i32
    %c0_i32_0 = arith.constant 0 : i32
    %c0_i32_1 = arith.constant 0 : i32
    %c0_i32_2 = arith.constant 0 : i32
    return %c0_i32, %c0_i32_0, %c0_i32_1 : i32, i32, i32
  }
  func.func @transform_50(%arg0: i32) -> (i32, i32) {
    %c0_i32 = arith.constant 0 : i32
    %c0_i32_0 = arith.constant 0 : i32
    %c0_i32_1 = arith.constant 0 : i32
    return %c0_i32, %c0_i32_0 : i32, i32
  }
  func.func @transform_51(%arg0: i32) -> (i32, i32) {
    %c0_i32 = arith.constant 0 : i32
    %c0_i32_0 = arith.constant 0 : i32
    %c0_i32_1 = arith.constant 0 : i32
    return %c0_i32, %c0_i32_0 : i32, i32
  }
  func.func @transform_52(%arg0: i32) -> (i32, i32) {
    %c0_i32 = arith.constant 0 : i32
    %c0_i32_0 = arith.constant 0 : i32
    %c0_i32_1 = arith.constant 0 : i32
    return %c0_i32, %c0_i32_0 : i32, i32
  }
  func.func @transform_53(%arg0: i32) -> (i32, i32) {
    %c0_i32 = arith.constant 0 : i32
    %c0_i32_0 = arith.constant 0 : i32
    %c0_i32_1 = arith.constant 0 : i32
    return %c0_i32, %c0_i32_0 : i32, i32
  }
  func.func @transform_54(%arg0: i32) -> (i32, i32) {
    %c0_i32 = arith.constant 0 : i32
    %c0_i32_0 = arith.constant 0 : i32
    %c0_i32_1 = arith.constant 0 : i32
    return %c0_i32, %c0_i32_0 : i32, i32
  }
  func.func @transform_55(%arg0: i32) -> (i32, i32) {
    %c0_i32 = arith.constant 0 : i32
    %c0_i32_0 = arith.constant 0 : i32
    %c0_i32_1 = arith.constant 0 : i32
    return %c0_i32, %c0_i32_0 : i32, i32
  }
  func.func @transform_56(%arg0: i32) -> (i32, i32) {
    %c0_i32 = arith.constant 0 : i32
    %c0_i32_0 = arith.constant 0 : i32
    %c0_i32_1 = arith.constant 0 : i32
    return %c0_i32, %c0_i32_0 : i32, i32
  }
  func.func @transform_57(%arg0: i32) -> (i32, i32) {
    %c0_i32 = arith.constant 0 : i32
    %c0_i32_0 = arith.constant 0 : i32
    %c0_i32_1 = arith.constant 0 : i32
    return %c0_i32, %c0_i32_0 : i32, i32
  }
  func.func @transform_58(%arg0: i32) -> (i32, i32) {
    %c0_i32 = arith.constant 0 : i32
    %c0_i32_0 = arith.constant 0 : i32
    %c0_i32_1 = arith.constant 0 : i32
    return %c0_i32, %c0_i32_0 : i32, i32
  }
  func.func @transform_59(%arg0: i32) -> (i32, i32) {
    %c0_i32 = arith.constant 0 : i32
    %c0_i32_0 = arith.constant 0 : i32
    %c0_i32_1 = arith.constant 0 : i32
    return %c0_i32, %c0_i32_0 : i32, i32
  }
  func.func @transform_60(%arg0: i32) -> (i32, i32) {
    %c0_i32 = arith.constant 0 : i32
    %c0_i32_0 = arith.constant 0 : i32
    %c0_i32_1 = arith.constant 0 : i32
    return %c0_i32, %c0_i32_0 : i32, i32
  }
  func.func @transform_61(%arg0: i32) -> (i32, i32) {
    %c0_i32 = arith.constant 0 : i32
    %c0_i32_0 = arith.constant 0 : i32
    %c0_i32_1 = arith.constant 0 : i32
    return %c0_i32, %c0_i32_0 : i32, i32
  }
  func.func @transform_62(%arg0: i32) -> (i32, i32) {
    %c0_i32 = arith.constant 0 : i32
    %c0_i32_0 = arith.constant 0 : i32
    %c0_i32_1 = arith.constant 0 : i32
    return %c0_i32, %c0_i32_0 : i32, i32
  }
  func.func @transform_63(%arg0: i32) -> (i32, i32) {
    %c0_i32 = arith.constant 0 : i32
    %c0_i32_0 = arith.constant 0 : i32
    %c0_i32_1 = arith.constant 0 : i32
    return %c0_i32, %c0_i32_0 : i32, i32
  }
  func.func @transform_64(%arg0: i32) -> (i32, i32) {
    %c0_i32 = arith.constant 0 : i32
    %c0_i32_0 = arith.constant 0 : i32
    %c0_i32_1 = arith.constant 0 : i32
    return %c0_i32, %c0_i32_0 : i32, i32
  }
  func.func @transform_65(%arg0: i32) -> (i32, i32) {
    %c0_i32 = arith.constant 0 : i32
    %c0_i32_0 = arith.constant 0 : i32
    %c0_i32_1 = arith.constant 0 : i32
    return %c0_i32, %c0_i32_0 : i32, i32
  }
  func.func @transform_66(%arg0: i32) -> (i32, i32, i32) {
    %c0_i32 = arith.constant 0 : i32
    %c0_i32_0 = arith.constant 0 : i32
    %c0_i32_1 = arith.constant 0 : i32
    return %arg0, %c0_i32, %c0_i32_0 : i32, i32, i32
  }
}

</mosaic_0001>

<llo_original>
// kernel: swin_forward.1
$region0: #{swin_forward.1}
  #allocation0 [shape = 'u32[]', space=smem, size = 0x4, offset = 0x4, fixed_abs, tag = 'smem constant byte address 0x4 - core index']
  #allocation1 [shape = 'u32[144,128]{1,0:T(1,128)}', space=vmem, size = 0x12000, scoped, tag = 'internal scratch']
  #allocation2 [shape = 'f32[1,1]{1,0:T(1,128)S(1)}', space=vmem, size = 0x200, scoped, tag = 'scoped memory for swin_forward.1']
  %s0 = inlined_call_operand.smem [shape: u32[67], index: -1, kind: input, shape index: {}]
  %s1 = sld [smem:[%s0]]
  %s2 = scalar_lea.smem %s0, 1
  %s3 = sld [smem:[%s2]]
  %s4 = scalar_lea.smem %s0, 2
  %s5 = sld [smem:[%s4]]
  %s6 = scalar_lea.smem %s0, 3
  %s7 = sld [smem:[%s6]]
  %s8 = scalar_lea.smem %s0, 4
  %s9 = sld [smem:[%s8]]
  %s10 = scalar_lea.smem %s0, 5
  %s11 = sld [smem:[%s10]]
  %s12 = scalar_lea.smem %s0, 6
  %s13 = sld [smem:[%s12]]
  %s14 = scalar_lea.smem %s0, 7
  %s15 = sld [smem:[%s14]]
  %s16 = scalar_lea.smem %s0, 8
  %s17 = sld [smem:[%s16]]
  %s18 = scalar_lea.smem %s0, 9
  %s19 = sld [smem:[%s18]]
  %s20 = scalar_lea.smem %s0, 10
  %s21 = sld [smem:[%s20]]
  %s22 = scalar_lea.smem %s0, 11
  %s23 = sld [smem:[%s22]]
  %s24 = scalar_lea.smem %s0, 12
  %s25 = sld [smem:[%s24]]
  %s26 = scalar_lea.smem %s0, 13
  %s27 = sld [smem:[%s26]]
  %s28 = scalar_lea.smem %s0, 14
  %s29 = sld [smem:[%s28]]
  %s30 = scalar_lea.smem %s0, 15
  %s31 = sld [smem:[%s30]]
  %s32 = scalar_lea.smem %s0, 16
  %s33 = sld [smem:[%s32]]
  %s34 = scalar_lea.smem %s0, 17
  %s35 = sld [smem:[%s34]]
  %s36 = scalar_lea.smem %s0, 18
  %s37 = sld [smem:[%s36]]
  %s38 = scalar_lea.smem %s0, 19
  %s39 = sld [smem:[%s38]]
  %s40 = scalar_lea.smem %s0, 20
  %s41 = sld [smem:[%s40]]
  %s42 = scalar_lea.smem %s0, 21
  %s43 = sld [smem:[%s42]]
  %s44 = scalar_lea.smem %s0, 22
  %s45 = sld [smem:[%s44]]
  %s46 = scalar_lea.smem %s0, 23
  %s47 = sld [smem:[%s46]]
  %s48 = scalar_lea.smem %s0, 24
  %s49 = sld [smem:[%s48]]
  %s50 = scalar_lea.smem %s0, 25
  %s51 = sld [smem:[%s50]]
  %s52 = scalar_lea.smem %s0, 26
  %s53 = sld [smem:[%s52]]
  %s54 = scalar_lea.smem %s0, 27
  %s55 = sld [smem:[%s54]]
  %s56 = scalar_lea.smem %s0, 28
  %s57 = sld [smem:[%s56]]
  %s58 = scalar_lea.smem %s0, 29
  %s59 = sld [smem:[%s58]]
  %s60 = scalar_lea.smem %s0, 30
  %s61 = sld [smem:[%s60]]
  %s62 = scalar_lea.smem %s0, 31
  %s63 = sld [smem:[%s62]]
  %s64 = scalar_lea.smem %s0, 32
  %s65 = sld [smem:[%s64]]
  %s66 = scalar_lea.smem %s0, 33
  %s67 = sld [smem:[%s66]]
  %s68 = scalar_lea.smem %s0, 34
  %s69 = sld [smem:[%s68]]
  %s70 = scalar_lea.smem %s0, 35
  %s71 = sld [smem:[%s70]]
  %s72 = scalar_lea.smem %s0, 36
  %s73 = sld [smem:[%s72]]
  %s74 = scalar_lea.smem %s0, 37
  %s75 = sld [smem:[%s74]]
  %s76 = scalar_lea.smem %s0, 38
  %s77 = sld [smem:[%s76]]
  %s78 = scalar_lea.smem %s0, 39
  %s79 = sld [smem:[%s78]]
  %s80 = scalar_lea.smem %s0, 40
  %s81 = sld [smem:[%s80]]
  %s82 = scalar_lea.smem %s0, 41
  %s83 = sld [smem:[%s82]]
  %s84 = scalar_lea.smem %s0, 42
  %s85 = sld [smem:[%s84]]
  %s86 = scalar_lea.smem %s0, 43
  %s87 = sld [smem:[%s86]]
  %s88 = scalar_lea.smem %s0, 44
  %s89 = sld [smem:[%s88]]
  %s90 = scalar_lea.smem %s0, 45
  %s91 = sld [smem:[%s90]]
  %s92 = scalar_lea.smem %s0, 46
  %s93 = sld [smem:[%s92]]
  %s94 = scalar_lea.smem %s0, 47
  %s95 = sld [smem:[%s94]]
  %s96 = scalar_lea.smem %s0, 48
  %s97 = sld [smem:[%s96]]
  %s98 = scalar_lea.smem %s0, 49
  %s99 = sld [smem:[%s98]]
  %s100 = scalar_lea.smem %s0, 50
  %s101 = sld [smem:[%s100]]
  %s102 = scalar_lea.smem %s0, 51
  %s103 = sld [smem:[%s102]]
  %s104 = scalar_lea.smem %s0, 52
  %s105 = sld [smem:[%s104]]
  %s106 = scalar_lea.smem %s0, 53
  %s107 = sld [smem:[%s106]]
  %s108 = scalar_lea.smem %s0, 54
  %s109 = sld [smem:[%s108]]
  %s110 = scalar_lea.smem %s0, 55
  %s111 = sld [smem:[%s110]]
  %s112 = scalar_lea.smem %s0, 56
  %s113 = sld [smem:[%s112]]
  %s114 = scalar_lea.smem %s0, 57
  %s115 = sld [smem:[%s114]]
  %s116 = scalar_lea.smem %s0, 58
  %s117 = sld [smem:[%s116]]
  %s118 = scalar_lea.smem %s0, 59
  %s119 = sld [smem:[%s118]]
  %s120 = scalar_lea.smem %s0, 60
  %s121 = sld [smem:[%s120]]
  %s122 = scalar_lea.smem %s0, 61
  %s123 = sld [smem:[%s122]]
  %s124 = scalar_lea.smem %s0, 62
  %s125 = sld [smem:[%s124]]
  %s126 = scalar_lea.smem %s0, 63
  %s127 = sld [smem:[%s126]]
  %s128 = scalar_lea.smem %s0, 64
  %s129 = sld [smem:[%s128]]
  %s130 = scalar_lea.smem %s0, 65
  %s131 = sld [smem:[%s130]]
  %s132 = scalar_lea.smem %s0, 66
  %s133 = sld [smem:[%s132]]
  %s134 = sld [smem:[#allocation0]]
  $region389: #{swin_forward.1} parent=0
    _
  %s136 = ssub.s32 1, %s134
  %s137 = scalar_select 0, %s136, %s134
  %v138 = vstv %s131
  %139 = vst [vmem:[#allocation2] sm:$0x1] %v138
  $region1: #{swin_forward.1} parent=0
    #allocation3 [shape = 'u8[512]{0}', space=vmem, size = 0x400, scoped, tag = 'input window, operand 25, single buffered']
    #allocation4 [shape = 's32[2]{0}', space=sflag, size = 0x8, scoped, tag = 'scoped memory for swin_forward.1']
    #allocation5 [shape = 'u8[512]{0}', space=vmem, size = 0x400, scoped, tag = 'input window, operand 26, single buffered']
    #allocation6 [shape = 's32[1]{0}', space=sflag, size = 0x4, scoped, tag = 'scoped memory for swin_forward.1']
    #allocation7 [shape = 'u8[512]{0}', space=vmem, size = 0x400, scoped, tag = 'input window, operand 27, single buffered']
    #allocation8 [shape = 'u8[512]{0}', space=vmem, size = 0x400, scoped, tag = 'input window, operand 29, single buffered']
    #allocation9 [shape = 's32[1]{0}', space=sflag, size = 0x4, scoped, tag = 'scoped memory for swin_forward.1']
    #allocation10 [shape = 'u8[512]{0}', space=vmem, size = 0x400, scoped, tag = 'input window, operand 31, single buffered']
    #allocation11 [shape = 'u8[512]{0}', space=vmem, size = 0x400, scoped, tag = 'input window, operand 33, single buffered']
    #allocation12 [shape = 's32[1]{0}', space=sflag, size = 0x4, scoped, tag = 'scoped memory for swin_forward.1']
    #allocation13 [shape = 'u8[512]{0}', space=vmem, size = 0x400, scoped, tag = 'input window, operand 34, single buffered']
    #allocation14 [shape = 'u8[512]{0}', space=vmem, size = 0x400, scoped, tag = 'input window, operand 37, single buffered']
    #allocation15 [shape = 's32[1]{0}', space=sflag, size = 0x4, scoped, tag = 'scoped memory for swin_forward.1']
    #allocation16 [shape = 'u8[512]{0}', space=vmem, size = 0x400, scoped, tag = 'input window, operand 38, single buffered']
    #allocation17 [shape = 'u8[512]{0}', space=vmem, size = 0x400, scoped, tag = 'input window, operand 42, single buffered']
    #allocation18 [shape = 's32[1]{0}', space=sflag, size = 0x4, scoped, tag = 'scoped memory for swin_forward.1']
    #allocation19 [shape = 'u8[512]{0}', space=vmem, size = 0x400, scoped, tag = 'input window, operand 43, single buffered']
    #allocation20 [shape = 'u8[512]{0}', space=vmem, size = 0x400, scoped, tag = 'input window, operand 44, single buffered']
    #allocation21 [shape = 's32[1]{0}', space=sflag, size = 0x4, scoped, tag = 'scoped memory for swin_forward.1']
    #allocation22 [shape = 'u8[512]{0}', space=vmem, size = 0x400, scoped, tag = 'input window, operand 46, single buffered']
    #allocation23 [shape = 'u8[512]{0}', space=vmem, size = 0x400, scoped, tag = 'input window, operand 48, single buffered']
    #allocation24 [shape = 's32[1]{0}', space=sflag, size = 0x4, scoped, tag = 'scoped memory for swin_forward.1']
    #allocation25 [shape = 'u8[512]{0}', space=vmem, size = 0x400, scoped, tag = 'input window, operand 50, single buffered']
    #allocation26 [shape = 'u8[512]{0}', space=vmem, size = 0x400, scoped, tag = 'input window, operand 51, single buffered']
    #allocation27 [shape = 's32[1]{0}', space=sflag, size = 0x4, scoped, tag = 'scoped memory for swin_forward.1']
    #allocation28 [shape = 'u8[512]{0}', space=vmem, size = 0x400, scoped, tag = 'input window, operand 55, single buffered']
    #allocation29 [shape = 'u8[512]{0}', space=vmem, size = 0x400, scoped, tag = 'input window, operand 56, single buffered']
    #allocation30 [shape = 's32[1]{0}', space=sflag, size = 0x4, scoped, tag = 'scoped memory for swin_forward.1']
    #allocation31 [shape = 'u8[512]{0}', space=vmem, size = 0x400, scoped, tag = 'input window, operand 57, single buffered']
    #allocation32 [shape = 'u8[512]{0}', space=vmem, size = 0x400, scoped, tag = 'input window, operand 59, single buffered']
    #allocation33 [shape = 's32[1]{0}', space=sflag, size = 0x4, scoped, tag = 'scoped memory for swin_forward.1']
    #allocation34 [shape = 'u8[512]{0}', space=vmem, size = 0x400, scoped, tag = 'input window, operand 61, single buffered']
    #allocation35 [shape = 'u8[512]{0}', space=vmem, size = 0x400, scoped, tag = 'input window, operand 62, single buffered']
    #allocation36 [shape = 's32[1]{0}', space=sflag, size = 0x4, scoped, tag = 'scoped memory for swin_forward.1']
    #allocation37 [shape = 'u8[512]{0}', space=vmem, size = 0x400, scoped, tag = 'input window, operand 63, single buffered']
    %140 = vsyncpa [#allocation4], 0
    %141 = vsyncpa [#allocation6], 0
    %142 = vsyncpa [#allocation9], 0
    %143 = vsyncpa [#allocation12], 0
    %144 = vsyncpa [#allocation15], 0
    %145 = vsyncpa [#allocation18], 0
    %146 = vsyncpa [#allocation21], 0
    %147 = vsyncpa [#allocation24], 0
    %148 = vsyncpa [#allocation27], 0
    %149 = vsyncpa [#allocation30], 0
    %150 = vsyncpa [#allocation33], 0
    %151 = vsyncpa [#allocation36], 0
    loop: start=0, step=1, limit=4
    $region2: #{swin_forward.1} parent=1 // loop_pre_header
      _
    $region3: #{swin_forward.1} parent=1 // loop_header
      %s153 = sphi 0, %s157
      %p154 = scmp.ge.s32.totalorder %s153, 4
      %s163 = sphi 0, %s165
      %s166 = sphi 0, %s163
      %s167 = sphi 0, %s166
      %s183 = sphi 0, %s167
      %s187 = sphi 0, %s187
      %s189 = sphi 0, %s187
      %s190 = sphi 0, %s189
      %s204 = sphi 0, %s190
      %s208 = sphi 0, %s208
      %s210 = sphi 0, %s208
      %s211 = sphi 0, %s210
      %s225 = sphi 0, %s211
      %s229 = sphi 0, %s229
      %s231 = sphi 0, %s229
      %s232 = sphi 0, %s231
      %s246 = sphi 0, %s232
      %s250 = sphi 0, %s250
      %s252 = sphi 0, %s250
      %s253 = sphi 0, %s252
      %s267 = sphi 0, %s253
      %s271 = sphi 0, %s271
      %s273 = sphi 0, %s271
      %s274 = sphi 0, %s273
      %s288 = sphi 0, %s274
      %s292 = sphi 0, %s292
      %s294 = sphi 0, %s292
      %s295 = sphi 0, %s294
      %s309 = sphi 0, %s295
      %s313 = sphi 0, %s313
      %s315 = sphi 0, %s313
      %s316 = sphi 0, %s315
      %s330 = sphi 0, %s316
      %s334 = sphi 0, %s334
      %s336 = sphi 0, %s334
      %s337 = sphi 0, %s336
      %s351 = sphi 0, %s337
      %s355 = sphi 0, %s355
      %s357 = sphi 0, %s355
      %s358 = sphi 0, %s357
      %s372 = sphi 0, %s358
      %s376 = sphi 0, %s376
      %s378 = sphi 0, %s376
      %s379 = sphi 0, %s378
      %s393 = sphi 0, %s379
      %s397 = sphi 0, %s397
      %s399 = sphi 0, %s397
      %s400 = sphi 0, %s399
      %s414 = sphi 0, %s400
      %s418 = sphi 0, %s418
      %s420 = sphi 0, %s418
      %s421 = sphi 0, %s420
      %s435 = sphi 0, %s421
      %s439 = sphi 0, %s439
      %s441 = sphi 0, %s439
      %s442 = sphi 0, %s441
      %s456 = sphi 0, %s442
      %s460 = sphi 0, %s460
      %s462 = sphi 0, %s460
      %s463 = sphi 0, %s462
      %s477 = sphi 0, %s463
      %s481 = sphi 0, %s481
      %s483 = sphi 0, %s481
      %s484 = sphi 0, %s483
      %s498 = sphi 0, %s484
      %s502 = sphi 0, %s502
      %s504 = sphi 0, %s502
      %s505 = sphi 0, %s504
      %s519 = sphi 0, %s505
      %s523 = sphi 0, %s523
      %s525 = sphi 0, %s523
      %s526 = sphi 0, %s525
      %s540 = sphi 0, %s526
      %s544 = sphi 0, %s544
      %s546 = sphi 0, %s544
      %s547 = sphi 0, %s546
      %s561 = sphi 0, %s547
      %s565 = sphi 0, %s565
      %s567 = sphi 0, %s565
      %s568 = sphi 0, %s567
      %s582 = sphi 0, %s568
      %s586 = sphi 0, %s586
      %s588 = sphi 0, %s586
      %s589 = sphi 0, %s588
      %s603 = sphi 0, %s589
      %s607 = sphi 0, %s607
      %s609 = sphi 0, %s607
      %s610 = sphi 0, %s609
      %s624 = sphi 0, %s610
      %s628 = sphi 0, %s628
      %s630 = sphi 0, %s628
      %s631 = sphi 0, %s630
      %s645 = sphi 0, %s631
      %s649 = sphi 0, %s649
      %s651 = sphi 0, %s649
      %s652 = sphi 0, %s651
      %s666 = sphi 0, %s652
      %s670 = sphi 0, %s670
      %s672 = sphi 0, %s670
      %s673 = sphi 0, %s672
      %s687 = sphi 0, %s673
      %s691 = sphi 0, %s691
      %s693 = sphi 0, %s691
      %s694 = sphi 0, %s693
      %s708 = sphi 0, %s694
      %s712 = sphi 0, %s712
      %s714 = sphi 0, %s712
      %s715 = sphi 0, %s714
      %s729 = sphi 0, %s715
      %s733 = sphi 0, %s733
      %s735 = sphi 0, %s733
      %s736 = sphi 0, %s735
      %s750 = sphi 0, %s736
      %s754 = sphi 0, %s754
      %s756 = sphi 0, %s754
      %s757 = sphi 0, %s756
      %s771 = sphi 0, %s757
      %s775 = sphi 0, %s775
      %s777 = sphi 0, %s775
      %s778 = sphi 0, %s777
      %s792 = sphi 0, %s778
      %s796 = sphi 0, %s796
      %s798 = sphi 0, %s796
      %s799 = sphi 0, %s798
      %s813 = sphi 0, %s799
      %s817 = sphi 0, %s817
      %s819 = sphi 0, %s817
      %s820 = sphi 0, %s819
      %s834 = sphi 0, %s820
      %s838 = sphi 0, %s838
      %s840 = sphi 0, %s838
      %s841 = sphi 0, %s840
      %s855 = sphi 0, %s841
      %s859 = sphi 0, %s859
      %s861 = sphi 0, %s859
      %s862 = sphi 0, %s861
      %s876 = sphi 0, %s862
      %s880 = sphi 0, %s880
      %s882 = sphi 0, %s880
      %s883 = sphi 0, %s882
      %s897 = sphi 0, %s883
      %s901 = sphi 0, %s901
      %s903 = sphi 0, %s901
      %s904 = sphi 0, %s903
      %s918 = sphi 0, %s904
      %s922 = sphi 0, %s922
      %s924 = sphi 0, %s922
      %s925 = sphi 0, %s924
      %s939 = sphi 0, %s925
      %s943 = sphi 0, %s943
      %s945 = sphi 0, %s943
      %s946 = sphi 0, %s945
      %s960 = sphi 0, %s946
      %s964 = sphi 0, %s964
      %s966 = sphi 0, %s964
      %s967 = sphi 0, %s966
      %s981 = sphi 0, %s967
      %s985 = sphi 0, %s985
      %s987 = sphi 0, %s985
      %s988 = sphi 0, %s987
      %s1002 = sphi 0, %s988
      %s1006 = sphi 0, %s1006
      %s1008 = sphi 0, %s1006
      %s1009 = sphi 0, %s1008
      %s1023 = sphi 0, %s1009
      %s1027 = sphi 0, %s1027
      %s1029 = sphi 0, %s1027
      %s1030 = sphi 0, %s1029
      %s1044 = sphi 0, %s1030
      %s1048 = sphi 0, %s1048
      %s1050 = sphi 0, %s1048
      %s1051 = sphi 0, %s1050
      %s1065 = sphi 0, %s1051
      %s1069 = sphi 0, %s1069
      %s1071 = sphi 0, %s1069
      %s1072 = sphi 0, %s1071
      %s1086 = sphi 0, %s1072
      %s1090 = sphi 0, %s1090
      %s1092 = sphi 0, %s1090
      %s1093 = sphi 0, %s1092
      %s1107 = sphi 0, %s1093
      %s1111 = sphi 0, %s1111
      %s1113 = sphi 0, %s1111
      %s1114 = sphi 0, %s1113
      %s1128 = sphi 0, %s1114
      %s1132 = sphi 0, %s1132
      %s1134 = sphi 0, %s1132
      %s1135 = sphi 0, %s1134
      %s1149 = sphi 0, %s1135
      %s1153 = sphi 0, %s1153
      %s1155 = sphi 0, %s1153
      %s1156 = sphi 0, %s1155
      %s1170 = sphi 0, %s1156
      %s1174 = sphi 0, %s1174
      %s1176 = sphi 0, %s1174
      %s1177 = sphi 0, %s1176
      %s1191 = sphi 0, %s1177
      %s1195 = sphi 0, %s1195
      %s1197 = sphi 0, %s1195
      %s1198 = sphi 0, %s1197
      %s1212 = sphi 0, %s1198
      %s1216 = sphi 0, %s1216
      %s1218 = sphi 0, %s1216
      %s1219 = sphi 0, %s1218
      %s1233 = sphi 0, %s1219
      %s1237 = sphi 0, %s1237
      %s1239 = sphi 0, %s1237
      %s1240 = sphi 0, %s1239
      %s1254 = sphi 0, %s1240
      %s1258 = sphi 0, %s1258
      %s1260 = sphi 0, %s1258
      %s1261 = sphi 0, %s1260
      %s1275 = sphi 0, %s1261
      %s1279 = sphi 0, %s1279
      %s1281 = sphi 0, %s1279
      %s1282 = sphi 0, %s1281
      %s1296 = sphi 0, %s1282
      %s1300 = sphi 0, %s1300
      %s1302 = sphi 0, %s1300
      %s1303 = sphi 0, %s1302
      %s1317 = sphi 0, %s1303
      %s1321 = sphi 0, %s1321
      %s1323 = sphi 0, %s1321
      %s1324 = sphi 0, %s1323
      %s1338 = sphi 0, %s1324
      %s1342 = sphi 0, %s1342
      %s1344 = sphi 0, %s1342
      %s1345 = sphi 0, %s1344
      %s1359 = sphi 0, %s1345
      %s1363 = sphi 0, %s1363
      %s1365 = sphi 0, %s1363
      %s1366 = sphi 0, %s1365
      %s1380 = sphi 0, %s1366
      %s1384 = sphi 0, %s1384
      %s1386 = sphi 0, %s1384
      %s1387 = sphi 0, %s1386
      %s1401 = sphi 0, %s1387
      %s1405 = sphi 0, %s1405
      %s1407 = sphi 0, %s1405
      %s1408 = sphi 0, %s1407
      %s1422 = sphi 0, %s1408
      %s1426 = sphi 0, %s1426
      %s1428 = sphi 0, %s1426
      %s1429 = sphi 0, %s1428
      %s1443 = sphi 0, %s1429
      %s1447 = sphi 0, %s1447
      %s1449 = sphi 0, %s1447
      %s1450 = sphi 0, %s1449
      %s1464 = sphi 0, %s1450
      %s1468 = sphi 0, %s1468
      %s1470 = sphi 0, %s1468
      %s1471 = sphi 0, %s1470
      %s1485 = sphi 0, %s1471
      %s1489 = sphi 0, %s1489
      %s1491 = sphi 0, %s1489
      %s1492 = sphi 0, %s1491
      %s1506 = sphi 0, %s1492
      %s1510 = sphi 0, %s1510
      %s1512 = sphi 0, %s1510
      %s1513 = sphi 0, %s1512
      %s1527 = sphi 0, %s1513
      %s1531 = sphi 0, %s1531
      %s1533 = sphi 0, %s1531
      %s1534 = sphi 0, %s1533
      %s1548 = sphi 0, %s1534
      %s1554 = sphi 0, %s1556
      %s1557 = sphi 0, %s1554
      %s1558 = sphi 0, %s1557
      %s1574 = sphi 0, %s1558
    $region4: #{swin_forward.1} parent=1 // loop_header_branch
      %156 = sbr.rel (%p154) target = $region8
    $region5: #{swin_forward.1} parent=1 // loop_body
      %s158 = ssub.s32 %s153, 1
      %s159 = ssub.s32 %s153, 2
      %s160 = sadd.s32 %s153, 1
      %s161 = ssub.s32 %s153, %s160
      %p162 = scmp.eq.s32.totalorder %s161, 0
      %s164 = sadd.s32 %s163, 1
      %s165 = scalar_select %p162, %s163, %s164
      %p168 = pneg %p162
      %p169 = scmp.eq.s32.totalorder %s153, 1
      %p170 = por %p168, %p169
      %p171 = scmp.ne.s32.totalorder %s163, %s166
      %p172 = scmp.eq.s32.totalorder %s153, 0
      %p173 = por %p171, %p172
      %p174 = scmp.ne.s32.totalorder %s163, %s166
      %p175 = scmp.eq.s32.totalorder %s158, 1
      %p176 = por %p174, %p175
      %p177 = scmp.ne.s32.totalorder %s166, %s167
      %p178 = scmp.eq.s32.totalorder %s158, 0
      %p179 = por %p177, %p178
      %p180 = scmp.ne.s32.totalorder %s166, %s167
      %p181 = scmp.eq.s32.totalorder %s159, 1
      %p182 = por %p180, %p181
      %p184 = scmp.ne.s32.totalorder %s167, %s183
      %p185 = scmp.eq.s32.totalorder %s159, 0
      %p186 = por %p184, %p185
      %s188 = sadd.s32 %s187, 1
      %p191 = scmp.eq.s32.totalorder %s153, 1
      %p192 = scmp.ne.s32.totalorder %s187, %s189
      %p193 = scmp.eq.s32.totalorder %s153, 0
      %p194 = por %p192, %p193
      %p195 = scmp.ne.s32.totalorder %s187, %s189
      %p196 = scmp.eq.s32.totalorder %s158, 1
      %p197 = por %p195, %p196
      %p198 = scmp.ne.s32.totalorder %s189, %s190
      %p199 = scmp.eq.s32.totalorder %s158, 0
      %p200 = por %p198, %p199
      %p201 = scmp.ne.s32.totalorder %s189, %s190
      %p202 = scmp.eq.s32.totalorder %s159, 1
      %p203 = por %p201, %p202
      %p205 = scmp.ne.s32.totalorder %s190, %s204
      %p206 = scmp.eq.s32.totalorder %s159, 0
      %p207 = por %p205, %p206
      %s209 = sadd.s32 %s208, 1
      %p212 = scmp.eq.s32.totalorder %s153, 1
      %p213 = scmp.ne.s32.totalorder %s208, %s210
      %p214 = scmp.eq.s32.totalorder %s153, 0
      %p215 = por %p213, %p214
      %p216 = scmp.ne.s32.totalorder %s208, %s210
      %p217 = scmp.eq.s32.totalorder %s158, 1
      %p218 = por %p216, %p217
      %p219 = scmp.ne.s32.totalorder %s210, %s211
      %p220 = scmp.eq.s32.totalorder %s158, 0
      %p221 = por %p219, %p220
      %p222 = scmp.ne.s32.totalorder %s210, %s211
      %p223 = scmp.eq.s32.totalorder %s159, 1
      %p224 = por %p222, %p223
      %p226 = scmp.ne.s32.totalorder %s211, %s225
      %p227 = scmp.eq.s32.totalorder %s159, 0
      %p228 = por %p226, %p227
      %s230 = sadd.s32 %s229, 1
      %p233 = scmp.eq.s32.totalorder %s153, 1
      %p234 = scmp.ne.s32.totalorder %s229, %s231
      %p235 = scmp.eq.s32.totalorder %s153, 0
      %p236 = por %p234, %p235
      %p237 = scmp.ne.s32.totalorder %s229, %s231
      %p238 = scmp.eq.s32.totalorder %s158, 1
      %p239 = por %p237, %p238
      %p240 = scmp.ne.s32.totalorder %s231, %s232
      %p241 = scmp.eq.s32.totalorder %s158, 0
      %p242 = por %p240, %p241
      %p243 = scmp.ne.s32.totalorder %s231, %s232
      %p244 = scmp.eq.s32.totalorder %s159, 1
      %p245 = por %p243, %p244
      %p247 = scmp.ne.s32.totalorder %s232, %s246
      %p248 = scmp.eq.s32.totalorder %s159, 0
      %p249 = por %p247, %p248
      %s251 = sadd.s32 %s250, 1
      %p254 = scmp.eq.s32.totalorder %s153, 1
      %p255 = scmp.ne.s32.totalorder %s250, %s252
      %p256 = scmp.eq.s32.totalorder %s153, 0
      %p257 = por %p255, %p256
      %p258 = scmp.ne.s32.totalorder %s250, %s252
      %p259 = scmp.eq.s32.totalorder %s158, 1
      %p260 = por %p258, %p259
      %p261 = scmp.ne.s32.totalorder %s252, %s253
      %p262 = scmp.eq.s32.totalorder %s158, 0
      %p263 = por %p261, %p262
      %p264 = scmp.ne.s32.totalorder %s252, %s253
      %p265 = scmp.eq.s32.totalorder %s159, 1
      %p266 = por %p264, %p265
      %p268 = scmp.ne.s32.totalorder %s253, %s267
      %p269 = scmp.eq.s32.totalorder %s159, 0
      %p270 = por %p268, %p269
      %s272 = sadd.s32 %s271, 1
      %p275 = scmp.eq.s32.totalorder %s153, 1
      %p276 = scmp.ne.s32.totalorder %s271, %s273
      %p277 = scmp.eq.s32.totalorder %s153, 0
      %p278 = por %p276, %p277
      %p279 = scmp.ne.s32.totalorder %s271, %s273
      %p280 = scmp.eq.s32.totalorder %s158, 1
      %p281 = por %p279, %p280
      %p282 = scmp.ne.s32.totalorder %s273, %s274
      %p283 = scmp.eq.s32.totalorder %s158, 0
      %p284 = por %p282, %p283
      %p285 = scmp.ne.s32.totalorder %s273, %s274
      %p286 = scmp.eq.s32.totalorder %s159, 1
      %p287 = por %p285, %p286
      %p289 = scmp.ne.s32.totalorder %s274, %s288
      %p290 = scmp.eq.s32.totalorder %s159, 0
      %p291 = por %p289, %p290
      %s293 = sadd.s32 %s292, 1
      %p296 = scmp.eq.s32.totalorder %s153, 1
      %p297 = scmp.ne.s32.totalorder %s292, %s294
      %p298 = scmp.eq.s32.totalorder %s153, 0
      %p299 = por %p297, %p298
      %p300 = scmp.ne.s32.totalorder %s292, %s294
      %p301 = scmp.eq.s32.totalorder %s158, 1
      %p302 = por %p300, %p301
      %p303 = scmp.ne.s32.totalorder %s294, %s295
      %p304 = scmp.eq.s32.totalorder %s158, 0
      %p305 = por %p303, %p304
      %p306 = scmp.ne.s32.totalorder %s294, %s295
      %p307 = scmp.eq.s32.totalorder %s159, 1
      %p308 = por %p306, %p307
      %p310 = scmp.ne.s32.totalorder %s295, %s309
      %p311 = scmp.eq.s32.totalorder %s159, 0
      %p312 = por %p310, %p311
      %s314 = sadd.s32 %s313, 1
      %p317 = scmp.eq.s32.totalorder %s153, 1
      %p318 = scmp.ne.s32.totalorder %s313, %s315
      %p319 = scmp.eq.s32.totalorder %s153, 0
      %p320 = por %p318, %p319
      %p321 = scmp.ne.s32.totalorder %s313, %s315
      %p322 = scmp.eq.s32.totalorder %s158, 1
      %p323 = por %p321, %p322
      %p324 = scmp.ne.s32.totalorder %s315, %s316
      %p325 = scmp.eq.s32.totalorder %s158, 0
      %p326 = por %p324, %p325
      %p327 = scmp.ne.s32.totalorder %s315, %s316
      %p328 = scmp.eq.s32.totalorder %s159, 1
      %p329 = por %p327, %p328
      %p331 = scmp.ne.s32.totalorder %s316, %s330
      %p332 = scmp.eq.s32.totalorder %s159, 0
      %p333 = por %p331, %p332
      %s335 = sadd.s32 %s334, 1
      %p338 = scmp.eq.s32.totalorder %s153, 1
      %p339 = scmp.ne.s32.totalorder %s334, %s336
      %p340 = scmp.eq.s32.totalorder %s153, 0
      %p341 = por %p339, %p340
      %p342 = scmp.ne.s32.totalorder %s334, %s336
      %p343 = scmp.eq.s32.totalorder %s158, 1
      %p344 = por %p342, %p343
      %p345 = scmp.ne.s32.totalorder %s336, %s337
      %p346 = scmp.eq.s32.totalorder %s158, 0
      %p347 = por %p345, %p346
      %p348 = scmp.ne.s32.totalorder %s336, %s337
      %p349 = scmp.eq.s32.totalorder %s159, 1
      %p350 = por %p348, %p349
      %p352 = scmp.ne.s32.totalorder %s337, %s351
      %p353 = scmp.eq.s32.totalorder %s159, 0
      %p354 = por %p352, %p353
      %s356 = sadd.s32 %s355, 1
      %p359 = scmp.eq.s32.totalorder %s153, 1
      %p360 = scmp.ne.s32.totalorder %s355, %s357
      %p361 = scmp.eq.s32.totalorder %s153, 0
      %p362 = por %p360, %p361
      %p363 = scmp.ne.s32.totalorder %s355, %s357
      %p364 = scmp.eq.s32.totalorder %s158, 1
      %p365 = por %p363, %p364
      %p366 = scmp.ne.s32.totalorder %s357, %s358
      %p367 = scmp.eq.s32.totalorder %s158, 0
      %p368 = por %p366, %p367
      %p369 = scmp.ne.s32.totalorder %s357, %s358
      %p370 = scmp.eq.s32.totalorder %s159, 1
      %p371 = por %p369, %p370
      %p373 = scmp.ne.s32.totalorder %s358, %s372
      %p374 = scmp.eq.s32.totalorder %s159, 0
      %p375 = por %p373, %p374
      %s377 = sadd.s32 %s376, 1
      %p380 = scmp.eq.s32.totalorder %s153, 1
      %p381 = scmp.ne.s32.totalorder %s376, %s378
      %p382 = scmp.eq.s32.totalorder %s153, 0
      %p383 = por %p381, %p382
      %p384 = scmp.ne.s32.totalorder %s376, %s378
      %p385 = scmp.eq.s32.totalorder %s158, 1
      %p386 = por %p384, %p385
      %p387 = scmp.ne.s32.totalorder %s378, %s379
      %p388 = scmp.eq.s32.totalorder %s158, 0
      %p389 = por %p387, %p388
      %p390 = scmp.ne.s32.totalorder %s378, %s379
      %p391 = scmp.eq.s32.totalorder %s159, 1
      %p392 = por %p390, %p391
      %p394 = scmp.ne.s32.totalorder %s379, %s393
      %p395 = scmp.eq.s32.totalorder %s159, 0
      %p396 = por %p394, %p395
      %s398 = sadd.s32 %s397, 1
      %p401 = scmp.eq.s32.totalorder %s153, 1
      %p402 = scmp.ne.s32.totalorder %s397, %s399
      %p403 = scmp.eq.s32.totalorder %s153, 0
      %p404 = por %p402, %p403
      %p405 = scmp.ne.s32.totalorder %s397, %s399
      %p406 = scmp.eq.s32.totalorder %s158, 1
      %p407 = por %p405, %p406
      %p408 = scmp.ne.s32.totalorder %s399, %s400
      %p409 = scmp.eq.s32.totalorder %s158, 0
      %p410 = por %p408, %p409
      %p411 = scmp.ne.s32.totalorder %s399, %s400
      %p412 = scmp.eq.s32.totalorder %s159, 1
      %p413 = por %p411, %p412
      %p415 = scmp.ne.s32.totalorder %s400, %s414
      %p416 = scmp.eq.s32.totalorder %s159, 0
      %p417 = por %p415, %p416
      %s419 = sadd.s32 %s418, 1
      %p422 = scmp.eq.s32.totalorder %s153, 1
      %p423 = scmp.ne.s32.totalorder %s418, %s420
      %p424 = scmp.eq.s32.totalorder %s153, 0
      %p425 = por %p423, %p424
      %p426 = scmp.ne.s32.totalorder %s418, %s420
      %p427 = scmp.eq.s32.totalorder %s158, 1
      %p428 = por %p426, %p427
      %p429 = scmp.ne.s32.totalorder %s420, %s421
      %p430 = scmp.eq.s32.totalorder %s158, 0
      %p431 = por %p429, %p430
      %p432 = scmp.ne.s32.totalorder %s420, %s421
      %p433 = scmp.eq.s32.totalorder %s159, 1
      %p434 = por %p432, %p433
      %p436 = scmp.ne.s32.totalorder %s421, %s435
      %p437 = scmp.eq.s32.totalorder %s159, 0
      %p438 = por %p436, %p437
      %s440 = sadd.s32 %s439, 1
      %p443 = scmp.eq.s32.totalorder %s153, 1
      %p444 = scmp.ne.s32.totalorder %s439, %s441
      %p445 = scmp.eq.s32.totalorder %s153, 0
      %p446 = por %p444, %p445
      %p447 = scmp.ne.s32.totalorder %s439, %s441
      %p448 = scmp.eq.s32.totalorder %s158, 1
      %p449 = por %p447, %p448
      %p450 = scmp.ne.s32.totalorder %s441, %s442
      %p451 = scmp.eq.s32.totalorder %s158, 0
      %p452 = por %p450, %p451
      %p453 = scmp.ne.s32.totalorder %s441, %s442
      %p454 = scmp.eq.s32.totalorder %s159, 1
      %p455 = por %p453, %p454
      %p457 = scmp.ne.s32.totalorder %s442, %s456
      %p458 = scmp.eq.s32.totalorder %s159, 0
      %p459 = por %p457, %p458
      %s461 = sadd.s32 %s460, 1
      %p464 = scmp.eq.s32.totalorder %s153, 1
      %p465 = scmp.ne.s32.totalorder %s460, %s462
      %p466 = scmp.eq.s32.totalorder %s153, 0
      %p467 = por %p465, %p466
      %p468 = scmp.ne.s32.totalorder %s460, %s462
      %p469 = scmp.eq.s32.totalorder %s158, 1
      %p470 = por %p468, %p469
      %p471 = scmp.ne.s32.totalorder %s462, %s463
      %p472 = scmp.eq.s32.totalorder %s158, 0
      %p473 = por %p471, %p472
      %p474 = scmp.ne.s32.totalorder %s462, %s463
      %p475 = scmp.eq.s32.totalorder %s159, 1
      %p476 = por %p474, %p475
      %p478 = scmp.ne.s32.totalorder %s463, %s477
      %p479 = scmp.eq.s32.totalorder %s159, 0
      %p480 = por %p478, %p479
      %s482 = sadd.s32 %s481, 1
      %p485 = scmp.eq.s32.totalorder %s153, 1
      %p486 = scmp.ne.s32.totalorder %s481, %s483
      %p487 = scmp.eq.s32.totalorder %s153, 0
      %p488 = por %p486, %p487
      %p489 = scmp.ne.s32.totalorder %s481, %s483
      %p490 = scmp.eq.s32.totalorder %s158, 1
      %p491 = por %p489, %p490
      %p492 = scmp.ne.s32.totalorder %s483, %s484
      %p493 = scmp.eq.s32.totalorder %s158, 0
      %p494 = por %p492, %p493
      %p495 = scmp.ne.s32.totalorder %s483, %s484
      %p496 = scmp.eq.s32.totalorder %s159, 1
      %p497 = por %p495, %p496
      %p499 = scmp.ne.s32.totalorder %s484, %s498
      %p500 = scmp.eq.s32.totalorder %s159, 0
      %p501 = por %p499, %p500
      %s503 = sadd.s32 %s502, 1
      %p506 = scmp.eq.s32.totalorder %s153, 1
      %p507 = scmp.ne.s32.totalorder %s502, %s504
      %p508 = scmp.eq.s32.totalorder %s153, 0
      %p509 = por %p507, %p508
      %p510 = scmp.ne.s32.totalorder %s502, %s504
      %p511 = scmp.eq.s32.totalorder %s158, 1
      %p512 = por %p510, %p511
      %p513 = scmp.ne.s32.totalorder %s504, %s505
      %p514 = scmp.eq.s32.totalorder %s158, 0
      %p515 = por %p513, %p514
      %p516 = scmp.ne.s32.totalorder %s504, %s505
      %p517 = scmp.eq.s32.totalorder %s159, 1
      %p518 = por %p516, %p517
      %p520 = scmp.ne.s32.totalorder %s505, %s519
      %p521 = scmp.eq.s32.totalorder %s159, 0
      %p522 = por %p520, %p521
      %s524 = sadd.s32 %s523, 1
      %p527 = scmp.eq.s32.totalorder %s153, 1
      %p528 = scmp.ne.s32.totalorder %s523, %s525
      %p529 = scmp.eq.s32.totalorder %s153, 0
      %p530 = por %p528, %p529
      %p531 = scmp.ne.s32.totalorder %s523, %s525
      %p532 = scmp.eq.s32.totalorder %s158, 1
      %p533 = por %p531, %p532
      %p534 = scmp.ne.s32.totalorder %s525, %s526
      %p535 = scmp.eq.s32.totalorder %s158, 0
      %p536 = por %p534, %p535
      %p537 = scmp.ne.s32.totalorder %s525, %s526
      %p538 = scmp.eq.s32.totalorder %s159, 1
      %p539 = por %p537, %p538
      %p541 = scmp.ne.s32.totalorder %s526, %s540
      %p542 = scmp.eq.s32.totalorder %s159, 0
      %p543 = por %p541, %p542
      %s545 = sadd.s32 %s544, 1
      %p548 = scmp.eq.s32.totalorder %s153, 1
      %p549 = scmp.ne.s32.totalorder %s544, %s546
      %p550 = scmp.eq.s32.totalorder %s153, 0
      %p551 = por %p549, %p550
      %p552 = scmp.ne.s32.totalorder %s544, %s546
      %p553 = scmp.eq.s32.totalorder %s158, 1
      %p554 = por %p552, %p553
      %p555 = scmp.ne.s32.totalorder %s546, %s547
      %p556 = scmp.eq.s32.totalorder %s158, 0
      %p557 = por %p555, %p556
      %p558 = scmp.ne.s32.totalorder %s546, %s547
      %p559 = scmp.eq.s32.totalorder %s159, 1
      %p560 = por %p558, %p559
      %p562 = scmp.ne.s32.totalorder %s547, %s561
      %p563 = scmp.eq.s32.totalorder %s159, 0
      %p564 = por %p562, %p563
      %s566 = sadd.s32 %s565, 1
      %p569 = scmp.eq.s32.totalorder %s153, 1
      %p570 = scmp.ne.s32.totalorder %s565, %s567
      %p571 = scmp.eq.s32.totalorder %s153, 0
      %p572 = por %p570, %p571
      %p573 = scmp.ne.s32.totalorder %s565, %s567
      %p574 = scmp.eq.s32.totalorder %s158, 1
      %p575 = por %p573, %p574
      %p576 = scmp.ne.s32.totalorder %s567, %s568
      %p577 = scmp.eq.s32.totalorder %s158, 0
      %p578 = por %p576, %p577
      %p579 = scmp.ne.s32.totalorder %s567, %s568
      %p580 = scmp.eq.s32.totalorder %s159, 1
      %p581 = por %p579, %p580
      %p583 = scmp.ne.s32.totalorder %s568, %s582
      %p584 = scmp.eq.s32.totalorder %s159, 0
      %p585 = por %p583, %p584
      %s587 = sadd.s32 %s586, 1
      %p590 = scmp.eq.s32.totalorder %s153, 1
      %p591 = scmp.ne.s32.totalorder %s586, %s588
      %p592 = scmp.eq.s32.totalorder %s153, 0
      %p593 = por %p591, %p592
      %p594 = scmp.ne.s32.totalorder %s586, %s588
      %p595 = scmp.eq.s32.totalorder %s158, 1
      %p596 = por %p594, %p595
      %p597 = scmp.ne.s32.totalorder %s588, %s589
      %p598 = scmp.eq.s32.totalorder %s158, 0
      %p599 = por %p597, %p598
      %p600 = scmp.ne.s32.totalorder %s588, %s589
      %p601 = scmp.eq.s32.totalorder %s159, 1
      %p602 = por %p600, %p601
      %p604 = scmp.ne.s32.totalorder %s589, %s603
      %p605 = scmp.eq.s32.totalorder %s159, 0
      %p606 = por %p604, %p605
      %s608 = sadd.s32 %s607, 1
      %p611 = scmp.eq.s32.totalorder %s153, 1
      %p612 = scmp.ne.s32.totalorder %s607, %s609
      %p613 = scmp.eq.s32.totalorder %s153, 0
      %p614 = por %p612, %p613
      %p615 = scmp.ne.s32.totalorder %s607, %s609
      %p616 = scmp.eq.s32.totalorder %s158, 1
      %p617 = por %p615, %p616
      %p618 = scmp.ne.s32.totalorder %s609, %s610
      %p619 = scmp.eq.s32.totalorder %s158, 0
      %p620 = por %p618, %p619
      %p621 = scmp.ne.s32.totalorder %s609, %s610
      %p622 = scmp.eq.s32.totalorder %s159, 1
      %p623 = por %p621, %p622
      %p625 = scmp.ne.s32.totalorder %s610, %s624
      %p626 = scmp.eq.s32.totalorder %s159, 0
      %p627 = por %p625, %p626
      %s629 = sadd.s32 %s628, 1
      %p632 = scmp.eq.s32.totalorder %s153, 1
      %p633 = scmp.ne.s32.totalorder %s628, %s630
      %p634 = scmp.eq.s32.totalorder %s153, 0
      %p635 = por %p633, %p634
      %p636 = scmp.ne.s32.totalorder %s628, %s630
      %p637 = scmp.eq.s32.totalorder %s158, 1
      %p638 = por %p636, %p637
      %p639 = scmp.ne.s32.totalorder %s630, %s631
      %p640 = scmp.eq.s32.totalorder %s158, 0
      %p641 = por %p639, %p640
      %p642 = scmp.ne.s32.totalorder %s630, %s631
      %p643 = scmp.eq.s32.totalorder %s159, 1
      %p644 = por %p642, %p643
      %p646 = scmp.ne.s32.totalorder %s631, %s645
      %p647 = scmp.eq.s32.totalorder %s159, 0
      %p648 = por %p646, %p647
      %s650 = sadd.s32 %s649, 1
      %p653 = scmp.eq.s32.totalorder %s153, 1
      %p654 = scmp.ne.s32.totalorder %s649, %s651
      %p655 = scmp.eq.s32.totalorder %s153, 0
      %p656 = por %p654, %p655
      %p657 = scmp.ne.s32.totalorder %s649, %s651
      %p658 = scmp.eq.s32.totalorder %s158, 1
      %p659 = por %p657, %p658
      %p660 = scmp.ne.s32.totalorder %s651, %s652
      %p661 = scmp.eq.s32.totalorder %s158, 0
      %p662 = por %p660, %p661
      %p663 = scmp.ne.s32.totalorder %s651, %s652
      %p664 = scmp.eq.s32.totalorder %s159, 1
      %p665 = por %p663, %p664
      %p667 = scmp.ne.s32.totalorder %s652, %s666
      %p668 = scmp.eq.s32.totalorder %s159, 0
      %p669 = por %p667, %p668
      %s671 = sadd.s32 %s670, 1
      %p674 = scmp.eq.s32.totalorder %s153, 1
      %p675 = scmp.ne.s32.totalorder %s670, %s672
      %p676 = scmp.eq.s32.totalorder %s153, 0
      %p677 = por %p675, %p676
      %p678 = scmp.ne.s32.totalorder %s670, %s672
      %p679 = scmp.eq.s32.totalorder %s158, 1
      %p680 = por %p678, %p679
      %p681 = scmp.ne.s32.totalorder %s672, %s673
      %p682 = scmp.eq.s32.totalorder %s158, 0
      %p683 = por %p681, %p682
      %p684 = scmp.ne.s32.totalorder %s672, %s673
      %p685 = scmp.eq.s32.totalorder %s159, 1
      %p686 = por %p684, %p685
      %p688 = scmp.ne.s32.totalorder %s673, %s687
      %p689 = scmp.eq.s32.totalorder %s159, 0
      %p690 = por %p688, %p689
      %s692 = sadd.s32 %s691, 1
      %p695 = scmp.eq.s32.totalorder %s153, 1
      %p696 = scmp.ne.s32.totalorder %s691, %s693
      %p697 = scmp.eq.s32.totalorder %s153, 0
      %p698 = por %p696, %p697
      %p699 = scmp.ne.s32.totalorder %s691, %s693
      %p700 = scmp.eq.s32.totalorder %s158, 1
      %p701 = por %p699, %p700
      %p702 = scmp.ne.s32.totalorder %s693, %s694
      %p703 = scmp.eq.s32.totalorder %s158, 0
      %p704 = por %p702, %p703
      %p705 = scmp.ne.s32.totalorder %s693, %s694
      %p706 = scmp.eq.s32.totalorder %s159, 1
      %p707 = por %p705, %p706
      %p709 = scmp.ne.s32.totalorder %s694, %s708
      %p710 = scmp.eq.s32.totalorder %s159, 0
      %p711 = por %p709, %p710
      %s713 = sadd.s32 %s712, 1
      %p716 = scmp.eq.s32.totalorder %s153, 1
      %p717 = scmp.ne.s32.totalorder %s712, %s714
      %p718 = scmp.eq.s32.totalorder %s153, 0
      %p719 = por %p717, %p718
      %p720 = scmp.ne.s32.totalorder %s712, %s714
      %p721 = scmp.eq.s32.totalorder %s158, 1
      %p722 = por %p720, %p721
      %p723 = scmp.ne.s32.totalorder %s714, %s715
      %p724 = scmp.eq.s32.totalorder %s158, 0
      %p725 = por %p723, %p724
      %p726 = scmp.ne.s32.totalorder %s714, %s715
      %p727 = scmp.eq.s32.totalorder %s159, 1
      %p728 = por %p726, %p727
      %p730 = scmp.ne.s32.totalorder %s715, %s729
      %p731 = scmp.eq.s32.totalorder %s159, 0
      %p732 = por %p730, %p731
      %s734 = sadd.s32 %s733, 1
      %p737 = scmp.eq.s32.totalorder %s153, 1
      %p738 = scmp.ne.s32.totalorder %s733, %s735
      %p739 = scmp.eq.s32.totalorder %s153, 0
      %p740 = por %p738, %p739
      %p741 = scmp.ne.s32.totalorder %s733, %s735
      %p742 = scmp.eq.s32.totalorder %s158, 1
      %p743 = por %p741, %p742
      %p744 = scmp.ne.s32.totalorder %s735, %s736
      %p745 = scmp.eq.s32.totalorder %s158, 0
      %p746 = por %p744, %p745
      %p747 = scmp.ne.s32.totalorder %s735, %s736
      %p748 = scmp.eq.s32.totalorder %s159, 1
      %p749 = por %p747, %p748
      %p751 = scmp.ne.s32.totalorder %s736, %s750
      %p752 = scmp.eq.s32.totalorder %s159, 0
      %p753 = por %p751, %p752
      %s755 = sadd.s32 %s754, 1
      %p758 = scmp.eq.s32.totalorder %s153, 1
      %p759 = scmp.ne.s32.totalorder %s754, %s756
      %p760 = scmp.eq.s32.totalorder %s153, 0
      %p761 = por %p759, %p760
      %p762 = scmp.ne.s32.totalorder %s754, %s756
      %p763 = scmp.eq.s32.totalorder %s158, 1
      %p764 = por %p762, %p763
      %p765 = scmp.ne.s32.totalorder %s756, %s757
      %p766 = scmp.eq.s32.totalorder %s158, 0
      %p767 = por %p765, %p766
      %p768 = scmp.ne.s32.totalorder %s756, %s757
      %p769 = scmp.eq.s32.totalorder %s159, 1
      %p770 = por %p768, %p769
      %p772 = scmp.ne.s32.totalorder %s757, %s771
      %p773 = scmp.eq.s32.totalorder %s159, 0
      %p774 = por %p772, %p773
      %s776 = sadd.s32 %s775, 1
      %p779 = scmp.eq.s32.totalorder %s153, 1
      %p780 = scmp.ne.s32.totalorder %s775, %s777
      %p781 = scmp.eq.s32.totalorder %s153, 0
      %p782 = por %p780, %p781
      %p783 = scmp.ne.s32.totalorder %s775, %s777
      %p784 = scmp.eq.s32.totalorder %s158, 1
      %p785 = por %p783, %p784
      %p786 = scmp.ne.s32.totalorder %s777, %s778
      %p787 = scmp.eq.s32.totalorder %s158, 0
      %p788 = por %p786, %p787
      %p789 = scmp.ne.s32.totalorder %s777, %s778
      %p790 = scmp.eq.s32.totalorder %s159, 1
      %p791 = por %p789, %p790
      %p793 = scmp.ne.s32.totalorder %s778, %s792
      %p794 = scmp.eq.s32.totalorder %s159, 0
      %p795 = por %p793, %p794
      %s797 = sadd.s32 %s796, 1
      %p800 = scmp.eq.s32.totalorder %s153, 1
      %p801 = scmp.ne.s32.totalorder %s796, %s798
      %p802 = scmp.eq.s32.totalorder %s153, 0
      %p803 = por %p801, %p802
      %p804 = scmp.ne.s32.totalorder %s796, %s798
      %p805 = scmp.eq.s32.totalorder %s158, 1
      %p806 = por %p804, %p805
      %p807 = scmp.ne.s32.totalorder %s798, %s799
      %p808 = scmp.eq.s32.totalorder %s158, 0
      %p809 = por %p807, %p808
      %p810 = scmp.ne.s32.totalorder %s798, %s799
      %p811 = scmp.eq.s32.totalorder %s159, 1
      %p812 = por %p810, %p811
      %p814 = scmp.ne.s32.totalorder %s799, %s813
      %p815 = scmp.eq.s32.totalorder %s159, 0
      %p816 = por %p814, %p815
      %s818 = sadd.s32 %s817, 1
      %p821 = scmp.eq.s32.totalorder %s153, 1
      %p822 = scmp.ne.s32.totalorder %s817, %s819
      %p823 = scmp.eq.s32.totalorder %s153, 0
      %p824 = por %p822, %p823
      %p825 = scmp.ne.s32.totalorder %s817, %s819
      %p826 = scmp.eq.s32.totalorder %s158, 1
      %p827 = por %p825, %p826
      %p828 = scmp.ne.s32.totalorder %s819, %s820
      %p829 = scmp.eq.s32.totalorder %s158, 0
      %p830 = por %p828, %p829
      %p831 = scmp.ne.s32.totalorder %s819, %s820
      %p832 = scmp.eq.s32.totalorder %s159, 1
      %p833 = por %p831, %p832
      %p835 = scmp.ne.s32.totalorder %s820, %s834
      %p836 = scmp.eq.s32.totalorder %s159, 0
      %p837 = por %p835, %p836
      %s839 = sadd.s32 %s838, 1
      %p842 = scmp.eq.s32.totalorder %s153, 1
      %p843 = scmp.ne.s32.totalorder %s838, %s840
      %p844 = scmp.eq.s32.totalorder %s153, 0
      %p845 = por %p843, %p844
      %p846 = scmp.ne.s32.totalorder %s838, %s840
      %p847 = scmp.eq.s32.totalorder %s158, 1
      %p848 = por %p846, %p847
      %p849 = scmp.ne.s32.totalorder %s840, %s841
      %p850 = scmp.eq.s32.totalorder %s158, 0
      %p851 = por %p849, %p850
      %p852 = scmp.ne.s32.totalorder %s840, %s841
      %p853 = scmp.eq.s32.totalorder %s159, 1
      %p854 = por %p852, %p853
      %p856 = scmp.ne.s32.totalorder %s841, %s855
      %p857 = scmp.eq.s32.totalorder %s159, 0
      %p858 = por %p856, %p857
      %s860 = sadd.s32 %s859, 1
      %p863 = scmp.eq.s32.totalorder %s153, 1
      %p864 = scmp.ne.s32.totalorder %s859, %s861
      %p865 = scmp.eq.s32.totalorder %s153, 0
      %p866 = por %p864, %p865
      %p867 = scmp.ne.s32.totalorder %s859, %s861
      %p868 = scmp.eq.s32.totalorder %s158, 1
      %p869 = por %p867, %p868
      %p870 = scmp.ne.s32.totalorder %s861, %s862
      %p871 = scmp.eq.s32.totalorder %s158, 0
      %p872 = por %p870, %p871
      %p873 = scmp.ne.s32.totalorder %s861, %s862
      %p874 = scmp.eq.s32.totalorder %s159, 1
      %p875 = por %p873, %p874
      %p877 = scmp.ne.s32.totalorder %s862, %s876
      %p878 = scmp.eq.s32.totalorder %s159, 0
      %p879 = por %p877, %p878
      %s881 = sadd.s32 %s880, 1
      %p884 = scmp.eq.s32.totalorder %s153, 1
      %p885 = scmp.ne.s32.totalorder %s880, %s882
      %p886 = scmp.eq.s32.totalorder %s153, 0
      %p887 = por %p885, %p886
      %p888 = scmp.ne.s32.totalorder %s880, %s882
      %p889 = scmp.eq.s32.totalorder %s158, 1
      %p890 = por %p888, %p889
      %p891 = scmp.ne.s32.totalorder %s882, %s883
      %p892 = scmp.eq.s32.totalorder %s158, 0
      %p893 = por %p891, %p892
      %p894 = scmp.ne.s32.totalorder %s882, %s883
      %p895 = scmp.eq.s32.totalorder %s159, 1
      %p896 = por %p894, %p895
      %p898 = scmp.ne.s32.totalorder %s883, %s897
      %p899 = scmp.eq.s32.totalorder %s159, 0
      %p900 = por %p898, %p899
      %s902 = sadd.s32 %s901, 1
      %p905 = scmp.eq.s32.totalorder %s153, 1
      %p906 = scmp.ne.s32.totalorder %s901, %s903
      %p907 = scmp.eq.s32.totalorder %s153, 0
      %p908 = por %p906, %p907
      %p909 = scmp.ne.s32.totalorder %s901, %s903
      %p910 = scmp.eq.s32.totalorder %s158, 1
      %p911 = por %p909, %p910
      %p912 = scmp.ne.s32.totalorder %s903, %s904
      %p913 = scmp.eq.s32.totalorder %s158, 0
      %p914 = por %p912, %p913
      %p915 = scmp.ne.s32.totalorder %s903, %s904
      %p916 = scmp.eq.s32.totalorder %s159, 1
      %p917 = por %p915, %p916
      %p919 = scmp.ne.s32.totalorder %s904, %s918
      %p920 = scmp.eq.s32.totalorder %s159, 0
      %p921 = por %p919, %p920
      %s923 = sadd.s32 %s922, 1
      %p926 = scmp.eq.s32.totalorder %s153, 1
      %p927 = scmp.ne.s32.totalorder %s922, %s924
      %p928 = scmp.eq.s32.totalorder %s153, 0
      %p929 = por %p927, %p928
      %p930 = scmp.ne.s32.totalorder %s922, %s924
      %p931 = scmp.eq.s32.totalorder %s158, 1
      %p932 = por %p930, %p931
      %p933 = scmp.ne.s32.totalorder %s924, %s925
      %p934 = scmp.eq.s32.totalorder %s158, 0
      %p935 = por %p933, %p934
      %p936 = scmp.ne.s32.totalorder %s924, %s925
      %p937 = scmp.eq.s32.totalorder %s159, 1
      %p938 = por %p936, %p937
      %p940 = scmp.ne.s32.totalorder %s925, %s939
      %p941 = scmp.eq.s32.totalorder %s159, 0
      %p942 = por %p940, %p941
      %s944 = sadd.s32 %s943, 1
      %p947 = scmp.eq.s32.totalorder %s153, 1
      %p948 = scmp.ne.s32.totalorder %s943, %s945
      %p949 = scmp.eq.s32.totalorder %s153, 0
      %p950 = por %p948, %p949
      %p951 = scmp.ne.s32.totalorder %s943, %s945
      %p952 = scmp.eq.s32.totalorder %s158, 1
      %p953 = por %p951, %p952
      %p954 = scmp.ne.s32.totalorder %s945, %s946
      %p955 = scmp.eq.s32.totalorder %s158, 0
      %p956 = por %p954, %p955
      %p957 = scmp.ne.s32.totalorder %s945, %s946
      %p958 = scmp.eq.s32.totalorder %s159, 1
      %p959 = por %p957, %p958
      %p961 = scmp.ne.s32.totalorder %s946, %s960
      %p962 = scmp.eq.s32.totalorder %s159, 0
      %p963 = por %p961, %p962
      %s965 = sadd.s32 %s964, 1
      %p968 = scmp.eq.s32.totalorder %s153, 1
      %p969 = scmp.ne.s32.totalorder %s964, %s966
      %p970 = scmp.eq.s32.totalorder %s153, 0
      %p971 = por %p969, %p970
      %p972 = scmp.ne.s32.totalorder %s964, %s966
      %p973 = scmp.eq.s32.totalorder %s158, 1
      %p974 = por %p972, %p973
      %p975 = scmp.ne.s32.totalorder %s966, %s967
      %p976 = scmp.eq.s32.totalorder %s158, 0
      %p977 = por %p975, %p976
      %p978 = scmp.ne.s32.totalorder %s966, %s967
      %p979 = scmp.eq.s32.totalorder %s159, 1
      %p980 = por %p978, %p979
      %p982 = scmp.ne.s32.totalorder %s967, %s981
      %p983 = scmp.eq.s32.totalorder %s159, 0
      %p984 = por %p982, %p983
      %s986 = sadd.s32 %s985, 1
      %p989 = scmp.eq.s32.totalorder %s153, 1
      %p990 = scmp.ne.s32.totalorder %s985, %s987
      %p991 = scmp.eq.s32.totalorder %s153, 0
      %p992 = por %p990, %p991
      %p993 = scmp.ne.s32.totalorder %s985, %s987
      %p994 = scmp.eq.s32.totalorder %s158, 1
      %p995 = por %p993, %p994
      %p996 = scmp.ne.s32.totalorder %s987, %s988
      %p997 = scmp.eq.s32.totalorder %s158, 0
      %p998 = por %p996, %p997
      %p999 = scmp.ne.s32.totalorder %s987, %s988
      %p1000 = scmp.eq.s32.totalorder %s159, 1
      %p1001 = por %p999, %p1000
      %p1003 = scmp.ne.s32.totalorder %s988, %s1002
      %p1004 = scmp.eq.s32.totalorder %s159, 0
      %p1005 = por %p1003, %p1004
      %s1007 = sadd.s32 %s1006, 1
      %p1010 = scmp.eq.s32.totalorder %s153, 1
      %p1011 = scmp.ne.s32.totalorder %s1006, %s1008
      %p1012 = scmp.eq.s32.totalorder %s153, 0
      %p1013 = por %p1011, %p1012
      %p1014 = scmp.ne.s32.totalorder %s1006, %s1008
      %p1015 = scmp.eq.s32.totalorder %s158, 1
      %p1016 = por %p1014, %p1015
      %p1017 = scmp.ne.s32.totalorder %s1008, %s1009
      %p1018 = scmp.eq.s32.totalorder %s158, 0
      %p1019 = por %p1017, %p1018
      %p1020 = scmp.ne.s32.totalorder %s1008, %s1009
      %p1021 = scmp.eq.s32.totalorder %s159, 1
      %p1022 = por %p1020, %p1021
      %p1024 = scmp.ne.s32.totalorder %s1009, %s1023
      %p1025 = scmp.eq.s32.totalorder %s159, 0
      %p1026 = por %p1024, %p1025
      %s1028 = sadd.s32 %s1027, 1
      %p1031 = scmp.eq.s32.totalorder %s153, 1
      %p1032 = scmp.ne.s32.totalorder %s1027, %s1029
      %p1033 = scmp.eq.s32.totalorder %s153, 0
      %p1034 = por %p1032, %p1033
      %p1035 = scmp.ne.s32.totalorder %s1027, %s1029
      %p1036 = scmp.eq.s32.totalorder %s158, 1
      %p1037 = por %p1035, %p1036
      %p1038 = scmp.ne.s32.totalorder %s1029, %s1030
      %p1039 = scmp.eq.s32.totalorder %s158, 0
      %p1040 = por %p1038, %p1039
      %p1041 = scmp.ne.s32.totalorder %s1029, %s1030
      %p1042 = scmp.eq.s32.totalorder %s159, 1
      %p1043 = por %p1041, %p1042
      %p1045 = scmp.ne.s32.totalorder %s1030, %s1044
      %p1046 = scmp.eq.s32.totalorder %s159, 0
      %p1047 = por %p1045, %p1046
      %s1049 = sadd.s32 %s1048, 1
      %p1052 = scmp.eq.s32.totalorder %s153, 1
      %p1053 = scmp.ne.s32.totalorder %s1048, %s1050
      %p1054 = scmp.eq.s32.totalorder %s153, 0
      %p1055 = por %p1053, %p1054
      %p1056 = scmp.ne.s32.totalorder %s1048, %s1050
      %p1057 = scmp.eq.s32.totalorder %s158, 1
      %p1058 = por %p1056, %p1057
      %p1059 = scmp.ne.s32.totalorder %s1050, %s1051
      %p1060 = scmp.eq.s32.totalorder %s158, 0
      %p1061 = por %p1059, %p1060
      %p1062 = scmp.ne.s32.totalorder %s1050, %s1051
      %p1063 = scmp.eq.s32.totalorder %s159, 1
      %p1064 = por %p1062, %p1063
      %p1066 = scmp.ne.s32.totalorder %s1051, %s1065
      %p1067 = scmp.eq.s32.totalorder %s159, 0
      %p1068 = por %p1066, %p1067
      %s1070 = sadd.s32 %s1069, 1
      %p1073 = scmp.eq.s32.totalorder %s153, 1
      %p1074 = scmp.ne.s32.totalorder %s1069, %s1071
      %p1075 = scmp.eq.s32.totalorder %s153, 0
      %p1076 = por %p1074, %p1075
      %p1077 = scmp.ne.s32.totalorder %s1069, %s1071
      %p1078 = scmp.eq.s32.totalorder %s158, 1
      %p1079 = por %p1077, %p1078
      %p1080 = scmp.ne.s32.totalorder %s1071, %s1072
      %p1081 = scmp.eq.s32.totalorder %s158, 0
      %p1082 = por %p1080, %p1081
      %p1083 = scmp.ne.s32.totalorder %s1071, %s1072
      %p1084 = scmp.eq.s32.totalorder %s159, 1
      %p1085 = por %p1083, %p1084
      %p1087 = scmp.ne.s32.totalorder %s1072, %s1086
      %p1088 = scmp.eq.s32.totalorder %s159, 0
      %p1089 = por %p1087, %p1088
      %s1091 = sadd.s32 %s1090, 1
      %p1094 = scmp.eq.s32.totalorder %s153, 1
      %p1095 = scmp.ne.s32.totalorder %s1090, %s1092
      %p1096 = scmp.eq.s32.totalorder %s153, 0
      %p1097 = por %p1095, %p1096
      %p1098 = scmp.ne.s32.totalorder %s1090, %s1092
      %p1099 = scmp.eq.s32.totalorder %s158, 1
      %p1100 = por %p1098, %p1099
      %p1101 = scmp.ne.s32.totalorder %s1092, %s1093
      %p1102 = scmp.eq.s32.totalorder %s158, 0
      %p1103 = por %p1101, %p1102
      %p1104 = scmp.ne.s32.totalorder %s1092, %s1093
      %p1105 = scmp.eq.s32.totalorder %s159, 1
      %p1106 = por %p1104, %p1105
      %p1108 = scmp.ne.s32.totalorder %s1093, %s1107
      %p1109 = scmp.eq.s32.totalorder %s159, 0
      %p1110 = por %p1108, %p1109
      %s1112 = sadd.s32 %s1111, 1
      %p1115 = scmp.eq.s32.totalorder %s153, 1
      %p1116 = scmp.ne.s32.totalorder %s1111, %s1113
      %p1117 = scmp.eq.s32.totalorder %s153, 0
      %p1118 = por %p1116, %p1117
      %p1119 = scmp.ne.s32.totalorder %s1111, %s1113
      %p1120 = scmp.eq.s32.totalorder %s158, 1
      %p1121 = por %p1119, %p1120
      %p1122 = scmp.ne.s32.totalorder %s1113, %s1114
      %p1123 = scmp.eq.s32.totalorder %s158, 0
      %p1124 = por %p1122, %p1123
      %p1125 = scmp.ne.s32.totalorder %s1113, %s1114
      %p1126 = scmp.eq.s32.totalorder %s159, 1
      %p1127 = por %p1125, %p1126
      %p1129 = scmp.ne.s32.totalorder %s1114, %s1128
      %p1130 = scmp.eq.s32.totalorder %s159, 0
      %p1131 = por %p1129, %p1130
      %s1133 = sadd.s32 %s1132, 1
      %p1136 = scmp.eq.s32.totalorder %s153, 1
      %p1137 = scmp.ne.s32.totalorder %s1132, %s1134
      %p1138 = scmp.eq.s32.totalorder %s153, 0
      %p1139 = por %p1137, %p1138
      %p1140 = scmp.ne.s32.totalorder %s1132, %s1134
      %p1141 = scmp.eq.s32.totalorder %s158, 1
      %p1142 = por %p1140, %p1141
      %p1143 = scmp.ne.s32.totalorder %s1134, %s1135
      %p1144 = scmp.eq.s32.totalorder %s158, 0
      %p1145 = por %p1143, %p1144
      %p1146 = scmp.ne.s32.totalorder %s1134, %s1135
      %p1147 = scmp.eq.s32.totalorder %s159, 1
      %p1148 = por %p1146, %p1147
      %p1150 = scmp.ne.s32.totalorder %s1135, %s1149
      %p1151 = scmp.eq.s32.totalorder %s159, 0
      %p1152 = por %p1150, %p1151
      %s1154 = sadd.s32 %s1153, 1
      %p1157 = scmp.eq.s32.totalorder %s153, 1
      %p1158 = scmp.ne.s32.totalorder %s1153, %s1155
      %p1159 = scmp.eq.s32.totalorder %s153, 0
      %p1160 = por %p1158, %p1159
      %p1161 = scmp.ne.s32.totalorder %s1153, %s1155
      %p1162 = scmp.eq.s32.totalorder %s158, 1
      %p1163 = por %p1161, %p1162
      %p1164 = scmp.ne.s32.totalorder %s1155, %s1156
      %p1165 = scmp.eq.s32.totalorder %s158, 0
      %p1166 = por %p1164, %p1165
      %p1167 = scmp.ne.s32.totalorder %s1155, %s1156
      %p1168 = scmp.eq.s32.totalorder %s159, 1
      %p1169 = por %p1167, %p1168
      %p1171 = scmp.ne.s32.totalorder %s1156, %s1170
      %p1172 = scmp.eq.s32.totalorder %s159, 0
      %p1173 = por %p1171, %p1172
      %s1175 = sadd.s32 %s1174, 1
      %p1178 = scmp.eq.s32.totalorder %s153, 1
      %p1179 = scmp.ne.s32.totalorder %s1174, %s1176
      %p1180 = scmp.eq.s32.totalorder %s153, 0
      %p1181 = por %p1179, %p1180
      %p1182 = scmp.ne.s32.totalorder %s1174, %s1176
      %p1183 = scmp.eq.s32.totalorder %s158, 1
      %p1184 = por %p1182, %p1183
      %p1185 = scmp.ne.s32.totalorder %s1176, %s1177
      %p1186 = scmp.eq.s32.totalorder %s158, 0
      %p1187 = por %p1185, %p1186
      %p1188 = scmp.ne.s32.totalorder %s1176, %s1177
      %p1189 = scmp.eq.s32.totalorder %s159, 1
      %p1190 = por %p1188, %p1189
      %p1192 = scmp.ne.s32.totalorder %s1177, %s1191
      %p1193 = scmp.eq.s32.totalorder %s159, 0
      %p1194 = por %p1192, %p1193
      %s1196 = sadd.s32 %s1195, 1
      %p1199 = scmp.eq.s32.totalorder %s153, 1
      %p1200 = scmp.ne.s32.totalorder %s1195, %s1197
      %p1201 = scmp.eq.s32.totalorder %s153, 0
      %p1202 = por %p1200, %p1201
      %p1203 = scmp.ne.s32.totalorder %s1195, %s1197
      %p1204 = scmp.eq.s32.totalorder %s158, 1
      %p1205 = por %p1203, %p1204
      %p1206 = scmp.ne.s32.totalorder %s1197, %s1198
      %p1207 = scmp.eq.s32.totalorder %s158, 0
      %p1208 = por %p1206, %p1207
      %p1209 = scmp.ne.s32.totalorder %s1197, %s1198
      %p1210 = scmp.eq.s32.totalorder %s159, 1
      %p1211 = por %p1209, %p1210
      %p1213 = scmp.ne.s32.totalorder %s1198, %s1212
      %p1214 = scmp.eq.s32.totalorder %s159, 0
      %p1215 = por %p1213, %p1214
      %s1217 = sadd.s32 %s1216, 1
      %p1220 = scmp.eq.s32.totalorder %s153, 1
      %p1221 = scmp.ne.s32.totalorder %s1216, %s1218
      %p1222 = scmp.eq.s32.totalorder %s153, 0
      %p1223 = por %p1221, %p1222
      %p1224 = scmp.ne.s32.totalorder %s1216, %s1218
      %p1225 = scmp.eq.s32.totalorder %s158, 1
      %p1226 = por %p1224, %p1225
      %p1227 = scmp.ne.s32.totalorder %s1218, %s1219
      %p1228 = scmp.eq.s32.totalorder %s158, 0
      %p1229 = por %p1227, %p1228
      %p1230 = scmp.ne.s32.totalorder %s1218, %s1219
      %p1231 = scmp.eq.s32.totalorder %s159, 1
      %p1232 = por %p1230, %p1231
      %p1234 = scmp.ne.s32.totalorder %s1219, %s1233
      %p1235 = scmp.eq.s32.totalorder %s159, 0
      %p1236 = por %p1234, %p1235
      %s1238 = sadd.s32 %s1237, 1
      %p1241 = scmp.eq.s32.totalorder %s153, 1
      %p1242 = scmp.ne.s32.totalorder %s1237, %s1239
      %p1243 = scmp.eq.s32.totalorder %s153, 0
      %p1244 = por %p1242, %p1243
      %p1245 = scmp.ne.s32.totalorder %s1237, %s1239
      %p1246 = scmp.eq.s32.totalorder %s158, 1
      %p1247 = por %p1245, %p1246
      %p1248 = scmp.ne.s32.totalorder %s1239, %s1240
      %p1249 = scmp.eq.s32.totalorder %s158, 0
      %p1250 = por %p1248, %p1249
      %p1251 = scmp.ne.s32.totalorder %s1239, %s1240
      %p1252 = scmp.eq.s32.totalorder %s159, 1
      %p1253 = por %p1251, %p1252
      %p1255 = scmp.ne.s32.totalorder %s1240, %s1254
      %p1256 = scmp.eq.s32.totalorder %s159, 0
      %p1257 = por %p1255, %p1256
      %s1259 = sadd.s32 %s1258, 1
      %p1262 = scmp.eq.s32.totalorder %s153, 1
      %p1263 = scmp.ne.s32.totalorder %s1258, %s1260
      %p1264 = scmp.eq.s32.totalorder %s153, 0
      %p1265 = por %p1263, %p1264
      %p1266 = scmp.ne.s32.totalorder %s1258, %s1260
      %p1267 = scmp.eq.s32.totalorder %s158, 1
      %p1268 = por %p1266, %p1267
      %p1269 = scmp.ne.s32.totalorder %s1260, %s1261
      %p1270 = scmp.eq.s32.totalorder %s158, 0
      %p1271 = por %p1269, %p1270
      %p1272 = scmp.ne.s32.totalorder %s1260, %s1261
      %p1273 = scmp.eq.s32.totalorder %s159, 1
      %p1274 = por %p1272, %p1273
      %p1276 = scmp.ne.s32.totalorder %s1261, %s1275
      %p1277 = scmp.eq.s32.totalorder %s159, 0
      %p1278 = por %p1276, %p1277
      %s1280 = sadd.s32 %s1279, 1
      %p1283 = scmp.eq.s32.totalorder %s153, 1
      %p1284 = scmp.ne.s32.totalorder %s1279, %s1281
      %p1285 = scmp.eq.s32.totalorder %s153, 0
      %p1286 = por %p1284, %p1285
      %p1287 = scmp.ne.s32.totalorder %s1279, %s1281
      %p1288 = scmp.eq.s32.totalorder %s158, 1
      %p1289 = por %p1287, %p1288
      %p1290 = scmp.ne.s32.totalorder %s1281, %s1282
      %p1291 = scmp.eq.s32.totalorder %s158, 0
      %p1292 = por %p1290, %p1291
      %p1293 = scmp.ne.s32.totalorder %s1281, %s1282
      %p1294 = scmp.eq.s32.totalorder %s159, 1
      %p1295 = por %p1293, %p1294
      %p1297 = scmp.ne.s32.totalorder %s1282, %s1296
      %p1298 = scmp.eq.s32.totalorder %s159, 0
      %p1299 = por %p1297, %p1298
      %s1301 = sadd.s32 %s1300, 1
      %p1304 = scmp.eq.s32.totalorder %s153, 1
      %p1305 = scmp.ne.s32.totalorder %s1300, %s1302
      %p1306 = scmp.eq.s32.totalorder %s153, 0
      %p1307 = por %p1305, %p1306
      %p1308 = scmp.ne.s32.totalorder %s1300, %s1302
      %p1309 = scmp.eq.s32.totalorder %s158, 1
      %p1310 = por %p1308, %p1309
      %p1311 = scmp.ne.s32.totalorder %s1302, %s1303
      %p1312 = scmp.eq.s32.totalorder %s158, 0
      %p1313 = por %p1311, %p1312
      %p1314 = scmp.ne.s32.totalorder %s1302, %s1303
      %p1315 = scmp.eq.s32.totalorder %s159, 1
      %p1316 = por %p1314, %p1315
      %p1318 = scmp.ne.s32.totalorder %s1303, %s1317
      %p1319 = scmp.eq.s32.totalorder %s159, 0
      %p1320 = por %p1318, %p1319
      %s1322 = sadd.s32 %s1321, 1
      %p1325 = scmp.eq.s32.totalorder %s153, 1
      %p1326 = scmp.ne.s32.totalorder %s1321, %s1323
      %p1327 = scmp.eq.s32.totalorder %s153, 0
      %p1328 = por %p1326, %p1327
      %p1329 = scmp.ne.s32.totalorder %s1321, %s1323
      %p1330 = scmp.eq.s32.totalorder %s158, 1
      %p1331 = por %p1329, %p1330
      %p1332 = scmp.ne.s32.totalorder %s1323, %s1324
      %p1333 = scmp.eq.s32.totalorder %s158, 0
      %p1334 = por %p1332, %p1333
      %p1335 = scmp.ne.s32.totalorder %s1323, %s1324
      %p1336 = scmp.eq.s32.totalorder %s159, 1
      %p1337 = por %p1335, %p1336
      %p1339 = scmp.ne.s32.totalorder %s1324, %s1338
      %p1340 = scmp.eq.s32.totalorder %s159, 0
      %p1341 = por %p1339, %p1340
      %s1343 = sadd.s32 %s1342, 1
      %p1346 = scmp.eq.s32.totalorder %s153, 1
      %p1347 = scmp.ne.s32.totalorder %s1342, %s1344
      %p1348 = scmp.eq.s32.totalorder %s153, 0
      %p1349 = por %p1347, %p1348
      %p1350 = scmp.ne.s32.totalorder %s1342, %s1344
      %p1351 = scmp.eq.s32.totalorder %s158, 1
      %p1352 = por %p1350, %p1351
      %p1353 = scmp.ne.s32.totalorder %s1344, %s1345
      %p1354 = scmp.eq.s32.totalorder %s158, 0
      %p1355 = por %p1353, %p1354
      %p1356 = scmp.ne.s32.totalorder %s1344, %s1345
      %p1357 = scmp.eq.s32.totalorder %s159, 1
      %p1358 = por %p1356, %p1357
      %p1360 = scmp.ne.s32.totalorder %s1345, %s1359
      %p1361 = scmp.eq.s32.totalorder %s159, 0
      %p1362 = por %p1360, %p1361
      %s1364 = sadd.s32 %s1363, 1
      %p1367 = scmp.eq.s32.totalorder %s153, 1
      %p1368 = scmp.ne.s32.totalorder %s1363, %s1365
      %p1369 = scmp.eq.s32.totalorder %s153, 0
      %p1370 = por %p1368, %p1369
      %p1371 = scmp.ne.s32.totalorder %s1363, %s1365
      %p1372 = scmp.eq.s32.totalorder %s158, 1
      %p1373 = por %p1371, %p1372
      %p1374 = scmp.ne.s32.totalorder %s1365, %s1366
      %p1375 = scmp.eq.s32.totalorder %s158, 0
      %p1376 = por %p1374, %p1375
      %p1377 = scmp.ne.s32.totalorder %s1365, %s1366
      %p1378 = scmp.eq.s32.totalorder %s159, 1
      %p1379 = por %p1377, %p1378
      %p1381 = scmp.ne.s32.totalorder %s1366, %s1380
      %p1382 = scmp.eq.s32.totalorder %s159, 0
      %p1383 = por %p1381, %p1382
      %s1385 = sadd.s32 %s1384, 1
      %p1388 = scmp.eq.s32.totalorder %s153, 1
      %p1389 = scmp.ne.s32.totalorder %s1384, %s1386
      %p1390 = scmp.eq.s32.totalorder %s153, 0
      %p1391 = por %p1389, %p1390
      %p1392 = scmp.ne.s32.totalorder %s1384, %s1386
      %p1393 = scmp.eq.s32.totalorder %s158, 1
      %p1394 = por %p1392, %p1393
      %p1395 = scmp.ne.s32.totalorder %s1386, %s1387
      %p1396 = scmp.eq.s32.totalorder %s158, 0
      %p1397 = por %p1395, %p1396
      %p1398 = scmp.ne.s32.totalorder %s1386, %s1387
      %p1399 = scmp.eq.s32.totalorder %s159, 1
      %p1400 = por %p1398, %p1399
      %p1402 = scmp.ne.s32.totalorder %s1387, %s1401
      %p1403 = scmp.eq.s32.totalorder %s159, 0
      %p1404 = por %p1402, %p1403
      %s1406 = sadd.s32 %s1405, 1
      %p1409 = scmp.eq.s32.totalorder %s153, 1
      %p1410 = scmp.ne.s32.totalorder %s1405, %s1407
      %p1411 = scmp.eq.s32.totalorder %s153, 0
      %p1412 = por %p1410, %p1411
      %p1413 = scmp.ne.s32.totalorder %s1405, %s1407
      %p1414 = scmp.eq.s32.totalorder %s158, 1
      %p1415 = por %p1413, %p1414
      %p1416 = scmp.ne.s32.totalorder %s1407, %s1408
      %p1417 = scmp.eq.s32.totalorder %s158, 0
      %p1418 = por %p1416, %p1417
      %p1419 = scmp.ne.s32.totalorder %s1407, %s1408
      %p1420 = scmp.eq.s32.totalorder %s159, 1
      %p1421 = por %p1419, %p1420
      %p1423 = scmp.ne.s32.totalorder %s1408, %s1422
      %p1424 = scmp.eq.s32.totalorder %s159, 0
      %p1425 = por %p1423, %p1424
      %s1427 = sadd.s32 %s1426, 1
      %p1430 = scmp.eq.s32.totalorder %s153, 1
      %p1431 = scmp.ne.s32.totalorder %s1426, %s1428
      %p1432 = scmp.eq.s32.totalorder %s153, 0
      %p1433 = por %p1431, %p1432
      %p1434 = scmp.ne.s32.totalorder %s1426, %s1428
      %p1435 = scmp.eq.s32.totalorder %s158, 1
      %p1436 = por %p1434, %p1435
      %p1437 = scmp.ne.s32.totalorder %s1428, %s1429
      %p1438 = scmp.eq.s32.totalorder %s158, 0
      %p1439 = por %p1437, %p1438
      %p1440 = scmp.ne.s32.totalorder %s1428, %s1429
      %p1441 = scmp.eq.s32.totalorder %s159, 1
      %p1442 = por %p1440, %p1441
      %p1444 = scmp.ne.s32.totalorder %s1429, %s1443
      %p1445 = scmp.eq.s32.totalorder %s159, 0
      %p1446 = por %p1444, %p1445
      %s1448 = sadd.s32 %s1447, 1
      %p1451 = scmp.eq.s32.totalorder %s153, 1
      %p1452 = scmp.ne.s32.totalorder %s1447, %s1449
      %p1453 = scmp.eq.s32.totalorder %s153, 0
      %p1454 = por %p1452, %p1453
      %p1455 = scmp.ne.s32.totalorder %s1447, %s1449
      %p1456 = scmp.eq.s32.totalorder %s158, 1
      %p1457 = por %p1455, %p1456
      %p1458 = scmp.ne.s32.totalorder %s1449, %s1450
      %p1459 = scmp.eq.s32.totalorder %s158, 0
      %p1460 = por %p1458, %p1459
      %p1461 = scmp.ne.s32.totalorder %s1449, %s1450
      %p1462 = scmp.eq.s32.totalorder %s159, 1
      %p1463 = por %p1461, %p1462
      %p1465 = scmp.ne.s32.totalorder %s1450, %s1464
      %p1466 = scmp.eq.s32.totalorder %s159, 0
      %p1467 = por %p1465, %p1466
      %s1469 = sadd.s32 %s1468, 1
      %p1472 = scmp.eq.s32.totalorder %s153, 1
      %p1473 = scmp.ne.s32.totalorder %s1468, %s1470
      %p1474 = scmp.eq.s32.totalorder %s153, 0
      %p1475 = por %p1473, %p1474
      %p1476 = scmp.ne.s32.totalorder %s1468, %s1470
      %p1477 = scmp.eq.s32.totalorder %s158, 1
      %p1478 = por %p1476, %p1477
      %p1479 = scmp.ne.s32.totalorder %s1470, %s1471
      %p1480 = scmp.eq.s32.totalorder %s158, 0
      %p1481 = por %p1479, %p1480
      %p1482 = scmp.ne.s32.totalorder %s1470, %s1471
      %p1483 = scmp.eq.s32.totalorder %s159, 1
      %p1484 = por %p1482, %p1483
      %p1486 = scmp.ne.s32.totalorder %s1471, %s1485
      %p1487 = scmp.eq.s32.totalorder %s159, 0
      %p1488 = por %p1486, %p1487
      %s1490 = sadd.s32 %s1489, 1
      %p1493 = scmp.eq.s32.totalorder %s153, 1
      %p1494 = scmp.ne.s32.totalorder %s1489, %s1491
      %p1495 = scmp.eq.s32.totalorder %s153, 0
      %p1496 = por %p1494, %p1495
      %p1497 = scmp.ne.s32.totalorder %s1489, %s1491
      %p1498 = scmp.eq.s32.totalorder %s158, 1
      %p1499 = por %p1497, %p1498
      %p1500 = scmp.ne.s32.totalorder %s1491, %s1492
      %p1501 = scmp.eq.s32.totalorder %s158, 0
      %p1502 = por %p1500, %p1501
      %p1503 = scmp.ne.s32.totalorder %s1491, %s1492
      %p1504 = scmp.eq.s32.totalorder %s159, 1
      %p1505 = por %p1503, %p1504
      %p1507 = scmp.ne.s32.totalorder %s1492, %s1506
      %p1508 = scmp.eq.s32.totalorder %s159, 0
      %p1509 = por %p1507, %p1508
      %s1511 = sadd.s32 %s1510, 1
      %p1514 = scmp.eq.s32.totalorder %s153, 1
      %p1515 = scmp.ne.s32.totalorder %s1510, %s1512
      %p1516 = scmp.eq.s32.totalorder %s153, 0
      %p1517 = por %p1515, %p1516
      %p1518 = scmp.ne.s32.totalorder %s1510, %s1512
      %p1519 = scmp.eq.s32.totalorder %s158, 1
      %p1520 = por %p1518, %p1519
      %p1521 = scmp.ne.s32.totalorder %s1512, %s1513
      %p1522 = scmp.eq.s32.totalorder %s158, 0
      %p1523 = por %p1521, %p1522
      %p1524 = scmp.ne.s32.totalorder %s1512, %s1513
      %p1525 = scmp.eq.s32.totalorder %s159, 1
      %p1526 = por %p1524, %p1525
      %p1528 = scmp.ne.s32.totalorder %s1513, %s1527
      %p1529 = scmp.eq.s32.totalorder %s159, 0
      %p1530 = por %p1528, %p1529
      %s1532 = sadd.s32 %s1531, 1
      %p1535 = scmp.eq.s32.totalorder %s153, 1
      %p1536 = scmp.ne.s32.totalorder %s1531, %s1533
      %p1537 = scmp.eq.s32.totalorder %s153, 0
      %p1538 = por %p1536, %p1537
      %p1539 = scmp.ne.s32.totalorder %s1531, %s1533
      %p1540 = scmp.eq.s32.totalorder %s158, 1
      %p1541 = por %p1539, %p1540
      %p1542 = scmp.ne.s32.totalorder %s1533, %s1534
      %p1543 = scmp.eq.s32.totalorder %s158, 0
      %p1544 = por %p1542, %p1543
      %p1545 = scmp.ne.s32.totalorder %s1533, %s1534
      %p1546 = scmp.eq.s32.totalorder %s159, 1
      %p1547 = por %p1545, %p1546
      %p1549 = scmp.ne.s32.totalorder %s1534, %s1548
      %p1550 = scmp.eq.s32.totalorder %s159, 0
      %p1551 = por %p1549, %p1550
      %s1552 = ssub.s32 %s153, %s160
      %p1553 = scmp.eq.s32.totalorder %s1552, 0
      %s1555 = sadd.s32 %s1554, 1
      %s1556 = scalar_select %p1553, %s1554, %s1555
      %p1559 = pneg %p1553
      %p1560 = scmp.eq.s32.totalorder %s153, 1
      %p1561 = por %p1559, %p1560
      %p1562 = scmp.ne.s32.totalorder %s1554, %s1557
      %p1563 = scmp.eq.s32.totalorder %s153, 0
      %p1564 = por %p1562, %p1563
      %p1565 = scmp.ne.s32.totalorder %s1554, %s1557
      %p1566 = scmp.eq.s32.totalorder %s158, 1
      %p1567 = por %p1565, %p1566
      %p1568 = scmp.ne.s32.totalorder %s1557, %s1558
      %p1569 = scmp.eq.s32.totalorder %s158, 0
      %p1570 = por %p1568, %p1569
      %p1571 = scmp.ne.s32.totalorder %s1557, %s1558
      %p1572 = scmp.eq.s32.totalorder %s159, 1
      %p1573 = por %p1571, %p1572
      %p1575 = scmp.ne.s32.totalorder %s1558, %s1574
      %p1576 = scmp.eq.s32.totalorder %s159, 0
      %p1577 = por %p1575, %p1576
      %p1578 = scmp.le.s32.totalorder 1, %s153
      %p1579 = scmp.lt.s32.totalorder %s153, 3
      %p1580 = pnand %p1578, %p1579
      %p1581 = pneg %p1580
      // Predicated region
      $region9: #{swin_forward.1} parent=5 // pred_check
        _
      $region10: #{swin_forward.1} parent=5 // pred_check_branch
        %1583 = sbr.rel (%p1580) target = $region12
      $region11: #{swin_forward.1} parent=5 // pred_region
        %s1584 = ssub.s32 %s153, 1
        // Predicated region
        $region13: #{swin_forward.1} parent=11 // pred_check
          %p1585 = pneg %p200
        $region14: #{swin_forward.1} parent=11 // pred_check_branch
          %1587 = sbr.rel (%p1585) target = $region16
        $region15: #{swin_forward.1} parent=11 // pred_region
          _
        $region16: #{swin_forward.1} parent=11 // pred_fallthru
          _
        // Predicated region
        $region17: #{swin_forward.1} parent=11 // pred_check
          %p1588 = pneg %p221
        $region18: #{swin_forward.1} parent=11 // pred_check_branch
          %1590 = sbr.rel (%p1588) target = $region20
        $region19: #{swin_forward.1} parent=11 // pred_region
          _
        $region20: #{swin_forward.1} parent=11 // pred_fallthru
          _
        // Predicated region
        $region21: #{swin_forward.1} parent=11 // pred_check
          %p1591 = pneg %p242
        $region22: #{swin_forward.1} parent=11 // pred_check_branch
          %1593 = sbr.rel (%p1591) target = $region24
        $region23: #{swin_forward.1} parent=11 // pred_region
          _
        $region24: #{swin_forward.1} parent=11 // pred_fallthru
          _
        // Predicated region
        $region25: #{swin_forward.1} parent=11 // pred_check
          %p1594 = pneg %p263
        $region26: #{swin_forward.1} parent=11 // pred_check_branch
          %1596 = sbr.rel (%p1594) target = $region28
        $region27: #{swin_forward.1} parent=11 // pred_region
          _
        $region28: #{swin_forward.1} parent=11 // pred_fallthru
          _
        // Predicated region
        $region29: #{swin_forward.1} parent=11 // pred_check
          %p1597 = pneg %p284
        $region30: #{swin_forward.1} parent=11 // pred_check_branch
          %1599 = sbr.rel (%p1597) target = $region32
        $region31: #{swin_forward.1} parent=11 // pred_region
          _
        $region32: #{swin_forward.1} parent=11 // pred_fallthru
          _
        // Predicated region
        $region33: #{swin_forward.1} parent=11 // pred_check
          %p1600 = pneg %p305
        $region34: #{swin_forward.1} parent=11 // pred_check_branch
          %1602 = sbr.rel (%p1600) target = $region36
        $region35: #{swin_forward.1} parent=11 // pred_region
          _
        $region36: #{swin_forward.1} parent=11 // pred_fallthru
          _
        // Predicated region
        $region37: #{swin_forward.1} parent=11 // pred_check
          %p1603 = pneg %p326
        $region38: #{swin_forward.1} parent=11 // pred_check_branch
          %1605 = sbr.rel (%p1603) target = $region40
        $region39: #{swin_forward.1} parent=11 // pred_region
          _
        $region40: #{swin_forward.1} parent=11 // pred_fallthru
          _
        // Predicated region
        $region41: #{swin_forward.1} parent=11 // pred_check
          %p1606 = pneg %p347
        $region42: #{swin_forward.1} parent=11 // pred_check_branch
          %1608 = sbr.rel (%p1606) target = $region44
        $region43: #{swin_forward.1} parent=11 // pred_region
          _
        $region44: #{swin_forward.1} parent=11 // pred_fallthru
          _
        // Predicated region
        $region45: #{swin_forward.1} parent=11 // pred_check
          %p1609 = pneg %p368
        $region46: #{swin_forward.1} parent=11 // pred_check_branch
          %1611 = sbr.rel (%p1609) target = $region48
        $region47: #{swin_forward.1} parent=11 // pred_region
          _
        $region48: #{swin_forward.1} parent=11 // pred_fallthru
          _
        // Predicated region
        $region49: #{swin_forward.1} parent=11 // pred_check
          %p1612 = pneg %p389
        $region50: #{swin_forward.1} parent=11 // pred_check_branch
          %1614 = sbr.rel (%p1612) target = $region52
        $region51: #{swin_forward.1} parent=11 // pred_region
          _
        $region52: #{swin_forward.1} parent=11 // pred_fallthru
          _
        // Predicated region
        $region53: #{swin_forward.1} parent=11 // pred_check
          %p1615 = pneg %p410
        $region54: #{swin_forward.1} parent=11 // pred_check_branch
          %1617 = sbr.rel (%p1615) target = $region56
        $region55: #{swin_forward.1} parent=11 // pred_region
          _
        $region56: #{swin_forward.1} parent=11 // pred_fallthru
          _
        // Predicated region
        $region57: #{swin_forward.1} parent=11 // pred_check
          %p1618 = pneg %p431
        $region58: #{swin_forward.1} parent=11 // pred_check_branch
          %1620 = sbr.rel (%p1618) target = $region60
        $region59: #{swin_forward.1} parent=11 // pred_region
          _
        $region60: #{swin_forward.1} parent=11 // pred_fallthru
          _
        // Predicated region
        $region61: #{swin_forward.1} parent=11 // pred_check
          %p1621 = pneg %p452
        $region62: #{swin_forward.1} parent=11 // pred_check_branch
          %1623 = sbr.rel (%p1621) target = $region64
        $region63: #{swin_forward.1} parent=11 // pred_region
          _
        $region64: #{swin_forward.1} parent=11 // pred_fallthru
          _
        // Predicated region
        $region65: #{swin_forward.1} parent=11 // pred_check
          %p1624 = pneg %p473
        $region66: #{swin_forward.1} parent=11 // pred_check_branch
          %1626 = sbr.rel (%p1624) target = $region68
        $region67: #{swin_forward.1} parent=11 // pred_region
          _
        $region68: #{swin_forward.1} parent=11 // pred_fallthru
          _
        // Predicated region
        $region69: #{swin_forward.1} parent=11 // pred_check
          %p1627 = pneg %p494
        $region70: #{swin_forward.1} parent=11 // pred_check_branch
          %1629 = sbr.rel (%p1627) target = $region72
        $region71: #{swin_forward.1} parent=11 // pred_region
          _
        $region72: #{swin_forward.1} parent=11 // pred_fallthru
          _
        // Predicated region
        $region73: #{swin_forward.1} parent=11 // pred_check
          %p1630 = pneg %p515
        $region74: #{swin_forward.1} parent=11 // pred_check_branch
          %1632 = sbr.rel (%p1630) target = $region76
        $region75: #{swin_forward.1} parent=11 // pred_region
          _
        $region76: #{swin_forward.1} parent=11 // pred_fallthru
          _
        // Predicated region
        $region77: #{swin_forward.1} parent=11 // pred_check
          %p1633 = pneg %p536
        $region78: #{swin_forward.1} parent=11 // pred_check_branch
          %1635 = sbr.rel (%p1633) target = $region80
        $region79: #{swin_forward.1} parent=11 // pred_region
          _
        $region80: #{swin_forward.1} parent=11 // pred_fallthru
          _
        // Predicated region
        $region81: #{swin_forward.1} parent=11 // pred_check
          %p1636 = pneg %p557
        $region82: #{swin_forward.1} parent=11 // pred_check_branch
          %1638 = sbr.rel (%p1636) target = $region84
        $region83: #{swin_forward.1} parent=11 // pred_region
          _
        $region84: #{swin_forward.1} parent=11 // pred_fallthru
          _
        // Predicated region
        $region85: #{swin_forward.1} parent=11 // pred_check
          %p1639 = pneg %p578
        $region86: #{swin_forward.1} parent=11 // pred_check_branch
          %1641 = sbr.rel (%p1639) target = $region88
        $region87: #{swin_forward.1} parent=11 // pred_region
          _
        $region88: #{swin_forward.1} parent=11 // pred_fallthru
          _
        // Predicated region
        $region89: #{swin_forward.1} parent=11 // pred_check
          %p1642 = pneg %p599
        $region90: #{swin_forward.1} parent=11 // pred_check_branch
          %1644 = sbr.rel (%p1642) target = $region92
        $region91: #{swin_forward.1} parent=11 // pred_region
          _
        $region92: #{swin_forward.1} parent=11 // pred_fallthru
          _
        // Predicated region
        $region93: #{swin_forward.1} parent=11 // pred_check
          %p1645 = pneg %p620
        $region94: #{swin_forward.1} parent=11 // pred_check_branch
          %1647 = sbr.rel (%p1645) target = $region96
        $region95: #{swin_forward.1} parent=11 // pred_region
          _
        $region96: #{swin_forward.1} parent=11 // pred_fallthru
          _
        // Predicated region
        $region97: #{swin_forward.1} parent=11 // pred_check
          %p1648 = pneg %p641
        $region98: #{swin_forward.1} parent=11 // pred_check_branch
          %1650 = sbr.rel (%p1648) target = $region100
        $region99: #{swin_forward.1} parent=11 // pred_region
          _
        $region100: #{swin_forward.1} parent=11 // pred_fallthru
          _
        // Predicated region
        $region101: #{swin_forward.1} parent=11 // pred_check
          %p1651 = pneg %p662
        $region102: #{swin_forward.1} parent=11 // pred_check_branch
          %1653 = sbr.rel (%p1651) target = $region104
        $region103: #{swin_forward.1} parent=11 // pred_region
          _
        $region104: #{swin_forward.1} parent=11 // pred_fallthru
          _
        // Predicated region
        $region105: #{swin_forward.1} parent=11 // pred_check
          %p1654 = pneg %p683
        $region106: #{swin_forward.1} parent=11 // pred_check_branch
          %1656 = sbr.rel (%p1654) target = $region108
        $region107: #{swin_forward.1} parent=11 // pred_region
          _
        $region108: #{swin_forward.1} parent=11 // pred_fallthru
          _
        // Predicated region
        $region109: #{swin_forward.1} parent=11 // pred_check
          %p1657 = pneg %p704
        $region110: #{swin_forward.1} parent=11 // pred_check_branch
          %1659 = sbr.rel (%p1657) target = $region112
        $region111: #{swin_forward.1} parent=11 // pred_region
          %s1661 = ssub.s32 16, 16
          %1662 = vsyncadd [#allocation4], %s1661
          %s1664 = sshll.u32 [#allocation3], 4
          %s1665 = int_to_ptr.vmem [resolvable:$true] %s1664
          %1667 = dma.hbm_to_vmem [thread:$0]  %s51, 16, %s1665, [#allocation4]
        $region112: #{swin_forward.1} parent=11 // pred_fallthru
          _
        // Predicated region
        $region113: #{swin_forward.1} parent=11 // pred_check
          %p1668 = pneg %p725
        $region114: #{swin_forward.1} parent=11 // pred_check_branch
          %1670 = sbr.rel (%p1668) target = $region116
        $region115: #{swin_forward.1} parent=11 // pred_region
          %s1672 = ssub.s32 16, 16
          %1673 = vsyncadd [#allocation6], %s1672
          %s1675 = sshll.u32 [#allocation5], 4
          %s1676 = int_to_ptr.vmem [resolvable:$true] %s1675
          %1678 = dma.hbm_to_vmem [thread:$0]  %s53, 16, %s1676, [#allocation6]
        $region116: #{swin_forward.1} parent=11 // pred_fallthru
          _
        // Predicated region
        $region117: #{swin_forward.1} parent=11 // pred_check
          %p1679 = pneg %p746
        $region118: #{swin_forward.1} parent=11 // pred_check_branch
          %1681 = sbr.rel (%p1679) target = $region120
        $region119: #{swin_forward.1} parent=11 // pred_region
          %s1683 = ssub.s32 16, 16
          %1684 = vsyncadd [#allocation6], %s1683
          %s1686 = sshll.u32 [#allocation7], 4
          %s1687 = int_to_ptr.vmem [resolvable:$true] %s1686
          %1689 = dma.hbm_to_vmem [thread:$0]  %s55, 16, %s1687, [#allocation6]
        $region120: #{swin_forward.1} parent=11 // pred_fallthru
          _
        // Predicated region
        $region121: #{swin_forward.1} parent=11 // pred_check
          %p1690 = pneg %p767
        $region122: #{swin_forward.1} parent=11 // pred_check_branch
          %1692 = sbr.rel (%p1690) target = $region124
        $region123: #{swin_forward.1} parent=11 // pred_region
          _
        $region124: #{swin_forward.1} parent=11 // pred_fallthru
          _
        // Predicated region
        $region125: #{swin_forward.1} parent=11 // pred_check
          %p1693 = pneg %p788
        $region126: #{swin_forward.1} parent=11 // pred_check_branch
          %1695 = sbr.rel (%p1693) target = $region128
        $region127: #{swin_forward.1} parent=11 // pred_region
          %s1697 = ssub.s32 16, 16
          %1698 = vsyncadd [#allocation9], %s1697
          %s1700 = sshll.u32 [#allocation8], 4
          %s1701 = int_to_ptr.vmem [resolvable:$true] %s1700
          %1703 = dma.hbm_to_vmem [thread:$0]  %s59, 16, %s1701, [#allocation9]
        $region128: #{swin_forward.1} parent=11 // pred_fallthru
          _
        // Predicated region
        $region129: #{swin_forward.1} parent=11 // pred_check
          %p1704 = pneg %p809
        $region130: #{swin_forward.1} parent=11 // pred_check_branch
          %1706 = sbr.rel (%p1704) target = $region132
        $region131: #{swin_forward.1} parent=11 // pred_region
          _
        $region132: #{swin_forward.1} parent=11 // pred_fallthru
          _
        // Predicated region
        $region133: #{swin_forward.1} parent=11 // pred_check
          %p1707 = pneg %p830
        $region134: #{swin_forward.1} parent=11 // pred_check_branch
          %1709 = sbr.rel (%p1707) target = $region136
        $region135: #{swin_forward.1} parent=11 // pred_region
          %s1711 = ssub.s32 16, 16
          %1712 = vsyncadd [#allocation9], %s1711
          %s1714 = sshll.u32 [#allocation10], 4
          %s1715 = int_to_ptr.vmem [resolvable:$true] %s1714
          %1717 = dma.hbm_to_vmem [thread:$0]  %s63, 16, %s1715, [#allocation9]
        $region136: #{swin_forward.1} parent=11 // pred_fallthru
          _
        // Predicated region
        $region137: #{swin_forward.1} parent=11 // pred_check
          %p1718 = pneg %p851
        $region138: #{swin_forward.1} parent=11 // pred_check_branch
          %1720 = sbr.rel (%p1718) target = $region140
        $region139: #{swin_forward.1} parent=11 // pred_region
          _
        $region140: #{swin_forward.1} parent=11 // pred_fallthru
          _
        // Predicated region
        $region141: #{swin_forward.1} parent=11 // pred_check
          %p1721 = pneg %p872
        $region142: #{swin_forward.1} parent=11 // pred_check_branch
          %1723 = sbr.rel (%p1721) target = $region144
        $region143: #{swin_forward.1} parent=11 // pred_region
          %s1725 = ssub.s32 16, 16
          %1726 = vsyncadd [#allocation12], %s1725
          %s1728 = sshll.u32 [#allocation11], 4
          %s1729 = int_to_ptr.vmem [resolvable:$true] %s1728
          %1731 = dma.hbm_to_vmem [thread:$0]  %s67, 16, %s1729, [#allocation12]
        $region144: #{swin_forward.1} parent=11 // pred_fallthru
          _
        // Predicated region
        $region145: #{swin_forward.1} parent=11 // pred_check
          %p1732 = pneg %p893
        $region146: #{swin_forward.1} parent=11 // pred_check_branch
          %1734 = sbr.rel (%p1732) target = $region148
        $region147: #{swin_forward.1} parent=11 // pred_region
          %s1736 = ssub.s32 16, 16
          %1737 = vsyncadd [#allocation12], %s1736
          %s1739 = sshll.u32 [#allocation13], 4
          %s1740 = int_to_ptr.vmem [resolvable:$true] %s1739
          %1742 = dma.hbm_to_vmem [thread:$0]  %s69, 16, %s1740, [#allocation12]
        $region148: #{swin_forward.1} parent=11 // pred_fallthru
          _
        // Predicated region
        $region149: #{swin_forward.1} parent=11 // pred_check
          %p1743 = pneg %p914
        $region150: #{swin_forward.1} parent=11 // pred_check_branch
          %1745 = sbr.rel (%p1743) target = $region152
        $region151: #{swin_forward.1} parent=11 // pred_region
          _
        $region152: #{swin_forward.1} parent=11 // pred_fallthru
          _
        // Predicated region
        $region153: #{swin_forward.1} parent=11 // pred_check
          %p1746 = pneg %p935
        $region154: #{swin_forward.1} parent=11 // pred_check_branch
          %1748 = sbr.rel (%p1746) target = $region156
        $region155: #{swin_forward.1} parent=11 // pred_region
          _
        $region156: #{swin_forward.1} parent=11 // pred_fallthru
          _
        // Predicated region
        $region157: #{swin_forward.1} parent=11 // pred_check
          %p1749 = pneg %p956
        $region158: #{swin_forward.1} parent=11 // pred_check_branch
          %1751 = sbr.rel (%p1749) target = $region160
        $region159: #{swin_forward.1} parent=11 // pred_region
          %s1753 = ssub.s32 16, 16
          %1754 = vsyncadd [#allocation15], %s1753
          %s1756 = sshll.u32 [#allocation14], 4
          %s1757 = int_to_ptr.vmem [resolvable:$true] %s1756
          %1759 = dma.hbm_to_vmem [thread:$0]  %s75, 16, %s1757, [#allocation15]
        $region160: #{swin_forward.1} parent=11 // pred_fallthru
          _
        // Predicated region
        $region161: #{swin_forward.1} parent=11 // pred_check
          %p1760 = pneg %p977
        $region162: #{swin_forward.1} parent=11 // pred_check_branch
          %1762 = sbr.rel (%p1760) target = $region164
        $region163: #{swin_forward.1} parent=11 // pred_region
          %s1764 = ssub.s32 16, 16
          %1765 = vsyncadd [#allocation15], %s1764
          %s1767 = sshll.u32 [#allocation16], 4
          %s1768 = int_to_ptr.vmem [resolvable:$true] %s1767
          %1770 = dma.hbm_to_vmem [thread:$0]  %s77, 16, %s1768, [#allocation15]
        $region164: #{swin_forward.1} parent=11 // pred_fallthru
          _
        // Predicated region
        $region165: #{swin_forward.1} parent=11 // pred_check
          %p1771 = pneg %p998
        $region166: #{swin_forward.1} parent=11 // pred_check_branch
          %1773 = sbr.rel (%p1771) target = $region168
        $region167: #{swin_forward.1} parent=11 // pred_region
          _
        $region168: #{swin_forward.1} parent=11 // pred_fallthru
          _
        // Predicated region
        $region169: #{swin_forward.1} parent=11 // pred_check
          %p1774 = pneg %p1019
        $region170: #{swin_forward.1} parent=11 // pred_check_branch
          %1776 = sbr.rel (%p1774) target = $region172
        $region171: #{swin_forward.1} parent=11 // pred_region
          _
        $region172: #{swin_forward.1} parent=11 // pred_fallthru
          _
        // Predicated region
        $region173: #{swin_forward.1} parent=11 // pred_check
          %p1777 = pneg %p1040
        $region174: #{swin_forward.1} parent=11 // pred_check_branch
          %1779 = sbr.rel (%p1777) target = $region176
        $region175: #{swin_forward.1} parent=11 // pred_region
          _
        $region176: #{swin_forward.1} parent=11 // pred_fallthru
          _
        // Predicated region
        $region177: #{swin_forward.1} parent=11 // pred_check
          %p1780 = pneg %p1061
        $region178: #{swin_forward.1} parent=11 // pred_check_branch
          %1782 = sbr.rel (%p1780) target = $region180
        $region179: #{swin_forward.1} parent=11 // pred_region
          %s1784 = ssub.s32 16, 16
          %1785 = vsyncadd [#allocation18], %s1784
          %s1787 = sshll.u32 [#allocation17], 4
          %s1788 = int_to_ptr.vmem [resolvable:$true] %s1787
          %1790 = dma.hbm_to_vmem [thread:$0]  %s85, 16, %s1788, [#allocation18]
        $region180: #{swin_forward.1} parent=11 // pred_fallthru
          _
        // Predicated region
        $region181: #{swin_forward.1} parent=11 // pred_check
          %p1791 = pneg %p1082
        $region182: #{swin_forward.1} parent=11 // pred_check_branch
          %1793 = sbr.rel (%p1791) target = $region184
        $region183: #{swin_forward.1} parent=11 // pred_region
          %s1795 = ssub.s32 16, 16
          %1796 = vsyncadd [#allocation18], %s1795
          %s1798 = sshll.u32 [#allocation19], 4
          %s1799 = int_to_ptr.vmem [resolvable:$true] %s1798
          %1801 = dma.hbm_to_vmem [thread:$0]  %s87, 16, %s1799, [#allocation18]
        $region184: #{swin_forward.1} parent=11 // pred_fallthru
          _
        // Predicated region
        $region185: #{swin_forward.1} parent=11 // pred_check
          %p1802 = pneg %p1103
        $region186: #{swin_forward.1} parent=11 // pred_check_branch
          %1804 = sbr.rel (%p1802) target = $region188
        $region187: #{swin_forward.1} parent=11 // pred_region
          %s1806 = ssub.s32 16, 16
          %1807 = vsyncadd [#allocation21], %s1806
          %s1809 = sshll.u32 [#allocation20], 4
          %s1810 = int_to_ptr.vmem [resolvable:$true] %s1809
          %1812 = dma.hbm_to_vmem [thread:$0]  %s89, 16, %s1810, [#allocation21]
        $region188: #{swin_forward.1} parent=11 // pred_fallthru
          _
        // Predicated region
        $region189: #{swin_forward.1} parent=11 // pred_check
          %p1813 = pneg %p1124
        $region190: #{swin_forward.1} parent=11 // pred_check_branch
          %1815 = sbr.rel (%p1813) target = $region192
        $region191: #{swin_forward.1} parent=11 // pred_region
          _
        $region192: #{swin_forward.1} parent=11 // pred_fallthru
          _
        // Predicated region
        $region193: #{swin_forward.1} parent=11 // pred_check
          %p1816 = pneg %p1145
        $region194: #{swin_forward.1} parent=11 // pred_check_branch
          %1818 = sbr.rel (%p1816) target = $region196
        $region195: #{swin_forward.1} parent=11 // pred_region
          %s1820 = ssub.s32 16, 16
          %1821 = vsyncadd [#allocation21], %s1820
          %s1823 = sshll.u32 [#allocation22], 4
          %s1824 = int_to_ptr.vmem [resolvable:$true] %s1823
          %1826 = dma.hbm_to_vmem [thread:$0]  %s93, 16, %s1824, [#allocation21]
        $region196: #{swin_forward.1} parent=11 // pred_fallthru
          _
        // Predicated region
        $region197: #{swin_forward.1} parent=11 // pred_check
          %p1827 = pneg %p1166
        $region198: #{swin_forward.1} parent=11 // pred_check_branch
          %1829 = sbr.rel (%p1827) target = $region200
        $region199: #{swin_forward.1} parent=11 // pred_region
          _
        $region200: #{swin_forward.1} parent=11 // pred_fallthru
          _
        // Predicated region
        $region201: #{swin_forward.1} parent=11 // pred_check
          %p1830 = pneg %p1187
        $region202: #{swin_forward.1} parent=11 // pred_check_branch
          %1832 = sbr.rel (%p1830) target = $region204
        $region203: #{swin_forward.1} parent=11 // pred_region
          %s1834 = ssub.s32 16, 16
          %1835 = vsyncadd [#allocation24], %s1834
          %s1837 = sshll.u32 [#allocation23], 4
          %s1838 = int_to_ptr.vmem [resolvable:$true] %s1837
          %1840 = dma.hbm_to_vmem [thread:$0]  %s97, 16, %s1838, [#allocation24]
        $region204: #{swin_forward.1} parent=11 // pred_fallthru
          _
        // Predicated region
        $region205: #{swin_forward.1} parent=11 // pred_check
          %p1841 = pneg %p1208
        $region206: #{swin_forward.1} parent=11 // pred_check_branch
          %1843 = sbr.rel (%p1841) target = $region208
        $region207: #{swin_forward.1} parent=11 // pred_region
          _
        $region208: #{swin_forward.1} parent=11 // pred_fallthru
          _
        // Predicated region
        $region209: #{swin_forward.1} parent=11 // pred_check
          %p1844 = pneg %p1229
        $region210: #{swin_forward.1} parent=11 // pred_check_branch
          %1846 = sbr.rel (%p1844) target = $region212
        $region211: #{swin_forward.1} parent=11 // pred_region
          %s1848 = ssub.s32 16, 16
          %1849 = vsyncadd [#allocation24], %s1848
          %s1851 = sshll.u32 [#allocation25], 4
          %s1852 = int_to_ptr.vmem [resolvable:$true] %s1851
          %1854 = dma.hbm_to_vmem [thread:$0]  %s101, 16, %s1852, [#allocation24]
        $region212: #{swin_forward.1} parent=11 // pred_fallthru
          _
        // Predicated region
        $region213: #{swin_forward.1} parent=11 // pred_check
          %p1855 = pneg %p1250
        $region214: #{swin_forward.1} parent=11 // pred_check_branch
          %1857 = sbr.rel (%p1855) target = $region216
        $region215: #{swin_forward.1} parent=11 // pred_region
          %s1859 = ssub.s32 16, 16
          %1860 = vsyncadd [#allocation27], %s1859
          %s1862 = sshll.u32 [#allocation26], 4
          %s1863 = int_to_ptr.vmem [resolvable:$true] %s1862
          %1865 = dma.hbm_to_vmem [thread:$0]  %s103, 16, %s1863, [#allocation27]
        $region216: #{swin_forward.1} parent=11 // pred_fallthru
          _
        // Predicated region
        $region217: #{swin_forward.1} parent=11 // pred_check
          %p1866 = pneg %p1271
        $region218: #{swin_forward.1} parent=11 // pred_check_branch
          %1868 = sbr.rel (%p1866) target = $region220
        $region219: #{swin_forward.1} parent=11 // pred_region
          _
        $region220: #{swin_forward.1} parent=11 // pred_fallthru
          _
        // Predicated region
        $region221: #{swin_forward.1} parent=11 // pred_check
          %p1869 = pneg %p1292
        $region222: #{swin_forward.1} parent=11 // pred_check_branch
          %1871 = sbr.rel (%p1869) target = $region224
        $region223: #{swin_forward.1} parent=11 // pred_region
          _
        $region224: #{swin_forward.1} parent=11 // pred_fallthru
          _
        // Predicated region
        $region225: #{swin_forward.1} parent=11 // pred_check
          %p1872 = pneg %p1313
        $region226: #{swin_forward.1} parent=11 // pred_check_branch
          %1874 = sbr.rel (%p1872) target = $region228
        $region227: #{swin_forward.1} parent=11 // pred_region
          _
        $region228: #{swin_forward.1} parent=11 // pred_fallthru
          _
        // Predicated region
        $region229: #{swin_forward.1} parent=11 // pred_check
          %p1875 = pneg %p1334
        $region230: #{swin_forward.1} parent=11 // pred_check_branch
          %1877 = sbr.rel (%p1875) target = $region232
        $region231: #{swin_forward.1} parent=11 // pred_region
          %s1879 = ssub.s32 16, 16
          %1880 = vsyncadd [#allocation27], %s1879
          %s1882 = sshll.u32 [#allocation28], 4
          %s1883 = int_to_ptr.vmem [resolvable:$true] %s1882
          %1885 = dma.hbm_to_vmem [thread:$0]  %s111, 16, %s1883, [#allocation27]
        $region232: #{swin_forward.1} parent=11 // pred_fallthru
          _
        // Predicated region
        $region233: #{swin_forward.1} parent=11 // pred_check
          %p1886 = pneg %p1355
        $region234: #{swin_forward.1} parent=11 // pred_check_branch
          %1888 = sbr.rel (%p1886) target = $region236
        $region235: #{swin_forward.1} parent=11 // pred_region
          %s1890 = ssub.s32 16, 16
          %1891 = vsyncadd [#allocation30], %s1890
          %s1893 = sshll.u32 [#allocation29], 4
          %s1894 = int_to_ptr.vmem [resolvable:$true] %s1893
          %1896 = dma.hbm_to_vmem [thread:$0]  %s113, 16, %s1894, [#allocation30]
        $region236: #{swin_forward.1} parent=11 // pred_fallthru
          _
        // Predicated region
        $region237: #{swin_forward.1} parent=11 // pred_check
          %p1897 = pneg %p1376
        $region238: #{swin_forward.1} parent=11 // pred_check_branch
          %1899 = sbr.rel (%p1897) target = $region240
        $region239: #{swin_forward.1} parent=11 // pred_region
          %s1901 = ssub.s32 16, 16
          %1902 = vsyncadd [#allocation30], %s1901
          %s1904 = sshll.u32 [#allocation31], 4
          %s1905 = int_to_ptr.vmem [resolvable:$true] %s1904
          %1907 = dma.hbm_to_vmem [thread:$0]  %s115, 16, %s1905, [#allocation30]
        $region240: #{swin_forward.1} parent=11 // pred_fallthru
          _
        // Predicated region
        $region241: #{swin_forward.1} parent=11 // pred_check
          %p1908 = pneg %p1397
        $region242: #{swin_forward.1} parent=11 // pred_check_branch
          %1910 = sbr.rel (%p1908) target = $region244
        $region243: #{swin_forward.1} parent=11 // pred_region
          _
        $region244: #{swin_forward.1} parent=11 // pred_fallthru
          _
        // Predicated region
        $region245: #{swin_forward.1} parent=11 // pred_check
          %p1911 = pneg %p1418
        $region246: #{swin_forward.1} parent=11 // pred_check_branch
          %1913 = sbr.rel (%p1911) target = $region248
        $region247: #{swin_forward.1} parent=11 // pred_region
          %s1915 = ssub.s32 16, 16
          %1916 = vsyncadd [#allocation33], %s1915
          %s1918 = sshll.u32 [#allocation32], 4
          %s1919 = int_to_ptr.vmem [resolvable:$true] %s1918
          %1921 = dma.hbm_to_vmem [thread:$0]  %s119, 16, %s1919, [#allocation33]
        $region248: #{swin_forward.1} parent=11 // pred_fallthru
          _
        // Predicated region
        $region249: #{swin_forward.1} parent=11 // pred_check
          %p1922 = pneg %p1439
        $region250: #{swin_forward.1} parent=11 // pred_check_branch
          %1924 = sbr.rel (%p1922) target = $region252
        $region251: #{swin_forward.1} parent=11 // pred_region
          _
        $region252: #{swin_forward.1} parent=11 // pred_fallthru
          _
        // Predicated region
        $region253: #{swin_forward.1} parent=11 // pred_check
          %p1925 = pneg %p1460
        $region254: #{swin_forward.1} parent=11 // pred_check_branch
          %1927 = sbr.rel (%p1925) target = $region256
        $region255: #{swin_forward.1} parent=11 // pred_region
          %s1929 = ssub.s32 16, 16
          %1930 = vsyncadd [#allocation33], %s1929
          %s1932 = sshll.u32 [#allocation34], 4
          %s1933 = int_to_ptr.vmem [resolvable:$true] %s1932
          %1935 = dma.hbm_to_vmem [thread:$0]  %s123, 16, %s1933, [#allocation33]
        $region256: #{swin_forward.1} parent=11 // pred_fallthru
          _
        // Predicated region
        $region257: #{swin_forward.1} parent=11 // pred_check
          %p1936 = pneg %p1481
        $region258: #{swin_forward.1} parent=11 // pred_check_branch
          %1938 = sbr.rel (%p1936) target = $region260
        $region259: #{swin_forward.1} parent=11 // pred_region
          %s1940 = ssub.s32 16, 16
          %1941 = vsyncadd [#allocation36], %s1940
          %s1943 = sshll.u32 [#allocation35], 4
          %s1944 = int_to_ptr.vmem [resolvable:$true] %s1943
          %1946 = dma.hbm_to_vmem [thread:$0]  %s125, 16, %s1944, [#allocation36]
        $region260: #{swin_forward.1} parent=11 // pred_fallthru
          _
        // Predicated region
        $region261: #{swin_forward.1} parent=11 // pred_check
          %p1947 = pneg %p1502
        $region262: #{swin_forward.1} parent=11 // pred_check_branch
          %1949 = sbr.rel (%p1947) target = $region264
        $region263: #{swin_forward.1} parent=11 // pred_region
          %s1951 = ssub.s32 16, 16
          %1952 = vsyncadd [#allocation36], %s1951
          %s1954 = sshll.u32 [#allocation37], 4
          %s1955 = int_to_ptr.vmem [resolvable:$true] %s1954
          %1957 = dma.hbm_to_vmem [thread:$0]  %s127, 16, %s1955, [#allocation36]
        $region264: #{swin_forward.1} parent=11 // pred_fallthru
          _
        // Predicated region
        $region265: #{swin_forward.1} parent=11 // pred_check
          %p1958 = pneg %p1523
        $region266: #{swin_forward.1} parent=11 // pred_check_branch
          %1960 = sbr.rel (%p1958) target = $region268
        $region267: #{swin_forward.1} parent=11 // pred_region
          _
        $region268: #{swin_forward.1} parent=11 // pred_fallthru
          _
        // Predicated region
        $region269: #{swin_forward.1} parent=11 // pred_check
          %p1961 = pneg %p1544
        $region270: #{swin_forward.1} parent=11 // pred_check_branch
          %1963 = sbr.rel (%p1961) target = $region272
        $region271: #{swin_forward.1} parent=11 // pred_region
          _
        $region272: #{swin_forward.1} parent=11 // pred_fallthru
          _
      $region12: #{swin_forward.1} parent=5 // pred_fallthru
        _
      %p1964 = scmp.lt.s32.totalorder %s153, 2
      // Predicated region
      $region273: #{swin_forward.1} parent=5 // pred_check
        %p1965 = pneg %p1964
      $region274: #{swin_forward.1} parent=5 // pred_check_branch
        %1967 = sbr.rel (%p1965) target = $region276
      $region275: #{swin_forward.1} parent=5 // pred_region
        // Predicated region
        $region277: #{swin_forward.1} parent=275 // pred_check
          %p1968 = pneg %p173
        $region278: #{swin_forward.1} parent=275 // pred_check_branch
          %1970 = sbr.rel (%p1968) target = $region280
        $region279: #{swin_forward.1} parent=275 // pred_region
          %p1971 = scmp.lt.s32.totalorder %s153, 1
          %s1972 = scalar_select %p1971, %s153, 1
          %s1973 = smul.addr %s1972, 8
          %s1974 = smul.addr %s1973, 8
          %s1975 = scalar_lea.vmem %s1, %s1974
        $region280: #{swin_forward.1} parent=275 // pred_fallthru
          _
      $region276: #{swin_forward.1} parent=5 // pred_fallthru
        _
      %p1976 = scmp.le.s32.totalorder 1, %s153
      %p1977 = scmp.lt.s32.totalorder %s153, 3
      %p1978 = pnand %p1976, %p1977
      %p1979 = pneg %p1978
      // Predicated region
      $region281: #{swin_forward.1} parent=5 // pred_check
        _
      $region282: #{swin_forward.1} parent=5 // pred_check_branch
        %1981 = sbr.rel (%p1978) target = $region284
      $region283: #{swin_forward.1} parent=5 // pred_region
        %s1982 = ssub.s32 %s153, 1
        // Predicated region
        $region285: #{swin_forward.1} parent=283 // pred_check
          %p1983 = pneg %p704
        $region286: #{swin_forward.1} parent=283 // pred_check_branch
          %1985 = sbr.rel (%p1983) target = $region288
        $region287: #{swin_forward.1} parent=283 // pred_region
          %1986 = dma.done [#allocation4], 16
        $region288: #{swin_forward.1} parent=283 // pred_fallthru
          _
        // Predicated region
        $region289: #{swin_forward.1} parent=283 // pred_check
          %p1987 = pneg %p725
        $region290: #{swin_forward.1} parent=283 // pred_check_branch
          %1989 = sbr.rel (%p1987) target = $region292
        $region291: #{swin_forward.1} parent=283 // pred_region
          %1990 = dma.done [#allocation6], 16
        $region292: #{swin_forward.1} parent=283 // pred_fallthru
          _
        // Predicated region
        $region293: #{swin_forward.1} parent=283 // pred_check
          %p1991 = pneg %p746
        $region294: #{swin_forward.1} parent=283 // pred_check_branch
          %1993 = sbr.rel (%p1991) target = $region296
        $region295: #{swin_forward.1} parent=283 // pred_region
          %1994 = dma.done [#allocation6], 16
        $region296: #{swin_forward.1} parent=283 // pred_fallthru
          _
        // Predicated region
        $region297: #{swin_forward.1} parent=283 // pred_check
          %p1995 = pneg %p788
        $region298: #{swin_forward.1} parent=283 // pred_check_branch
          %1997 = sbr.rel (%p1995) target = $region300
        $region299: #{swin_forward.1} parent=283 // pred_region
          %1998 = dma.done [#allocation9], 16
        $region300: #{swin_forward.1} parent=283 // pred_fallthru
          _
        // Predicated region
        $region301: #{swin_forward.1} parent=283 // pred_check
          %p1999 = pneg %p830
        $region302: #{swin_forward.1} parent=283 // pred_check_branch
          %2001 = sbr.rel (%p1999) target = $region304
        $region303: #{swin_forward.1} parent=283 // pred_region
          %2002 = dma.done [#allocation9], 16
        $region304: #{swin_forward.1} parent=283 // pred_fallthru
          _
        // Predicated region
        $region305: #{swin_forward.1} parent=283 // pred_check
          %p2003 = pneg %p872
        $region306: #{swin_forward.1} parent=283 // pred_check_branch
          %2005 = sbr.rel (%p2003) target = $region308
        $region307: #{swin_forward.1} parent=283 // pred_region
          %2006 = dma.done [#allocation12], 16
        $region308: #{swin_forward.1} parent=283 // pred_fallthru
          _
        // Predicated region
        $region309: #{swin_forward.1} parent=283 // pred_check
          %p2007 = pneg %p893
        $region310: #{swin_forward.1} parent=283 // pred_check_branch
          %2009 = sbr.rel (%p2007) target = $region312
        $region311: #{swin_forward.1} parent=283 // pred_region
          %2010 = dma.done [#allocation12], 16
        $region312: #{swin_forward.1} parent=283 // pred_fallthru
          _
        // Predicated region
        $region313: #{swin_forward.1} parent=283 // pred_check
          %p2011 = pneg %p956
        $region314: #{swin_forward.1} parent=283 // pred_check_branch
          %2013 = sbr.rel (%p2011) target = $region316
        $region315: #{swin_forward.1} parent=283 // pred_region
          %2014 = dma.done [#allocation15], 16
        $region316: #{swin_forward.1} parent=283 // pred_fallthru
          _
        // Predicated region
        $region317: #{swin_forward.1} parent=283 // pred_check
          %p2015 = pneg %p977
        $region318: #{swin_forward.1} parent=283 // pred_check_branch
          %2017 = sbr.rel (%p2015) target = $region320
        $region319: #{swin_forward.1} parent=283 // pred_region
          %2018 = dma.done [#allocation15], 16
        $region320: #{swin_forward.1} parent=283 // pred_fallthru
          _
        // Predicated region
        $region321: #{swin_forward.1} parent=283 // pred_check
          %p2019 = pneg %p1061
        $region322: #{swin_forward.1} parent=283 // pred_check_branch
          %2021 = sbr.rel (%p2019) target = $region324
        $region323: #{swin_forward.1} parent=283 // pred_region
          %2022 = dma.done [#allocation18], 16
        $region324: #{swin_forward.1} parent=283 // pred_fallthru
          _
        // Predicated region
        $region325: #{swin_forward.1} parent=283 // pred_check
          %p2023 = pneg %p1082
        $region326: #{swin_forward.1} parent=283 // pred_check_branch
          %2025 = sbr.rel (%p2023) target = $region328
        $region327: #{swin_forward.1} parent=283 // pred_region
          %2026 = dma.done [#allocation18], 16
        $region328: #{swin_forward.1} parent=283 // pred_fallthru
          _
        // Predicated region
        $region329: #{swin_forward.1} parent=283 // pred_check
          %p2027 = pneg %p1103
        $region330: #{swin_forward.1} parent=283 // pred_check_branch
          %2029 = sbr.rel (%p2027) target = $region332
        $region331: #{swin_forward.1} parent=283 // pred_region
          %2030 = dma.done [#allocation21], 16
        $region332: #{swin_forward.1} parent=283 // pred_fallthru
          _
        // Predicated region
        $region333: #{swin_forward.1} parent=283 // pred_check
          %p2031 = pneg %p1145
        $region334: #{swin_forward.1} parent=283 // pred_check_branch
          %2033 = sbr.rel (%p2031) target = $region336
        $region335: #{swin_forward.1} parent=283 // pred_region
          %2034 = dma.done [#allocation21], 16
        $region336: #{swin_forward.1} parent=283 // pred_fallthru
          _
        // Predicated region
        $region337: #{swin_forward.1} parent=283 // pred_check
          %p2035 = pneg %p1187
        $region338: #{swin_forward.1} parent=283 // pred_check_branch
          %2037 = sbr.rel (%p2035) target = $region340
        $region339: #{swin_forward.1} parent=283 // pred_region
          %2038 = dma.done [#allocation24], 16
        $region340: #{swin_forward.1} parent=283 // pred_fallthru
          _
        // Predicated region
        $region341: #{swin_forward.1} parent=283 // pred_check
          %p2039 = pneg %p1229
        $region342: #{swin_forward.1} parent=283 // pred_check_branch
          %2041 = sbr.rel (%p2039) target = $region344
        $region343: #{swin_forward.1} parent=283 // pred_region
          %2042 = dma.done [#allocation24], 16
        $region344: #{swin_forward.1} parent=283 // pred_fallthru
          _
        // Predicated region
        $region345: #{swin_forward.1} parent=283 // pred_check
          %p2043 = pneg %p1250
        $region346: #{swin_forward.1} parent=283 // pred_check_branch
          %2045 = sbr.rel (%p2043) target = $region348
        $region347: #{swin_forward.1} parent=283 // pred_region
          %2046 = dma.done [#allocation27], 16
        $region348: #{swin_forward.1} parent=283 // pred_fallthru
          _
        // Predicated region
        $region349: #{swin_forward.1} parent=283 // pred_check
          %p2047 = pneg %p1334
        $region350: #{swin_forward.1} parent=283 // pred_check_branch
          %2049 = sbr.rel (%p2047) target = $region352
        $region351: #{swin_forward.1} parent=283 // pred_region
          %2050 = dma.done [#allocation27], 16
        $region352: #{swin_forward.1} parent=283 // pred_fallthru
          _
        // Predicated region
        $region353: #{swin_forward.1} parent=283 // pred_check
          %p2051 = pneg %p1355
        $region354: #{swin_forward.1} parent=283 // pred_check_branch
          %2053 = sbr.rel (%p2051) target = $region356
        $region355: #{swin_forward.1} parent=283 // pred_region
          %2054 = dma.done [#allocation30], 16
        $region356: #{swin_forward.1} parent=283 // pred_fallthru
          _
        // Predicated region
        $region357: #{swin_forward.1} parent=283 // pred_check
          %p2055 = pneg %p1376
        $region358: #{swin_forward.1} parent=283 // pred_check_branch
          %2057 = sbr.rel (%p2055) target = $region360
        $region359: #{swin_forward.1} parent=283 // pred_region
          %2058 = dma.done [#allocation30], 16
        $region360: #{swin_forward.1} parent=283 // pred_fallthru
          _
        // Predicated region
        $region361: #{swin_forward.1} parent=283 // pred_check
          %p2059 = pneg %p1418
        $region362: #{swin_forward.1} parent=283 // pred_check_branch
          %2061 = sbr.rel (%p2059) target = $region364
        $region363: #{swin_forward.1} parent=283 // pred_region
          %2062 = dma.done [#allocation33], 16
        $region364: #{swin_forward.1} parent=283 // pred_fallthru
          _
        // Predicated region
        $region365: #{swin_forward.1} parent=283 // pred_check
          %p2063 = pneg %p1460
        $region366: #{swin_forward.1} parent=283 // pred_check_branch
          %2065 = sbr.rel (%p2063) target = $region368
        $region367: #{swin_forward.1} parent=283 // pred_region
          %2066 = dma.done [#allocation33], 16
        $region368: #{swin_forward.1} parent=283 // pred_fallthru
          _
        // Predicated region
        $region369: #{swin_forward.1} parent=283 // pred_check
          %p2067 = pneg %p1481
        $region370: #{swin_forward.1} parent=283 // pred_check_branch
          %2069 = sbr.rel (%p2067) target = $region372
        $region371: #{swin_forward.1} parent=283 // pred_region
          %2070 = dma.done [#allocation36], 16
        $region372: #{swin_forward.1} parent=283 // pred_fallthru
          _
        // Predicated region
        $region373: #{swin_forward.1} parent=283 // pred_check
          %p2071 = pneg %p1502
        $region374: #{swin_forward.1} parent=283 // pred_check_branch
          %2073 = sbr.rel (%p2071) target = $region376
        $region375: #{swin_forward.1} parent=283 // pred_region
          %2074 = dma.done [#allocation36], 16
        $region376: #{swin_forward.1} parent=283 // pred_fallthru
          _
        %p2075 = scmp.lt.s32.totalorder %s158, 1
        %s2076 = scalar_select %p2075, %s158, 1
        %s2077 = smul.addr %s2076, 8
        %s2078 = smul.addr %s2077, 8
        %s2079 = scalar_lea.vmem %s1, %s2078
        %p2080 = pneg %p179
        %p2081 = pneg %p176
        %p2082 = pneg %p200
        %p2083 = pneg %p197
        %p2084 = pneg %p221
        %p2085 = pneg %p218
        %p2086 = pneg %p242
        %p2087 = pneg %p239
        %p2088 = pneg %p263
        %p2089 = pneg %p260
        %p2090 = pneg %p284
        %p2091 = pneg %p281
        %p2092 = pneg %p305
        %p2093 = pneg %p302
        %p2094 = pneg %p326
        %p2095 = pneg %p323
        %p2096 = pneg %p347
        %p2097 = pneg %p344
        %p2098 = pneg %p368
        %p2099 = pneg %p365
        %p2100 = pneg %p389
        %p2101 = pneg %p386
        %p2102 = pneg %p410
        %p2103 = pneg %p407
        %p2104 = pneg %p431
        %p2105 = pneg %p428
        %p2106 = pneg %p452
        %p2107 = pneg %p449
        %p2108 = pneg %p473
        %p2109 = pneg %p470
        %p2110 = pneg %p494
        %p2111 = pneg %p491
        %p2112 = pneg %p515
        %p2113 = pneg %p512
        %p2114 = pneg %p536
        %p2115 = pneg %p533
        %p2116 = pneg %p557
        %p2117 = pneg %p554
        %p2118 = pneg %p578
        %p2119 = pneg %p575
        %p2120 = pneg %p599
        %p2121 = pneg %p596
        %p2122 = pneg %p620
        %p2123 = pneg %p617
        %p2124 = pneg %p641
        %p2125 = pneg %p638
        %p2126 = pneg %p662
        %p2127 = pneg %p659
        %p2128 = pneg %p683
        %p2129 = pneg %p680
        %p2130 = pneg %p704
        %p2131 = pneg %p701
        %p2132 = pneg %p725
        %p2133 = pneg %p722
        %p2134 = pneg %p746
        %p2135 = pneg %p743
        %p2136 = pneg %p767
        %p2137 = pneg %p764
        %p2138 = pneg %p788
        %p2139 = pneg %p785
        %p2140 = pneg %p809
        %p2141 = pneg %p806
        %p2142 = pneg %p830
        %p2143 = pneg %p827
        %p2144 = pneg %p851
        %p2145 = pneg %p848
        %p2146 = pneg %p872
        %p2147 = pneg %p869
        %p2148 = pneg %p893
        %p2149 = pneg %p890
        %p2150 = pneg %p914
        %p2151 = pneg %p911
        %p2152 = pneg %p935
        %p2153 = pneg %p932
        %p2154 = pneg %p956
        %p2155 = pneg %p953
        %p2156 = pneg %p977
        %p2157 = pneg %p974
        %p2158 = pneg %p998
        %p2159 = pneg %p995
        %p2160 = pneg %p1019
        %p2161 = pneg %p1016
        %p2162 = pneg %p1040
        %p2163 = pneg %p1037
        %p2164 = pneg %p1061
        %p2165 = pneg %p1058
        %p2166 = pneg %p1082
        %p2167 = pneg %p1079
        %p2168 = pneg %p1103
        %p2169 = pneg %p1100
        %p2170 = pneg %p1124
        %p2171 = pneg %p1121
        %p2172 = pneg %p1145
        %p2173 = pneg %p1142
        %p2174 = pneg %p1166
        %p2175 = pneg %p1163
        %p2176 = pneg %p1187
        %p2177 = pneg %p1184
        %p2178 = pneg %p1208
        %p2179 = pneg %p1205
        %p2180 = pneg %p1229
        %p2181 = pneg %p1226
        %p2182 = pneg %p1250
        %p2183 = pneg %p1247
        %p2184 = pneg %p1271
        %p2185 = pneg %p1268
        %p2186 = pneg %p1292
        %p2187 = pneg %p1289
        %p2188 = pneg %p1313
        %p2189 = pneg %p1310
        %p2190 = pneg %p1334
        %p2191 = pneg %p1331
        %p2192 = pneg %p1355
        %p2193 = pneg %p1352
        %p2194 = pneg %p1376
        %p2195 = pneg %p1373
        %p2196 = pneg %p1397
        %p2197 = pneg %p1394
        %p2198 = pneg %p1418
        %p2199 = pneg %p1415
        %p2200 = pneg %p1439
        %p2201 = pneg %p1436
        %p2202 = pneg %p1460
        %p2203 = pneg %p1457
        %p2204 = pneg %p1481
        %p2205 = pneg %p1478
        %p2206 = pneg %p1502
        %p2207 = pneg %p1499
        %p2208 = pneg %p1523
        %p2209 = pneg %p1520
        %p2210 = pneg %p1544
        %p2211 = pneg %p1541
        %p2212 = pneg %p1570
        %p2213 = pneg %p1567
        %p2214 = scmp.lt.s32.totalorder %s158, 1
        %s2215 = scalar_select %p2214, %s158, 1
        %s2216 = scalar_lea.vmem %s133, %s2215
        %p2217 = scmp.lt.s32.totalorder %s158, 1
        %s2218 = scalar_select %p2217, %s158, 1
        %s2219 = smul.addr %s2218, 8
        %s2220 = smul.addr %s2219, 8
        %s2221 = scalar_lea.vmem %s1, %s2220
        %p2222 = scmp.lt.s32.totalorder %s158, 1
        %s2223 = scalar_select %p2222, %s158, 1
        %s2224 = scalar_lea.vmem %s133, %s2223
        %v2226 = vld [vmem:[%s2221] sm:$0xff]
        %v2227 = vld [vmem:[%s2221 + $0x8] sm:$0xff]
        %v2228 = vld [vmem:[%s2221 + $0x10] sm:$0xff]
        %v2229 = vld [vmem:[%s2221 + $0x18] sm:$0xff]
        %v2230 = vld [vmem:[%s2221 + $0x20] sm:$0xff]
        %v2231 = vld [vmem:[%s2221 + $0x28] sm:$0xff]
        %v2232 = vld [vmem:[%s2221 + $0x30] sm:$0xff]
        %v2233 = vld [vmem:[%s2221 + $0x38] sm:$0xff]
        %v2234 = vld [vmem:[%s3] sm:$0xf]
        %v2235 = vld [vmem:[%s3 + $0x4] sm:$0xf]
        %v2236 = vld [vmem:[%s3 + $0x8] sm:$0xf]
        %v2237 = vld [vmem:[%s3 + $0xc] sm:$0xf]
        %v2238 = vld [vmem:[%s3 + $0x10] sm:$0xf]
        %v2239 = vld [vmem:[%s3 + $0x14] sm:$0xf]
        %v2240 = vpack.c.bf16 %v2227, %v2226
        %v2241 = vpack.c.bf16 %v2229, %v2228
        %v2242 = vpack.c.bf16 %v2231, %v2230
        %v2243 = vpack.c.bf16 %v2233, %v2232
        %v2244 = vld [vmem:[%s5] sm:$0x1]
        %v2246 = vlaneseq
        %v2247 = vshrl.u32 %v2246, 7
        %v2248 = vsub.s32 0, %v2247
        %v2249 = vrot.slane %v2244, %v2248
        %v2257 = vunpack.c.l.b16 %v2234
        %v2258 = vunpack.c.l.b16 %v2235
        %v2259 = vunpack.c.l.b16 %v2236
        %v2260 = vunpack.c.l.b16 %v2237
        %v2261 = vunpack.c.l.b16 %v2238
        %v2262 = vunpack.c.l.b16 %v2239
        %v2263 = vpack.c.b16 %v2258, %v2257
        %v2264 = vpack.c.b16 %v2260, %v2259
        %v2265 = vpack.c.b16 %v2262, %v2261
        %vm2269 = vcmask 392192
        %v2271 = vsel %vm2269, %v2240, 0
        %v2274 = vsel %vm2269, %v2241, 0
        %v2277 = vsel %vm2269, %v2242, 0
        %v2280 = vsel %vm2269, %v2243, 0
        %2282 = vmatprep.subr.bf16.mxu0 0
        %2283 = vmatpush1.bf16.msra.mxu0 %v2263
        %2284 = vmatprep.subr.bf16.mxu0 0
        %2285 = vmatpush1.bf16.msra.mxu0 %v2264
        %2286 = vmatprep.subr.bf16.mxu0 0
        %2287 = vmatpush1.bf16.msra.mxu0 %v2265
        %2288 = vmatprep.subr.bf16.mxu0 0
        %2289 = vmatpush1.bf16.msra.mxu0 0
        %2290 = vmatprep.subr.bf16.mxu0 0
        %2291 = vmatpush1.bf16.msra.mxu0 0
        %2292 = vmatprep.subr.bf16.mxu0 0
        %2293 = vmatpush1.bf16.msra.mxu0 0
        %2294 = vmatprep.subr.bf16.mxu0 0
        %2295 = vmatpush1.bf16.msra.mxu0 0
        %2296 = vmatprep.subr.bf16.mxu0 0
        %2297 = vmatpush1.bf16.msra.mxu0 0
        %2298 = vmatprep.subr.bf16.mxu0 0
        %2299 = vmatpush1.bf16.msra.mxu0 0
        %2300 = vmatprep.subr.bf16.mxu0 0
        %2301 = vmatpush1.bf16.msra.mxu0 0
        %2302 = vmatprep.subr.bf16.mxu0 0
        %2303 = vmatpush1.bf16.msra.mxu0 0
        %2304 = vmatprep.subr.bf16.mxu0 0
        %2305 = vmatpush1.bf16.msra.mxu0 0
        %2306 = vmatprep.subr.bf16.mxu0 0
        %2307 = vmatpush1.bf16.msra.mxu0 0
        %2308 = vmatprep.subr.bf16.mxu0 0
        %2309 = vmatpush1.bf16.msra.mxu0 0
        %2310 = vmatprep.subr.bf16.mxu0 0
        %2311 = vmatpush1.bf16.msra.mxu0 0
        %2312 = vmatprep.subr.bf16.mxu0 0
        %2313 = vmatpush1.bf16.msra.mxu0 0
        %2314 = vmatprep.mubr.bf16.mxu0 0
        %2315 = vmatmul.mubr.bf16.gmra.mrb[0].mxu0 %v2271
        %v2316 = vpop.f32.mrb[0].mxu0
        %v2317 = vadd.f32 %v2249, %v2316
        %v2318 = vpop.f32.mrb[0].mxu0
        %v2319 = vpop.f32.mrb[0].mxu0
        %v2320 = vadd.f32 %v2249, %v2319
        %v2321 = vpop.f32.mrb[0].mxu0
        %2322 = vmatprep.mubr.bf16.mxu0 0
        %2323 = vmatmul.mubr.bf16.gmra.mrb[0].mxu0 %v2274
        %v2324 = vpop.f32.mrb[0].mxu0
        %v2325 = vadd.f32 %v2249, %v2324
        %v2326 = vpop.f32.mrb[0].mxu0
        %v2327 = vpop.f32.mrb[0].mxu0
        %v2328 = vadd.f32 %v2249, %v2327
        %v2329 = vpop.f32.mrb[0].mxu0
        %2330 = vmatprep.mubr.bf16.mxu0 0
        %2331 = vmatmul.mubr.bf16.gmra.mrb[0].mxu0 %v2277
        %v2332 = vpop.f32.mrb[0].mxu0
        %v2333 = vadd.f32 %v2249, %v2332
        %v2334 = vpop.f32.mrb[0].mxu0
        %v2335 = vpop.f32.mrb[0].mxu0
        %v2336 = vadd.f32 %v2249, %v2335
        %v2337 = vpop.f32.mrb[0].mxu0
        %2338 = vmatprep.mubr.bf16.mxu0 0
        %2339 = vmatmul.mubr.bf16.gmra.mrb[0].mxu0 %v2280
        %v2340 = vpop.f32.mrb[0].mxu0
        %v2341 = vadd.f32 %v2249, %v2340
        %v2342 = vpop.f32.mrb[0].mxu0
        %v2343 = vpop.f32.mrb[0].mxu0
        %v2344 = vadd.f32 %v2249, %v2343
        %v2345 = vpop.f32.mrb[0].mxu0
        %2346 = vdwg.mxu0
        %v2347 = vld [vmem:[%s7] sm:$0x1]
        %v2348 = vld [vmem:[%s9] sm:$0x1]
        %vm2349 = vcmask 261120
        %v2350 = vsel %vm2349, %v2317, 0.0
        %2351 = vadd.xlane.f32.xlu0 %v2350
        %v2352 = vpop.xlane.xlu0 %2351
        %v2353 = vsel %vm2349, %v2320, 0.0
        %2354 = vadd.xlane.f32.xlu0 %v2353
        %v2355 = vpop.xlane.xlu0 %2354
        %v2356 = vsel %vm2349, %v2325, 0.0
        %2357 = vadd.xlane.f32.xlu0 %v2356
        %v2358 = vpop.xlane.xlu0 %2357
        %v2359 = vsel %vm2349, %v2328, 0.0
        %2360 = vadd.xlane.f32.xlu0 %v2359
        %v2361 = vpop.xlane.xlu0 %2360
        %v2362 = vsel %vm2349, %v2333, 0.0
        %2363 = vadd.xlane.f32.xlu0 %v2362
        %v2364 = vpop.xlane.xlu0 %2363
        %v2365 = vsel %vm2349, %v2336, 0.0
        %2366 = vadd.xlane.f32.xlu0 %v2365
        %v2367 = vpop.xlane.xlu0 %2366
        %v2368 = vsel %vm2349, %v2341, 0.0
        %2369 = vadd.xlane.f32.xlu0 %v2368
        %v2370 = vpop.xlane.xlu0 %2369
        %v2371 = vsel %vm2349, %v2344, 0.0
        %2372 = vadd.xlane.f32.xlu0 %v2371
        %v2373 = vpop.xlane.xlu0 %2372
        %v2374 = vrcp.pop 32.0
        %v2375 = vmul.f32 %v2352, %v2374
        %v2376 = vmul.f32 %v2355, %v2374
        %v2377 = vmul.f32 %v2358, %v2374
        %v2378 = vmul.f32 %v2361, %v2374
        %v2379 = vmul.f32 %v2364, %v2374
        %v2380 = vmul.f32 %v2367, %v2374
        %v2381 = vmul.f32 %v2370, %v2374
        %v2382 = vmul.f32 %v2373, %v2374
        %v2383 = vsub.f32 %v2317, %v2375
        %v2384 = vsub.f32 %v2320, %v2376
        %v2385 = vsub.f32 %v2325, %v2377
        %v2386 = vsub.f32 %v2328, %v2378
        %v2387 = vsub.f32 %v2333, %v2379
        %v2388 = vsub.f32 %v2336, %v2380
        %v2389 = vsub.f32 %v2341, %v2381
        %v2390 = vsub.f32 %v2344, %v2382
        %v2391 = vmul.f32 %v2383, %v2383
        %v2392 = vmul.f32 %v2384, %v2384
        %v2393 = vmul.f32 %v2385, %v2385
        %v2394 = vmul.f32 %v2386, %v2386
        %v2395 = vmul.f32 %v2387, %v2387
        %v2396 = vmul.f32 %v2388, %v2388
        %v2397 = vmul.f32 %v2389, %v2389
        %v2398 = vmul.f32 %v2390, %v2390
        %v2399 = vsel %vm2349, %v2391, 0.0
        %2400 = vadd.xlane.f32.xlu0 %v2399
        %v2401 = vpop.xlane.xlu0 %2400
        %v2402 = vsel %vm2349, %v2392, 0.0
        %2403 = vadd.xlane.f32.xlu0 %v2402
        %v2404 = vpop.xlane.xlu0 %2403
        %v2405 = vsel %vm2349, %v2393, 0.0
        %2406 = vadd.xlane.f32.xlu0 %v2405
        %v2407 = vpop.xlane.xlu0 %2406
        %v2408 = vsel %vm2349, %v2394, 0.0
        %2409 = vadd.xlane.f32.xlu0 %v2408
        %v2410 = vpop.xlane.xlu0 %2409
        %v2411 = vsel %vm2349, %v2395, 0.0
        %2412 = vadd.xlane.f32.xlu0 %v2411
        %v2413 = vpop.xlane.xlu0 %2412
        %v2414 = vsel %vm2349, %v2396, 0.0
        %2415 = vadd.xlane.f32.xlu0 %v2414
        %v2416 = vpop.xlane.xlu0 %2415
        %v2417 = vsel %vm2349, %v2397, 0.0
        %2418 = vadd.xlane.f32.xlu0 %v2417
        %v2419 = vpop.xlane.xlu0 %2418
        %v2420 = vsel %vm2349, %v2398, 0.0
        %2421 = vadd.xlane.f32.xlu0 %v2420
        %v2422 = vpop.xlane.xlu0 %2421
        %v2423 = vmul.f32 %v2401, %v2374
        %v2424 = vmul.f32 %v2404, %v2374
        %v2425 = vmul.f32 %v2407, %v2374
        %v2426 = vmul.f32 %v2410, %v2374
        %v2427 = vmul.f32 %v2413, %v2374
        %v2428 = vmul.f32 %v2416, %v2374
        %v2429 = vmul.f32 %v2419, %v2374
        %v2430 = vmul.f32 %v2422, %v2374
        %v2431 = vadd.f32 %v2423, 1e-05
        %v2432 = vadd.f32 %v2424, 1e-05
        %v2433 = vadd.f32 %v2425, 1e-05
        %v2434 = vadd.f32 %v2426, 1e-05
        %v2435 = vadd.f32 %v2427, 1e-05
        %v2436 = vadd.f32 %v2428, 1e-05
        %v2437 = vadd.f32 %v2429, 1e-05
        %v2438 = vadd.f32 %v2430, 1e-05
        %v2439 = vrsqrt.pop %v2431
        %v2440 = vrsqrt.pop %v2432
        %v2441 = vrsqrt.pop %v2433
        %v2442 = vrsqrt.pop %v2434
        %v2443 = vrsqrt.pop %v2435
        %v2444 = vrsqrt.pop %v2436
        %v2445 = vrsqrt.pop %v2437
        %v2446 = vrsqrt.pop %v2438
        %v2447 = vmul.f32 %v2383, %v2439
        %v2448 = vmul.f32 %v2384, %v2440
        %v2449 = vmul.f32 %v2385, %v2441
        %v2450 = vmul.f32 %v2386, %v2442
        %v2451 = vmul.f32 %v2387, %v2443
        %v2452 = vmul.f32 %v2388, %v2444
        %v2453 = vmul.f32 %v2389, %v2445
        %v2454 = vmul.f32 %v2390, %v2446
        %v2456 = vlaneseq
        %v2457 = vshrl.u32 %v2456, 7
        %v2458 = vsub.s32 0, %v2457
        %v2459 = vrot.slane %v2347, %v2458
        %v2461 = vmul.f32 %v2447, %v2459
        %v2462 = vmul.f32 %v2448, %v2459
        %v2463 = vmul.f32 %v2449, %v2459
        %v2464 = vmul.f32 %v2450, %v2459
        %v2465 = vmul.f32 %v2451, %v2459
        %v2466 = vmul.f32 %v2452, %v2459
        %v2467 = vmul.f32 %v2453, %v2459
        %v2468 = vmul.f32 %v2454, %v2459
        %v2470 = vlaneseq
        %v2471 = vshrl.u32 %v2470, 7
        %v2472 = vsub.s32 0, %v2471
        %v2473 = vrot.slane %v2348, %v2472
        %v2475 = vadd.f32 %v2461, %v2473
        %v2476 = vadd.f32 %v2462, %v2473
        %v2477 = vadd.f32 %v2463, %v2473
        %v2478 = vadd.f32 %v2464, %v2473
        %v2479 = vadd.f32 %v2465, %v2473
        %v2480 = vadd.f32 %v2466, %v2473
        %v2481 = vadd.f32 %v2467, %v2473
        %v2482 = vadd.f32 %v2468, %v2473
        %v2483 = vld [vmem:[%s11] sm:$0xff]
        %v2484 = vld [vmem:[%s11 + $0x8] sm:$0xff]
        %v2485 = vld [vmem:[%s11 + $0x10] sm:$0xff]
        %v2486 = vld [vmem:[%s11 + $0x18] sm:$0xff]
        %v2487 = vld [vmem:[%s11 + $0x20] sm:$0xff]
        %v2488 = vld [vmem:[%s11 + $0x28] sm:$0xff]
        %v2489 = vld [vmem:[%s11 + $0x30] sm:$0xff]
        %v2490 = vld [vmem:[%s11 + $0x38] sm:$0xff]
        %v2491 = vadd.f32 %v2475, %v2483
        %v2492 = vadd.f32 %v2476, %v2484
        %v2493 = vadd.f32 %v2477, %v2485
        %v2494 = vadd.f32 %v2478, %v2486
        %v2495 = vadd.f32 %v2479, %v2487
        %v2496 = vadd.f32 %v2480, %v2488
        %v2497 = vadd.f32 %v2481, %v2489
        %v2498 = vadd.f32 %v2482, %v2490
        %v2499 = vld [vmem:[%s15] sm:$0x1]
        %v2500 = vld [vmem:[%s17] sm:$0x1]
        %v2501 = vsel %vm2349, %v2491, 0.0
        %2502 = vadd.xlane.f32.xlu0 %v2501
        %v2503 = vpop.xlane.xlu0 %2502
        %v2504 = vsel %vm2349, %v2492, 0.0
        %2505 = vadd.xlane.f32.xlu0 %v2504
        %v2506 = vpop.xlane.xlu0 %2505
        %v2507 = vsel %vm2349, %v2493, 0.0
        %2508 = vadd.xlane.f32.xlu0 %v2507
        %v2509 = vpop.xlane.xlu0 %2508
        %v2510 = vsel %vm2349, %v2494, 0.0
        %2511 = vadd.xlane.f32.xlu0 %v2510
        %v2512 = vpop.xlane.xlu0 %2511
        %v2513 = vsel %vm2349, %v2495, 0.0
        %2514 = vadd.xlane.f32.xlu0 %v2513
        %v2515 = vpop.xlane.xlu0 %2514
        %v2516 = vsel %vm2349, %v2496, 0.0
        %2517 = vadd.xlane.f32.xlu0 %v2516
        %v2518 = vpop.xlane.xlu0 %2517
        %v2519 = vsel %vm2349, %v2497, 0.0
        %2520 = vadd.xlane.f32.xlu0 %v2519
        %v2521 = vpop.xlane.xlu0 %2520
        %v2522 = vsel %vm2349, %v2498, 0.0
        %2523 = vadd.xlane.f32.xlu0 %v2522
        %v2524 = vpop.xlane.xlu0 %2523
        %v2525 = vmul.f32 %v2503, %v2374
        %v2526 = vmul.f32 %v2506, %v2374
        %v2527 = vmul.f32 %v2509, %v2374
        %v2528 = vmul.f32 %v2512, %v2374
        %v2529 = vmul.f32 %v2515, %v2374
        %v2530 = vmul.f32 %v2518, %v2374
        %v2531 = vmul.f32 %v2521, %v2374
        %v2532 = vmul.f32 %v2524, %v2374
        %v2533 = vsub.f32 %v2491, %v2525
        %v2534 = vsub.f32 %v2492, %v2526
        %v2535 = vsub.f32 %v2493, %v2527
        %v2536 = vsub.f32 %v2494, %v2528
        %v2537 = vsub.f32 %v2495, %v2529
        %v2538 = vsub.f32 %v2496, %v2530
        %v2539 = vsub.f32 %v2497, %v2531
        %v2540 = vsub.f32 %v2498, %v2532
        %v2541 = vmul.f32 %v2533, %v2533
        %v2542 = vmul.f32 %v2534, %v2534
        %v2543 = vmul.f32 %v2535, %v2535
        %v2544 = vmul.f32 %v2536, %v2536
        %v2545 = vmul.f32 %v2537, %v2537
        %v2546 = vmul.f32 %v2538, %v2538
        %v2547 = vmul.f32 %v2539, %v2539
        %v2548 = vmul.f32 %v2540, %v2540
        %v2549 = vsel %vm2349, %v2541, 0.0
        %2550 = vadd.xlane.f32.xlu0 %v2549
        %v2551 = vpop.xlane.xlu0 %2550
        %v2552 = vsel %vm2349, %v2542, 0.0
        %2553 = vadd.xlane.f32.xlu0 %v2552
        %v2554 = vpop.xlane.xlu0 %2553
        %v2555 = vsel %vm2349, %v2543, 0.0
        %2556 = vadd.xlane.f32.xlu0 %v2555
        %v2557 = vpop.xlane.xlu0 %2556
        %v2558 = vsel %vm2349, %v2544, 0.0
        %2559 = vadd.xlane.f32.xlu0 %v2558
        %v2560 = vpop.xlane.xlu0 %2559
        %v2561 = vsel %vm2349, %v2545, 0.0
        %2562 = vadd.xlane.f32.xlu0 %v2561
        %v2563 = vpop.xlane.xlu0 %2562
        %v2564 = vsel %vm2349, %v2546, 0.0
        %2565 = vadd.xlane.f32.xlu0 %v2564
        %v2566 = vpop.xlane.xlu0 %2565
        %v2567 = vsel %vm2349, %v2547, 0.0
        %2568 = vadd.xlane.f32.xlu0 %v2567
        %v2569 = vpop.xlane.xlu0 %2568
        %v2570 = vsel %vm2349, %v2548, 0.0
        %2571 = vadd.xlane.f32.xlu0 %v2570
        %v2572 = vpop.xlane.xlu0 %2571
        %v2573 = vmul.f32 %v2551, %v2374
        %v2574 = vmul.f32 %v2554, %v2374
        %v2575 = vmul.f32 %v2557, %v2374
        %v2576 = vmul.f32 %v2560, %v2374
        %v2577 = vmul.f32 %v2563, %v2374
        %v2578 = vmul.f32 %v2566, %v2374
        %v2579 = vmul.f32 %v2569, %v2374
        %v2580 = vmul.f32 %v2572, %v2374
        %v2581 = vadd.f32 %v2573, 1e-05
        %v2582 = vadd.f32 %v2574, 1e-05
        %v2583 = vadd.f32 %v2575, 1e-05
        %v2584 = vadd.f32 %v2576, 1e-05
        %v2585 = vadd.f32 %v2577, 1e-05
        %v2586 = vadd.f32 %v2578, 1e-05
        %v2587 = vadd.f32 %v2579, 1e-05
        %v2588 = vadd.f32 %v2580, 1e-05
        %v2589 = vrsqrt.pop %v2581
        %v2590 = vrsqrt.pop %v2582
        %v2591 = vrsqrt.pop %v2583
        %v2592 = vrsqrt.pop %v2584
        %v2593 = vrsqrt.pop %v2585
        %v2594 = vrsqrt.pop %v2586
        %v2595 = vrsqrt.pop %v2587
        %v2596 = vrsqrt.pop %v2588
        %v2597 = vmul.f32 %v2533, %v2589
        %v2598 = vmul.f32 %v2534, %v2590
        %v2599 = vmul.f32 %v2535, %v2591
        %v2600 = vmul.f32 %v2536, %v2592
        %v2601 = vmul.f32 %v2537, %v2593
        %v2602 = vmul.f32 %v2538, %v2594
        %v2603 = vmul.f32 %v2539, %v2595
        %v2604 = vmul.f32 %v2540, %v2596
        %v2606 = vlaneseq
        %v2607 = vshrl.u32 %v2606, 7
        %v2608 = vsub.s32 0, %v2607
        %v2609 = vrot.slane %v2499, %v2608
        %v2611 = vmul.f32 %v2597, %v2609
        %v2612 = vmul.f32 %v2598, %v2609
        %v2613 = vmul.f32 %v2599, %v2609
        %v2614 = vmul.f32 %v2600, %v2609
        %v2615 = vmul.f32 %v2601, %v2609
        %v2616 = vmul.f32 %v2602, %v2609
        %v2617 = vmul.f32 %v2603, %v2609
        %v2618 = vmul.f32 %v2604, %v2609
        %v2620 = vlaneseq
        %v2621 = vshrl.u32 %v2620, 7
        %v2622 = vsub.s32 0, %v2621
        %v2623 = vrot.slane %v2500, %v2622
        %v2625 = vadd.f32 %v2611, %v2623
        %v2626 = vadd.f32 %v2612, %v2623
        %v2627 = vadd.f32 %v2613, %v2623
        %v2628 = vadd.f32 %v2614, %v2623
        %v2629 = vadd.f32 %v2615, %v2623
        %v2630 = vadd.f32 %v2616, %v2623
        %v2631 = vadd.f32 %v2617, %v2623
        %v2632 = vadd.f32 %v2618, %v2623
        %v2633 = vld [vmem:[%s19] sm:$0xf]
        %v2634 = vld [vmem:[%s19 + $0x4] sm:$0xf]
        %v2635 = vld [vmem:[%s19 + $0x8] sm:$0xf]
        %v2636 = vld [vmem:[%s19 + $0xc] sm:$0xf]
        %v2637 = vpack.c.bf16 %v2626, %v2625
        %v2638 = vpack.c.bf16 %v2628, %v2627
        %v2639 = vpack.c.bf16 %v2630, %v2629
        %v2640 = vpack.c.bf16 %v2632, %v2631
        %v2641 = vld [vmem:[%s21] sm:$0x1]
        %v2643 = vlaneseq
        %v2644 = vshrl.u32 %v2643, 7
        %v2645 = vsub.s32 0, %v2644
        %v2646 = vrot.slane %v2641, %v2645
        %v2652 = vunpack.c.l.b16 %v2633
        %v2653 = vunpack.c.l.b16 %v2634
        %v2654 = vunpack.c.l.b16 %v2635
        %v2655 = vunpack.c.l.b16 %v2636
        %v2656 = vpack.c.b16 %v2653, %v2652
        %v2657 = vpack.c.b16 %v2655, %v2654
        %v2661 = vsel %vm2349, %v2637, 0
        %v2664 = vsel %vm2349, %v2638, 0
        %v2667 = vsel %vm2349, %v2639, 0
        %v2670 = vsel %vm2349, %v2640, 0
        %2672 = vmatprep.subr.bf16.mxu0 0
        %2673 = vmatpush1.bf16.msra.mxu0 %v2656
        %2674 = vmatprep.subr.bf16.mxu0 0
        %2675 = vmatpush1.bf16.msra.mxu0 %v2657
        %2676 = vmatprep.subr.bf16.mxu0 0
        %2677 = vmatpush1.bf16.msra.mxu0 0
        %2678 = vmatprep.subr.bf16.mxu0 0
        %2679 = vmatpush1.bf16.msra.mxu0 0
        %2680 = vmatprep.subr.bf16.mxu0 0
        %2681 = vmatpush1.bf16.msra.mxu0 0
        %2682 = vmatprep.subr.bf16.mxu0 0
        %2683 = vmatpush1.bf16.msra.mxu0 0
        %2684 = vmatprep.subr.bf16.mxu0 0
        %2685 = vmatpush1.bf16.msra.mxu0 0
        %2686 = vmatprep.subr.bf16.mxu0 0
        %2687 = vmatpush1.bf16.msra.mxu0 0
        %2688 = vmatprep.subr.bf16.mxu0 0
        %2689 = vmatpush1.bf16.msra.mxu0 0
        %2690 = vmatprep.subr.bf16.mxu0 0
        %2691 = vmatpush1.bf16.msra.mxu0 0
        %2692 = vmatprep.subr.bf16.mxu0 0
        %2693 = vmatpush1.bf16.msra.mxu0 0
        %2694 = vmatprep.subr.bf16.mxu0 0
        %2695 = vmatpush1.bf16.msra.mxu0 0
        %2696 = vmatprep.subr.bf16.mxu0 0
        %2697 = vmatpush1.bf16.msra.mxu0 0
        %2698 = vmatprep.subr.bf16.mxu0 0
        %2699 = vmatpush1.bf16.msra.mxu0 0
        %2700 = vmatprep.subr.bf16.mxu0 0
        %2701 = vmatpush1.bf16.msra.mxu0 0
        %2702 = vmatprep.subr.bf16.mxu0 0
        %2703 = vmatpush1.bf16.msra.mxu0 0
        %2704 = vmatprep.mubr.bf16.mxu0 0
        %2705 = vmatmul.mubr.bf16.gmra.mrb[0].mxu0 %v2661
        %v2706 = vpop.f32.mrb[0].mxu0
        %v2707 = vadd.f32 %v2646, %v2706
        %v2708 = vpop.f32.mrb[0].mxu0
        %v2709 = vpop.f32.mrb[0].mxu0
        %v2710 = vadd.f32 %v2646, %v2709
        %v2711 = vpop.f32.mrb[0].mxu0
        %2712 = vmatprep.mubr.bf16.mxu0 0
        %2713 = vmatmul.mubr.bf16.gmra.mrb[0].mxu0 %v2664
        %v2714 = vpop.f32.mrb[0].mxu0
        %v2715 = vadd.f32 %v2646, %v2714
        %v2716 = vpop.f32.mrb[0].mxu0
        %v2717 = vpop.f32.mrb[0].mxu0
        %v2718 = vadd.f32 %v2646, %v2717
        %v2719 = vpop.f32.mrb[0].mxu0
        %2720 = vmatprep.mubr.bf16.mxu0 0
        %2721 = vmatmul.mubr.bf16.gmra.mrb[0].mxu0 %v2667
        %v2722 = vpop.f32.mrb[0].mxu0
        %v2723 = vadd.f32 %v2646, %v2722
        %v2724 = vpop.f32.mrb[0].mxu0
        %v2725 = vpop.f32.mrb[0].mxu0
        %v2726 = vadd.f32 %v2646, %v2725
        %v2727 = vpop.f32.mrb[0].mxu0
        %2728 = vmatprep.mubr.bf16.mxu0 0
        %2729 = vmatmul.mubr.bf16.gmra.mrb[0].mxu0 %v2670
        %v2730 = vpop.f32.mrb[0].mxu0
        %v2731 = vadd.f32 %v2646, %v2730
        %v2732 = vpop.f32.mrb[0].mxu0
        %v2733 = vpop.f32.mrb[0].mxu0
        %v2734 = vadd.f32 %v2646, %v2733
        %v2735 = vpop.f32.mrb[0].mxu0
        %2736 = vdwg.mxu0
        %v2737 = vpack.c.bf16 %v2710, %v2707
        %v2738 = vpack.c.bf16 %v2718, %v2715
        %v2739 = vpack.c.bf16 %v2726, %v2723
        %v2740 = vpack.c.bf16 %v2734, %v2731
        %v2741 = vld [vmem:[%s13] sm:$0xf]
        %v2742 = vld [vmem:[%s13 + $0x4] sm:$0xf]
        %v2743 = vld [vmem:[%s13 + $0x8] sm:$0xf]
        %v2744 = vld [vmem:[%s13 + $0xc] sm:$0xf]
        %v2745 = vld [vmem:[%s13 + $0x10] sm:$0xf]
        %v2746 = vld [vmem:[%s13 + $0x14] sm:$0xf]
        %v2747 = vld [vmem:[%s13 + $0x18] sm:$0xf]
        %v2748 = vld [vmem:[%s13 + $0x1c] sm:$0xf]
        %v2749 = vunpack.c.l.bf16 %v2741
        %v2750 = vunpack.c.l.bf16 %v2742
        %v2751 = vunpack.c.l.bf16 %v2743
        %v2752 = vunpack.c.l.bf16 %v2744
        %v2753 = vunpack.c.l.bf16 %v2745
        %v2754 = vunpack.c.l.bf16 %v2746
        %v2755 = vunpack.c.l.bf16 %v2747
        %v2756 = vunpack.c.l.bf16 %v2748
        %2761 = vrot.lane.b32.xlu0 %v2737, 96
        %v2762 = vpop.permute.xlu0 %2761
        %2763 = vrot.lane.b32.xlu0 %v2738, 96
        %v2764 = vpop.permute.xlu0 %2763
        %2765 = vrot.lane.b32.xlu0 %v2739, 96
        %v2766 = vpop.permute.xlu0 %2765
        %2767 = vrot.lane.b32.xlu0 %v2740, 96
        %v2768 = vpop.permute.xlu0 %2767
        %vm2769 = vcmask 130048
        %v2771 = vsel %vm2769, %v2737, 0
        %v2774 = vsel %vm2769, %v2738, 0
        %v2777 = vsel %vm2769, %v2739, 0
        %v2780 = vsel %vm2769, %v2740, 0
        %v2783 = vsel %vm2769, %v2762, 0
        %v2786 = vsel %vm2769, %v2764, 0
        %v2789 = vsel %vm2769, %v2766, 0
        %v2792 = vsel %vm2769, %v2768, 0
        %2794 = vmatprep.subr.bf16.mxu0 0
        %2795 = vmatpush1.bf16.xpose.msra.mxu0 %v2783
        %2796 = vmatprep.subr.bf16.mxu0 0
        %2797 = vmatpush1.bf16.xpose.msra.mxu0 %v2786
        %2798 = vmatprep.subr.bf16.mxu0 0
        %2799 = vmatpush1.bf16.xpose.msra.mxu0 %v2789
        %2800 = vmatprep.subr.bf16.mxu0 0
        %2801 = vmatpush1.bf16.xpose.msra.mxu0 %v2792
        %2802 = vmatprep.subr.bf16.mxu0 0
        %2803 = vmatpush1.bf16.xpose.msra.mxu0 0
        %2804 = vmatprep.subr.bf16.mxu0 0
        %2805 = vmatpush1.bf16.xpose.msra.mxu0 0
        %2806 = vmatprep.subr.bf16.mxu0 0
        %2807 = vmatpush1.bf16.xpose.msra.mxu0 0
        %2808 = vmatprep.subr.bf16.mxu0 0
        %2809 = vmatpush1.bf16.xpose.msra.mxu0 0
        %2810 = vmatprep.subr.bf16.mxu0 0
        %2811 = vmatpush1.bf16.xpose.msra.mxu0 0
        %2812 = vmatprep.subr.bf16.mxu0 0
        %2813 = vmatpush1.bf16.xpose.msra.mxu0 0
        %2814 = vmatprep.subr.bf16.mxu0 0
        %2815 = vmatpush1.bf16.xpose.msra.mxu0 0
        %2816 = vmatprep.subr.bf16.mxu0 0
        %2817 = vmatpush1.bf16.xpose.msra.mxu0 0
        %2818 = vmatprep.subr.bf16.mxu0 0
        %2819 = vmatpush1.bf16.xpose.msra.mxu0 0
        %2820 = vmatprep.subr.bf16.mxu0 0
        %2821 = vmatpush1.bf16.xpose.msra.mxu0 0
        %2822 = vmatprep.subr.bf16.mxu0 0
        %2823 = vmatpush1.bf16.xpose.msra.mxu0 0
        %2824 = vmatprep.subr.bf16.mxu0 0
        %2825 = vmatpush1.bf16.xpose.msra.mxu0 0
        %2826 = vmatprep.mubr.bf16.mxu0 0
        %2827 = vmatmul.mubr.bf16.gmra.mrb[0].mxu0 %v2771
        %v2828 = vpop.f32.mrb[0].mxu0
        %v2829 = vadd.f32 %v2749, %v2828
        %v2830 = vpop.f32.mrb[0].mxu0
        %v2831 = vpop.f32.mrb[0].mxu0
        %v2832 = vadd.f32 %v2750, %v2831
        %v2833 = vpop.f32.mrb[0].mxu0
        %2834 = vmatprep.mubr.bf16.mxu0 0
        %2835 = vmatmul.mubr.bf16.gmra.mrb[0].mxu0 %v2774
        %v2836 = vpop.f32.mrb[0].mxu0
        %v2837 = vadd.f32 %v2751, %v2836
        %v2838 = vpop.f32.mrb[0].mxu0
        %v2839 = vpop.f32.mrb[0].mxu0
        %v2840 = vadd.f32 %v2752, %v2839
        %v2841 = vpop.f32.mrb[0].mxu0
        %2842 = vmatprep.mubr.bf16.mxu0 0
        %2843 = vmatmul.mubr.bf16.gmra.mrb[0].mxu0 %v2777
        %v2844 = vpop.f32.mrb[0].mxu0
        %v2845 = vadd.f32 %v2753, %v2844
        %v2846 = vpop.f32.mrb[0].mxu0
        %v2847 = vpop.f32.mrb[0].mxu0
        %v2848 = vadd.f32 %v2754, %v2847
        %v2849 = vpop.f32.mrb[0].mxu0
        %2850 = vmatprep.mubr.bf16.mxu0 0
        %2851 = vmatmul.mubr.bf16.gmra.mrb[0].mxu0 %v2780
        %v2852 = vpop.f32.mrb[0].mxu0
        %v2853 = vadd.f32 %v2755, %v2852
        %v2854 = vpop.f32.mrb[0].mxu0
        %v2855 = vpop.f32.mrb[0].mxu0
        %v2856 = vadd.f32 %v2756, %v2855
        %v2857 = vpop.f32.mrb[0].mxu0
        %2858 = vdwg.mxu0
        %vm2859 = vcmask 523264
        %v2860 = vsel %vm2859, %v2829, -inf
        %2861 = vmax.xlane.f32.xlu0 %v2860
        %v2862 = vpop.xlane.xlu0 %2861
        %v2863 = vsel %vm2859, %v2832, -inf
        %2864 = vmax.xlane.f32.xlu0 %v2863
        %v2865 = vpop.xlane.xlu0 %2864
        %v2866 = vsel %vm2859, %v2837, -inf
        %2867 = vmax.xlane.f32.xlu0 %v2866
        %v2868 = vpop.xlane.xlu0 %2867
        %v2869 = vsel %vm2859, %v2840, -inf
        %2870 = vmax.xlane.f32.xlu0 %v2869
        %v2871 = vpop.xlane.xlu0 %2870
        %v2872 = vsel %vm2859, %v2845, -inf
        %2873 = vmax.xlane.f32.xlu0 %v2872
        %v2874 = vpop.xlane.xlu0 %2873
        %v2875 = vsel %vm2859, %v2848, -inf
        %2876 = vmax.xlane.f32.xlu0 %v2875
        %v2877 = vpop.xlane.xlu0 %2876
        %v2878 = vsel %vm2859, %v2853, -inf
        %2879 = vmax.xlane.f32.xlu0 %v2878
        %v2880 = vpop.xlane.xlu0 %2879
        %v2881 = vsel %vm2859, %v2856, -inf
        %2882 = vmax.xlane.f32.xlu0 %v2881
        %v2883 = vpop.xlane.xlu0 %2882
        %v2884 = vsub.f32 %v2829, %v2862
        %v2885 = vsub.f32 %v2832, %v2865
        %v2886 = vsub.f32 %v2837, %v2868
        %v2887 = vsub.f32 %v2840, %v2871
        %v2888 = vsub.f32 %v2845, %v2874
        %v2889 = vsub.f32 %v2848, %v2877
        %v2890 = vsub.f32 %v2853, %v2880
        %v2891 = vsub.f32 %v2856, %v2883
        %v2892 = vmul.f32 %v2884, 1.442695
        %v2893 = vpow.pop %v2892
        %v2894 = vmul.f32 %v2885, 1.442695
        %v2895 = vpow.pop %v2894
        %v2896 = vmul.f32 %v2886, 1.442695
        %v2897 = vpow.pop %v2896
        %v2898 = vmul.f32 %v2887, 1.442695
        %v2899 = vpow.pop %v2898
        %v2900 = vmul.f32 %v2888, 1.442695
        %v2901 = vpow.pop %v2900
        %v2902 = vmul.f32 %v2889, 1.442695
        %v2903 = vpow.pop %v2902
        %v2904 = vmul.f32 %v2890, 1.442695
        %v2905 = vpow.pop %v2904
        %v2906 = vmul.f32 %v2891, 1.442695
        %v2907 = vpow.pop %v2906
        %v2908 = vsel %vm2859, %v2893, 0.0
        %2909 = vadd.xlane.f32.xlu0 %v2908
        %v2910 = vpop.xlane.xlu0 %2909
        %v2911 = vsel %vm2859, %v2895, 0.0
        %2912 = vadd.xlane.f32.xlu0 %v2911
        %v2913 = vpop.xlane.xlu0 %2912
        %v2914 = vsel %vm2859, %v2897, 0.0
        %2915 = vadd.xlane.f32.xlu0 %v2914
        %v2916 = vpop.xlane.xlu0 %2915
        %v2917 = vsel %vm2859, %v2899, 0.0
        %2918 = vadd.xlane.f32.xlu0 %v2917
        %v2919 = vpop.xlane.xlu0 %2918
        %v2920 = vsel %vm2859, %v2901, 0.0
        %2921 = vadd.xlane.f32.xlu0 %v2920
        %v2922 = vpop.xlane.xlu0 %2921
        %v2923 = vsel %vm2859, %v2903, 0.0
        %2924 = vadd.xlane.f32.xlu0 %v2923
        %v2925 = vpop.xlane.xlu0 %2924
        %v2926 = vsel %vm2859, %v2905, 0.0
        %2927 = vadd.xlane.f32.xlu0 %v2926
        %v2928 = vpop.xlane.xlu0 %2927
        %v2929 = vsel %vm2859, %v2907, 0.0
        %2930 = vadd.xlane.f32.xlu0 %v2929
        %v2931 = vpop.xlane.xlu0 %2930
        %v2932 = vrcp.pop %v2910
        %v2933 = vrcp.pop %v2913
        %v2934 = vrcp.pop %v2916
        %v2935 = vrcp.pop %v2919
        %v2936 = vrcp.pop %v2922
        %v2937 = vrcp.pop %v2925
        %v2938 = vrcp.pop %v2928
        %v2939 = vrcp.pop %v2931
        %v2940 = vmul.f32 %v2893, %v2932
        %v2941 = vmul.f32 %v2895, %v2933
        %v2942 = vmul.f32 %v2897, %v2934
        %v2943 = vmul.f32 %v2899, %v2935
        %v2944 = vmul.f32 %v2901, %v2936
        %v2945 = vmul.f32 %v2903, %v2937
        %v2946 = vmul.f32 %v2905, %v2938
        %v2947 = vmul.f32 %v2907, %v2939
        %v2948 = vpack.c.bf16 %v2941, %v2940
        %v2949 = vpack.c.bf16 %v2943, %v2942
        %v2950 = vpack.c.bf16 %v2945, %v2944
        %v2951 = vpack.c.bf16 %v2947, %v2946
        %2952 = vrot.lane.b32.xlu0 %v2737, 64
        %v2953 = vpop.permute.xlu0 %2952
        %2954 = vrot.lane.b32.xlu0 %v2738, 64
        %v2955 = vpop.permute.xlu0 %2954
        %2956 = vrot.lane.b32.xlu0 %v2739, 64
        %v2957 = vpop.permute.xlu0 %2956
        %2958 = vrot.lane.b32.xlu0 %v2740, 64
        %v2959 = vpop.permute.xlu0 %2958
        %v2965 = vsel %vm2859, %v2948, 0
        %v2968 = vsel %vm2859, %v2949, 0
        %v2971 = vsel %vm2859, %v2950, 0
        %v2974 = vsel %vm2859, %v2951, 0
        %2976 = vmatprep.subr.bf16.mxu0 0
        %2977 = vmatpush1.bf16.msra.mxu0 %v2953
        %2978 = vmatprep.subr.bf16.mxu0 0
        %2979 = vmatpush1.bf16.msra.mxu0 %v2955
        %2980 = vmatprep.subr.bf16.mxu0 0
        %2981 = vmatpush1.bf16.msra.mxu0 %v2957
        %2982 = vmatprep.subr.bf16.mxu0 0
        %2983 = vmatpush1.bf16.msra.mxu0 %v2959
        %2984 = vmatprep.subr.bf16.mxu0 0
        %2985 = vmatpush1.bf16.msra.mxu0 0
        %2986 = vmatprep.subr.bf16.mxu0 0
        %2987 = vmatpush1.bf16.msra.mxu0 0
        %2988 = vmatprep.subr.bf16.mxu0 0
        %2989 = vmatpush1.bf16.msra.mxu0 0
        %2990 = vmatprep.subr.bf16.mxu0 0
        %2991 = vmatpush1.bf16.msra.mxu0 0
        %2992 = vmatprep.subr.bf16.mxu0 0
        %2993 = vmatpush1.bf16.msra.mxu0 0
        %2994 = vmatprep.subr.bf16.mxu0 0
        %2995 = vmatpush1.bf16.msra.mxu0 0
        %2996 = vmatprep.subr.bf16.mxu0 0
        %2997 = vmatpush1.bf16.msra.mxu0 0
        %2998 = vmatprep.subr.bf16.mxu0 0
        %2999 = vmatpush1.bf16.msra.mxu0 0
        %3000 = vmatprep.subr.bf16.mxu0 0
        %3001 = vmatpush1.bf16.msra.mxu0 0
        %3002 = vmatprep.subr.bf16.mxu0 0
        %3003 = vmatpush1.bf16.msra.mxu0 0
        %3004 = vmatprep.subr.bf16.mxu0 0
        %3005 = vmatpush1.bf16.msra.mxu0 0
        %3006 = vmatprep.subr.bf16.mxu0 0
        %3007 = vmatpush1.bf16.msra.mxu0 0
        %3008 = vmatprep.mubr.bf16.mxu0 0
        %3009 = vmatmul.mubr.bf16.gmra.mrb[0].mxu0 %v2965
        %v3010 = vpop.f32.mrb[0].mxu0
        %v3011 = vadd.f32 0.0, %v3010
        %v3012 = vpop.f32.mrb[0].mxu0
        %v3013 = vpop.f32.mrb[0].mxu0
        %v3014 = vadd.f32 0.0, %v3013
        %v3015 = vpop.f32.mrb[0].mxu0
        %3016 = vmatprep.mubr.bf16.mxu0 0
        %3017 = vmatmul.mubr.bf16.gmra.mrb[0].mxu0 %v2968
        %v3018 = vpop.f32.mrb[0].mxu0
        %v3019 = vadd.f32 0.0, %v3018
        %v3020 = vpop.f32.mrb[0].mxu0
        %v3021 = vpop.f32.mrb[0].mxu0
        %v3022 = vadd.f32 0.0, %v3021
        %v3023 = vpop.f32.mrb[0].mxu0
        %3024 = vmatprep.mubr.bf16.mxu0 0
        %3025 = vmatmul.mubr.bf16.gmra.mrb[0].mxu0 %v2971
        %v3026 = vpop.f32.mrb[0].mxu0
        %v3027 = vadd.f32 0.0, %v3026
        %v3028 = vpop.f32.mrb[0].mxu0
        %v3029 = vpop.f32.mrb[0].mxu0
        %v3030 = vadd.f32 0.0, %v3029
        %v3031 = vpop.f32.mrb[0].mxu0
        %3032 = vmatprep.mubr.bf16.mxu0 0
        %3033 = vmatmul.mubr.bf16.gmra.mrb[0].mxu0 %v2974
        %v3034 = vpop.f32.mrb[0].mxu0
        %v3035 = vadd.f32 0.0, %v3034
        %v3036 = vpop.f32.mrb[0].mxu0
        %v3037 = vpop.f32.mrb[0].mxu0
        %v3038 = vadd.f32 0.0, %v3037
        %v3039 = vpop.f32.mrb[0].mxu0
        %3040 = vdwg.mxu0
        %s3041 = scalar_lea.vmem %s13, 32
        %v3042 = vld [vmem:[%s3041] sm:$0xf]
        %v3043 = vld [vmem:[%s3041 + $0x4] sm:$0xf]
        %v3044 = vld [vmem:[%s3041 + $0x8] sm:$0xf]
        %v3045 = vld [vmem:[%s3041 + $0xc] sm:$0xf]
        %v3046 = vld [vmem:[%s3041 + $0x10] sm:$0xf]
        %v3047 = vld [vmem:[%s3041 + $0x14] sm:$0xf]
        %v3048 = vld [vmem:[%s3041 + $0x18] sm:$0xf]
        %v3049 = vld [vmem:[%s3041 + $0x1c] sm:$0xf]
        %v3050 = vunpack.c.l.bf16 %v3042
        %v3051 = vunpack.c.l.bf16 %v3043
        %v3052 = vunpack.c.l.bf16 %v3044
        %v3053 = vunpack.c.l.bf16 %v3045
        %v3054 = vunpack.c.l.bf16 %v3046
        %v3055 = vunpack.c.l.bf16 %v3047
        %v3056 = vunpack.c.l.bf16 %v3048
        %v3057 = vunpack.c.l.bf16 %v3049
        %3058 = vrot.lane.b32.xlu0 %v2737, 112
        %v3059 = vpop.permute.xlu0 %3058
        %3060 = vrot.lane.b32.xlu0 %v2738, 112
        %v3061 = vpop.permute.xlu0 %3060
        %3062 = vrot.lane.b32.xlu0 %v2739, 112
        %v3063 = vpop.permute.xlu0 %3062
        %3064 = vrot.lane.b32.xlu0 %v2740, 112
        %v3065 = vpop.permute.xlu0 %3064
        %3066 = vrot.lane.b32.xlu0 %v2737, 80
        %v3067 = vpop.permute.xlu0 %3066
        %3068 = vrot.lane.b32.xlu0 %v2738, 80
        %v3069 = vpop.permute.xlu0 %3068
        %3070 = vrot.lane.b32.xlu0 %v2739, 80
        %v3071 = vpop.permute.xlu0 %3070
        %3072 = vrot.lane.b32.xlu0 %v2740, 80
        %v3073 = vpop.permute.xlu0 %3072
        %v3075 = vsel %vm2769, %v3059, 0
        %v3078 = vsel %vm2769, %v3061, 0
        %v3081 = vsel %vm2769, %v3063, 0
        %v3084 = vsel %vm2769, %v3065, 0
        %v3087 = vsel %vm2769, %v3067, 0
        %v3090 = vsel %vm2769, %v3069, 0
        %v3093 = vsel %vm2769, %v3071, 0
        %v3096 = vsel %vm2769, %v3073, 0
        %3098 = vmatprep.subr.bf16.mxu0 0
        %3099 = vmatpush1.bf16.xpose.msra.mxu0 %v3087
        %3100 = vmatprep.subr.bf16.mxu0 0
        %3101 = vmatpush1.bf16.xpose.msra.mxu0 %v3090
        %3102 = vmatprep.subr.bf16.mxu0 0
        %3103 = vmatpush1.bf16.xpose.msra.mxu0 %v3093
        %3104 = vmatprep.subr.bf16.mxu0 0
        %3105 = vmatpush1.bf16.xpose.msra.mxu0 %v3096
        %3106 = vmatprep.subr.bf16.mxu0 0
        %3107 = vmatpush1.bf16.xpose.msra.mxu0 0
        %3108 = vmatprep.subr.bf16.mxu0 0
        %3109 = vmatpush1.bf16.xpose.msra.mxu0 0
        %3110 = vmatprep.subr.bf16.mxu0 0
        %3111 = vmatpush1.bf16.xpose.msra.mxu0 0
        %3112 = vmatprep.subr.bf16.mxu0 0
        %3113 = vmatpush1.bf16.xpose.msra.mxu0 0
        %3114 = vmatprep.subr.bf16.mxu0 0
        %3115 = vmatpush1.bf16.xpose.msra.mxu0 0
        %3116 = vmatprep.subr.bf16.mxu0 0
        %3117 = vmatpush1.bf16.xpose.msra.mxu0 0
        %3118 = vmatprep.subr.bf16.mxu0 0
        %3119 = vmatpush1.bf16.xpose.msra.mxu0 0
        %3120 = vmatprep.subr.bf16.mxu0 0
        %3121 = vmatpush1.bf16.xpose.msra.mxu0 0
        %3122 = vmatprep.subr.bf16.mxu0 0
        %3123 = vmatpush1.bf16.xpose.msra.mxu0 0
        %3124 = vmatprep.subr.bf16.mxu0 0
        %3125 = vmatpush1.bf16.xpose.msra.mxu0 0
        %3126 = vmatprep.subr.bf16.mxu0 0
        %3127 = vmatpush1.bf16.xpose.msra.mxu0 0
        %3128 = vmatprep.subr.bf16.mxu0 0
        %3129 = vmatpush1.bf16.xpose.msra.mxu0 0
        %3130 = vmatprep.mubr.bf16.mxu0 0
        %3131 = vmatmul.mubr.bf16.gmra.mrb[0].mxu0 %v3075
        %v3132 = vpop.f32.mrb[0].mxu0
        %v3133 = vadd.f32 %v3050, %v3132
        %v3134 = vpop.f32.mrb[0].mxu0
        %v3135 = vpop.f32.mrb[0].mxu0
        %v3136 = vadd.f32 %v3051, %v3135
        %v3137 = vpop.f32.mrb[0].mxu0
        %3138 = vmatprep.mubr.bf16.mxu0 0
        %3139 = vmatmul.mubr.bf16.gmra.mrb[0].mxu0 %v3078
        %v3140 = vpop.f32.mrb[0].mxu0
        %v3141 = vadd.f32 %v3052, %v3140
        %v3142 = vpop.f32.mrb[0].mxu0
        %v3143 = vpop.f32.mrb[0].mxu0
        %v3144 = vadd.f32 %v3053, %v3143
        %v3145 = vpop.f32.mrb[0].mxu0
        %3146 = vmatprep.mubr.bf16.mxu0 0
        %3147 = vmatmul.mubr.bf16.gmra.mrb[0].mxu0 %v3081
        %v3148 = vpop.f32.mrb[0].mxu0
        %v3149 = vadd.f32 %v3054, %v3148
        %v3150 = vpop.f32.mrb[0].mxu0
        %v3151 = vpop.f32.mrb[0].mxu0
        %v3152 = vadd.f32 %v3055, %v3151
        %v3153 = vpop.f32.mrb[0].mxu0
        %3154 = vmatprep.mubr.bf16.mxu0 0
        %3155 = vmatmul.mubr.bf16.gmra.mrb[0].mxu0 %v3084
        %v3156 = vpop.f32.mrb[0].mxu0
        %v3157 = vadd.f32 %v3056, %v3156
        %v3158 = vpop.f32.mrb[0].mxu0
        %v3159 = vpop.f32.mrb[0].mxu0
        %v3160 = vadd.f32 %v3057, %v3159
        %v3161 = vpop.f32.mrb[0].mxu0
        %3162 = vdwg.mxu0
        %v3163 = vsel %vm2859, %v3133, -inf
        %3164 = vmax.xlane.f32.xlu0 %v3163
        %v3165 = vpop.xlane.xlu0 %3164
        %v3166 = vsel %vm2859, %v3136, -inf
        %3167 = vmax.xlane.f32.xlu0 %v3166
        %v3168 = vpop.xlane.xlu0 %3167
        %v3169 = vsel %vm2859, %v3141, -inf
        %3170 = vmax.xlane.f32.xlu0 %v3169
        %v3171 = vpop.xlane.xlu0 %3170
        %v3172 = vsel %vm2859, %v3144, -inf
        %3173 = vmax.xlane.f32.xlu0 %v3172
        %v3174 = vpop.xlane.xlu0 %3173
        %v3175 = vsel %vm2859, %v3149, -inf
        %3176 = vmax.xlane.f32.xlu0 %v3175
        %v3177 = vpop.xlane.xlu0 %3176
        %v3178 = vsel %vm2859, %v3152, -inf
        %3179 = vmax.xlane.f32.xlu0 %v3178
        %v3180 = vpop.xlane.xlu0 %3179
        %v3181 = vsel %vm2859, %v3157, -inf
        %3182 = vmax.xlane.f32.xlu0 %v3181
        %v3183 = vpop.xlane.xlu0 %3182
        %v3184 = vsel %vm2859, %v3160, -inf
        %3185 = vmax.xlane.f32.xlu0 %v3184
        %v3186 = vpop.xlane.xlu0 %3185
        %v3187 = vsub.f32 %v3133, %v3165
        %v3188 = vsub.f32 %v3136, %v3168
        %v3189 = vsub.f32 %v3141, %v3171
        %v3190 = vsub.f32 %v3144, %v3174
        %v3191 = vsub.f32 %v3149, %v3177
        %v3192 = vsub.f32 %v3152, %v3180
        %v3193 = vsub.f32 %v3157, %v3183
        %v3194 = vsub.f32 %v3160, %v3186
        %v3195 = vmul.f32 %v3187, 1.442695
        %v3196 = vpow.pop %v3195
        %v3197 = vmul.f32 %v3188, 1.442695
        %v3198 = vpow.pop %v3197
        %v3199 = vmul.f32 %v3189, 1.442695
        %v3200 = vpow.pop %v3199
        %v3201 = vmul.f32 %v3190, 1.442695
        %v3202 = vpow.pop %v3201
        %v3203 = vmul.f32 %v3191, 1.442695
        %v3204 = vpow.pop %v3203
        %v3205 = vmul.f32 %v3192, 1.442695
        %v3206 = vpow.pop %v3205
        %v3207 = vmul.f32 %v3193, 1.442695
        %v3208 = vpow.pop %v3207
        %v3209 = vmul.f32 %v3194, 1.442695
        %v3210 = vpow.pop %v3209
        %v3211 = vsel %vm2859, %v3196, 0.0
        %3212 = vadd.xlane.f32.xlu0 %v3211
        %v3213 = vpop.xlane.xlu0 %3212
        %v3214 = vsel %vm2859, %v3198, 0.0
        %3215 = vadd.xlane.f32.xlu0 %v3214
        %v3216 = vpop.xlane.xlu0 %3215
        %v3217 = vsel %vm2859, %v3200, 0.0
        %3218 = vadd.xlane.f32.xlu0 %v3217
        %v3219 = vpop.xlane.xlu0 %3218
        %v3220 = vsel %vm2859, %v3202, 0.0
        %3221 = vadd.xlane.f32.xlu0 %v3220
        %v3222 = vpop.xlane.xlu0 %3221
        %v3223 = vsel %vm2859, %v3204, 0.0
        %3224 = vadd.xlane.f32.xlu0 %v3223
        %v3225 = vpop.xlane.xlu0 %3224
        %v3226 = vsel %vm2859, %v3206, 0.0
        %3227 = vadd.xlane.f32.xlu0 %v3226
        %v3228 = vpop.xlane.xlu0 %3227
        %v3229 = vsel %vm2859, %v3208, 0.0
        %3230 = vadd.xlane.f32.xlu0 %v3229
        %v3231 = vpop.xlane.xlu0 %3230
        %v3232 = vsel %vm2859, %v3210, 0.0
        %3233 = vadd.xlane.f32.xlu0 %v3232
        %v3234 = vpop.xlane.xlu0 %3233
        %v3235 = vrcp.pop %v3213
        %v3236 = vrcp.pop %v3216
        %v3237 = vrcp.pop %v3219
        %v3238 = vrcp.pop %v3222
        %v3239 = vrcp.pop %v3225
        %v3240 = vrcp.pop %v3228
        %v3241 = vrcp.pop %v3231
        %v3242 = vrcp.pop %v3234
        %v3243 = vmul.f32 %v3196, %v3235
        %v3244 = vmul.f32 %v3198, %v3236
        %v3245 = vmul.f32 %v3200, %v3237
        %v3246 = vmul.f32 %v3202, %v3238
        %v3247 = vmul.f32 %v3204, %v3239
        %v3248 = vmul.f32 %v3206, %v3240
        %v3249 = vmul.f32 %v3208, %v3241
        %v3250 = vmul.f32 %v3210, %v3242
        %v3251 = vpack.c.bf16 %v3244, %v3243
        %v3252 = vpack.c.bf16 %v3246, %v3245
        %v3253 = vpack.c.bf16 %v3248, %v3247
        %v3254 = vpack.c.bf16 %v3250, %v3249
        %3255 = vrot.lane.b32.xlu0 %v2737, 48
        %v3256 = vpop.permute.xlu0 %3255
        %3257 = vrot.lane.b32.xlu0 %v2738, 48
        %v3258 = vpop.permute.xlu0 %3257
        %3259 = vrot.lane.b32.xlu0 %v2739, 48
        %v3260 = vpop.permute.xlu0 %3259
        %3261 = vrot.lane.b32.xlu0 %v2740, 48
        %v3262 = vpop.permute.xlu0 %3261
        %v3268 = vsel %vm2859, %v3251, 0
        %v3271 = vsel %vm2859, %v3252, 0
        %v3274 = vsel %vm2859, %v3253, 0
        %v3277 = vsel %vm2859, %v3254, 0
        %3279 = vmatprep.subr.bf16.mxu0 0
        %3280 = vmatpush1.bf16.msra.mxu0 %v3256
        %3281 = vmatprep.subr.bf16.mxu0 0
        %3282 = vmatpush1.bf16.msra.mxu0 %v3258
        %3283 = vmatprep.subr.bf16.mxu0 0
        %3284 = vmatpush1.bf16.msra.mxu0 %v3260
        %3285 = vmatprep.subr.bf16.mxu0 0
        %3286 = vmatpush1.bf16.msra.mxu0 %v3262
        %3287 = vmatprep.subr.bf16.mxu0 0
        %3288 = vmatpush1.bf16.msra.mxu0 0
        %3289 = vmatprep.subr.bf16.mxu0 0
        %3290 = vmatpush1.bf16.msra.mxu0 0
        %3291 = vmatprep.subr.bf16.mxu0 0
        %3292 = vmatpush1.bf16.msra.mxu0 0
        %3293 = vmatprep.subr.bf16.mxu0 0
        %3294 = vmatpush1.bf16.msra.mxu0 0
        %3295 = vmatprep.subr.bf16.mxu0 0
        %3296 = vmatpush1.bf16.msra.mxu0 0
        %3297 = vmatprep.subr.bf16.mxu0 0
        %3298 = vmatpush1.bf16.msra.mxu0 0
        %3299 = vmatprep.subr.bf16.mxu0 0
        %3300 = vmatpush1.bf16.msra.mxu0 0
        %3301 = vmatprep.subr.bf16.mxu0 0
        %3302 = vmatpush1.bf16.msra.mxu0 0
        %3303 = vmatprep.subr.bf16.mxu0 0
        %3304 = vmatpush1.bf16.msra.mxu0 0
        %3305 = vmatprep.subr.bf16.mxu0 0
        %3306 = vmatpush1.bf16.msra.mxu0 0
        %3307 = vmatprep.subr.bf16.mxu0 0
        %3308 = vmatpush1.bf16.msra.mxu0 0
        %3309 = vmatprep.subr.bf16.mxu0 0
        %3310 = vmatpush1.bf16.msra.mxu0 0
        %3311 = vmatprep.mubr.bf16.mxu0 0
        %3312 = vmatmul.mubr.bf16.gmra.mrb[0].mxu0 %v3268
        %v3313 = vpop.f32.mrb[0].mxu0
        %v3314 = vadd.f32 0.0, %v3313
        %v3315 = vpop.f32.mrb[0].mxu0
        %v3316 = vpop.f32.mrb[0].mxu0
        %v3317 = vadd.f32 0.0, %v3316
        %v3318 = vpop.f32.mrb[0].mxu0
        %3319 = vmatprep.mubr.bf16.mxu0 0
        %3320 = vmatmul.mubr.bf16.gmra.mrb[0].mxu0 %v3271
        %v3321 = vpop.f32.mrb[0].mxu0
        %v3322 = vadd.f32 0.0, %v3321
        %v3323 = vpop.f32.mrb[0].mxu0
        %v3324 = vpop.f32.mrb[0].mxu0
        %v3325 = vadd.f32 0.0, %v3324
        %v3326 = vpop.f32.mrb[0].mxu0
        %3327 = vmatprep.mubr.bf16.mxu0 0
        %3328 = vmatmul.mubr.bf16.gmra.mrb[0].mxu0 %v3274
        %v3329 = vpop.f32.mrb[0].mxu0
        %v3330 = vadd.f32 0.0, %v3329
        %v3331 = vpop.f32.mrb[0].mxu0
        %v3332 = vpop.f32.mrb[0].mxu0
        %v3333 = vadd.f32 0.0, %v3332
        %v3334 = vpop.f32.mrb[0].mxu0
        %3335 = vmatprep.mubr.bf16.mxu0 0
        %3336 = vmatmul.mubr.bf16.gmra.mrb[0].mxu0 %v3277
        %v3337 = vpop.f32.mrb[0].mxu0
        %v3338 = vadd.f32 0.0, %v3337
        %v3339 = vpop.f32.mrb[0].mxu0
        %v3340 = vpop.f32.mrb[0].mxu0
        %v3341 = vadd.f32 0.0, %v3340
        %v3342 = vpop.f32.mrb[0].mxu0
        %3343 = vdwg.mxu0
        %3352 = vrot.lane.b32.xlu0 %v3314, 16
        %v3353 = vpop.permute.xlu0 %3352
        %3354 = vrot.lane.b32.xlu0 %v3317, 16
        %v3355 = vpop.permute.xlu0 %3354
        %3356 = vrot.lane.b32.xlu0 %v3322, 16
        %v3357 = vpop.permute.xlu0 %3356
        %3358 = vrot.lane.b32.xlu0 %v3325, 16
        %v3359 = vpop.permute.xlu0 %3358
        %3360 = vrot.lane.b32.xlu0 %v3330, 16
        %v3361 = vpop.permute.xlu0 %3360
        %3362 = vrot.lane.b32.xlu0 %v3333, 16
        %v3363 = vpop.permute.xlu0 %3362
        %3364 = vrot.lane.b32.xlu0 %v3338, 16
        %v3365 = vpop.permute.xlu0 %3364
        %3366 = vrot.lane.b32.xlu0 %v3341, 16
        %v3367 = vpop.permute.xlu0 %3366
        %v3376 = vsel %vm2769, %v3011, %v3353
        %v3377 = vsel %vm2769, %v3014, %v3355
        %v3378 = vsel %vm2769, %v3019, %v3357
        %v3379 = vsel %vm2769, %v3022, %v3359
        %v3380 = vsel %vm2769, %v3027, %v3361
        %v3381 = vsel %vm2769, %v3030, %v3363
        %v3382 = vsel %vm2769, %v3035, %v3365
        %v3383 = vsel %vm2769, %v3038, %v3367
        %v3384 = vld [vmem:[%s23] sm:$0xf]
        %v3385 = vld [vmem:[%s23 + $0x4] sm:$0xf]
        %v3386 = vld [vmem:[%s23 + $0x8] sm:$0xf]
        %v3387 = vld [vmem:[%s23 + $0xc] sm:$0xf]
        %v3388 = vpack.c.bf16 %v3377, %v3376
        %v3389 = vpack.c.bf16 %v3379, %v3378
        %v3390 = vpack.c.bf16 %v3381, %v3380
        %v3391 = vpack.c.bf16 %v3383, %v3382
        %v3392 = vld [vmem:[%s25] sm:$0x1]
        %v3394 = vlaneseq
        %v3395 = vshrl.u32 %v3394, 7
        %v3396 = vsub.s32 0, %v3395
        %v3397 = vrot.slane %v3392, %v3396
        %v3403 = vunpack.c.l.b16 %v3384
        %v3404 = vunpack.c.l.b16 %v3385
        %v3405 = vunpack.c.l.b16 %v3386
        %v3406 = vunpack.c.l.b16 %v3387
        %v3407 = vpack.c.b16 %v3404, %v3403
        %v3408 = vpack.c.b16 %v3406, %v3405
        %v3412 = vsel %vm2349, %v3388, 0
        %v3415 = vsel %vm2349, %v3389, 0
        %v3418 = vsel %vm2349, %v3390, 0
        %v3421 = vsel %vm2349, %v3391, 0
        %3423 = vmatprep.subr.bf16.mxu0 0
        %3424 = vmatpush1.bf16.msra.mxu0 %v3407
        %3425 = vmatprep.subr.bf16.mxu0 0
        %3426 = vmatpush1.bf16.msra.mxu0 %v3408
        %3427 = vmatprep.subr.bf16.mxu0 0
        %3428 = vmatpush1.bf16.msra.mxu0 0
        %3429 = vmatprep.subr.bf16.mxu0 0
        %3430 = vmatpush1.bf16.msra.mxu0 0
        %3431 = vmatprep.subr.bf16.mxu0 0
        %3432 = vmatpush1.bf16.msra.mxu0 0
        %3433 = vmatprep.subr.bf16.mxu0 0
        %3434 = vmatpush1.bf16.msra.mxu0 0
        %3435 = vmatprep.subr.bf16.mxu0 0
        %3436 = vmatpush1.bf16.msra.mxu0 0
        %3437 = vmatprep.subr.bf16.mxu0 0
        %3438 = vmatpush1.bf16.msra.mxu0 0
        %3439 = vmatprep.subr.bf16.mxu0 0
        %3440 = vmatpush1.bf16.msra.mxu0 0
        %3441 = vmatprep.subr.bf16.mxu0 0
        %3442 = vmatpush1.bf16.msra.mxu0 0
        %3443 = vmatprep.subr.bf16.mxu0 0
        %3444 = vmatpush1.bf16.msra.mxu0 0
        %3445 = vmatprep.subr.bf16.mxu0 0
        %3446 = vmatpush1.bf16.msra.mxu0 0
        %3447 = vmatprep.subr.bf16.mxu0 0
        %3448 = vmatpush1.bf16.msra.mxu0 0
        %3449 = vmatprep.subr.bf16.mxu0 0
        %3450 = vmatpush1.bf16.msra.mxu0 0
        %3451 = vmatprep.subr.bf16.mxu0 0
        %3452 = vmatpush1.bf16.msra.mxu0 0
        %3453 = vmatprep.subr.bf16.mxu0 0
        %3454 = vmatpush1.bf16.msra.mxu0 0
        %3455 = vmatprep.mubr.bf16.mxu0 0
        %3456 = vmatmul.mubr.bf16.gmra.mrb[0].mxu0 %v3412
        %v3457 = vpop.f32.mrb[0].mxu0
        %v3458 = vadd.f32 %v3397, %v3457
        %v3459 = vpop.f32.mrb[0].mxu0
        %v3460 = vpop.f32.mrb[0].mxu0
        %v3461 = vadd.f32 %v3397, %v3460
        %v3462 = vpop.f32.mrb[0].mxu0
        %3463 = vmatprep.mubr.bf16.mxu0 0
        %3464 = vmatmul.mubr.bf16.gmra.mrb[0].mxu0 %v3415
        %v3465 = vpop.f32.mrb[0].mxu0
        %v3466 = vadd.f32 %v3397, %v3465
        %v3467 = vpop.f32.mrb[0].mxu0
        %v3468 = vpop.f32.mrb[0].mxu0
        %v3469 = vadd.f32 %v3397, %v3468
        %v3470 = vpop.f32.mrb[0].mxu0
        %3471 = vmatprep.mubr.bf16.mxu0 0
        %3472 = vmatmul.mubr.bf16.gmra.mrb[0].mxu0 %v3418
        %v3473 = vpop.f32.mrb[0].mxu0
        %v3474 = vadd.f32 %v3397, %v3473
        %v3475 = vpop.f32.mrb[0].mxu0
        %v3476 = vpop.f32.mrb[0].mxu0
        %v3477 = vadd.f32 %v3397, %v3476
        %v3478 = vpop.f32.mrb[0].mxu0
        %3479 = vmatprep.mubr.bf16.mxu0 0
        %3480 = vmatmul.mubr.bf16.gmra.mrb[0].mxu0 %v3421
        %v3481 = vpop.f32.mrb[0].mxu0
        %v3482 = vadd.f32 %v3397, %v3481
        %v3483 = vpop.f32.mrb[0].mxu0
        %v3484 = vpop.f32.mrb[0].mxu0
        %v3485 = vadd.f32 %v3397, %v3484
        %v3486 = vpop.f32.mrb[0].mxu0
        %3487 = vdwg.mxu0
        %v3488 = vadd.f32 %v2491, %v3458
        %v3489 = vadd.f32 %v2492, %v3461
        %v3490 = vadd.f32 %v2493, %v3466
        %v3491 = vadd.f32 %v2494, %v3469
        %v3492 = vadd.f32 %v2495, %v3474
        %v3493 = vadd.f32 %v2496, %v3477
        %v3494 = vadd.f32 %v2497, %v3482
        %v3495 = vadd.f32 %v2498, %v3485
        %v3496 = vld [vmem:[%s27] sm:$0x1]
        %v3497 = vld [vmem:[%s29] sm:$0x1]
        %v3498 = vsel %vm2349, %v3488, 0.0
        %3499 = vadd.xlane.f32.xlu0 %v3498
        %v3500 = vpop.xlane.xlu0 %3499
        %v3501 = vsel %vm2349, %v3489, 0.0
        %3502 = vadd.xlane.f32.xlu0 %v3501
        %v3503 = vpop.xlane.xlu0 %3502
        %v3504 = vsel %vm2349, %v3490, 0.0
        %3505 = vadd.xlane.f32.xlu0 %v3504
        %v3506 = vpop.xlane.xlu0 %3505
        %v3507 = vsel %vm2349, %v3491, 0.0
        %3508 = vadd.xlane.f32.xlu0 %v3507
        %v3509 = vpop.xlane.xlu0 %3508
        %v3510 = vsel %vm2349, %v3492, 0.0
        %3511 = vadd.xlane.f32.xlu0 %v3510
        %v3512 = vpop.xlane.xlu0 %3511
        %v3513 = vsel %vm2349, %v3493, 0.0
        %3514 = vadd.xlane.f32.xlu0 %v3513
        %v3515 = vpop.xlane.xlu0 %3514
        %v3516 = vsel %vm2349, %v3494, 0.0
        %3517 = vadd.xlane.f32.xlu0 %v3516
        %v3518 = vpop.xlane.xlu0 %3517
        %v3519 = vsel %vm2349, %v3495, 0.0
        %3520 = vadd.xlane.f32.xlu0 %v3519
        %v3521 = vpop.xlane.xlu0 %3520
        %v3522 = vmul.f32 %v3500, %v2374
        %v3523 = vmul.f32 %v3503, %v2374
        %v3524 = vmul.f32 %v3506, %v2374
        %v3525 = vmul.f32 %v3509, %v2374
        %v3526 = vmul.f32 %v3512, %v2374
        %v3527 = vmul.f32 %v3515, %v2374
        %v3528 = vmul.f32 %v3518, %v2374
        %v3529 = vmul.f32 %v3521, %v2374
        %v3530 = vsub.f32 %v3488, %v3522
        %v3531 = vsub.f32 %v3489, %v3523
        %v3532 = vsub.f32 %v3490, %v3524
        %v3533 = vsub.f32 %v3491, %v3525
        %v3534 = vsub.f32 %v3492, %v3526
        %v3535 = vsub.f32 %v3493, %v3527
        %v3536 = vsub.f32 %v3494, %v3528
        %v3537 = vsub.f32 %v3495, %v3529
        %v3538 = vmul.f32 %v3530, %v3530
        %v3539 = vmul.f32 %v3531, %v3531
        %v3540 = vmul.f32 %v3532, %v3532
        %v3541 = vmul.f32 %v3533, %v3533
        %v3542 = vmul.f32 %v3534, %v3534
        %v3543 = vmul.f32 %v3535, %v3535
        %v3544 = vmul.f32 %v3536, %v3536
        %v3545 = vmul.f32 %v3537, %v3537
        %v3546 = vsel %vm2349, %v3538, 0.0
        %3547 = vadd.xlane.f32.xlu0 %v3546
        %v3548 = vpop.xlane.xlu0 %3547
        %v3549 = vsel %vm2349, %v3539, 0.0
        %3550 = vadd.xlane.f32.xlu0 %v3549
        %v3551 = vpop.xlane.xlu0 %3550
        %v3552 = vsel %vm2349, %v3540, 0.0
        %3553 = vadd.xlane.f32.xlu0 %v3552
        %v3554 = vpop.xlane.xlu0 %3553
        %v3555 = vsel %vm2349, %v3541, 0.0
        %3556 = vadd.xlane.f32.xlu0 %v3555
        %v3557 = vpop.xlane.xlu0 %3556
        %v3558 = vsel %vm2349, %v3542, 0.0
        %3559 = vadd.xlane.f32.xlu0 %v3558
        %v3560 = vpop.xlane.xlu0 %3559
        %v3561 = vsel %vm2349, %v3543, 0.0
        %3562 = vadd.xlane.f32.xlu0 %v3561
        %v3563 = vpop.xlane.xlu0 %3562
        %v3564 = vsel %vm2349, %v3544, 0.0
        %3565 = vadd.xlane.f32.xlu0 %v3564
        %v3566 = vpop.xlane.xlu0 %3565
        %v3567 = vsel %vm2349, %v3545, 0.0
        %3568 = vadd.xlane.f32.xlu0 %v3567
        %v3569 = vpop.xlane.xlu0 %3568
        %v3570 = vmul.f32 %v3548, %v2374
        %v3571 = vmul.f32 %v3551, %v2374
        %v3572 = vmul.f32 %v3554, %v2374
        %v3573 = vmul.f32 %v3557, %v2374
        %v3574 = vmul.f32 %v3560, %v2374
        %v3575 = vmul.f32 %v3563, %v2374
        %v3576 = vmul.f32 %v3566, %v2374
        %v3577 = vmul.f32 %v3569, %v2374
        %v3578 = vadd.f32 %v3570, 1e-05
        %v3579 = vadd.f32 %v3571, 1e-05
        %v3580 = vadd.f32 %v3572, 1e-05
        %v3581 = vadd.f32 %v3573, 1e-05
        %v3582 = vadd.f32 %v3574, 1e-05
        %v3583 = vadd.f32 %v3575, 1e-05
        %v3584 = vadd.f32 %v3576, 1e-05
        %v3585 = vadd.f32 %v3577, 1e-05
        %v3586 = vrsqrt.pop %v3578
        %v3587 = vrsqrt.pop %v3579
        %v3588 = vrsqrt.pop %v3580
        %v3589 = vrsqrt.pop %v3581
        %v3590 = vrsqrt.pop %v3582
        %v3591 = vrsqrt.pop %v3583
        %v3592 = vrsqrt.pop %v3584
        %v3593 = vrsqrt.pop %v3585
        %v3594 = vmul.f32 %v3530, %v3586
        %v3595 = vmul.f32 %v3531, %v3587
        %v3596 = vmul.f32 %v3532, %v3588
        %v3597 = vmul.f32 %v3533, %v3589
        %v3598 = vmul.f32 %v3534, %v3590
        %v3599 = vmul.f32 %v3535, %v3591
        %v3600 = vmul.f32 %v3536, %v3592
        %v3601 = vmul.f32 %v3537, %v3593
        %v3603 = vlaneseq
        %v3604 = vshrl.u32 %v3603, 7
        %v3605 = vsub.s32 0, %v3604
        %v3606 = vrot.slane %v3496, %v3605
        %v3608 = vmul.f32 %v3594, %v3606
        %v3609 = vmul.f32 %v3595, %v3606
        %v3610 = vmul.f32 %v3596, %v3606
        %v3611 = vmul.f32 %v3597, %v3606
        %v3612 = vmul.f32 %v3598, %v3606
        %v3613 = vmul.f32 %v3599, %v3606
        %v3614 = vmul.f32 %v3600, %v3606
        %v3615 = vmul.f32 %v3601, %v3606
        %v3617 = vlaneseq
        %v3618 = vshrl.u32 %v3617, 7
        %v3619 = vsub.s32 0, %v3618
        %v3620 = vrot.slane %v3497, %v3619
        %v3622 = vadd.f32 %v3608, %v3620
        %v3623 = vadd.f32 %v3609, %v3620
        %v3624 = vadd.f32 %v3610, %v3620
        %v3625 = vadd.f32 %v3611, %v3620
        %v3626 = vadd.f32 %v3612, %v3620
        %v3627 = vadd.f32 %v3613, %v3620
        %v3628 = vadd.f32 %v3614, %v3620
        %v3629 = vadd.f32 %v3615, %v3620
        %v3630 = vld [vmem:[%s31] sm:$0xf]
        %v3631 = vld [vmem:[%s31 + $0x4] sm:$0xf]
        %v3632 = vld [vmem:[%s31 + $0x8] sm:$0xf]
        %v3633 = vld [vmem:[%s31 + $0xc] sm:$0xf]
        %v3634 = vpack.c.bf16 %v3623, %v3622
        %v3635 = vpack.c.bf16 %v3625, %v3624
        %v3636 = vpack.c.bf16 %v3627, %v3626
        %v3637 = vpack.c.bf16 %v3629, %v3628
        %v3638 = vld [vmem:[%s33] sm:$0x1]
        %v3640 = vlaneseq
        %v3641 = vshrl.u32 %v3640, 7
        %v3642 = vsub.s32 0, %v3641
        %v3643 = vrot.slane %v3638, %v3642
        %v3649 = vunpack.c.l.b16 %v3630
        %v3650 = vunpack.c.l.b16 %v3631
        %v3651 = vunpack.c.l.b16 %v3632
        %v3652 = vunpack.c.l.b16 %v3633
        %v3653 = vpack.c.b16 %v3650, %v3649
        %v3654 = vpack.c.b16 %v3652, %v3651
        %v3658 = vsel %vm2349, %v3634, 0
        %v3661 = vsel %vm2349, %v3635, 0
        %v3664 = vsel %vm2349, %v3636, 0
        %v3667 = vsel %vm2349, %v3637, 0
        %3669 = vmatprep.subr.bf16.mxu0 0
        %3670 = vmatpush1.bf16.msra.mxu0 %v3653
        %3671 = vmatprep.subr.bf16.mxu0 0
        %3672 = vmatpush1.bf16.msra.mxu0 %v3654
        %3673 = vmatprep.subr.bf16.mxu0 0
        %3674 = vmatpush1.bf16.msra.mxu0 0
        %3675 = vmatprep.subr.bf16.mxu0 0
        %3676 = vmatpush1.bf16.msra.mxu0 0
        %3677 = vmatprep.subr.bf16.mxu0 0
        %3678 = vmatpush1.bf16.msra.mxu0 0
        %3679 = vmatprep.subr.bf16.mxu0 0
        %3680 = vmatpush1.bf16.msra.mxu0 0
        %3681 = vmatprep.subr.bf16.mxu0 0
        %3682 = vmatpush1.bf16.msra.mxu0 0
        %3683 = vmatprep.subr.bf16.mxu0 0
        %3684 = vmatpush1.bf16.msra.mxu0 0
        %3685 = vmatprep.subr.bf16.mxu0 0
        %3686 = vmatpush1.bf16.msra.mxu0 0
        %3687 = vmatprep.subr.bf16.mxu0 0
        %3688 = vmatpush1.bf16.msra.mxu0 0
        %3689 = vmatprep.subr.bf16.mxu0 0
        %3690 = vmatpush1.bf16.msra.mxu0 0
        %3691 = vmatprep.subr.bf16.mxu0 0
        %3692 = vmatpush1.bf16.msra.mxu0 0
        %3693 = vmatprep.subr.bf16.mxu0 0
        %3694 = vmatpush1.bf16.msra.mxu0 0
        %3695 = vmatprep.subr.bf16.mxu0 0
        %3696 = vmatpush1.bf16.msra.mxu0 0
        %3697 = vmatprep.subr.bf16.mxu0 0
        %3698 = vmatpush1.bf16.msra.mxu0 0
        %3699 = vmatprep.subr.bf16.mxu0 0
        %3700 = vmatpush1.bf16.msra.mxu0 0
        %3701 = vmatprep.mubr.bf16.mxu0 0
        %3702 = vmatmul.mubr.bf16.gmra.mrb[0].mxu0 %v3658
        %v3703 = vpop.f32.mrb[0].mxu0
        %v3704 = vadd.f32 %v3643, %v3703
        %v3705 = vpop.f32.mrb[0].mxu0
        %v3706 = vpop.f32.mrb[0].mxu0
        %v3707 = vadd.f32 %v3643, %v3706
        %v3708 = vpop.f32.mrb[0].mxu0
        %3709 = vmatprep.mubr.bf16.mxu0 0
        %3710 = vmatmul.mubr.bf16.gmra.mrb[0].mxu0 %v3661
        %v3711 = vpop.f32.mrb[0].mxu0
        %v3712 = vadd.f32 %v3643, %v3711
        %v3713 = vpop.f32.mrb[0].mxu0
        %v3714 = vpop.f32.mrb[0].mxu0
        %v3715 = vadd.f32 %v3643, %v3714
        %v3716 = vpop.f32.mrb[0].mxu0
        %3717 = vmatprep.mubr.bf16.mxu0 0
        %3718 = vmatmul.mubr.bf16.gmra.mrb[0].mxu0 %v3664
        %v3719 = vpop.f32.mrb[0].mxu0
        %v3720 = vadd.f32 %v3643, %v3719
        %v3721 = vpop.f32.mrb[0].mxu0
        %v3722 = vpop.f32.mrb[0].mxu0
        %v3723 = vadd.f32 %v3643, %v3722
        %v3724 = vpop.f32.mrb[0].mxu0
        %3725 = vmatprep.mubr.bf16.mxu0 0
        %3726 = vmatmul.mubr.bf16.gmra.mrb[0].mxu0 %v3667
        %v3727 = vpop.f32.mrb[0].mxu0
        %v3728 = vadd.f32 %v3643, %v3727
        %v3729 = vpop.f32.mrb[0].mxu0
        %v3730 = vpop.f32.mrb[0].mxu0
        %v3731 = vadd.f32 %v3643, %v3730
        %v3732 = vpop.f32.mrb[0].mxu0
        %3733 = vdwg.mxu0
        %v3734 = vmul.f32 %v3704, %v3704
        %v3735 = vmul.f32 %v3707, %v3707
        %v3736 = vmul.f32 %v3712, %v3712
        %v3737 = vmul.f32 %v3715, %v3715
        %v3738 = vmul.f32 %v3720, %v3720
        %v3739 = vmul.f32 %v3723, %v3723
        %v3740 = vmul.f32 %v3728, %v3728
        %v3741 = vmul.f32 %v3731, %v3731
        %v3742 = vmul.f32 %v3704, %v3734
        %v3743 = vmul.f32 %v3707, %v3735
        %v3744 = vmul.f32 %v3712, %v3736
        %v3745 = vmul.f32 %v3715, %v3737
        %v3746 = vmul.f32 %v3720, %v3738
        %v3747 = vmul.f32 %v3723, %v3739
        %v3748 = vmul.f32 %v3728, %v3740
        %v3749 = vmul.f32 %v3731, %v3741
        %v3750 = vmul.f32 %v3742, 0.044715
        %v3751 = vmul.f32 %v3743, 0.044715
        %v3752 = vmul.f32 %v3744, 0.044715
        %v3753 = vmul.f32 %v3745, 0.044715
        %v3754 = vmul.f32 %v3746, 0.044715
        %v3755 = vmul.f32 %v3747, 0.044715
        %v3756 = vmul.f32 %v3748, 0.044715
        %v3757 = vmul.f32 %v3749, 0.044715
        %v3758 = vadd.f32 %v3704, %v3750
        %v3759 = vadd.f32 %v3707, %v3751
        %v3760 = vadd.f32 %v3712, %v3752
        %v3761 = vadd.f32 %v3715, %v3753
        %v3762 = vadd.f32 %v3720, %v3754
        %v3763 = vadd.f32 %v3723, %v3755
        %v3764 = vadd.f32 %v3728, %v3756
        %v3765 = vadd.f32 %v3731, %v3757
        %v3766 = vmul.f32 %v3758, 0.7978846
        %v3767 = vmul.f32 %v3759, 0.7978846
        %v3768 = vmul.f32 %v3760, 0.7978846
        %v3769 = vmul.f32 %v3761, 0.7978846
        %v3770 = vmul.f32 %v3762, 0.7978846
        %v3771 = vmul.f32 %v3763, 0.7978846
        %v3772 = vmul.f32 %v3764, 0.7978846
        %v3773 = vmul.f32 %v3765, 0.7978846
        %v3774 = vtanh.pop %v3766
        %v3775 = vtanh.pop %v3767
        %v3776 = vtanh.pop %v3768
        %v3777 = vtanh.pop %v3769
        %v3778 = vtanh.pop %v3770
        %v3779 = vtanh.pop %v3771
        %v3780 = vtanh.pop %v3772
        %v3781 = vtanh.pop %v3773
        %v3782 = vadd.f32 %v3774, 1.0
        %v3783 = vadd.f32 %v3775, 1.0
        %v3784 = vadd.f32 %v3776, 1.0
        %v3785 = vadd.f32 %v3777, 1.0
        %v3786 = vadd.f32 %v3778, 1.0
        %v3787 = vadd.f32 %v3779, 1.0
        %v3788 = vadd.f32 %v3780, 1.0
        %v3789 = vadd.f32 %v3781, 1.0
        %v3790 = vmul.f32 %v3782, 0.5
        %v3791 = vmul.f32 %v3783, 0.5
        %v3792 = vmul.f32 %v3784, 0.5
        %v3793 = vmul.f32 %v3785, 0.5
        %v3794 = vmul.f32 %v3786, 0.5
        %v3795 = vmul.f32 %v3787, 0.5
        %v3796 = vmul.f32 %v3788, 0.5
        %v3797 = vmul.f32 %v3789, 0.5
        %v3798 = vmul.f32 %v3704, %v3790
        %v3799 = vmul.f32 %v3707, %v3791
        %v3800 = vmul.f32 %v3712, %v3792
        %v3801 = vmul.f32 %v3715, %v3793
        %v3802 = vmul.f32 %v3720, %v3794
        %v3803 = vmul.f32 %v3723, %v3795
        %v3804 = vmul.f32 %v3728, %v3796
        %v3805 = vmul.f32 %v3731, %v3797
        %v3806 = vld [vmem:[%s35] sm:$0xf]
        %v3807 = vld [vmem:[%s35 + $0x4] sm:$0xf]
        %v3808 = vld [vmem:[%s35 + $0x8] sm:$0xf]
        %v3809 = vld [vmem:[%s35 + $0xc] sm:$0xf]
        %v3810 = vld [vmem:[%s35 + $0x10] sm:$0xf]
        %v3811 = vld [vmem:[%s35 + $0x14] sm:$0xf]
        %v3812 = vld [vmem:[%s35 + $0x18] sm:$0xf]
        %v3813 = vld [vmem:[%s35 + $0x1c] sm:$0xf]
        %v3814 = vpack.c.bf16 %v3799, %v3798
        %v3815 = vpack.c.bf16 %v3801, %v3800
        %v3816 = vpack.c.bf16 %v3803, %v3802
        %v3817 = vpack.c.bf16 %v3805, %v3804
        %v3818 = vld [vmem:[%s37] sm:$0x1]
        %v3820 = vlaneseq
        %v3821 = vshrl.u32 %v3820, 7
        %v3822 = vsub.s32 0, %v3821
        %v3823 = vrot.slane %v3818, %v3822
        %v3833 = vunpack.c.l.b16 %v3806
        %v3834 = vunpack.c.l.b16 %v3807
        %v3835 = vunpack.c.l.b16 %v3808
        %v3836 = vunpack.c.l.b16 %v3809
        %v3837 = vunpack.c.l.b16 %v3810
        %v3838 = vunpack.c.l.b16 %v3811
        %v3839 = vunpack.c.l.b16 %v3812
        %v3840 = vunpack.c.l.b16 %v3813
        %v3841 = vpack.c.b16 %v3834, %v3833
        %v3842 = vpack.c.b16 %v3836, %v3835
        %v3843 = vpack.c.b16 %v3838, %v3837
        %v3844 = vpack.c.b16 %v3840, %v3839
        %v3850 = vsel %vm2859, %v3814, 0
        %v3853 = vsel %vm2859, %v3815, 0
        %v3856 = vsel %vm2859, %v3816, 0
        %v3859 = vsel %vm2859, %v3817, 0
        %3861 = vmatprep.subr.bf16.mxu0 0
        %3862 = vmatpush1.bf16.msra.mxu0 %v3841
        %3863 = vmatprep.subr.bf16.mxu0 0
        %3864 = vmatpush1.bf16.msra.mxu0 %v3842
        %3865 = vmatprep.subr.bf16.mxu0 0
        %3866 = vmatpush1.bf16.msra.mxu0 %v3843
        %3867 = vmatprep.subr.bf16.mxu0 0
        %3868 = vmatpush1.bf16.msra.mxu0 %v3844
        %3869 = vmatprep.subr.bf16.mxu0 0
        %3870 = vmatpush1.bf16.msra.mxu0 0
        %3871 = vmatprep.subr.bf16.mxu0 0
        %3872 = vmatpush1.bf16.msra.mxu0 0
        %3873 = vmatprep.subr.bf16.mxu0 0
        %3874 = vmatpush1.bf16.msra.mxu0 0
        %3875 = vmatprep.subr.bf16.mxu0 0
        %3876 = vmatpush1.bf16.msra.mxu0 0
        %3877 = vmatprep.subr.bf16.mxu0 0
        %3878 = vmatpush1.bf16.msra.mxu0 0
        %3879 = vmatprep.subr.bf16.mxu0 0
        %3880 = vmatpush1.bf16.msra.mxu0 0
        %3881 = vmatprep.subr.bf16.mxu0 0
        %3882 = vmatpush1.bf16.msra.mxu0 0
        %3883 = vmatprep.subr.bf16.mxu0 0
        %3884 = vmatpush1.bf16.msra.mxu0 0
        %3885 = vmatprep.subr.bf16.mxu0 0
        %3886 = vmatpush1.bf16.msra.mxu0 0
        %3887 = vmatprep.subr.bf16.mxu0 0
        %3888 = vmatpush1.bf16.msra.mxu0 0
        %3889 = vmatprep.subr.bf16.mxu0 0
        %3890 = vmatpush1.bf16.msra.mxu0 0
        %3891 = vmatprep.subr.bf16.mxu0 0
        %3892 = vmatpush1.bf16.msra.mxu0 0
        %3893 = vmatprep.mubr.bf16.mxu0 0
        %3894 = vmatmul.mubr.bf16.gmra.mrb[0].mxu0 %v3850
        %v3895 = vpop.f32.mrb[0].mxu0
        %v3896 = vadd.f32 %v3823, %v3895
        %v3897 = vpop.f32.mrb[0].mxu0
        %v3898 = vpop.f32.mrb[0].mxu0
        %v3899 = vadd.f32 %v3823, %v3898
        %v3900 = vpop.f32.mrb[0].mxu0
        %3901 = vmatprep.mubr.bf16.mxu0 0
        %3902 = vmatmul.mubr.bf16.gmra.mrb[0].mxu0 %v3853
        %v3903 = vpop.f32.mrb[0].mxu0
        %v3904 = vadd.f32 %v3823, %v3903
        %v3905 = vpop.f32.mrb[0].mxu0
        %v3906 = vpop.f32.mrb[0].mxu0
        %v3907 = vadd.f32 %v3823, %v3906
        %v3908 = vpop.f32.mrb[0].mxu0
        %3909 = vmatprep.mubr.bf16.mxu0 0
        %3910 = vmatmul.mubr.bf16.gmra.mrb[0].mxu0 %v3856
        %v3911 = vpop.f32.mrb[0].mxu0
        %v3912 = vadd.f32 %v3823, %v3911
        %v3913 = vpop.f32.mrb[0].mxu0
        %v3914 = vpop.f32.mrb[0].mxu0
        %v3915 = vadd.f32 %v3823, %v3914
        %v3916 = vpop.f32.mrb[0].mxu0
        %3917 = vmatprep.mubr.bf16.mxu0 0
        %3918 = vmatmul.mubr.bf16.gmra.mrb[0].mxu0 %v3859
        %v3919 = vpop.f32.mrb[0].mxu0
        %v3920 = vadd.f32 %v3823, %v3919
        %v3921 = vpop.f32.mrb[0].mxu0
        %v3922 = vpop.f32.mrb[0].mxu0
        %v3923 = vadd.f32 %v3823, %v3922
        %v3924 = vpop.f32.mrb[0].mxu0
        %3925 = vdwg.mxu0
        %v3926 = vadd.f32 %v3488, %v3896
        %v3927 = vadd.f32 %v3489, %v3899
        %v3928 = vadd.f32 %v3490, %v3904
        %v3929 = vadd.f32 %v3491, %v3907
        %v3930 = vadd.f32 %v3492, %v3912
        %v3931 = vadd.f32 %v3493, %v3915
        %v3932 = vadd.f32 %v3494, %v3920
        %v3933 = vadd.f32 %v3495, %v3923
        %v3934 = vld [vmem:[%s41] sm:$0x1]
        %v3935 = vld [vmem:[%s43] sm:$0x1]
        %v3936 = vsel %vm2349, %v3926, 0.0
        %3937 = vadd.xlane.f32.xlu0 %v3936
        %v3938 = vpop.xlane.xlu0 %3937
        %v3939 = vsel %vm2349, %v3927, 0.0
        %3940 = vadd.xlane.f32.xlu0 %v3939
        %v3941 = vpop.xlane.xlu0 %3940
        %v3942 = vsel %vm2349, %v3928, 0.0
        %3943 = vadd.xlane.f32.xlu0 %v3942
        %v3944 = vpop.xlane.xlu0 %3943
        %v3945 = vsel %vm2349, %v3929, 0.0
        %3946 = vadd.xlane.f32.xlu0 %v3945
        %v3947 = vpop.xlane.xlu0 %3946
        %v3948 = vsel %vm2349, %v3930, 0.0
        %3949 = vadd.xlane.f32.xlu0 %v3948
        %v3950 = vpop.xlane.xlu0 %3949
        %v3951 = vsel %vm2349, %v3931, 0.0
        %3952 = vadd.xlane.f32.xlu0 %v3951
        %v3953 = vpop.xlane.xlu0 %3952
        %v3954 = vsel %vm2349, %v3932, 0.0
        %3955 = vadd.xlane.f32.xlu0 %v3954
        %v3956 = vpop.xlane.xlu0 %3955
        %v3957 = vsel %vm2349, %v3933, 0.0
        %3958 = vadd.xlane.f32.xlu0 %v3957
        %v3959 = vpop.xlane.xlu0 %3958
        %v3960 = vmul.f32 %v3938, %v2374
        %v3961 = vmul.f32 %v3941, %v2374
        %v3962 = vmul.f32 %v3944, %v2374
        %v3963 = vmul.f32 %v3947, %v2374
        %v3964 = vmul.f32 %v3950, %v2374
        %v3965 = vmul.f32 %v3953, %v2374
        %v3966 = vmul.f32 %v3956, %v2374
        %v3967 = vmul.f32 %v3959, %v2374
        %v3968 = vsub.f32 %v3926, %v3960
        %v3969 = vsub.f32 %v3927, %v3961
        %v3970 = vsub.f32 %v3928, %v3962
        %v3971 = vsub.f32 %v3929, %v3963
        %v3972 = vsub.f32 %v3930, %v3964
        %v3973 = vsub.f32 %v3931, %v3965
        %v3974 = vsub.f32 %v3932, %v3966
        %v3975 = vsub.f32 %v3933, %v3967
        %v3976 = vmul.f32 %v3968, %v3968
        %v3977 = vmul.f32 %v3969, %v3969
        %v3978 = vmul.f32 %v3970, %v3970
        %v3979 = vmul.f32 %v3971, %v3971
        %v3980 = vmul.f32 %v3972, %v3972
        %v3981 = vmul.f32 %v3973, %v3973
        %v3982 = vmul.f32 %v3974, %v3974
        %v3983 = vmul.f32 %v3975, %v3975
        %v3984 = vsel %vm2349, %v3976, 0.0
        %3985 = vadd.xlane.f32.xlu0 %v3984
        %v3986 = vpop.xlane.xlu0 %3985
        %v3987 = vsel %vm2349, %v3977, 0.0
        %3988 = vadd.xlane.f32.xlu0 %v3987
        %v3989 = vpop.xlane.xlu0 %3988
        %v3990 = vsel %vm2349, %v3978, 0.0
        %3991 = vadd.xlane.f32.xlu0 %v3990
        %v3992 = vpop.xlane.xlu0 %3991
        %v3993 = vsel %vm2349, %v3979, 0.0
        %3994 = vadd.xlane.f32.xlu0 %v3993
        %v3995 = vpop.xlane.xlu0 %3994
        %v3996 = vsel %vm2349, %v3980, 0.0
        %3997 = vadd.xlane.f32.xlu0 %v3996
        %v3998 = vpop.xlane.xlu0 %3997
        %v3999 = vsel %vm2349, %v3981, 0.0
        %4000 = vadd.xlane.f32.xlu0 %v3999
        %v4001 = vpop.xlane.xlu0 %4000
        %v4002 = vsel %vm2349, %v3982, 0.0
        %4003 = vadd.xlane.f32.xlu0 %v4002
        %v4004 = vpop.xlane.xlu0 %4003
        %v4005 = vsel %vm2349, %v3983, 0.0
        %4006 = vadd.xlane.f32.xlu0 %v4005
        %v4007 = vpop.xlane.xlu0 %4006
        %v4008 = vmul.f32 %v3986, %v2374
        %v4009 = vmul.f32 %v3989, %v2374
        %v4010 = vmul.f32 %v3992, %v2374
        %v4011 = vmul.f32 %v3995, %v2374
        %v4012 = vmul.f32 %v3998, %v2374
        %v4013 = vmul.f32 %v4001, %v2374
        %v4014 = vmul.f32 %v4004, %v2374
        %v4015 = vmul.f32 %v4007, %v2374
        %v4016 = vadd.f32 %v4008, 1e-05
        %v4017 = vadd.f32 %v4009, 1e-05
        %v4018 = vadd.f32 %v4010, 1e-05
        %v4019 = vadd.f32 %v4011, 1e-05
        %v4020 = vadd.f32 %v4012, 1e-05
        %v4021 = vadd.f32 %v4013, 1e-05
        %v4022 = vadd.f32 %v4014, 1e-05
        %v4023 = vadd.f32 %v4015, 1e-05
        %v4024 = vrsqrt.pop %v4016
        %v4025 = vrsqrt.pop %v4017
        %v4026 = vrsqrt.pop %v4018
        %v4027 = vrsqrt.pop %v4019
        %v4028 = vrsqrt.pop %v4020
        %v4029 = vrsqrt.pop %v4021
        %v4030 = vrsqrt.pop %v4022
        %v4031 = vrsqrt.pop %v4023
        %v4032 = vmul.f32 %v3968, %v4024
        %v4033 = vmul.f32 %v3969, %v4025
        %v4034 = vmul.f32 %v3970, %v4026
        %v4035 = vmul.f32 %v3971, %v4027
        %v4036 = vmul.f32 %v3972, %v4028
        %v4037 = vmul.f32 %v3973, %v4029
        %v4038 = vmul.f32 %v3974, %v4030
        %v4039 = vmul.f32 %v3975, %v4031
        %v4041 = vlaneseq
        %v4042 = vshrl.u32 %v4041, 7
        %v4043 = vsub.s32 0, %v4042
        %v4044 = vrot.slane %v3934, %v4043
        %v4046 = vmul.f32 %v4032, %v4044
        %v4047 = vmul.f32 %v4033, %v4044
        %v4048 = vmul.f32 %v4034, %v4044
        %v4049 = vmul.f32 %v4035, %v4044
        %v4050 = vmul.f32 %v4036, %v4044
        %v4051 = vmul.f32 %v4037, %v4044
        %v4052 = vmul.f32 %v4038, %v4044
        %v4053 = vmul.f32 %v4039, %v4044
        %v4055 = vlaneseq
        %v4056 = vshrl.u32 %v4055, 7
        %v4057 = vsub.s32 0, %v4056
        %v4058 = vrot.slane %v3935, %v4057
        %v4060 = vadd.f32 %v4046, %v4058
        %v4061 = vadd.f32 %v4047, %v4058
        %v4062 = vadd.f32 %v4048, %v4058
        %v4063 = vadd.f32 %v4049, %v4058
        %v4064 = vadd.f32 %v4050, %v4058
        %v4065 = vadd.f32 %v4051, %v4058
        %v4066 = vadd.f32 %v4052, %v4058
        %v4067 = vadd.f32 %v4053, %v4058
        %v4068 = vld [vmem:[%s45] sm:$0xf]
        %v4069 = vld [vmem:[%s45 + $0x4] sm:$0xf]
        %v4070 = vld [vmem:[%s45 + $0x8] sm:$0xf]
        %v4071 = vld [vmem:[%s45 + $0xc] sm:$0xf]
        %v4072 = vpack.c.bf16 %v4061, %v4060
        %v4073 = vpack.c.bf16 %v4063, %v4062
        %v4074 = vpack.c.bf16 %v4065, %v4064
        %v4075 = vpack.c.bf16 %v4067, %v4066
        %v4076 = vld [vmem:[%s47] sm:$0x1]
        %v4078 = vlaneseq
        %v4079 = vshrl.u32 %v4078, 7
        %v4080 = vsub.s32 0, %v4079
        %v4081 = vrot.slane %v4076, %v4080
        %v4087 = vunpack.c.l.b16 %v4068
        %v4088 = vunpack.c.l.b16 %v4069
        %v4089 = vunpack.c.l.b16 %v4070
        %v4090 = vunpack.c.l.b16 %v4071
        %v4091 = vpack.c.b16 %v4088, %v4087
        %v4092 = vpack.c.b16 %v4090, %v4089
        %v4096 = vsel %vm2349, %v4072, 0
        %v4099 = vsel %vm2349, %v4073, 0
        %v4102 = vsel %vm2349, %v4074, 0
        %v4105 = vsel %vm2349, %v4075, 0
        %4107 = vmatprep.subr.bf16.mxu0 0
        %4108 = vmatpush1.bf16.msra.mxu0 %v4091
        %4109 = vmatprep.subr.bf16.mxu0 0
        %4110 = vmatpush1.bf16.msra.mxu0 %v4092
        %4111 = vmatprep.subr.bf16.mxu0 0
        %4112 = vmatpush1.bf16.msra.mxu0 0
        %4113 = vmatprep.subr.bf16.mxu0 0
        %4114 = vmatpush1.bf16.msra.mxu0 0
        %4115 = vmatprep.subr.bf16.mxu0 0
        %4116 = vmatpush1.bf16.msra.mxu0 0
        %4117 = vmatprep.subr.bf16.mxu0 0
        %4118 = vmatpush1.bf16.msra.mxu0 0
        %4119 = vmatprep.subr.bf16.mxu0 0
        %4120 = vmatpush1.bf16.msra.mxu0 0
        %4121 = vmatprep.subr.bf16.mxu0 0
        %4122 = vmatpush1.bf16.msra.mxu0 0
        %4123 = vmatprep.subr.bf16.mxu0 0
        %4124 = vmatpush1.bf16.msra.mxu0 0
        %4125 = vmatprep.subr.bf16.mxu0 0
        %4126 = vmatpush1.bf16.msra.mxu0 0
        %4127 = vmatprep.subr.bf16.mxu0 0
        %4128 = vmatpush1.bf16.msra.mxu0 0
        %4129 = vmatprep.subr.bf16.mxu0 0
        %4130 = vmatpush1.bf16.msra.mxu0 0
        %4131 = vmatprep.subr.bf16.mxu0 0
        %4132 = vmatpush1.bf16.msra.mxu0 0
        %4133 = vmatprep.subr.bf16.mxu0 0
        %4134 = vmatpush1.bf16.msra.mxu0 0
        %4135 = vmatprep.subr.bf16.mxu0 0
        %4136 = vmatpush1.bf16.msra.mxu0 0
        %4137 = vmatprep.subr.bf16.mxu0 0
        %4138 = vmatpush1.bf16.msra.mxu0 0
        %4139 = vmatprep.mubr.bf16.mxu0 0
        %4140 = vmatmul.mubr.bf16.gmra.mrb[0].mxu0 %v4096
        %v4141 = vpop.f32.mrb[0].mxu0
        %v4142 = vadd.f32 %v4081, %v4141
        %v4143 = vpop.f32.mrb[0].mxu0
        %v4144 = vpop.f32.mrb[0].mxu0
        %v4145 = vadd.f32 %v4081, %v4144
        %v4146 = vpop.f32.mrb[0].mxu0
        %4147 = vmatprep.mubr.bf16.mxu0 0
        %4148 = vmatmul.mubr.bf16.gmra.mrb[0].mxu0 %v4099
        %v4149 = vpop.f32.mrb[0].mxu0
        %v4150 = vadd.f32 %v4081, %v4149
        %v4151 = vpop.f32.mrb[0].mxu0
        %v4152 = vpop.f32.mrb[0].mxu0
        %v4153 = vadd.f32 %v4081, %v4152
        %v4154 = vpop.f32.mrb[0].mxu0
        %4155 = vmatprep.mubr.bf16.mxu0 0
        %4156 = vmatmul.mubr.bf16.gmra.mrb[0].mxu0 %v4102
        %v4157 = vpop.f32.mrb[0].mxu0
        %v4158 = vadd.f32 %v4081, %v4157
        %v4159 = vpop.f32.mrb[0].mxu0
        %v4160 = vpop.f32.mrb[0].mxu0
        %v4161 = vadd.f32 %v4081, %v4160
        %v4162 = vpop.f32.mrb[0].mxu0
        %4163 = vmatprep.mubr.bf16.mxu0 0
        %4164 = vmatmul.mubr.bf16.gmra.mrb[0].mxu0 %v4105
        %v4165 = vpop.f32.mrb[0].mxu0
        %v4166 = vadd.f32 %v4081, %v4165
        %v4167 = vpop.f32.mrb[0].mxu0
        %v4168 = vpop.f32.mrb[0].mxu0
        %v4169 = vadd.f32 %v4081, %v4168
        %v4170 = vpop.f32.mrb[0].mxu0
        %4171 = vdwg.mxu0
        %v4172 = vpack.c.bf16 %v4145, %v4142
        %v4173 = vpack.c.bf16 %v4153, %v4150
        %v4174 = vpack.c.bf16 %v4161, %v4158
        %v4175 = vpack.c.bf16 %v4169, %v4166
        %v4176 = vld [vmem:[%s39] sm:$0xf]
        %v4177 = vld [vmem:[%s39 + $0x4] sm:$0xf]
        %v4178 = vld [vmem:[%s39 + $0x8] sm:$0xf]
        %v4179 = vld [vmem:[%s39 + $0xc] sm:$0xf]
        %v4180 = vld [vmem:[%s39 + $0x10] sm:$0xf]
        %v4181 = vld [vmem:[%s39 + $0x14] sm:$0xf]
        %v4182 = vld [vmem:[%s39 + $0x18] sm:$0xf]
        %v4183 = vld [vmem:[%s39 + $0x1c] sm:$0xf]
        %v4184 = vunpack.c.l.bf16 %v4176
        %v4185 = vunpack.c.l.bf16 %v4177
        %v4186 = vunpack.c.l.bf16 %v4178
        %v4187 = vunpack.c.l.bf16 %v4179
        %v4188 = vunpack.c.l.bf16 %v4180
        %v4189 = vunpack.c.l.bf16 %v4181
        %v4190 = vunpack.c.l.bf16 %v4182
        %v4191 = vunpack.c.l.bf16 %v4183
        %4196 = vrot.lane.b32.xlu0 %v4172, 96
        %v4197 = vpop.permute.xlu0 %4196
        %4198 = vrot.lane.b32.xlu0 %v4173, 96
        %v4199 = vpop.permute.xlu0 %4198
        %4200 = vrot.lane.b32.xlu0 %v4174, 96
        %v4201 = vpop.permute.xlu0 %4200
        %4202 = vrot.lane.b32.xlu0 %v4175, 96
        %v4203 = vpop.permute.xlu0 %4202
        %v4205 = vsel %vm2769, %v4172, 0
        %v4208 = vsel %vm2769, %v4173, 0
        %v4211 = vsel %vm2769, %v4174, 0
        %v4214 = vsel %vm2769, %v4175, 0
        %v4217 = vsel %vm2769, %v4197, 0
        %v4220 = vsel %vm2769, %v4199, 0
        %v4223 = vsel %vm2769, %v4201, 0
        %v4226 = vsel %vm2769, %v4203, 0
        %4228 = vmatprep.subr.bf16.mxu0 0
        %4229 = vmatpush1.bf16.xpose.msra.mxu0 %v4217
        %4230 = vmatprep.subr.bf16.mxu0 0
        %4231 = vmatpush1.bf16.xpose.msra.mxu0 %v4220
        %4232 = vmatprep.subr.bf16.mxu0 0
        %4233 = vmatpush1.bf16.xpose.msra.mxu0 %v4223
        %4234 = vmatprep.subr.bf16.mxu0 0
        %4235 = vmatpush1.bf16.xpose.msra.mxu0 %v4226
        %4236 = vmatprep.subr.bf16.mxu0 0
        %4237 = vmatpush1.bf16.xpose.msra.mxu0 0
        %4238 = vmatprep.subr.bf16.mxu0 0
        %4239 = vmatpush1.bf16.xpose.msra.mxu0 0
        %4240 = vmatprep.subr.bf16.mxu0 0
        %4241 = vmatpush1.bf16.xpose.msra.mxu0 0
        %4242 = vmatprep.subr.bf16.mxu0 0
        %4243 = vmatpush1.bf16.xpose.msra.mxu0 0
        %4244 = vmatprep.subr.bf16.mxu0 0
        %4245 = vmatpush1.bf16.xpose.msra.mxu0 0
        %4246 = vmatprep.subr.bf16.mxu0 0
        %4247 = vmatpush1.bf16.xpose.msra.mxu0 0
        %4248 = vmatprep.subr.bf16.mxu0 0
        %4249 = vmatpush1.bf16.xpose.msra.mxu0 0
        %4250 = vmatprep.subr.bf16.mxu0 0
        %4251 = vmatpush1.bf16.xpose.msra.mxu0 0
        %4252 = vmatprep.subr.bf16.mxu0 0
        %4253 = vmatpush1.bf16.xpose.msra.mxu0 0
        %4254 = vmatprep.subr.bf16.mxu0 0
        %4255 = vmatpush1.bf16.xpose.msra.mxu0 0
        %4256 = vmatprep.subr.bf16.mxu0 0
        %4257 = vmatpush1.bf16.xpose.msra.mxu0 0
        %4258 = vmatprep.subr.bf16.mxu0 0
        %4259 = vmatpush1.bf16.xpose.msra.mxu0 0
        %4260 = vmatprep.mubr.bf16.mxu0 0
        %4261 = vmatmul.mubr.bf16.gmra.mrb[0].mxu0 %v4205
        %v4262 = vpop.f32.mrb[0].mxu0
        %v4263 = vadd.f32 %v4184, %v4262
        %v4264 = vpop.f32.mrb[0].mxu0
        %v4265 = vpop.f32.mrb[0].mxu0
        %v4266 = vadd.f32 %v4185, %v4265
        %v4267 = vpop.f32.mrb[0].mxu0
        %4268 = vmatprep.mubr.bf16.mxu0 0
        %4269 = vmatmul.mubr.bf16.gmra.mrb[0].mxu0 %v4208
        %v4270 = vpop.f32.mrb[0].mxu0
        %v4271 = vadd.f32 %v4186, %v4270
        %v4272 = vpop.f32.mrb[0].mxu0
        %v4273 = vpop.f32.mrb[0].mxu0
        %v4274 = vadd.f32 %v4187, %v4273
        %v4275 = vpop.f32.mrb[0].mxu0
        %4276 = vmatprep.mubr.bf16.mxu0 0
        %4277 = vmatmul.mubr.bf16.gmra.mrb[0].mxu0 %v4211
        %v4278 = vpop.f32.mrb[0].mxu0
        %v4279 = vadd.f32 %v4188, %v4278
        %v4280 = vpop.f32.mrb[0].mxu0
        %v4281 = vpop.f32.mrb[0].mxu0
        %v4282 = vadd.f32 %v4189, %v4281
        %v4283 = vpop.f32.mrb[0].mxu0
        %4284 = vmatprep.mubr.bf16.mxu0 0
        %4285 = vmatmul.mubr.bf16.gmra.mrb[0].mxu0 %v4214
        %v4286 = vpop.f32.mrb[0].mxu0
        %v4287 = vadd.f32 %v4190, %v4286
        %v4288 = vpop.f32.mrb[0].mxu0
        %v4289 = vpop.f32.mrb[0].mxu0
        %v4290 = vadd.f32 %v4191, %v4289
        %v4291 = vpop.f32.mrb[0].mxu0
        %4292 = vdwg.mxu0
        %v4293 = vsel %vm2859, %v4263, -inf
        %4294 = vmax.xlane.f32.xlu0 %v4293
        %v4295 = vpop.xlane.xlu0 %4294
        %v4296 = vsel %vm2859, %v4266, -inf
        %4297 = vmax.xlane.f32.xlu0 %v4296
        %v4298 = vpop.xlane.xlu0 %4297
        %v4299 = vsel %vm2859, %v4271, -inf
        %4300 = vmax.xlane.f32.xlu0 %v4299
        %v4301 = vpop.xlane.xlu0 %4300
        %v4302 = vsel %vm2859, %v4274, -inf
        %4303 = vmax.xlane.f32.xlu0 %v4302
        %v4304 = vpop.xlane.xlu0 %4303
        %v4305 = vsel %vm2859, %v4279, -inf
        %4306 = vmax.xlane.f32.xlu0 %v4305
        %v4307 = vpop.xlane.xlu0 %4306
        %v4308 = vsel %vm2859, %v4282, -inf
        %4309 = vmax.xlane.f32.xlu0 %v4308
        %v4310 = vpop.xlane.xlu0 %4309
        %v4311 = vsel %vm2859, %v4287, -inf
        %4312 = vmax.xlane.f32.xlu0 %v4311
        %v4313 = vpop.xlane.xlu0 %4312
        %v4314 = vsel %vm2859, %v4290, -inf
        %4315 = vmax.xlane.f32.xlu0 %v4314
        %v4316 = vpop.xlane.xlu0 %4315
        %v4317 = vsub.f32 %v4263, %v4295
        %v4318 = vsub.f32 %v4266, %v4298
        %v4319 = vsub.f32 %v4271, %v4301
        %v4320 = vsub.f32 %v4274, %v4304
        %v4321 = vsub.f32 %v4279, %v4307
        %v4322 = vsub.f32 %v4282, %v4310
        %v4323 = vsub.f32 %v4287, %v4313
        %v4324 = vsub.f32 %v4290, %v4316
        %v4325 = vmul.f32 %v4317, 1.442695
        %v4326 = vpow.pop %v4325
        %v4327 = vmul.f32 %v4318, 1.442695
        %v4328 = vpow.pop %v4327
        %v4329 = vmul.f32 %v4319, 1.442695
        %v4330 = vpow.pop %v4329
        %v4331 = vmul.f32 %v4320, 1.442695
        %v4332 = vpow.pop %v4331
        %v4333 = vmul.f32 %v4321, 1.442695
        %v4334 = vpow.pop %v4333
        %v4335 = vmul.f32 %v4322, 1.442695
        %v4336 = vpow.pop %v4335
        %v4337 = vmul.f32 %v4323, 1.442695
        %v4338 = vpow.pop %v4337
        %v4339 = vmul.f32 %v4324, 1.442695
        %v4340 = vpow.pop %v4339
        %v4341 = vsel %vm2859, %v4326, 0.0
        %4342 = vadd.xlane.f32.xlu0 %v4341
        %v4343 = vpop.xlane.xlu0 %4342
        %v4344 = vsel %vm2859, %v4328, 0.0
        %4345 = vadd.xlane.f32.xlu0 %v4344
        %v4346 = vpop.xlane.xlu0 %4345
        %v4347 = vsel %vm2859, %v4330, 0.0
        %4348 = vadd.xlane.f32.xlu0 %v4347
        %v4349 = vpop.xlane.xlu0 %4348
        %v4350 = vsel %vm2859, %v4332, 0.0
        %4351 = vadd.xlane.f32.xlu0 %v4350
        %v4352 = vpop.xlane.xlu0 %4351
        %v4353 = vsel %vm2859, %v4334, 0.0
        %4354 = vadd.xlane.f32.xlu0 %v4353
        %v4355 = vpop.xlane.xlu0 %4354
        %v4356 = vsel %vm2859, %v4336, 0.0
        %4357 = vadd.xlane.f32.xlu0 %v4356
        %v4358 = vpop.xlane.xlu0 %4357
        %v4359 = vsel %vm2859, %v4338, 0.0
        %4360 = vadd.xlane.f32.xlu0 %v4359
        %v4361 = vpop.xlane.xlu0 %4360
        %v4362 = vsel %vm2859, %v4340, 0.0
        %4363 = vadd.xlane.f32.xlu0 %v4362
        %v4364 = vpop.xlane.xlu0 %4363
        %v4365 = vrcp.pop %v4343
        %v4366 = vrcp.pop %v4346
        %v4367 = vrcp.pop %v4349
        %v4368 = vrcp.pop %v4352
        %v4369 = vrcp.pop %v4355
        %v4370 = vrcp.pop %v4358
        %v4371 = vrcp.pop %v4361
        %v4372 = vrcp.pop %v4364
        %v4373 = vmul.f32 %v4326, %v4365
        %v4374 = vmul.f32 %v4328, %v4366
        %v4375 = vmul.f32 %v4330, %v4367
        %v4376 = vmul.f32 %v4332, %v4368
        %v4377 = vmul.f32 %v4334, %v4369
        %v4378 = vmul.f32 %v4336, %v4370
        %v4379 = vmul.f32 %v4338, %v4371
        %v4380 = vmul.f32 %v4340, %v4372
        %v4381 = vpack.c.bf16 %v4374, %v4373
        %v4382 = vpack.c.bf16 %v4376, %v4375
        %v4383 = vpack.c.bf16 %v4378, %v4377
        %v4384 = vpack.c.bf16 %v4380, %v4379
        %4385 = vrot.lane.b32.xlu0 %v4172, 64
        %v4386 = vpop.permute.xlu0 %4385
        %4387 = vrot.lane.b32.xlu0 %v4173, 64
        %v4388 = vpop.permute.xlu0 %4387
        %4389 = vrot.lane.b32.xlu0 %v4174, 64
        %v4390 = vpop.permute.xlu0 %4389
        %4391 = vrot.lane.b32.xlu0 %v4175, 64
        %v4392 = vpop.permute.xlu0 %4391
        %v4398 = vsel %vm2859, %v4381, 0
        %v4401 = vsel %vm2859, %v4382, 0
        %v4404 = vsel %vm2859, %v4383, 0
        %v4407 = vsel %vm2859, %v4384, 0
        %4409 = vmatprep.subr.bf16.mxu0 0
        %4410 = vmatpush1.bf16.msra.mxu0 %v4386
        %4411 = vmatprep.subr.bf16.mxu0 0
        %4412 = vmatpush1.bf16.msra.mxu0 %v4388
        %4413 = vmatprep.subr.bf16.mxu0 0
        %4414 = vmatpush1.bf16.msra.mxu0 %v4390
        %4415 = vmatprep.subr.bf16.mxu0 0
        %4416 = vmatpush1.bf16.msra.mxu0 %v4392
        %4417 = vmatprep.subr.bf16.mxu0 0
        %4418 = vmatpush1.bf16.msra.mxu0 0
        %4419 = vmatprep.subr.bf16.mxu0 0
        %4420 = vmatpush1.bf16.msra.mxu0 0
        %4421 = vmatprep.subr.bf16.mxu0 0
        %4422 = vmatpush1.bf16.msra.mxu0 0
        %4423 = vmatprep.subr.bf16.mxu0 0
        %4424 = vmatpush1.bf16.msra.mxu0 0
        %4425 = vmatprep.subr.bf16.mxu0 0
        %4426 = vmatpush1.bf16.msra.mxu0 0
        %4427 = vmatprep.subr.bf16.mxu0 0
        %4428 = vmatpush1.bf16.msra.mxu0 0
        %4429 = vmatprep.subr.bf16.mxu0 0
        %4430 = vmatpush1.bf16.msra.mxu0 0
        %4431 = vmatprep.subr.bf16.mxu0 0
        %4432 = vmatpush1.bf16.msra.mxu0 0
        %4433 = vmatprep.subr.bf16.mxu0 0
        %4434 = vmatpush1.bf16.msra.mxu0 0
        %4435 = vmatprep.subr.bf16.mxu0 0
        %4436 = vmatpush1.bf16.msra.mxu0 0
        %4437 = vmatprep.subr.bf16.mxu0 0
        %4438 = vmatpush1.bf16.msra.mxu0 0
        %4439 = vmatprep.subr.bf16.mxu0 0
        %4440 = vmatpush1.bf16.msra.mxu0 0
        %4441 = vmatprep.mubr.bf16.mxu0 0
        %4442 = vmatmul.mubr.bf16.gmra.mrb[0].mxu0 %v4398
        %v4443 = vpop.f32.mrb[0].mxu0
        %v4444 = vadd.f32 0.0, %v4443
        %v4445 = vpop.f32.mrb[0].mxu0
        %v4446 = vpop.f32.mrb[0].mxu0
        %v4447 = vadd.f32 0.0, %v4446
        %v4448 = vpop.f32.mrb[0].mxu0
        %4449 = vmatprep.mubr.bf16.mxu0 0
        %4450 = vmatmul.mubr.bf16.gmra.mrb[0].mxu0 %v4401
        %v4451 = vpop.f32.mrb[0].mxu0
        %v4452 = vadd.f32 0.0, %v4451
        %v4453 = vpop.f32.mrb[0].mxu0
        %v4454 = vpop.f32.mrb[0].mxu0
        %v4455 = vadd.f32 0.0, %v4454
        %v4456 = vpop.f32.mrb[0].mxu0
        %4457 = vmatprep.mubr.bf16.mxu0 0
        %4458 = vmatmul.mubr.bf16.gmra.mrb[0].mxu0 %v4404
        %v4459 = vpop.f32.mrb[0].mxu0
        %v4460 = vadd.f32 0.0, %v4459
        %v4461 = vpop.f32.mrb[0].mxu0
        %v4462 = vpop.f32.mrb[0].mxu0
        %v4463 = vadd.f32 0.0, %v4462
        %v4464 = vpop.f32.mrb[0].mxu0
        %4465 = vmatprep.mubr.bf16.mxu0 0
        %4466 = vmatmul.mubr.bf16.gmra.mrb[0].mxu0 %v4407
        %v4467 = vpop.f32.mrb[0].mxu0
        %v4468 = vadd.f32 0.0, %v4467
        %v4469 = vpop.f32.mrb[0].mxu0
        %v4470 = vpop.f32.mrb[0].mxu0
        %v4471 = vadd.f32 0.0, %v4470
        %v4472 = vpop.f32.mrb[0].mxu0
        %4473 = vdwg.mxu0
        %s4474 = scalar_lea.vmem %s39, 32
        %v4475 = vld [vmem:[%s4474] sm:$0xf]
        %v4476 = vld [vmem:[%s4474 + $0x4] sm:$0xf]
        %v4477 = vld [vmem:[%s4474 + $0x8] sm:$0xf]
        %v4478 = vld [vmem:[%s4474 + $0xc] sm:$0xf]
        %v4479 = vld [vmem:[%s4474 + $0x10] sm:$0xf]
        %v4480 = vld [vmem:[%s4474 + $0x14] sm:$0xf]
        %v4481 = vld [vmem:[%s4474 + $0x18] sm:$0xf]
        %v4482 = vld [vmem:[%s4474 + $0x1c] sm:$0xf]
        %v4483 = vunpack.c.l.bf16 %v4475
        %v4484 = vunpack.c.l.bf16 %v4476
        %v4485 = vunpack.c.l.bf16 %v4477
        %v4486 = vunpack.c.l.bf16 %v4478
        %v4487 = vunpack.c.l.bf16 %v4479
        %v4488 = vunpack.c.l.bf16 %v4480
        %v4489 = vunpack.c.l.bf16 %v4481
        %v4490 = vunpack.c.l.bf16 %v4482
        %4491 = vrot.lane.b32.xlu0 %v4172, 112
        %v4492 = vpop.permute.xlu0 %4491
        %4493 = vrot.lane.b32.xlu0 %v4173, 112
        %v4494 = vpop.permute.xlu0 %4493
        %4495 = vrot.lane.b32.xlu0 %v4174, 112
        %v4496 = vpop.permute.xlu0 %4495
        %4497 = vrot.lane.b32.xlu0 %v4175, 112
        %v4498 = vpop.permute.xlu0 %4497
        %4499 = vrot.lane.b32.xlu0 %v4172, 80
        %v4500 = vpop.permute.xlu0 %4499
        %4501 = vrot.lane.b32.xlu0 %v4173, 80
        %v4502 = vpop.permute.xlu0 %4501
        %4503 = vrot.lane.b32.xlu0 %v4174, 80
        %v4504 = vpop.permute.xlu0 %4503
        %4505 = vrot.lane.b32.xlu0 %v4175, 80
        %v4506 = vpop.permute.xlu0 %4505
        %v4508 = vsel %vm2769, %v4492, 0
        %v4511 = vsel %vm2769, %v4494, 0
        %v4514 = vsel %vm2769, %v4496, 0
        %v4517 = vsel %vm2769, %v4498, 0
        %v4520 = vsel %vm2769, %v4500, 0
        %v4523 = vsel %vm2769, %v4502, 0
        %v4526 = vsel %vm2769, %v4504, 0
        %v4529 = vsel %vm2769, %v4506, 0
        %4531 = vmatprep.subr.bf16.mxu0 0
        %4532 = vmatpush1.bf16.xpose.msra.mxu0 %v4520
        %4533 = vmatprep.subr.bf16.mxu0 0
        %4534 = vmatpush1.bf16.xpose.msra.mxu0 %v4523
        %4535 = vmatprep.subr.bf16.mxu0 0
        %4536 = vmatpush1.bf16.xpose.msra.mxu0 %v4526
        %4537 = vmatprep.subr.bf16.mxu0 0
        %4538 = vmatpush1.bf16.xpose.msra.mxu0 %v4529
        %4539 = vmatprep.subr.bf16.mxu0 0
        %4540 = vmatpush1.bf16.xpose.msra.mxu0 0
        %4541 = vmatprep.subr.bf16.mxu0 0
        %4542 = vmatpush1.bf16.xpose.msra.mxu0 0
        %4543 = vmatprep.subr.bf16.mxu0 0
        %4544 = vmatpush1.bf16.xpose.msra.mxu0 0
        %4545 = vmatprep.subr.bf16.mxu0 0
        %4546 = vmatpush1.bf16.xpose.msra.mxu0 0
        %4547 = vmatprep.subr.bf16.mxu0 0
        %4548 = vmatpush1.bf16.xpose.msra.mxu0 0
        %4549 = vmatprep.subr.bf16.mxu0 0
        %4550 = vmatpush1.bf16.xpose.msra.mxu0 0
        %4551 = vmatprep.subr.bf16.mxu0 0
        %4552 = vmatpush1.bf16.xpose.msra.mxu0 0
        %4553 = vmatprep.subr.bf16.mxu0 0
        %4554 = vmatpush1.bf16.xpose.msra.mxu0 0
        %4555 = vmatprep.subr.bf16.mxu0 0
        %4556 = vmatpush1.bf16.xpose.msra.mxu0 0
        %4557 = vmatprep.subr.bf16.mxu0 0
        %4558 = vmatpush1.bf16.xpose.msra.mxu0 0
        %4559 = vmatprep.subr.bf16.mxu0 0
        %4560 = vmatpush1.bf16.xpose.msra.mxu0 0
        %4561 = vmatprep.subr.bf16.mxu0 0
        %4562 = vmatpush1.bf16.xpose.msra.mxu0 0
        %4563 = vmatprep.mubr.bf16.mxu0 0
        %4564 = vmatmul.mubr.bf16.gmra.mrb[0].mxu0 %v4508
        %v4565 = vpop.f32.mrb[0].mxu0
        %v4566 = vadd.f32 %v4483, %v4565
        %v4567 = vpop.f32.mrb[0].mxu0
        %v4568 = vpop.f32.mrb[0].mxu0
        %v4569 = vadd.f32 %v4484, %v4568
        %v4570 = vpop.f32.mrb[0].mxu0
        %4571 = vmatprep.mubr.bf16.mxu0 0
        %4572 = vmatmul.mubr.bf16.gmra.mrb[0].mxu0 %v4511
        %v4573 = vpop.f32.mrb[0].mxu0
        %v4574 = vadd.f32 %v4485, %v4573
        %v4575 = vpop.f32.mrb[0].mxu0
        %v4576 = vpop.f32.mrb[0].mxu0
        %v4577 = vadd.f32 %v4486, %v4576
        %v4578 = vpop.f32.mrb[0].mxu0
        %4579 = vmatprep.mubr.bf16.mxu0 0
        %4580 = vmatmul.mubr.bf16.gmra.mrb[0].mxu0 %v4514
        %v4581 = vpop.f32.mrb[0].mxu0
        %v4582 = vadd.f32 %v4487, %v4581
        %v4583 = vpop.f32.mrb[0].mxu0
        %v4584 = vpop.f32.mrb[0].mxu0
        %v4585 = vadd.f32 %v4488, %v4584
        %v4586 = vpop.f32.mrb[0].mxu0
        %4587 = vmatprep.mubr.bf16.mxu0 0
        %4588 = vmatmul.mubr.bf16.gmra.mrb[0].mxu0 %v4517
        %v4589 = vpop.f32.mrb[0].mxu0
        %v4590 = vadd.f32 %v4489, %v4589
        %v4591 = vpop.f32.mrb[0].mxu0
        %v4592 = vpop.f32.mrb[0].mxu0
        %v4593 = vadd.f32 %v4490, %v4592
        %v4594 = vpop.f32.mrb[0].mxu0
        %4595 = vdwg.mxu0
        %v4596 = vsel %vm2859, %v4566, -inf
        %4597 = vmax.xlane.f32.xlu0 %v4596
        %v4598 = vpop.xlane.xlu0 %4597
        %v4599 = vsel %vm2859, %v4569, -inf
        %4600 = vmax.xlane.f32.xlu0 %v4599
        %v4601 = vpop.xlane.xlu0 %4600
        %v4602 = vsel %vm2859, %v4574, -inf
        %4603 = vmax.xlane.f32.xlu0 %v4602
        %v4604 = vpop.xlane.xlu0 %4603
        %v4605 = vsel %vm2859, %v4577, -inf
        %4606 = vmax.xlane.f32.xlu0 %v4605
        %v4607 = vpop.xlane.xlu0 %4606
        %v4608 = vsel %vm2859, %v4582, -inf
        %4609 = vmax.xlane.f32.xlu0 %v4608
        %v4610 = vpop.xlane.xlu0 %4609
        %v4611 = vsel %vm2859, %v4585, -inf
        %4612 = vmax.xlane.f32.xlu0 %v4611
        %v4613 = vpop.xlane.xlu0 %4612
        %v4614 = vsel %vm2859, %v4590, -inf
        %4615 = vmax.xlane.f32.xlu0 %v4614
        %v4616 = vpop.xlane.xlu0 %4615
        %v4617 = vsel %vm2859, %v4593, -inf
        %4618 = vmax.xlane.f32.xlu0 %v4617
        %v4619 = vpop.xlane.xlu0 %4618
        %v4620 = vsub.f32 %v4566, %v4598
        %v4621 = vsub.f32 %v4569, %v4601
        %v4622 = vsub.f32 %v4574, %v4604
        %v4623 = vsub.f32 %v4577, %v4607
        %v4624 = vsub.f32 %v4582, %v4610
        %v4625 = vsub.f32 %v4585, %v4613
        %v4626 = vsub.f32 %v4590, %v4616
        %v4627 = vsub.f32 %v4593, %v4619
        %v4628 = vmul.f32 %v4620, 1.442695
        %v4629 = vpow.pop %v4628
        %v4630 = vmul.f32 %v4621, 1.442695
        %v4631 = vpow.pop %v4630
        %v4632 = vmul.f32 %v4622, 1.442695
        %v4633 = vpow.pop %v4632
        %v4634 = vmul.f32 %v4623, 1.442695
        %v4635 = vpow.pop %v4634
        %v4636 = vmul.f32 %v4624, 1.442695
        %v4637 = vpow.pop %v4636
        %v4638 = vmul.f32 %v4625, 1.442695
        %v4639 = vpow.pop %v4638
        %v4640 = vmul.f32 %v4626, 1.442695
        %v4641 = vpow.pop %v4640
        %v4642 = vmul.f32 %v4627, 1.442695
        %v4643 = vpow.pop %v4642
        %v4644 = vsel %vm2859, %v4629, 0.0
        %4645 = vadd.xlane.f32.xlu0 %v4644
        %v4646 = vpop.xlane.xlu0 %4645
        %v4647 = vsel %vm2859, %v4631, 0.0
        %4648 = vadd.xlane.f32.xlu0 %v4647
        %v4649 = vpop.xlane.xlu0 %4648
        %v4650 = vsel %vm2859, %v4633, 0.0
        %4651 = vadd.xlane.f32.xlu0 %v4650
        %v4652 = vpop.xlane.xlu0 %4651
        %v4653 = vsel %vm2859, %v4635, 0.0
        %4654 = vadd.xlane.f32.xlu0 %v4653
        %v4655 = vpop.xlane.xlu0 %4654
        %v4656 = vsel %vm2859, %v4637, 0.0
        %4657 = vadd.xlane.f32.xlu0 %v4656
        %v4658 = vpop.xlane.xlu0 %4657
        %v4659 = vsel %vm2859, %v4639, 0.0
        %4660 = vadd.xlane.f32.xlu0 %v4659
        %v4661 = vpop.xlane.xlu0 %4660
        %v4662 = vsel %vm2859, %v4641, 0.0
        %4663 = vadd.xlane.f32.xlu0 %v4662
        %v4664 = vpop.xlane.xlu0 %4663
        %v4665 = vsel %vm2859, %v4643, 0.0
        %4666 = vadd.xlane.f32.xlu0 %v4665
        %v4667 = vpop.xlane.xlu0 %4666
        %v4668 = vrcp.pop %v4646
        %v4669 = vrcp.pop %v4649
        %v4670 = vrcp.pop %v4652
        %v4671 = vrcp.pop %v4655
        %v4672 = vrcp.pop %v4658
        %v4673 = vrcp.pop %v4661
        %v4674 = vrcp.pop %v4664
        %v4675 = vrcp.pop %v4667
        %v4676 = vmul.f32 %v4629, %v4668
        %v4677 = vmul.f32 %v4631, %v4669
        %v4678 = vmul.f32 %v4633, %v4670
        %v4679 = vmul.f32 %v4635, %v4671
        %v4680 = vmul.f32 %v4637, %v4672
        %v4681 = vmul.f32 %v4639, %v4673
        %v4682 = vmul.f32 %v4641, %v4674
        %v4683 = vmul.f32 %v4643, %v4675
        %v4684 = vpack.c.bf16 %v4677, %v4676
        %v4685 = vpack.c.bf16 %v4679, %v4678
        %v4686 = vpack.c.bf16 %v4681, %v4680
        %v4687 = vpack.c.bf16 %v4683, %v4682
        %4688 = vrot.lane.b32.xlu0 %v4172, 48
        %v4689 = vpop.permute.xlu0 %4688
        %4690 = vrot.lane.b32.xlu0 %v4173, 48
        %v4691 = vpop.permute.xlu0 %4690
        %4692 = vrot.lane.b32.xlu0 %v4174, 48
        %v4693 = vpop.permute.xlu0 %4692
        %4694 = vrot.lane.b32.xlu0 %v4175, 48
        %v4695 = vpop.permute.xlu0 %4694
        %v4701 = vsel %vm2859, %v4684, 0
        %v4704 = vsel %vm2859, %v4685, 0
        %v4707 = vsel %vm2859, %v4686, 0
        %v4710 = vsel %vm2859, %v4687, 0
        %4712 = vmatprep.subr.bf16.mxu0 0
        %4713 = vmatpush1.bf16.msra.mxu0 %v4689
        %4714 = vmatprep.subr.bf16.mxu0 0
        %4715 = vmatpush1.bf16.msra.mxu0 %v4691
        %4716 = vmatprep.subr.bf16.mxu0 0
        %4717 = vmatpush1.bf16.msra.mxu0 %v4693
        %4718 = vmatprep.subr.bf16.mxu0 0
        %4719 = vmatpush1.bf16.msra.mxu0 %v4695
        %4720 = vmatprep.subr.bf16.mxu0 0
        %4721 = vmatpush1.bf16.msra.mxu0 0
        %4722 = vmatprep.subr.bf16.mxu0 0
        %4723 = vmatpush1.bf16.msra.mxu0 0
        %4724 = vmatprep.subr.bf16.mxu0 0
        %4725 = vmatpush1.bf16.msra.mxu0 0
        %4726 = vmatprep.subr.bf16.mxu0 0
        %4727 = vmatpush1.bf16.msra.mxu0 0
        %4728 = vmatprep.subr.bf16.mxu0 0
        %4729 = vmatpush1.bf16.msra.mxu0 0
        %4730 = vmatprep.subr.bf16.mxu0 0
        %4731 = vmatpush1.bf16.msra.mxu0 0
        %4732 = vmatprep.subr.bf16.mxu0 0
        %4733 = vmatpush1.bf16.msra.mxu0 0
        %4734 = vmatprep.subr.bf16.mxu0 0
        %4735 = vmatpush1.bf16.msra.mxu0 0
        %4736 = vmatprep.subr.bf16.mxu0 0
        %4737 = vmatpush1.bf16.msra.mxu0 0
        %4738 = vmatprep.subr.bf16.mxu0 0
        %4739 = vmatpush1.bf16.msra.mxu0 0
        %4740 = vmatprep.subr.bf16.mxu0 0
        %4741 = vmatpush1.bf16.msra.mxu0 0
        %4742 = vmatprep.subr.bf16.mxu0 0
        %4743 = vmatpush1.bf16.msra.mxu0 0
        %4744 = vmatprep.mubr.bf16.mxu0 0
        %4745 = vmatmul.mubr.bf16.gmra.mrb[0].mxu0 %v4701
        %v4746 = vpop.f32.mrb[0].mxu0
        %v4747 = vadd.f32 0.0, %v4746
        %v4748 = vpop.f32.mrb[0].mxu0
        %v4749 = vpop.f32.mrb[0].mxu0
        %v4750 = vadd.f32 0.0, %v4749
        %v4751 = vpop.f32.mrb[0].mxu0
        %4752 = vmatprep.mubr.bf16.mxu0 0
        %4753 = vmatmul.mubr.bf16.gmra.mrb[0].mxu0 %v4704
        %v4754 = vpop.f32.mrb[0].mxu0
        %v4755 = vadd.f32 0.0, %v4754
        %v4756 = vpop.f32.mrb[0].mxu0
        %v4757 = vpop.f32.mrb[0].mxu0
        %v4758 = vadd.f32 0.0, %v4757
        %v4759 = vpop.f32.mrb[0].mxu0
        %4760 = vmatprep.mubr.bf16.mxu0 0
        %4761 = vmatmul.mubr.bf16.gmra.mrb[0].mxu0 %v4707
        %v4762 = vpop.f32.mrb[0].mxu0
        %v4763 = vadd.f32 0.0, %v4762
        %v4764 = vpop.f32.mrb[0].mxu0
        %v4765 = vpop.f32.mrb[0].mxu0
        %v4766 = vadd.f32 0.0, %v4765
        %v4767 = vpop.f32.mrb[0].mxu0
        %4768 = vmatprep.mubr.bf16.mxu0 0
        %4769 = vmatmul.mubr.bf16.gmra.mrb[0].mxu0 %v4710
        %v4770 = vpop.f32.mrb[0].mxu0
        %v4771 = vadd.f32 0.0, %v4770
        %v4772 = vpop.f32.mrb[0].mxu0
        %v4773 = vpop.f32.mrb[0].mxu0
        %v4774 = vadd.f32 0.0, %v4773
        %v4775 = vpop.f32.mrb[0].mxu0
        %4776 = vdwg.mxu0
        %4785 = vrot.lane.b32.xlu0 %v4747, 16
        %v4786 = vpop.permute.xlu0 %4785
        %4787 = vrot.lane.b32.xlu0 %v4750, 16
        %v4788 = vpop.permute.xlu0 %4787
        %4789 = vrot.lane.b32.xlu0 %v4755, 16
        %v4790 = vpop.permute.xlu0 %4789
        %4791 = vrot.lane.b32.xlu0 %v4758, 16
        %v4792 = vpop.permute.xlu0 %4791
        %4793 = vrot.lane.b32.xlu0 %v4763, 16
        %v4794 = vpop.permute.xlu0 %4793
        %4795 = vrot.lane.b32.xlu0 %v4766, 16
        %v4796 = vpop.permute.xlu0 %4795
        %4797 = vrot.lane.b32.xlu0 %v4771, 16
        %v4798 = vpop.permute.xlu0 %4797
        %4799 = vrot.lane.b32.xlu0 %v4774, 16
        %v4800 = vpop.permute.xlu0 %4799
        %v4809 = vsel %vm2769, %v4444, %v4786
        %v4810 = vsel %vm2769, %v4447, %v4788
        %v4811 = vsel %vm2769, %v4452, %v4790
        %v4812 = vsel %vm2769, %v4455, %v4792
        %v4813 = vsel %vm2769, %v4460, %v4794
        %v4814 = vsel %vm2769, %v4463, %v4796
        %v4815 = vsel %vm2769, %v4468, %v4798
        %v4816 = vsel %vm2769, %v4471, %v4800
        %v4817 = vld [vmem:[%s49] sm:$0xf]
        %v4818 = vld [vmem:[%s49 + $0x4] sm:$0xf]
        %v4819 = vld [vmem:[%s49 + $0x8] sm:$0xf]
        %v4820 = vld [vmem:[%s49 + $0xc] sm:$0xf]
        %v4821 = vpack.c.bf16 %v4810, %v4809
        %v4822 = vpack.c.bf16 %v4812, %v4811
        %v4823 = vpack.c.bf16 %v4814, %v4813
        %v4824 = vpack.c.bf16 %v4816, %v4815
        %v4825 = vld [vmem:[#allocation3] sm:$0x1]
        %v4827 = vlaneseq
        %v4828 = vshrl.u32 %v4827, 7
        %v4829 = vsub.s32 0, %v4828
        %v4830 = vrot.slane %v4825, %v4829
        %v4836 = vunpack.c.l.b16 %v4817
        %v4837 = vunpack.c.l.b16 %v4818
        %v4838 = vunpack.c.l.b16 %v4819
        %v4839 = vunpack.c.l.b16 %v4820
        %v4840 = vpack.c.b16 %v4837, %v4836
        %v4841 = vpack.c.b16 %v4839, %v4838
        %v4845 = vsel %vm2349, %v4821, 0
        %v4848 = vsel %vm2349, %v4822, 0
        %v4851 = vsel %vm2349, %v4823, 0
        %v4854 = vsel %vm2349, %v4824, 0
        %4856 = vmatprep.subr.bf16.mxu0 0
        %4857 = vmatpush1.bf16.msra.mxu0 %v4840
        %4858 = vmatprep.subr.bf16.mxu0 0
        %4859 = vmatpush1.bf16.msra.mxu0 %v4841
        %4860 = vmatprep.subr.bf16.mxu0 0
        %4861 = vmatpush1.bf16.msra.mxu0 0
        %4862 = vmatprep.subr.bf16.mxu0 0
        %4863 = vmatpush1.bf16.msra.mxu0 0
        %4864 = vmatprep.subr.bf16.mxu0 0
        %4865 = vmatpush1.bf16.msra.mxu0 0
        %4866 = vmatprep.subr.bf16.mxu0 0
        %4867 = vmatpush1.bf16.msra.mxu0 0
        %4868 = vmatprep.subr.bf16.mxu0 0
        %4869 = vmatpush1.bf16.msra.mxu0 0
        %4870 = vmatprep.subr.bf16.mxu0 0
        %4871 = vmatpush1.bf16.msra.mxu0 0
        %4872 = vmatprep.subr.bf16.mxu0 0
        %4873 = vmatpush1.bf16.msra.mxu0 0
        %4874 = vmatprep.subr.bf16.mxu0 0
        %4875 = vmatpush1.bf16.msra.mxu0 0
        %4876 = vmatprep.subr.bf16.mxu0 0
        %4877 = vmatpush1.bf16.msra.mxu0 0
        %4878 = vmatprep.subr.bf16.mxu0 0
        %4879 = vmatpush1.bf16.msra.mxu0 0
        %4880 = vmatprep.subr.bf16.mxu0 0
        %4881 = vmatpush1.bf16.msra.mxu0 0
        %4882 = vmatprep.subr.bf16.mxu0 0
        %4883 = vmatpush1.bf16.msra.mxu0 0
        %4884 = vmatprep.subr.bf16.mxu0 0
        %4885 = vmatpush1.bf16.msra.mxu0 0
        %4886 = vmatprep.subr.bf16.mxu0 0
        %4887 = vmatpush1.bf16.msra.mxu0 0
        %4888 = vmatprep.mubr.bf16.mxu0 0
        %4889 = vmatmul.mubr.bf16.gmra.mrb[0].mxu0 %v4845
        %v4890 = vpop.f32.mrb[0].mxu0
        %v4891 = vadd.f32 %v4830, %v4890
        %v4892 = vpop.f32.mrb[0].mxu0
        %v4893 = vpop.f32.mrb[0].mxu0
        %v4894 = vadd.f32 %v4830, %v4893
        %v4895 = vpop.f32.mrb[0].mxu0
        %4896 = vmatprep.mubr.bf16.mxu0 0
        %4897 = vmatmul.mubr.bf16.gmra.mrb[0].mxu0 %v4848
        %v4898 = vpop.f32.mrb[0].mxu0
        %v4899 = vadd.f32 %v4830, %v4898
        %v4900 = vpop.f32.mrb[0].mxu0
        %v4901 = vpop.f32.mrb[0].mxu0
        %v4902 = vadd.f32 %v4830, %v4901
        %v4903 = vpop.f32.mrb[0].mxu0
        %4904 = vmatprep.mubr.bf16.mxu0 0
        %4905 = vmatmul.mubr.bf16.gmra.mrb[0].mxu0 %v4851
        %v4906 = vpop.f32.mrb[0].mxu0
        %v4907 = vadd.f32 %v4830, %v4906
        %v4908 = vpop.f32.mrb[0].mxu0
        %v4909 = vpop.f32.mrb[0].mxu0
        %v4910 = vadd.f32 %v4830, %v4909
        %v4911 = vpop.f32.mrb[0].mxu0
        %4912 = vmatprep.mubr.bf16.mxu0 0
        %4913 = vmatmul.mubr.bf16.gmra.mrb[0].mxu0 %v4854
        %v4914 = vpop.f32.mrb[0].mxu0
        %v4915 = vadd.f32 %v4830, %v4914
        %v4916 = vpop.f32.mrb[0].mxu0
        %v4917 = vpop.f32.mrb[0].mxu0
        %v4918 = vadd.f32 %v4830, %v4917
        %v4919 = vpop.f32.mrb[0].mxu0
        %4920 = vdwg.mxu0
        %v4921 = vadd.f32 %v3926, %v4891
        %v4922 = vadd.f32 %v3927, %v4894
        %v4923 = vadd.f32 %v3928, %v4899
        %v4924 = vadd.f32 %v3929, %v4902
        %v4925 = vadd.f32 %v3930, %v4907
        %v4926 = vadd.f32 %v3931, %v4910
        %v4927 = vadd.f32 %v3932, %v4915
        %v4928 = vadd.f32 %v3933, %v4918
        %v4929 = vld [vmem:[#allocation5] sm:$0x1]
        %v4930 = vld [vmem:[#allocation7] sm:$0x1]
        %v4931 = vsel %vm2349, %v4921, 0.0
        %4932 = vadd.xlane.f32.xlu0 %v4931
        %v4933 = vpop.xlane.xlu0 %4932
        %v4934 = vsel %vm2349, %v4922, 0.0
        %4935 = vadd.xlane.f32.xlu0 %v4934
        %v4936 = vpop.xlane.xlu0 %4935
        %v4937 = vsel %vm2349, %v4923, 0.0
        %4938 = vadd.xlane.f32.xlu0 %v4937
        %v4939 = vpop.xlane.xlu0 %4938
        %v4940 = vsel %vm2349, %v4924, 0.0
        %4941 = vadd.xlane.f32.xlu0 %v4940
        %v4942 = vpop.xlane.xlu0 %4941
        %v4943 = vsel %vm2349, %v4925, 0.0
        %4944 = vadd.xlane.f32.xlu0 %v4943
        %v4945 = vpop.xlane.xlu0 %4944
        %v4946 = vsel %vm2349, %v4926, 0.0
        %4947 = vadd.xlane.f32.xlu0 %v4946
        %v4948 = vpop.xlane.xlu0 %4947
        %v4949 = vsel %vm2349, %v4927, 0.0
        %4950 = vadd.xlane.f32.xlu0 %v4949
        %v4951 = vpop.xlane.xlu0 %4950
        %v4952 = vsel %vm2349, %v4928, 0.0
        %4953 = vadd.xlane.f32.xlu0 %v4952
        %v4954 = vpop.xlane.xlu0 %4953
        %v4955 = vmul.f32 %v4933, %v2374
        %v4956 = vmul.f32 %v4936, %v2374
        %v4957 = vmul.f32 %v4939, %v2374
        %v4958 = vmul.f32 %v4942, %v2374
        %v4959 = vmul.f32 %v4945, %v2374
        %v4960 = vmul.f32 %v4948, %v2374
        %v4961 = vmul.f32 %v4951, %v2374
        %v4962 = vmul.f32 %v4954, %v2374
        %v4963 = vsub.f32 %v4921, %v4955
        %v4964 = vsub.f32 %v4922, %v4956
        %v4965 = vsub.f32 %v4923, %v4957
        %v4966 = vsub.f32 %v4924, %v4958
        %v4967 = vsub.f32 %v4925, %v4959
        %v4968 = vsub.f32 %v4926, %v4960
        %v4969 = vsub.f32 %v4927, %v4961
        %v4970 = vsub.f32 %v4928, %v4962
        %v4971 = vmul.f32 %v4963, %v4963
        %v4972 = vmul.f32 %v4964, %v4964
        %v4973 = vmul.f32 %v4965, %v4965
        %v4974 = vmul.f32 %v4966, %v4966
        %v4975 = vmul.f32 %v4967, %v4967
        %v4976 = vmul.f32 %v4968, %v4968
        %v4977 = vmul.f32 %v4969, %v4969
        %v4978 = vmul.f32 %v4970, %v4970
        %v4979 = vsel %vm2349, %v4971, 0.0
        %4980 = vadd.xlane.f32.xlu0 %v4979
        %v4981 = vpop.xlane.xlu0 %4980
        %v4982 = vsel %vm2349, %v4972, 0.0
        %4983 = vadd.xlane.f32.xlu0 %v4982
        %v4984 = vpop.xlane.xlu0 %4983
        %v4985 = vsel %vm2349, %v4973, 0.0
        %4986 = vadd.xlane.f32.xlu0 %v4985
        %v4987 = vpop.xlane.xlu0 %4986
        %v4988 = vsel %vm2349, %v4974, 0.0
        %4989 = vadd.xlane.f32.xlu0 %v4988
        %v4990 = vpop.xlane.xlu0 %4989
        %v4991 = vsel %vm2349, %v4975, 0.0
        %4992 = vadd.xlane.f32.xlu0 %v4991
        %v4993 = vpop.xlane.xlu0 %4992
        %v4994 = vsel %vm2349, %v4976, 0.0
        %4995 = vadd.xlane.f32.xlu0 %v4994
        %v4996 = vpop.xlane.xlu0 %4995
        %v4997 = vsel %vm2349, %v4977, 0.0
        %4998 = vadd.xlane.f32.xlu0 %v4997
        %v4999 = vpop.xlane.xlu0 %4998
        %v5000 = vsel %vm2349, %v4978, 0.0
        %5001 = vadd.xlane.f32.xlu0 %v5000
        %v5002 = vpop.xlane.xlu0 %5001
        %v5003 = vmul.f32 %v4981, %v2374
        %v5004 = vmul.f32 %v4984, %v2374
        %v5005 = vmul.f32 %v4987, %v2374
        %v5006 = vmul.f32 %v4990, %v2374
        %v5007 = vmul.f32 %v4993, %v2374
        %v5008 = vmul.f32 %v4996, %v2374
        %v5009 = vmul.f32 %v4999, %v2374
        %v5010 = vmul.f32 %v5002, %v2374
        %v5011 = vadd.f32 %v5003, 1e-05
        %v5012 = vadd.f32 %v5004, 1e-05
        %v5013 = vadd.f32 %v5005, 1e-05
        %v5014 = vadd.f32 %v5006, 1e-05
        %v5015 = vadd.f32 %v5007, 1e-05
        %v5016 = vadd.f32 %v5008, 1e-05
        %v5017 = vadd.f32 %v5009, 1e-05
        %v5018 = vadd.f32 %v5010, 1e-05
        %v5019 = vrsqrt.pop %v5011
        %v5020 = vrsqrt.pop %v5012
        %v5021 = vrsqrt.pop %v5013
        %v5022 = vrsqrt.pop %v5014
        %v5023 = vrsqrt.pop %v5015
        %v5024 = vrsqrt.pop %v5016
        %v5025 = vrsqrt.pop %v5017
        %v5026 = vrsqrt.pop %v5018
        %v5027 = vmul.f32 %v4963, %v5019
        %v5028 = vmul.f32 %v4964, %v5020
        %v5029 = vmul.f32 %v4965, %v5021
        %v5030 = vmul.f32 %v4966, %v5022
        %v5031 = vmul.f32 %v4967, %v5023
        %v5032 = vmul.f32 %v4968, %v5024
        %v5033 = vmul.f32 %v4969, %v5025
        %v5034 = vmul.f32 %v4970, %v5026
        %v5036 = vlaneseq
        %v5037 = vshrl.u32 %v5036, 7
        %v5038 = vsub.s32 0, %v5037
        %v5039 = vrot.slane %v4929, %v5038
        %v5041 = vmul.f32 %v5027, %v5039
        %v5042 = vmul.f32 %v5028, %v5039
        %v5043 = vmul.f32 %v5029, %v5039
        %v5044 = vmul.f32 %v5030, %v5039
        %v5045 = vmul.f32 %v5031, %v5039
        %v5046 = vmul.f32 %v5032, %v5039
        %v5047 = vmul.f32 %v5033, %v5039
        %v5048 = vmul.f32 %v5034, %v5039
        %v5050 = vlaneseq
        %v5051 = vshrl.u32 %v5050, 7
        %v5052 = vsub.s32 0, %v5051
        %v5053 = vrot.slane %v4930, %v5052
        %v5055 = vadd.f32 %v5041, %v5053
        %v5056 = vadd.f32 %v5042, %v5053
        %v5057 = vadd.f32 %v5043, %v5053
        %v5058 = vadd.f32 %v5044, %v5053
        %v5059 = vadd.f32 %v5045, %v5053
        %v5060 = vadd.f32 %v5046, %v5053
        %v5061 = vadd.f32 %v5047, %v5053
        %v5062 = vadd.f32 %v5048, %v5053
        %v5063 = vld [vmem:[%s57] sm:$0xf]
        %v5064 = vld [vmem:[%s57 + $0x4] sm:$0xf]
        %v5065 = vld [vmem:[%s57 + $0x8] sm:$0xf]
        %v5066 = vld [vmem:[%s57 + $0xc] sm:$0xf]
        %v5067 = vpack.c.bf16 %v5056, %v5055
        %v5068 = vpack.c.bf16 %v5058, %v5057
        %v5069 = vpack.c.bf16 %v5060, %v5059
        %v5070 = vpack.c.bf16 %v5062, %v5061
        %v5071 = vld [vmem:[#allocation8] sm:$0x1]
        %v5073 = vlaneseq
        %v5074 = vshrl.u32 %v5073, 7
        %v5075 = vsub.s32 0, %v5074
        %v5076 = vrot.slane %v5071, %v5075
        %v5082 = vunpack.c.l.b16 %v5063
        %v5083 = vunpack.c.l.b16 %v5064
        %v5084 = vunpack.c.l.b16 %v5065
        %v5085 = vunpack.c.l.b16 %v5066
        %v5086 = vpack.c.b16 %v5083, %v5082
        %v5087 = vpack.c.b16 %v5085, %v5084
        %v5091 = vsel %vm2349, %v5067, 0
        %v5094 = vsel %vm2349, %v5068, 0
        %v5097 = vsel %vm2349, %v5069, 0
        %v5100 = vsel %vm2349, %v5070, 0
        %5102 = vmatprep.subr.bf16.mxu0 0
        %5103 = vmatpush1.bf16.msra.mxu0 %v5086
        %5104 = vmatprep.subr.bf16.mxu0 0
        %5105 = vmatpush1.bf16.msra.mxu0 %v5087
        %5106 = vmatprep.subr.bf16.mxu0 0
        %5107 = vmatpush1.bf16.msra.mxu0 0
        %5108 = vmatprep.subr.bf16.mxu0 0
        %5109 = vmatpush1.bf16.msra.mxu0 0
        %5110 = vmatprep.subr.bf16.mxu0 0
        %5111 = vmatpush1.bf16.msra.mxu0 0
        %5112 = vmatprep.subr.bf16.mxu0 0
        %5113 = vmatpush1.bf16.msra.mxu0 0
        %5114 = vmatprep.subr.bf16.mxu0 0
        %5115 = vmatpush1.bf16.msra.mxu0 0
        %5116 = vmatprep.subr.bf16.mxu0 0
        %5117 = vmatpush1.bf16.msra.mxu0 0
        %5118 = vmatprep.subr.bf16.mxu0 0
        %5119 = vmatpush1.bf16.msra.mxu0 0
        %5120 = vmatprep.subr.bf16.mxu0 0
        %5121 = vmatpush1.bf16.msra.mxu0 0
        %5122 = vmatprep.subr.bf16.mxu0 0
        %5123 = vmatpush1.bf16.msra.mxu0 0
        %5124 = vmatprep.subr.bf16.mxu0 0
        %5125 = vmatpush1.bf16.msra.mxu0 0
        %5126 = vmatprep.subr.bf16.mxu0 0
        %5127 = vmatpush1.bf16.msra.mxu0 0
        %5128 = vmatprep.subr.bf16.mxu0 0
        %5129 = vmatpush1.bf16.msra.mxu0 0
        %5130 = vmatprep.subr.bf16.mxu0 0
        %5131 = vmatpush1.bf16.msra.mxu0 0
        %5132 = vmatprep.subr.bf16.mxu0 0
        %5133 = vmatpush1.bf16.msra.mxu0 0
        %5134 = vmatprep.mubr.bf16.mxu0 0
        %5135 = vmatmul.mubr.bf16.gmra.mrb[0].mxu0 %v5091
        %v5136 = vpop.f32.mrb[0].mxu0
        %v5137 = vadd.f32 %v5076, %v5136
        %v5138 = vpop.f32.mrb[0].mxu0
        %v5139 = vpop.f32.mrb[0].mxu0
        %v5140 = vadd.f32 %v5076, %v5139
        %v5141 = vpop.f32.mrb[0].mxu0
        %5142 = vmatprep.mubr.bf16.mxu0 0
        %5143 = vmatmul.mubr.bf16.gmra.mrb[0].mxu0 %v5094
        %v5144 = vpop.f32.mrb[0].mxu0
        %v5145 = vadd.f32 %v5076, %v5144
        %v5146 = vpop.f32.mrb[0].mxu0
        %v5147 = vpop.f32.mrb[0].mxu0
        %v5148 = vadd.f32 %v5076, %v5147
        %v5149 = vpop.f32.mrb[0].mxu0
        %5150 = vmatprep.mubr.bf16.mxu0 0
        %5151 = vmatmul.mubr.bf16.gmra.mrb[0].mxu0 %v5097
        %v5152 = vpop.f32.mrb[0].mxu0
        %v5153 = vadd.f32 %v5076, %v5152
        %v5154 = vpop.f32.mrb[0].mxu0
        %v5155 = vpop.f32.mrb[0].mxu0
        %v5156 = vadd.f32 %v5076, %v5155
        %v5157 = vpop.f32.mrb[0].mxu0
        %5158 = vmatprep.mubr.bf16.mxu0 0
        %5159 = vmatmul.mubr.bf16.gmra.mrb[0].mxu0 %v5100
        %v5160 = vpop.f32.mrb[0].mxu0
        %v5161 = vadd.f32 %v5076, %v5160
        %v5162 = vpop.f32.mrb[0].mxu0
        %v5163 = vpop.f32.mrb[0].mxu0
        %v5164 = vadd.f32 %v5076, %v5163
        %v5165 = vpop.f32.mrb[0].mxu0
        %5166 = vdwg.mxu0
        %v5167 = vmul.f32 %v5137, %v5137
        %v5168 = vmul.f32 %v5140, %v5140
        %v5169 = vmul.f32 %v5145, %v5145
        %v5170 = vmul.f32 %v5148, %v5148
        %v5171 = vmul.f32 %v5153, %v5153
        %v5172 = vmul.f32 %v5156, %v5156
        %v5173 = vmul.f32 %v5161, %v5161
        %v5174 = vmul.f32 %v5164, %v5164
        %v5175 = vmul.f32 %v5137, %v5167
        %v5176 = vmul.f32 %v5140, %v5168
        %v5177 = vmul.f32 %v5145, %v5169
        %v5178 = vmul.f32 %v5148, %v5170
        %v5179 = vmul.f32 %v5153, %v5171
        %v5180 = vmul.f32 %v5156, %v5172
        %v5181 = vmul.f32 %v5161, %v5173
        %v5182 = vmul.f32 %v5164, %v5174
        %v5183 = vmul.f32 %v5175, 0.044715
        %v5184 = vmul.f32 %v5176, 0.044715
        %v5185 = vmul.f32 %v5177, 0.044715
        %v5186 = vmul.f32 %v5178, 0.044715
        %v5187 = vmul.f32 %v5179, 0.044715
        %v5188 = vmul.f32 %v5180, 0.044715
        %v5189 = vmul.f32 %v5181, 0.044715
        %v5190 = vmul.f32 %v5182, 0.044715
        %v5191 = vadd.f32 %v5137, %v5183
        %v5192 = vadd.f32 %v5140, %v5184
        %v5193 = vadd.f32 %v5145, %v5185
        %v5194 = vadd.f32 %v5148, %v5186
        %v5195 = vadd.f32 %v5153, %v5187
        %v5196 = vadd.f32 %v5156, %v5188
        %v5197 = vadd.f32 %v5161, %v5189
        %v5198 = vadd.f32 %v5164, %v5190
        %v5199 = vmul.f32 %v5191, 0.7978846
        %v5200 = vmul.f32 %v5192, 0.7978846
        %v5201 = vmul.f32 %v5193, 0.7978846
        %v5202 = vmul.f32 %v5194, 0.7978846
        %v5203 = vmul.f32 %v5195, 0.7978846
        %v5204 = vmul.f32 %v5196, 0.7978846
        %v5205 = vmul.f32 %v5197, 0.7978846
        %v5206 = vmul.f32 %v5198, 0.7978846
        %v5207 = vtanh.pop %v5199
        %v5208 = vtanh.pop %v5200
        %v5209 = vtanh.pop %v5201
        %v5210 = vtanh.pop %v5202
        %v5211 = vtanh.pop %v5203
        %v5212 = vtanh.pop %v5204
        %v5213 = vtanh.pop %v5205
        %v5214 = vtanh.pop %v5206
        %v5215 = vadd.f32 %v5207, 1.0
        %v5216 = vadd.f32 %v5208, 1.0
        %v5217 = vadd.f32 %v5209, 1.0
        %v5218 = vadd.f32 %v5210, 1.0
        %v5219 = vadd.f32 %v5211, 1.0
        %v5220 = vadd.f32 %v5212, 1.0
        %v5221 = vadd.f32 %v5213, 1.0
        %v5222 = vadd.f32 %v5214, 1.0
        %v5223 = vmul.f32 %v5215, 0.5
        %v5224 = vmul.f32 %v5216, 0.5
        %v5225 = vmul.f32 %v5217, 0.5
        %v5226 = vmul.f32 %v5218, 0.5
        %v5227 = vmul.f32 %v5219, 0.5
        %v5228 = vmul.f32 %v5220, 0.5
        %v5229 = vmul.f32 %v5221, 0.5
        %v5230 = vmul.f32 %v5222, 0.5
        %v5231 = vmul.f32 %v5137, %v5223
        %v5232 = vmul.f32 %v5140, %v5224
        %v5233 = vmul.f32 %v5145, %v5225
        %v5234 = vmul.f32 %v5148, %v5226
        %v5235 = vmul.f32 %v5153, %v5227
        %v5236 = vmul.f32 %v5156, %v5228
        %v5237 = vmul.f32 %v5161, %v5229
        %v5238 = vmul.f32 %v5164, %v5230
        %v5239 = vld [vmem:[%s61] sm:$0xf]
        %v5240 = vld [vmem:[%s61 + $0x4] sm:$0xf]
        %v5241 = vld [vmem:[%s61 + $0x8] sm:$0xf]
        %v5242 = vld [vmem:[%s61 + $0xc] sm:$0xf]
        %v5243 = vld [vmem:[%s61 + $0x10] sm:$0xf]
        %v5244 = vld [vmem:[%s61 + $0x14] sm:$0xf]
        %v5245 = vld [vmem:[%s61 + $0x18] sm:$0xf]
        %v5246 = vld [vmem:[%s61 + $0x1c] sm:$0xf]
        %v5247 = vpack.c.bf16 %v5232, %v5231
        %v5248 = vpack.c.bf16 %v5234, %v5233
        %v5249 = vpack.c.bf16 %v5236, %v5235
        %v5250 = vpack.c.bf16 %v5238, %v5237
        %v5251 = vld [vmem:[#allocation10] sm:$0x1]
        %v5253 = vlaneseq
        %v5254 = vshrl.u32 %v5253, 7
        %v5255 = vsub.s32 0, %v5254
        %v5256 = vrot.slane %v5251, %v5255
        %v5266 = vunpack.c.l.b16 %v5239
        %v5267 = vunpack.c.l.b16 %v5240
        %v5268 = vunpack.c.l.b16 %v5241
        %v5269 = vunpack.c.l.b16 %v5242
        %v5270 = vunpack.c.l.b16 %v5243
        %v5271 = vunpack.c.l.b16 %v5244
        %v5272 = vunpack.c.l.b16 %v5245
        %v5273 = vunpack.c.l.b16 %v5246
        %v5274 = vpack.c.b16 %v5267, %v5266
        %v5275 = vpack.c.b16 %v5269, %v5268
        %v5276 = vpack.c.b16 %v5271, %v5270
        %v5277 = vpack.c.b16 %v5273, %v5272
        %v5283 = vsel %vm2859, %v5247, 0
        %v5286 = vsel %vm2859, %v5248, 0
        %v5289 = vsel %vm2859, %v5249, 0
        %v5292 = vsel %vm2859, %v5250, 0
        %5294 = vmatprep.subr.bf16.mxu0 0
        %5295 = vmatpush1.bf16.msra.mxu0 %v5274
        %5296 = vmatprep.subr.bf16.mxu0 0
        %5297 = vmatpush1.bf16.msra.mxu0 %v5275
        %5298 = vmatprep.subr.bf16.mxu0 0
        %5299 = vmatpush1.bf16.msra.mxu0 %v5276
        %5300 = vmatprep.subr.bf16.mxu0 0
        %5301 = vmatpush1.bf16.msra.mxu0 %v5277
        %5302 = vmatprep.subr.bf16.mxu0 0
        %5303 = vmatpush1.bf16.msra.mxu0 0
        %5304 = vmatprep.subr.bf16.mxu0 0
        %5305 = vmatpush1.bf16.msra.mxu0 0
        %5306 = vmatprep.subr.bf16.mxu0 0
        %5307 = vmatpush1.bf16.msra.mxu0 0
        %5308 = vmatprep.subr.bf16.mxu0 0
        %5309 = vmatpush1.bf16.msra.mxu0 0
        %5310 = vmatprep.subr.bf16.mxu0 0
        %5311 = vmatpush1.bf16.msra.mxu0 0
        %5312 = vmatprep.subr.bf16.mxu0 0
        %5313 = vmatpush1.bf16.msra.mxu0 0
        %5314 = vmatprep.subr.bf16.mxu0 0
        %5315 = vmatpush1.bf16.msra.mxu0 0
        %5316 = vmatprep.subr.bf16.mxu0 0
        %5317 = vmatpush1.bf16.msra.mxu0 0
        %5318 = vmatprep.subr.bf16.mxu0 0
        %5319 = vmatpush1.bf16.msra.mxu0 0
        %5320 = vmatprep.subr.bf16.mxu0 0
        %5321 = vmatpush1.bf16.msra.mxu0 0
        %5322 = vmatprep.subr.bf16.mxu0 0
        %5323 = vmatpush1.bf16.msra.mxu0 0
        %5324 = vmatprep.subr.bf16.mxu0 0
        %5325 = vmatpush1.bf16.msra.mxu0 0
        %5326 = vmatprep.mubr.bf16.mxu0 0
        %5327 = vmatmul.mubr.bf16.gmra.mrb[0].mxu0 %v5283
        %v5328 = vpop.f32.mrb[0].mxu0
        %v5329 = vadd.f32 %v5256, %v5328
        %v5330 = vpop.f32.mrb[0].mxu0
        %v5331 = vpop.f32.mrb[0].mxu0
        %v5332 = vadd.f32 %v5256, %v5331
        %v5333 = vpop.f32.mrb[0].mxu0
        %5334 = vmatprep.mubr.bf16.mxu0 0
        %5335 = vmatmul.mubr.bf16.gmra.mrb[0].mxu0 %v5286
        %v5336 = vpop.f32.mrb[0].mxu0
        %v5337 = vadd.f32 %v5256, %v5336
        %v5338 = vpop.f32.mrb[0].mxu0
        %v5339 = vpop.f32.mrb[0].mxu0
        %v5340 = vadd.f32 %v5256, %v5339
        %v5341 = vpop.f32.mrb[0].mxu0
        %5342 = vmatprep.mubr.bf16.mxu0 0
        %5343 = vmatmul.mubr.bf16.gmra.mrb[0].mxu0 %v5289
        %v5344 = vpop.f32.mrb[0].mxu0
        %v5345 = vadd.f32 %v5256, %v5344
        %v5346 = vpop.f32.mrb[0].mxu0
        %v5347 = vpop.f32.mrb[0].mxu0
        %v5348 = vadd.f32 %v5256, %v5347
        %v5349 = vpop.f32.mrb[0].mxu0
        %5350 = vmatprep.mubr.bf16.mxu0 0
        %5351 = vmatmul.mubr.bf16.gmra.mrb[0].mxu0 %v5292
        %v5352 = vpop.f32.mrb[0].mxu0
        %v5353 = vadd.f32 %v5256, %v5352
        %v5354 = vpop.f32.mrb[0].mxu0
        %v5355 = vpop.f32.mrb[0].mxu0
        %v5356 = vadd.f32 %v5256, %v5355
        %v5357 = vpop.f32.mrb[0].mxu0
        %5358 = vdwg.mxu0
        %v5359 = vadd.f32 %v4921, %v5329
        %v5360 = vadd.f32 %v4922, %v5332
        %v5361 = vadd.f32 %v4923, %v5337
        %v5362 = vadd.f32 %v4924, %v5340
        %v5363 = vadd.f32 %v4925, %v5345
        %v5364 = vadd.f32 %v4926, %v5348
        %v5365 = vadd.f32 %v4927, %v5353
        %v5366 = vadd.f32 %v4928, %v5356
        %v5367 = vld [vmem:[%s65] sm:$0xf]
        %v5368 = vld [vmem:[%s65 + $0x4] sm:$0xf]
        %v5369 = vld [vmem:[%s65 + $0x8] sm:$0xf]
        %v5370 = vld [vmem:[%s65 + $0xc] sm:$0xf]
        %v5371 = vld [vmem:[%s65 + $0x10] sm:$0xf]
        %v5372 = vld [vmem:[%s65 + $0x14] sm:$0xf]
        %v5373 = vld [vmem:[%s65 + $0x18] sm:$0xf]
        %v5374 = vld [vmem:[%s65 + $0x1c] sm:$0xf]
        %v5375 = vpack.c.bf16 %v5360, %v5359
        %v5376 = vpack.c.bf16 %v5362, %v5361
        %v5377 = vpack.c.bf16 %v5364, %v5363
        %v5378 = vpack.c.bf16 %v5366, %v5365
        %v5381 = vunpack.c.l.b16 %v5367
        %v5382 = vunpack.c.l.b16 %v5368
        %v5383 = vpack.c.b16 %v5382, %v5381
        %v5385 = vsel %vm2859, %v5383, 0
        %5387 = vmatprep.subr.bf16.mxu0 0
        %5388 = vmatpush1.bf16.msra.mxu0 %v5375
        %5389 = vmatprep.subr.bf16.mxu0 0
        %5390 = vmatpush1.bf16.msra.mxu0 %v5376
        %5391 = vmatprep.subr.bf16.mxu0 0
        %5392 = vmatpush1.bf16.msra.mxu0 %v5377
        %5393 = vmatprep.subr.bf16.mxu0 0
        %5394 = vmatpush1.bf16.msra.mxu0 %v5378
        %5395 = vmatprep.subr.bf16.mxu0 0
        %5396 = vmatpush1.bf16.msra.mxu0 0
        %5397 = vmatprep.subr.bf16.mxu0 0
        %5398 = vmatpush1.bf16.msra.mxu0 0
        %5399 = vmatprep.subr.bf16.mxu0 0
        %5400 = vmatpush1.bf16.msra.mxu0 0
        %5401 = vmatprep.subr.bf16.mxu0 0
        %5402 = vmatpush1.bf16.msra.mxu0 0
        %5403 = vmatprep.subr.bf16.mxu0 0
        %5404 = vmatpush1.bf16.msra.mxu0 0
        %5405 = vmatprep.subr.bf16.mxu0 0
        %5406 = vmatpush1.bf16.msra.mxu0 0
        %5407 = vmatprep.subr.bf16.mxu0 0
        %5408 = vmatpush1.bf16.msra.mxu0 0
        %5409 = vmatprep.subr.bf16.mxu0 0
        %5410 = vmatpush1.bf16.msra.mxu0 0
        %5411 = vmatprep.subr.bf16.mxu0 0
        %5412 = vmatpush1.bf16.msra.mxu0 0
        %5413 = vmatprep.subr.bf16.mxu0 0
        %5414 = vmatpush1.bf16.msra.mxu0 0
        %5415 = vmatprep.subr.bf16.mxu0 0
        %5416 = vmatpush1.bf16.msra.mxu0 0
        %5417 = vmatprep.subr.bf16.mxu0 0
        %5418 = vmatpush1.bf16.msra.mxu0 0
        %5419 = vmatprep.mubr.bf16.mxu0 0
        %5420 = vmatmul.mubr.bf16.gmra.mrb[0].mxu0 %v5385
        %v5421 = vpop.f32.mrb[0].mxu0
        %v5422 = vadd.f32 0.0, %v5421
        %v5423 = vpop.f32.mrb[0].mxu0
        %v5424 = vpop.f32.mrb[0].mxu0
        %v5425 = vadd.f32 0.0, %v5424
        %v5426 = vpop.f32.mrb[0].mxu0
        %5427 = vdwg.mxu0
        %v5430 = vunpack.c.l.b16 %v5369
        %v5431 = vunpack.c.l.b16 %v5370
        %v5432 = vpack.c.b16 %v5431, %v5430
        %v5434 = vsel %vm2859, %v5432, 0
        %5436 = vmatprep.subr.bf16.mxu0 0
        %5437 = vmatpush1.bf16.msra.mxu0 %v5375
        %5438 = vmatprep.subr.bf16.mxu0 0
        %5439 = vmatpush1.bf16.msra.mxu0 %v5376
        %5440 = vmatprep.subr.bf16.mxu0 0
        %5441 = vmatpush1.bf16.msra.mxu0 %v5377
        %5442 = vmatprep.subr.bf16.mxu0 0
        %5443 = vmatpush1.bf16.msra.mxu0 %v5378
        %5444 = vmatprep.subr.bf16.mxu0 0
        %5445 = vmatpush1.bf16.msra.mxu0 0
        %5446 = vmatprep.subr.bf16.mxu0 0
        %5447 = vmatpush1.bf16.msra.mxu0 0
        %5448 = vmatprep.subr.bf16.mxu0 0
        %5449 = vmatpush1.bf16.msra.mxu0 0
        %5450 = vmatprep.subr.bf16.mxu0 0
        %5451 = vmatpush1.bf16.msra.mxu0 0
        %5452 = vmatprep.subr.bf16.mxu0 0
        %5453 = vmatpush1.bf16.msra.mxu0 0
        %5454 = vmatprep.subr.bf16.mxu0 0
        %5455 = vmatpush1.bf16.msra.mxu0 0
        %5456 = vmatprep.subr.bf16.mxu0 0
        %5457 = vmatpush1.bf16.msra.mxu0 0
        %5458 = vmatprep.subr.bf16.mxu0 0
        %5459 = vmatpush1.bf16.msra.mxu0 0
        %5460 = vmatprep.subr.bf16.mxu0 0
        %5461 = vmatpush1.bf16.msra.mxu0 0
        %5462 = vmatprep.subr.bf16.mxu0 0
        %5463 = vmatpush1.bf16.msra.mxu0 0
        %5464 = vmatprep.subr.bf16.mxu0 0
        %5465 = vmatpush1.bf16.msra.mxu0 0
        %5466 = vmatprep.subr.bf16.mxu0 0
        %5467 = vmatpush1.bf16.msra.mxu0 0
        %5468 = vmatprep.mubr.bf16.mxu0 0
        %5469 = vmatmul.mubr.bf16.gmra.mrb[0].mxu0 %v5434
        %v5470 = vpop.f32.mrb[0].mxu0
        %v5471 = vadd.f32 0.0, %v5470
        %v5472 = vpop.f32.mrb[0].mxu0
        %v5473 = vpop.f32.mrb[0].mxu0
        %v5474 = vadd.f32 0.0, %v5473
        %v5475 = vpop.f32.mrb[0].mxu0
        %5476 = vdwg.mxu0
        %v5479 = vunpack.c.l.b16 %v5371
        %v5480 = vunpack.c.l.b16 %v5372
        %v5481 = vpack.c.b16 %v5480, %v5479
        %v5483 = vsel %vm2859, %v5481, 0
        %5485 = vmatprep.subr.bf16.mxu0 0
        %5486 = vmatpush1.bf16.msra.mxu0 %v5375
        %5487 = vmatprep.subr.bf16.mxu0 0
        %5488 = vmatpush1.bf16.msra.mxu0 %v5376
        %5489 = vmatprep.subr.bf16.mxu0 0
        %5490 = vmatpush1.bf16.msra.mxu0 %v5377
        %5491 = vmatprep.subr.bf16.mxu0 0
        %5492 = vmatpush1.bf16.msra.mxu0 %v5378
        %5493 = vmatprep.subr.bf16.mxu0 0
        %5494 = vmatpush1.bf16.msra.mxu0 0
        %5495 = vmatprep.subr.bf16.mxu0 0
        %5496 = vmatpush1.bf16.msra.mxu0 0
        %5497 = vmatprep.subr.bf16.mxu0 0
        %5498 = vmatpush1.bf16.msra.mxu0 0
        %5499 = vmatprep.subr.bf16.mxu0 0
        %5500 = vmatpush1.bf16.msra.mxu0 0
        %5501 = vmatprep.subr.bf16.mxu0 0
        %5502 = vmatpush1.bf16.msra.mxu0 0
        %5503 = vmatprep.subr.bf16.mxu0 0
        %5504 = vmatpush1.bf16.msra.mxu0 0
        %5505 = vmatprep.subr.bf16.mxu0 0
        %5506 = vmatpush1.bf16.msra.mxu0 0
        %5507 = vmatprep.subr.bf16.mxu0 0
        %5508 = vmatpush1.bf16.msra.mxu0 0
        %5509 = vmatprep.subr.bf16.mxu0 0
        %5510 = vmatpush1.bf16.msra.mxu0 0
        %5511 = vmatprep.subr.bf16.mxu0 0
        %5512 = vmatpush1.bf16.msra.mxu0 0
        %5513 = vmatprep.subr.bf16.mxu0 0
        %5514 = vmatpush1.bf16.msra.mxu0 0
        %5515 = vmatprep.subr.bf16.mxu0 0
        %5516 = vmatpush1.bf16.msra.mxu0 0
        %5517 = vmatprep.mubr.bf16.mxu0 0
        %5518 = vmatmul.mubr.bf16.gmra.mrb[0].mxu0 %v5483
        %v5519 = vpop.f32.mrb[0].mxu0
        %v5520 = vadd.f32 0.0, %v5519
        %v5521 = vpop.f32.mrb[0].mxu0
        %v5522 = vpop.f32.mrb[0].mxu0
        %v5523 = vadd.f32 0.0, %v5522
        %v5524 = vpop.f32.mrb[0].mxu0
        %5525 = vdwg.mxu0
        %v5528 = vunpack.c.l.b16 %v5373
        %v5529 = vunpack.c.l.b16 %v5374
        %v5530 = vpack.c.b16 %v5529, %v5528
        %v5532 = vsel %vm2859, %v5530, 0
        %5534 = vmatprep.subr.bf16.mxu0 0
        %5535 = vmatpush1.bf16.msra.mxu0 %v5375
        %5536 = vmatprep.subr.bf16.mxu0 0
        %5537 = vmatpush1.bf16.msra.mxu0 %v5376
        %5538 = vmatprep.subr.bf16.mxu0 0
        %5539 = vmatpush1.bf16.msra.mxu0 %v5377
        %5540 = vmatprep.subr.bf16.mxu0 0
        %5541 = vmatpush1.bf16.msra.mxu0 %v5378
        %5542 = vmatprep.subr.bf16.mxu0 0
        %5543 = vmatpush1.bf16.msra.mxu0 0
        %5544 = vmatprep.subr.bf16.mxu0 0
        %5545 = vmatpush1.bf16.msra.mxu0 0
        %5546 = vmatprep.subr.bf16.mxu0 0
        %5547 = vmatpush1.bf16.msra.mxu0 0
        %5548 = vmatprep.subr.bf16.mxu0 0
        %5549 = vmatpush1.bf16.msra.mxu0 0
        %5550 = vmatprep.subr.bf16.mxu0 0
        %5551 = vmatpush1.bf16.msra.mxu0 0
        %5552 = vmatprep.subr.bf16.mxu0 0
        %5553 = vmatpush1.bf16.msra.mxu0 0
        %5554 = vmatprep.subr.bf16.mxu0 0
        %5555 = vmatpush1.bf16.msra.mxu0 0
        %5556 = vmatprep.subr.bf16.mxu0 0
        %5557 = vmatpush1.bf16.msra.mxu0 0
        %5558 = vmatprep.subr.bf16.mxu0 0
        %5559 = vmatpush1.bf16.msra.mxu0 0
        %5560 = vmatprep.subr.bf16.mxu0 0
        %5561 = vmatpush1.bf16.msra.mxu0 0
        %5562 = vmatprep.subr.bf16.mxu0 0
        %5563 = vmatpush1.bf16.msra.mxu0 0
        %5564 = vmatprep.subr.bf16.mxu0 0
        %5565 = vmatpush1.bf16.msra.mxu0 0
        %5566 = vmatprep.mubr.bf16.mxu0 0
        %5567 = vmatmul.mubr.bf16.gmra.mrb[0].mxu0 %v5532
        %v5568 = vpop.f32.mrb[0].mxu0
        %v5569 = vadd.f32 0.0, %v5568
        %v5570 = vpop.f32.mrb[0].mxu0
        %v5571 = vpop.f32.mrb[0].mxu0
        %v5572 = vadd.f32 0.0, %v5571
        %v5573 = vpop.f32.mrb[0].mxu0
        %5574 = vdwg.mxu0
        %5577 = vrot.lane.b32.xlu0 %v5471, 32
        %v5578 = vpop.permute.xlu0 %5577
        %5579 = vrot.lane.b32.xlu0 %v5474, 32
        %v5580 = vpop.permute.xlu0 %5579
        %5585 = vrot.lane.b32.xlu0 %v5520, 64
        %v5586 = vpop.permute.xlu0 %5585
        %5587 = vrot.lane.b32.xlu0 %v5523, 64
        %v5588 = vpop.permute.xlu0 %5587
        %5593 = vrot.lane.b32.xlu0 %v5569, 96
        %v5594 = vpop.permute.xlu0 %5593
        %5595 = vrot.lane.b32.xlu0 %v5572, 96
        %v5596 = vpop.permute.xlu0 %5595
        %v5599 = vsel %vm2349, %v5422, %v5578
        %v5600 = vsel %vm2349, %v5425, %v5580
        %v5601 = vsel %vm2859, %v5599, %v5586
        %v5602 = vsel %vm2859, %v5600, %v5588
        %vm5603 = vcmask 785408
        %v5604 = vsel %vm5603, %v5601, %v5594
        %v5605 = vsel %vm5603, %v5602, %v5596
        %v5606 = vld [vmem:[#allocation11] sm:$0x1]
        %v5607 = vld [vmem:[#allocation13] sm:$0x1]
        %5608 = vadd.xlane.f32.xlu0 %v5604
        %v5609 = vpop.xlane.xlu0 %5608
        %5610 = vadd.xlane.f32.xlu0 %v5605
        %v5611 = vpop.xlane.xlu0 %5610
        %v5612 = vrcp.pop 128.0
        %v5613 = vmul.f32 %v5609, %v5612
        %v5614 = vmul.f32 %v5611, %v5612
        %v5615 = vsub.f32 %v5604, %v5613
        %v5616 = vsub.f32 %v5605, %v5614
        %v5617 = vmul.f32 %v5615, %v5615
        %v5618 = vmul.f32 %v5616, %v5616
        %5619 = vadd.xlane.f32.xlu0 %v5617
        %v5620 = vpop.xlane.xlu0 %5619
        %5621 = vadd.xlane.f32.xlu0 %v5618
        %v5622 = vpop.xlane.xlu0 %5621
        %v5623 = vmul.f32 %v5620, %v5612
        %v5624 = vmul.f32 %v5622, %v5612
        %v5625 = vadd.f32 %v5623, 1e-05
        %v5626 = vadd.f32 %v5624, 1e-05
        %v5627 = vrsqrt.pop %v5625
        %v5628 = vrsqrt.pop %v5626
        %v5629 = vmul.f32 %v5615, %v5627
        %v5630 = vmul.f32 %v5616, %v5628
        %v5632 = vlaneseq
        %v5633 = vshrl.u32 %v5632, 7
        %v5634 = vsub.s32 0, %v5633
        %v5635 = vrot.slane %v5606, %v5634
        %v5637 = vmul.f32 %v5629, %v5635
        %v5638 = vmul.f32 %v5630, %v5635
        %v5640 = vlaneseq
        %v5641 = vshrl.u32 %v5640, 7
        %v5642 = vsub.s32 0, %v5641
        %v5643 = vrot.slane %v5607, %v5642
        %v5645 = vadd.f32 %v5637, %v5643
        %v5646 = vadd.f32 %v5638, %v5643
        %v5647 = vld [vmem:[%s71] sm:$0xf]
        %v5648 = vld [vmem:[%s71 + $0x4] sm:$0xf]
        %v5649 = vld [vmem:[%s71 + $0x8] sm:$0xf]
        %v5650 = vld [vmem:[%s71 + $0xc] sm:$0xf]
        %v5651 = vld [vmem:[%s71 + $0x10] sm:$0xf]
        %v5652 = vld [vmem:[%s71 + $0x14] sm:$0xf]
        %v5653 = vld [vmem:[%s71 + $0x18] sm:$0xf]
        %v5654 = vld [vmem:[%s71 + $0x1c] sm:$0xf]
        %v5655 = vld [vmem:[%s71 + $0x20] sm:$0xf]
        %v5656 = vld [vmem:[%s71 + $0x24] sm:$0xf]
        %v5657 = vld [vmem:[%s71 + $0x28] sm:$0xf]
        %v5658 = vld [vmem:[%s71 + $0x2c] sm:$0xf]
        %v5659 = vld [vmem:[%s71 + $0x30] sm:$0xf]
        %v5660 = vld [vmem:[%s71 + $0x34] sm:$0xf]
        %v5661 = vld [vmem:[%s71 + $0x38] sm:$0xf]
        %v5662 = vld [vmem:[%s71 + $0x3c] sm:$0xf]
        %v5663 = vpack.c.bf16 %v5646, %v5645
        %v5680 = vunpack.c.l.b16 %v5647
        %v5681 = vunpack.c.l.b16 %v5648
        %v5682 = vunpack.c.l.b16 %v5649
        %v5683 = vunpack.c.l.b16 %v5650
        %v5684 = vunpack.c.l.b16 %v5651
        %v5685 = vunpack.c.l.b16 %v5652
        %v5686 = vunpack.c.l.b16 %v5653
        %v5687 = vunpack.c.l.b16 %v5654
        %v5688 = vunpack.c.l.b16 %v5655
        %v5689 = vunpack.c.l.b16 %v5656
        %v5690 = vunpack.c.l.b16 %v5657
        %v5691 = vunpack.c.l.b16 %v5658
        %v5692 = vunpack.c.l.b16 %v5659
        %v5693 = vunpack.c.l.b16 %v5660
        %v5694 = vunpack.c.l.b16 %v5661
        %v5695 = vunpack.c.l.b16 %v5662
        %v5696 = vpack.c.b16 %v5681, %v5680
        %v5697 = vpack.c.b16 %v5683, %v5682
        %v5698 = vpack.c.b16 %v5685, %v5684
        %v5699 = vpack.c.b16 %v5687, %v5686
        %v5700 = vpack.c.b16 %v5689, %v5688
        %v5701 = vpack.c.b16 %v5691, %v5690
        %v5702 = vpack.c.b16 %v5693, %v5692
        %v5703 = vpack.c.b16 %v5695, %v5694
        %5712 = vmatprep.subr.bf16.mxu0 0
        %5713 = vmatpush1.bf16.msra.mxu0 %v5696
        %5714 = vmatprep.subr.bf16.mxu0 0
        %5715 = vmatpush1.bf16.msra.mxu0 %v5697
        %5716 = vmatprep.subr.bf16.mxu0 0
        %5717 = vmatpush1.bf16.msra.mxu0 %v5698
        %5718 = vmatprep.subr.bf16.mxu0 0
        %5719 = vmatpush1.bf16.msra.mxu0 %v5699
        %5720 = vmatprep.subr.bf16.mxu0 0
        %5721 = vmatpush1.bf16.msra.mxu0 %v5700
        %5722 = vmatprep.subr.bf16.mxu0 0
        %5723 = vmatpush1.bf16.msra.mxu0 %v5701
        %5724 = vmatprep.subr.bf16.mxu0 0
        %5725 = vmatpush1.bf16.msra.mxu0 %v5702
        %5726 = vmatprep.subr.bf16.mxu0 0
        %5727 = vmatpush1.bf16.msra.mxu0 %v5703
        %5728 = vmatprep.subr.bf16.mxu0 0
        %5729 = vmatpush1.bf16.msra.mxu0 0
        %5730 = vmatprep.subr.bf16.mxu0 0
        %5731 = vmatpush1.bf16.msra.mxu0 0
        %5732 = vmatprep.subr.bf16.mxu0 0
        %5733 = vmatpush1.bf16.msra.mxu0 0
        %5734 = vmatprep.subr.bf16.mxu0 0
        %5735 = vmatpush1.bf16.msra.mxu0 0
        %5736 = vmatprep.subr.bf16.mxu0 0
        %5737 = vmatpush1.bf16.msra.mxu0 0
        %5738 = vmatprep.subr.bf16.mxu0 0
        %5739 = vmatpush1.bf16.msra.mxu0 0
        %5740 = vmatprep.subr.bf16.mxu0 0
        %5741 = vmatpush1.bf16.msra.mxu0 0
        %5742 = vmatprep.subr.bf16.mxu0 0
        %5743 = vmatpush1.bf16.msra.mxu0 0
        %5744 = vmatprep.mubr.bf16.mxu0 0
        %5745 = vmatmul.mubr.bf16.gmra.mrb[0].mxu0 %v5663
        %v5746 = vpop.f32.mrb[0].mxu0
        %v5747 = vadd.f32 0.0, %v5746
        %v5748 = vpop.f32.mrb[0].mxu0
        %v5749 = vpop.f32.mrb[0].mxu0
        %v5750 = vadd.f32 0.0, %v5749
        %v5751 = vpop.f32.mrb[0].mxu0
        %5752 = vdwg.mxu0
        %v5753 = vld [vmem:[#allocation14] sm:$0x1]
        %v5754 = vld [vmem:[#allocation16] sm:$0x1]
        %v5755 = vsel %vm2859, %v5747, 0.0
        %5756 = vadd.xlane.f32.xlu0 %v5755
        %v5757 = vpop.xlane.xlu0 %5756
        %v5758 = vsel %vm2859, %v5750, 0.0
        %5759 = vadd.xlane.f32.xlu0 %v5758
        %v5760 = vpop.xlane.xlu0 %5759
        %v5761 = vrcp.pop 64.0
        %v5762 = vmul.f32 %v5757, %v5761
        %v5763 = vmul.f32 %v5760, %v5761
        %v5764 = vsub.f32 %v5747, %v5762
        %v5765 = vsub.f32 %v5750, %v5763
        %v5766 = vmul.f32 %v5764, %v5764
        %v5767 = vmul.f32 %v5765, %v5765
        %v5768 = vsel %vm2859, %v5766, 0.0
        %5769 = vadd.xlane.f32.xlu0 %v5768
        %v5770 = vpop.xlane.xlu0 %5769
        %v5771 = vsel %vm2859, %v5767, 0.0
        %5772 = vadd.xlane.f32.xlu0 %v5771
        %v5773 = vpop.xlane.xlu0 %5772
        %v5774 = vmul.f32 %v5770, %v5761
        %v5775 = vmul.f32 %v5773, %v5761
        %v5776 = vadd.f32 %v5774, 1e-05
        %v5777 = vadd.f32 %v5775, 1e-05
        %v5778 = vrsqrt.pop %v5776
        %v5779 = vrsqrt.pop %v5777
        %v5780 = vmul.f32 %v5764, %v5778
        %v5781 = vmul.f32 %v5765, %v5779
        %v5783 = vlaneseq
        %v5784 = vshrl.u32 %v5783, 7
        %v5785 = vsub.s32 0, %v5784
        %v5786 = vrot.slane %v5753, %v5785
        %v5788 = vmul.f32 %v5780, %v5786
        %v5789 = vmul.f32 %v5781, %v5786
        %v5791 = vlaneseq
        %v5792 = vshrl.u32 %v5791, 7
        %v5793 = vsub.s32 0, %v5792
        %v5794 = vrot.slane %v5754, %v5793
        %v5796 = vadd.f32 %v5788, %v5794
        %v5797 = vadd.f32 %v5789, %v5794
        %v5798 = vld [vmem:[%s79] sm:$0xff]
        %v5799 = vld [vmem:[%s79 + $0x8] sm:$0xff]
        %v5800 = vld [vmem:[%s79 + $0x10] sm:$0xff]
        %v5801 = vld [vmem:[%s79 + $0x18] sm:$0xff]
        %v5802 = vld [vmem:[%s79 + $0x20] sm:$0xff]
        %v5803 = vld [vmem:[%s79 + $0x28] sm:$0xff]
        %v5804 = vld [vmem:[%s79 + $0x30] sm:$0xff]
        %v5805 = vld [vmem:[%s79 + $0x38] sm:$0xff]
        %v5806 = vpack.c.bf16 %v5797, %v5796
        %v5807 = vld [vmem:[%s81] sm:$0x3]
        %v5809 = vlaneseq
        %v5810 = vshrl.u32 %v5809, 7
        %v5811 = vsub.s32 0, %v5810
        %v5812 = vrot.slane %v5807, %v5811
        %v5813 = vlaneseq
        %v5814 = vshrl.u32 %v5813, 7
        %v5815 = vsub.s32 1, %v5814
        %v5816 = vrot.slane %v5807, %v5815
        %v5827 = vunpack.c.l.b16 %v5798
        %v5828 = vunpack.c.h.b16 %v5798
        %v5829 = vunpack.c.l.b16 %v5799
        %v5830 = vunpack.c.h.b16 %v5799
        %v5831 = vunpack.c.l.b16 %v5800
        %v5832 = vunpack.c.h.b16 %v5800
        %v5833 = vunpack.c.l.b16 %v5801
        %v5834 = vunpack.c.h.b16 %v5801
        %v5835 = vunpack.c.l.b16 %v5802
        %v5836 = vunpack.c.h.b16 %v5802
        %v5837 = vunpack.c.l.b16 %v5803
        %v5838 = vunpack.c.h.b16 %v5803
        %v5839 = vunpack.c.l.b16 %v5804
        %v5840 = vunpack.c.h.b16 %v5804
        %v5841 = vunpack.c.l.b16 %v5805
        %v5842 = vunpack.c.h.b16 %v5805
        %v5843 = vpack.c.b16 %v5829, %v5827
        %v5844 = vpack.c.b16 %v5830, %v5828
        %v5845 = vpack.c.b16 %v5833, %v5831
        %v5846 = vpack.c.b16 %v5834, %v5832
        %v5847 = vpack.c.b16 %v5837, %v5835
        %v5848 = vpack.c.b16 %v5838, %v5836
        %v5849 = vpack.c.b16 %v5841, %v5839
        %v5850 = vpack.c.b16 %v5842, %v5840
        %v5860 = vsel %vm2859, %v5806, 0
        %5862 = vmatprep.subr.bf16.mxu0 %v5844
        %5863 = vmatpush1.bf16.msra.mxu0 %v5843
        %5864 = vmatprep.subr.bf16.mxu0 %v5846
        %5865 = vmatpush1.bf16.msra.mxu0 %v5845
        %5866 = vmatprep.subr.bf16.mxu0 %v5848
        %5867 = vmatpush1.bf16.msra.mxu0 %v5847
        %5868 = vmatprep.subr.bf16.mxu0 %v5850
        %5869 = vmatpush1.bf16.msra.mxu0 %v5849
        %5870 = vmatprep.subr.bf16.mxu0 0
        %5871 = vmatpush1.bf16.msra.mxu0 0
        %5872 = vmatprep.subr.bf16.mxu0 0
        %5873 = vmatpush1.bf16.msra.mxu0 0
        %5874 = vmatprep.subr.bf16.mxu0 0
        %5875 = vmatpush1.bf16.msra.mxu0 0
        %5876 = vmatprep.subr.bf16.mxu0 0
        %5877 = vmatpush1.bf16.msra.mxu0 0
        %5878 = vmatprep.subr.bf16.mxu0 0
        %5879 = vmatpush1.bf16.msra.mxu0 0
        %5880 = vmatprep.subr.bf16.mxu0 0
        %5881 = vmatpush1.bf16.msra.mxu0 0
        %5882 = vmatprep.subr.bf16.mxu0 0
        %5883 = vmatpush1.bf16.msra.mxu0 0
        %5884 = vmatprep.subr.bf16.mxu0 0
        %5885 = vmatpush1.bf16.msra.mxu0 0
        %5886 = vmatprep.subr.bf16.mxu0 0
        %5887 = vmatpush1.bf16.msra.mxu0 0
        %5888 = vmatprep.subr.bf16.mxu0 0
        %5889 = vmatpush1.bf16.msra.mxu0 0
        %5890 = vmatprep.subr.bf16.mxu0 0
        %5891 = vmatpush1.bf16.msra.mxu0 0
        %5892 = vmatprep.subr.bf16.mxu0 0
        %5893 = vmatpush1.bf16.msra.mxu0 0
        %5894 = vmatprep.mubr.bf16.mxu0 0
        %5895 = vmatmul.mubr.bf16.gmra.mrb[0].mxu0 %v5860
        %v5896 = vpop.f32.mrb[0].mxu0
        %v5897 = vadd.f32 %v5812, %v5896
        %v5898 = vpop.f32.mrb[0].mxu0
        %v5899 = vadd.f32 %v5816, %v5898
        %v5900 = vpop.f32.mrb[0].mxu0
        %v5901 = vadd.f32 %v5812, %v5900
        %v5902 = vpop.f32.mrb[0].mxu0
        %v5903 = vadd.f32 %v5816, %v5902
        %5904 = vdwg.mxu0
        %v5905 = vpack.c.bf16 %v5901, %v5897
        %v5906 = vpack.c.bf16 %v5903, %v5899
        %v5907 = vld [vmem:[%s73] sm:$0xf]
        %v5908 = vld [vmem:[%s73 + $0x4] sm:$0xf]
        %v5909 = vunpack.c.l.bf16 %v5907
        %v5910 = vunpack.c.l.bf16 %v5908
        %5912 = vrot.lane.b32.xlu0 %v5905, 64
        %v5913 = vpop.permute.xlu0 %5912
        %v5915 = vsel %vm2769, %v5905, 0
        %v5918 = vsel %vm2769, %v5913, 0
        %5920 = vmatprep.subr.bf16.mxu0 0
        %5921 = vmatpush1.bf16.xpose.msra.mxu0 %v5918
        %5922 = vmatprep.subr.bf16.mxu0 0
        %5923 = vmatpush1.bf16.xpose.msra.mxu0 0
        %5924 = vmatprep.subr.bf16.mxu0 0
        %5925 = vmatpush1.bf16.xpose.msra.mxu0 0
        %5926 = vmatprep.subr.bf16.mxu0 0
        %5927 = vmatpush1.bf16.xpose.msra.mxu0 0
        %5928 = vmatprep.subr.bf16.mxu0 0
        %5929 = vmatpush1.bf16.xpose.msra.mxu0 0
        %5930 = vmatprep.subr.bf16.mxu0 0
        %5931 = vmatpush1.bf16.xpose.msra.mxu0 0
        %5932 = vmatprep.subr.bf16.mxu0 0
        %5933 = vmatpush1.bf16.xpose.msra.mxu0 0
        %5934 = vmatprep.subr.bf16.mxu0 0
        %5935 = vmatpush1.bf16.xpose.msra.mxu0 0
        %5936 = vmatprep.subr.bf16.mxu0 0
        %5937 = vmatpush1.bf16.xpose.msra.mxu0 0
        %5938 = vmatprep.subr.bf16.mxu0 0
        %5939 = vmatpush1.bf16.xpose.msra.mxu0 0
        %5940 = vmatprep.subr.bf16.mxu0 0
        %5941 = vmatpush1.bf16.xpose.msra.mxu0 0
        %5942 = vmatprep.subr.bf16.mxu0 0
        %5943 = vmatpush1.bf16.xpose.msra.mxu0 0
        %5944 = vmatprep.subr.bf16.mxu0 0
        %5945 = vmatpush1.bf16.xpose.msra.mxu0 0
        %5946 = vmatprep.subr.bf16.mxu0 0
        %5947 = vmatpush1.bf16.xpose.msra.mxu0 0
        %5948 = vmatprep.subr.bf16.mxu0 0
        %5949 = vmatpush1.bf16.xpose.msra.mxu0 0
        %5950 = vmatprep.subr.bf16.mxu0 0
        %5951 = vmatpush1.bf16.xpose.msra.mxu0 0
        %5952 = vmatprep.mubr.bf16.mxu0 0
        %5953 = vmatmul.mubr.bf16.gmra.mrb[0].mxu0 %v5915
        %v5954 = vpop.f32.mrb[0].mxu0
        %v5955 = vadd.f32 %v5909, %v5954
        %v5956 = vpop.f32.mrb[0].mxu0
        %v5957 = vpop.f32.mrb[0].mxu0
        %v5958 = vadd.f32 %v5910, %v5957
        %v5959 = vpop.f32.mrb[0].mxu0
        %5960 = vdwg.mxu0
        %v5961 = vsel %vm2769, %v5955, -inf
        %5962 = vmax.xlane.f32.xlu0 %v5961
        %v5963 = vpop.xlane.xlu0 %5962
        %v5964 = vsel %vm2769, %v5958, -inf
        %5965 = vmax.xlane.f32.xlu0 %v5964
        %v5966 = vpop.xlane.xlu0 %5965
        %v5967 = vsub.f32 %v5955, %v5963
        %v5968 = vsub.f32 %v5958, %v5966
        %v5969 = vmul.f32 %v5967, 1.442695
        %v5970 = vpow.pop %v5969
        %v5971 = vmul.f32 %v5968, 1.442695
        %v5972 = vpow.pop %v5971
        %v5973 = vsel %vm2769, %v5970, 0.0
        %5974 = vadd.xlane.f32.xlu0 %v5973
        %v5975 = vpop.xlane.xlu0 %5974
        %v5976 = vsel %vm2769, %v5972, 0.0
        %5977 = vadd.xlane.f32.xlu0 %v5976
        %v5978 = vpop.xlane.xlu0 %5977
        %v5979 = vrcp.pop %v5975
        %v5980 = vrcp.pop %v5978
        %v5981 = vmul.f32 %v5970, %v5979
        %v5982 = vmul.f32 %v5972, %v5980
        %v5983 = vpack.c.bf16 %v5982, %v5981
        %v5985 = vsel %vm2769, %v5983, 0
        %5987 = vmatprep.subr.bf16.mxu0 0
        %5988 = vmatpush1.bf16.msra.mxu0 %v5906
        %5989 = vmatprep.subr.bf16.mxu0 0
        %5990 = vmatpush1.bf16.msra.mxu0 0
        %5991 = vmatprep.subr.bf16.mxu0 0
        %5992 = vmatpush1.bf16.msra.mxu0 0
        %5993 = vmatprep.subr.bf16.mxu0 0
        %5994 = vmatpush1.bf16.msra.mxu0 0
        %5995 = vmatprep.subr.bf16.mxu0 0
        %5996 = vmatpush1.bf16.msra.mxu0 0
        %5997 = vmatprep.subr.bf16.mxu0 0
        %5998 = vmatpush1.bf16.msra.mxu0 0
        %5999 = vmatprep.subr.bf16.mxu0 0
        %6000 = vmatpush1.bf16.msra.mxu0 0
        %6001 = vmatprep.subr.bf16.mxu0 0
        %6002 = vmatpush1.bf16.msra.mxu0 0
        %6003 = vmatprep.subr.bf16.mxu0 0
        %6004 = vmatpush1.bf16.msra.mxu0 0
        %6005 = vmatprep.subr.bf16.mxu0 0
        %6006 = vmatpush1.bf16.msra.mxu0 0
        %6007 = vmatprep.subr.bf16.mxu0 0
        %6008 = vmatpush1.bf16.msra.mxu0 0
        %6009 = vmatprep.subr.bf16.mxu0 0
        %6010 = vmatpush1.bf16.msra.mxu0 0
        %6011 = vmatprep.subr.bf16.mxu0 0
        %6012 = vmatpush1.bf16.msra.mxu0 0
        %6013 = vmatprep.subr.bf16.mxu0 0
        %6014 = vmatpush1.bf16.msra.mxu0 0
        %6015 = vmatprep.subr.bf16.mxu0 0
        %6016 = vmatpush1.bf16.msra.mxu0 0
        %6017 = vmatprep.subr.bf16.mxu0 0
        %6018 = vmatpush1.bf16.msra.mxu0 0
        %6019 = vmatprep.mubr.bf16.mxu0 0
        %6020 = vmatmul.mubr.bf16.gmra.mrb[0].mxu0 %v5985
        %v6021 = vpop.f32.mrb[0].mxu0
        %v6022 = vadd.f32 0.0, %v6021
        %v6023 = vpop.f32.mrb[0].mxu0
        %v6024 = vpop.f32.mrb[0].mxu0
        %v6025 = vadd.f32 0.0, %v6024
        %v6026 = vpop.f32.mrb[0].mxu0
        %6027 = vdwg.mxu0
        %s6028 = scalar_lea.vmem %s73, 8
        %v6029 = vld [vmem:[%s6028] sm:$0xf]
        %v6030 = vld [vmem:[%s6028 + $0x4] sm:$0xf]
        %v6031 = vunpack.c.l.bf16 %v6029
        %v6032 = vunpack.c.l.bf16 %v6030
        %6033 = vrot.lane.b32.xlu0 %v5905, 112
        %v6034 = vpop.permute.xlu0 %6033
        %6035 = vrot.lane.b32.xlu0 %v5905, 48
        %v6036 = vpop.permute.xlu0 %6035
        %v6038 = vsel %vm2769, %v6034, 0
        %v6041 = vsel %vm2769, %v6036, 0
        %6043 = vmatprep.subr.bf16.mxu0 0
        %6044 = vmatpush1.bf16.xpose.msra.mxu0 %v6041
        %6045 = vmatprep.subr.bf16.mxu0 0
        %6046 = vmatpush1.bf16.xpose.msra.mxu0 0
        %6047 = vmatprep.subr.bf16.mxu0 0
        %6048 = vmatpush1.bf16.xpose.msra.mxu0 0
        %6049 = vmatprep.subr.bf16.mxu0 0
        %6050 = vmatpush1.bf16.xpose.msra.mxu0 0
        %6051 = vmatprep.subr.bf16.mxu0 0
        %6052 = vmatpush1.bf16.xpose.msra.mxu0 0
        %6053 = vmatprep.subr.bf16.mxu0 0
        %6054 = vmatpush1.bf16.xpose.msra.mxu0 0
        %6055 = vmatprep.subr.bf16.mxu0 0
        %6056 = vmatpush1.bf16.xpose.msra.mxu0 0
        %6057 = vmatprep.subr.bf16.mxu0 0
        %6058 = vmatpush1.bf16.xpose.msra.mxu0 0
        %6059 = vmatprep.subr.bf16.mxu0 0
        %6060 = vmatpush1.bf16.xpose.msra.mxu0 0
        %6061 = vmatprep.subr.bf16.mxu0 0
        %6062 = vmatpush1.bf16.xpose.msra.mxu0 0
        %6063 = vmatprep.subr.bf16.mxu0 0
        %6064 = vmatpush1.bf16.xpose.msra.mxu0 0
        %6065 = vmatprep.subr.bf16.mxu0 0
        %6066 = vmatpush1.bf16.xpose.msra.mxu0 0
        %6067 = vmatprep.subr.bf16.mxu0 0
        %6068 = vmatpush1.bf16.xpose.msra.mxu0 0
        %6069 = vmatprep.subr.bf16.mxu0 0
        %6070 = vmatpush1.bf16.xpose.msra.mxu0 0
        %6071 = vmatprep.subr.bf16.mxu0 0
        %6072 = vmatpush1.bf16.xpose.msra.mxu0 0
        %6073 = vmatprep.subr.bf16.mxu0 0
        %6074 = vmatpush1.bf16.xpose.msra.mxu0 0
        %6075 = vmatprep.mubr.bf16.mxu0 0
        %6076 = vmatmul.mubr.bf16.gmra.mrb[0].mxu0 %v6038
        %v6077 = vpop.f32.mrb[0].mxu0
        %v6078 = vadd.f32 %v6031, %v6077
        %v6079 = vpop.f32.mrb[0].mxu0
        %v6080 = vpop.f32.mrb[0].mxu0
        %v6081 = vadd.f32 %v6032, %v6080
        %v6082 = vpop.f32.mrb[0].mxu0
        %6083 = vdwg.mxu0
        %v6084 = vsel %vm2769, %v6078, -inf
        %6085 = vmax.xlane.f32.xlu0 %v6084
        %v6086 = vpop.xlane.xlu0 %6085
        %v6087 = vsel %vm2769, %v6081, -inf
        %6088 = vmax.xlane.f32.xlu0 %v6087
        %v6089 = vpop.xlane.xlu0 %6088
        %v6090 = vsub.f32 %v6078, %v6086
        %v6091 = vsub.f32 %v6081, %v6089
        %v6092 = vmul.f32 %v6090, 1.442695
        %v6093 = vpow.pop %v6092
        %v6094 = vmul.f32 %v6091, 1.442695
        %v6095 = vpow.pop %v6094
        %v6096 = vsel %vm2769, %v6093, 0.0
        %6097 = vadd.xlane.f32.xlu0 %v6096
        %v6098 = vpop.xlane.xlu0 %6097
        %v6099 = vsel %vm2769, %v6095, 0.0
        %6100 = vadd.xlane.f32.xlu0 %v6099
        %v6101 = vpop.xlane.xlu0 %6100
        %v6102 = vrcp.pop %v6098
        %v6103 = vrcp.pop %v6101
        %v6104 = vmul.f32 %v6093, %v6102
        %v6105 = vmul.f32 %v6095, %v6103
        %v6106 = vpack.c.bf16 %v6105, %v6104
        %6108 = vrot.lane.b32.xlu0 %v5906, 112
        %v6109 = vpop.permute.xlu0 %6108
        %v6112 = vsel %vm2769, %v6106, 0
        %6114 = vmatprep.subr.bf16.mxu0 0
        %6115 = vmatpush1.bf16.msra.mxu0 %v6109
        %6116 = vmatprep.subr.bf16.mxu0 0
        %6117 = vmatpush1.bf16.msra.mxu0 0
        %6118 = vmatprep.subr.bf16.mxu0 0
        %6119 = vmatpush1.bf16.msra.mxu0 0
        %6120 = vmatprep.subr.bf16.mxu0 0
        %6121 = vmatpush1.bf16.msra.mxu0 0
        %6122 = vmatprep.subr.bf16.mxu0 0
        %6123 = vmatpush1.bf16.msra.mxu0 0
        %6124 = vmatprep.subr.bf16.mxu0 0
        %6125 = vmatpush1.bf16.msra.mxu0 0
        %6126 = vmatprep.subr.bf16.mxu0 0
        %6127 = vmatpush1.bf16.msra.mxu0 0
        %6128 = vmatprep.subr.bf16.mxu0 0
        %6129 = vmatpush1.bf16.msra.mxu0 0
        %6130 = vmatprep.subr.bf16.mxu0 0
        %6131 = vmatpush1.bf16.msra.mxu0 0
        %6132 = vmatprep.subr.bf16.mxu0 0
        %6133 = vmatpush1.bf16.msra.mxu0 0
        %6134 = vmatprep.subr.bf16.mxu0 0
        %6135 = vmatpush1.bf16.msra.mxu0 0
        %6136 = vmatprep.subr.bf16.mxu0 0
        %6137 = vmatpush1.bf16.msra.mxu0 0
        %6138 = vmatprep.subr.bf16.mxu0 0
        %6139 = vmatpush1.bf16.msra.mxu0 0
        %6140 = vmatprep.subr.bf16.mxu0 0
        %6141 = vmatpush1.bf16.msra.mxu0 0
        %6142 = vmatprep.subr.bf16.mxu0 0
        %6143 = vmatpush1.bf16.msra.mxu0 0
        %6144 = vmatprep.subr.bf16.mxu0 0
        %6145 = vmatpush1.bf16.msra.mxu0 0
        %6146 = vmatprep.mubr.bf16.mxu0 0
        %6147 = vmatmul.mubr.bf16.gmra.mrb[0].mxu0 %v6112
        %v6148 = vpop.f32.mrb[0].mxu0
        %v6149 = vadd.f32 0.0, %v6148
        %v6150 = vpop.f32.mrb[0].mxu0
        %v6151 = vpop.f32.mrb[0].mxu0
        %v6152 = vadd.f32 0.0, %v6151
        %v6153 = vpop.f32.mrb[0].mxu0
        %6154 = vdwg.mxu0
        %s6155 = scalar_lea.vmem %s73, 16
        %v6156 = vld [vmem:[%s6155] sm:$0xf]
        %v6157 = vld [vmem:[%s6155 + $0x4] sm:$0xf]
        %v6158 = vunpack.c.l.bf16 %v6156
        %v6159 = vunpack.c.l.bf16 %v6157
        %6160 = vrot.lane.b32.xlu0 %v5905, 96
        %v6161 = vpop.permute.xlu0 %6160
        %6162 = vrot.lane.b32.xlu0 %v5905, 32
        %v6163 = vpop.permute.xlu0 %6162
        %v6165 = vsel %vm2769, %v6161, 0
        %v6168 = vsel %vm2769, %v6163, 0
        %6170 = vmatprep.subr.bf16.mxu0 0
        %6171 = vmatpush1.bf16.xpose.msra.mxu0 %v6168
        %6172 = vmatprep.subr.bf16.mxu0 0
        %6173 = vmatpush1.bf16.xpose.msra.mxu0 0
        %6174 = vmatprep.subr.bf16.mxu0 0
        %6175 = vmatpush1.bf16.xpose.msra.mxu0 0
        %6176 = vmatprep.subr.bf16.mxu0 0
        %6177 = vmatpush1.bf16.xpose.msra.mxu0 0
        %6178 = vmatprep.subr.bf16.mxu0 0
        %6179 = vmatpush1.bf16.xpose.msra.mxu0 0
        %6180 = vmatprep.subr.bf16.mxu0 0
        %6181 = vmatpush1.bf16.xpose.msra.mxu0 0
        %6182 = vmatprep.subr.bf16.mxu0 0
        %6183 = vmatpush1.bf16.xpose.msra.mxu0 0
        %6184 = vmatprep.subr.bf16.mxu0 0
        %6185 = vmatpush1.bf16.xpose.msra.mxu0 0
        %6186 = vmatprep.subr.bf16.mxu0 0
        %6187 = vmatpush1.bf16.xpose.msra.mxu0 0
        %6188 = vmatprep.subr.bf16.mxu0 0
        %6189 = vmatpush1.bf16.xpose.msra.mxu0 0
        %6190 = vmatprep.subr.bf16.mxu0 0
        %6191 = vmatpush1.bf16.xpose.msra.mxu0 0
        %6192 = vmatprep.subr.bf16.mxu0 0
        %6193 = vmatpush1.bf16.xpose.msra.mxu0 0
        %6194 = vmatprep.subr.bf16.mxu0 0
        %6195 = vmatpush1.bf16.xpose.msra.mxu0 0
        %6196 = vmatprep.subr.bf16.mxu0 0
        %6197 = vmatpush1.bf16.xpose.msra.mxu0 0
        %6198 = vmatprep.subr.bf16.mxu0 0
        %6199 = vmatpush1.bf16.xpose.msra.mxu0 0
        %6200 = vmatprep.subr.bf16.mxu0 0
        %6201 = vmatpush1.bf16.xpose.msra.mxu0 0
        %6202 = vmatprep.mubr.bf16.mxu0 0
        %6203 = vmatmul.mubr.bf16.gmra.mrb[0].mxu0 %v6165
        %v6204 = vpop.f32.mrb[0].mxu0
        %v6205 = vadd.f32 %v6158, %v6204
        %v6206 = vpop.f32.mrb[0].mxu0
        %v6207 = vpop.f32.mrb[0].mxu0
        %v6208 = vadd.f32 %v6159, %v6207
        %v6209 = vpop.f32.mrb[0].mxu0
        %6210 = vdwg.mxu0
        %v6211 = vsel %vm2769, %v6205, -inf
        %6212 = vmax.xlane.f32.xlu0 %v6211
        %v6213 = vpop.xlane.xlu0 %6212
        %v6214 = vsel %vm2769, %v6208, -inf
        %6215 = vmax.xlane.f32.xlu0 %v6214
        %v6216 = vpop.xlane.xlu0 %6215
        %v6217 = vsub.f32 %v6205, %v6213
        %v6218 = vsub.f32 %v6208, %v6216
        %v6219 = vmul.f32 %v6217, 1.442695
        %v6220 = vpow.pop %v6219
        %v6221 = vmul.f32 %v6218, 1.442695
        %v6222 = vpow.pop %v6221
        %v6223 = vsel %vm2769, %v6220, 0.0
        %6224 = vadd.xlane.f32.xlu0 %v6223
        %v6225 = vpop.xlane.xlu0 %6224
        %v6226 = vsel %vm2769, %v6222, 0.0
        %6227 = vadd.xlane.f32.xlu0 %v6226
        %v6228 = vpop.xlane.xlu0 %6227
        %v6229 = vrcp.pop %v6225
        %v6230 = vrcp.pop %v6228
        %v6231 = vmul.f32 %v6220, %v6229
        %v6232 = vmul.f32 %v6222, %v6230
        %v6233 = vpack.c.bf16 %v6232, %v6231
        %6234 = vrot.lane.b32.xlu0 %v5906, 96
        %v6235 = vpop.permute.xlu0 %6234
        %v6238 = vsel %vm2769, %v6233, 0
        %6240 = vmatprep.subr.bf16.mxu0 0
        %6241 = vmatpush1.bf16.msra.mxu0 %v6235
        %6242 = vmatprep.subr.bf16.mxu0 0
        %6243 = vmatpush1.bf16.msra.mxu0 0
        %6244 = vmatprep.subr.bf16.mxu0 0
        %6245 = vmatpush1.bf16.msra.mxu0 0
        %6246 = vmatprep.subr.bf16.mxu0 0
        %6247 = vmatpush1.bf16.msra.mxu0 0
        %6248 = vmatprep.subr.bf16.mxu0 0
        %6249 = vmatpush1.bf16.msra.mxu0 0
        %6250 = vmatprep.subr.bf16.mxu0 0
        %6251 = vmatpush1.bf16.msra.mxu0 0
        %6252 = vmatprep.subr.bf16.mxu0 0
        %6253 = vmatpush1.bf16.msra.mxu0 0
        %6254 = vmatprep.subr.bf16.mxu0 0
        %6255 = vmatpush1.bf16.msra.mxu0 0
        %6256 = vmatprep.subr.bf16.mxu0 0
        %6257 = vmatpush1.bf16.msra.mxu0 0
        %6258 = vmatprep.subr.bf16.mxu0 0
        %6259 = vmatpush1.bf16.msra.mxu0 0
        %6260 = vmatprep.subr.bf16.mxu0 0
        %6261 = vmatpush1.bf16.msra.mxu0 0
        %6262 = vmatprep.subr.bf16.mxu0 0
        %6263 = vmatpush1.bf16.msra.mxu0 0
        %6264 = vmatprep.subr.bf16.mxu0 0
        %6265 = vmatpush1.bf16.msra.mxu0 0
        %6266 = vmatprep.subr.bf16.mxu0 0
        %6267 = vmatpush1.bf16.msra.mxu0 0
        %6268 = vmatprep.subr.bf16.mxu0 0
        %6269 = vmatpush1.bf16.msra.mxu0 0
        %6270 = vmatprep.subr.bf16.mxu0 0
        %6271 = vmatpush1.bf16.msra.mxu0 0
        %6272 = vmatprep.mubr.bf16.mxu0 0
        %6273 = vmatmul.mubr.bf16.gmra.mrb[0].mxu0 %v6238
        %v6274 = vpop.f32.mrb[0].mxu0
        %v6275 = vadd.f32 0.0, %v6274
        %v6276 = vpop.f32.mrb[0].mxu0
        %v6277 = vpop.f32.mrb[0].mxu0
        %v6278 = vadd.f32 0.0, %v6277
        %v6279 = vpop.f32.mrb[0].mxu0
        %6280 = vdwg.mxu0
        %s6281 = scalar_lea.vmem %s73, 24
        %v6282 = vld [vmem:[%s6281] sm:$0xf]
        %v6283 = vld [vmem:[%s6281 + $0x4] sm:$0xf]
        %v6284 = vunpack.c.l.bf16 %v6282
        %v6285 = vunpack.c.l.bf16 %v6283
        %6286 = vrot.lane.b32.xlu0 %v5905, 80
        %v6287 = vpop.permute.xlu0 %6286
        %6288 = vrot.lane.b32.xlu0 %v5905, 16
        %v6289 = vpop.permute.xlu0 %6288
        %v6291 = vsel %vm2769, %v6287, 0
        %v6294 = vsel %vm2769, %v6289, 0
        %6296 = vmatprep.subr.bf16.mxu0 0
        %6297 = vmatpush1.bf16.xpose.msra.mxu0 %v6294
        %6298 = vmatprep.subr.bf16.mxu0 0
        %6299 = vmatpush1.bf16.xpose.msra.mxu0 0
        %6300 = vmatprep.subr.bf16.mxu0 0
        %6301 = vmatpush1.bf16.xpose.msra.mxu0 0
        %6302 = vmatprep.subr.bf16.mxu0 0
        %6303 = vmatpush1.bf16.xpose.msra.mxu0 0
        %6304 = vmatprep.subr.bf16.mxu0 0
        %6305 = vmatpush1.bf16.xpose.msra.mxu0 0
        %6306 = vmatprep.subr.bf16.mxu0 0
        %6307 = vmatpush1.bf16.xpose.msra.mxu0 0
        %6308 = vmatprep.subr.bf16.mxu0 0
        %6309 = vmatpush1.bf16.xpose.msra.mxu0 0
        %6310 = vmatprep.subr.bf16.mxu0 0
        %6311 = vmatpush1.bf16.xpose.msra.mxu0 0
        %6312 = vmatprep.subr.bf16.mxu0 0
        %6313 = vmatpush1.bf16.xpose.msra.mxu0 0
        %6314 = vmatprep.subr.bf16.mxu0 0
        %6315 = vmatpush1.bf16.xpose.msra.mxu0 0
        %6316 = vmatprep.subr.bf16.mxu0 0
        %6317 = vmatpush1.bf16.xpose.msra.mxu0 0
        %6318 = vmatprep.subr.bf16.mxu0 0
        %6319 = vmatpush1.bf16.xpose.msra.mxu0 0
        %6320 = vmatprep.subr.bf16.mxu0 0
        %6321 = vmatpush1.bf16.xpose.msra.mxu0 0
        %6322 = vmatprep.subr.bf16.mxu0 0
        %6323 = vmatpush1.bf16.xpose.msra.mxu0 0
        %6324 = vmatprep.subr.bf16.mxu0 0
        %6325 = vmatpush1.bf16.xpose.msra.mxu0 0
        %6326 = vmatprep.subr.bf16.mxu0 0
        %6327 = vmatpush1.bf16.xpose.msra.mxu0 0
        %6328 = vmatprep.mubr.bf16.mxu0 0
        %6329 = vmatmul.mubr.bf16.gmra.mrb[0].mxu0 %v6291
        %v6330 = vpop.f32.mrb[0].mxu0
        %v6331 = vadd.f32 %v6284, %v6330
        %v6332 = vpop.f32.mrb[0].mxu0
        %v6333 = vpop.f32.mrb[0].mxu0
        %v6334 = vadd.f32 %v6285, %v6333
        %v6335 = vpop.f32.mrb[0].mxu0
        %6336 = vdwg.mxu0
        %v6337 = vsel %vm2769, %v6331, -inf
        %6338 = vmax.xlane.f32.xlu0 %v6337
        %v6339 = vpop.xlane.xlu0 %6338
        %v6340 = vsel %vm2769, %v6334, -inf
        %6341 = vmax.xlane.f32.xlu0 %v6340
        %v6342 = vpop.xlane.xlu0 %6341
        %v6343 = vsub.f32 %v6331, %v6339
        %v6344 = vsub.f32 %v6334, %v6342
        %v6345 = vmul.f32 %v6343, 1.442695
        %v6346 = vpow.pop %v6345
        %v6347 = vmul.f32 %v6344, 1.442695
        %v6348 = vpow.pop %v6347
        %v6349 = vsel %vm2769, %v6346, 0.0
        %6350 = vadd.xlane.f32.xlu0 %v6349
        %v6351 = vpop.xlane.xlu0 %6350
        %v6352 = vsel %vm2769, %v6348, 0.0
        %6353 = vadd.xlane.f32.xlu0 %v6352
        %v6354 = vpop.xlane.xlu0 %6353
        %v6355 = vrcp.pop %v6351
        %v6356 = vrcp.pop %v6354
        %v6357 = vmul.f32 %v6346, %v6355
        %v6358 = vmul.f32 %v6348, %v6356
        %v6359 = vpack.c.bf16 %v6358, %v6357
        %6360 = vrot.lane.b32.xlu0 %v5906, 80
        %v6361 = vpop.permute.xlu0 %6360
        %v6364 = vsel %vm2769, %v6359, 0
        %6366 = vmatprep.subr.bf16.mxu0 0
        %6367 = vmatpush1.bf16.msra.mxu0 %v6361
        %6368 = vmatprep.subr.bf16.mxu0 0
        %6369 = vmatpush1.bf16.msra.mxu0 0
        %6370 = vmatprep.subr.bf16.mxu0 0
        %6371 = vmatpush1.bf16.msra.mxu0 0
        %6372 = vmatprep.subr.bf16.mxu0 0
        %6373 = vmatpush1.bf16.msra.mxu0 0
        %6374 = vmatprep.subr.bf16.mxu0 0
        %6375 = vmatpush1.bf16.msra.mxu0 0
        %6376 = vmatprep.subr.bf16.mxu0 0
        %6377 = vmatpush1.bf16.msra.mxu0 0
        %6378 = vmatprep.subr.bf16.mxu0 0
        %6379 = vmatpush1.bf16.msra.mxu0 0
        %6380 = vmatprep.subr.bf16.mxu0 0
        %6381 = vmatpush1.bf16.msra.mxu0 0
        %6382 = vmatprep.subr.bf16.mxu0 0
        %6383 = vmatpush1.bf16.msra.mxu0 0
        %6384 = vmatprep.subr.bf16.mxu0 0
        %6385 = vmatpush1.bf16.msra.mxu0 0
        %6386 = vmatprep.subr.bf16.mxu0 0
        %6387 = vmatpush1.bf16.msra.mxu0 0
        %6388 = vmatprep.subr.bf16.mxu0 0
        %6389 = vmatpush1.bf16.msra.mxu0 0
        %6390 = vmatprep.subr.bf16.mxu0 0
        %6391 = vmatpush1.bf16.msra.mxu0 0
        %6392 = vmatprep.subr.bf16.mxu0 0
        %6393 = vmatpush1.bf16.msra.mxu0 0
        %6394 = vmatprep.subr.bf16.mxu0 0
        %6395 = vmatpush1.bf16.msra.mxu0 0
        %6396 = vmatprep.subr.bf16.mxu0 0
        %6397 = vmatpush1.bf16.msra.mxu0 0
        %6398 = vmatprep.mubr.bf16.mxu0 0
        %6399 = vmatmul.mubr.bf16.gmra.mrb[0].mxu0 %v6364
        %v6400 = vpop.f32.mrb[0].mxu0
        %v6401 = vadd.f32 0.0, %v6400
        %v6402 = vpop.f32.mrb[0].mxu0
        %v6403 = vpop.f32.mrb[0].mxu0
        %v6404 = vadd.f32 0.0, %v6403
        %v6405 = vpop.f32.mrb[0].mxu0
        %6406 = vdwg.mxu0
        %6409 = vrot.lane.b32.xlu0 %v6149, 16
        %v6410 = vpop.permute.xlu0 %6409
        %6411 = vrot.lane.b32.xlu0 %v6152, 16
        %v6412 = vpop.permute.xlu0 %6411
        %6417 = vrot.lane.b32.xlu0 %v6275, 32
        %v6418 = vpop.permute.xlu0 %6417
        %6419 = vrot.lane.b32.xlu0 %v6278, 32
        %v6420 = vpop.permute.xlu0 %6419
        %6425 = vrot.lane.b32.xlu0 %v6401, 48
        %v6426 = vpop.permute.xlu0 %6425
        %6427 = vrot.lane.b32.xlu0 %v6404, 48
        %v6428 = vpop.permute.xlu0 %6427
        %v6431 = vsel %vm2769, %v6022, %v6410
        %v6432 = vsel %vm2769, %v6025, %v6412
        %v6433 = vsel %vm2349, %v6431, %v6418
        %v6434 = vsel %vm2349, %v6432, %v6420
        %v6435 = vsel %vm2269, %v6433, %v6426
        %v6436 = vsel %vm2269, %v6434, %v6428
        %v6437 = vld [vmem:[%s83] sm:$0xf]
        %v6438 = vld [vmem:[%s83 + $0x4] sm:$0xf]
        %v6439 = vld [vmem:[%s83 + $0x8] sm:$0xf]
        %v6440 = vld [vmem:[%s83 + $0xc] sm:$0xf]
        %v6441 = vld [vmem:[%s83 + $0x10] sm:$0xf]
        %v6442 = vld [vmem:[%s83 + $0x14] sm:$0xf]
        %v6443 = vld [vmem:[%s83 + $0x18] sm:$0xf]
        %v6444 = vld [vmem:[%s83 + $0x1c] sm:$0xf]
        %v6445 = vpack.c.bf16 %v6436, %v6435
        %v6446 = vld [vmem:[#allocation17] sm:$0x1]
        %v6448 = vlaneseq
        %v6449 = vshrl.u32 %v6448, 7
        %v6450 = vsub.s32 0, %v6449
        %v6451 = vrot.slane %v6446, %v6450
        %v6461 = vunpack.c.l.b16 %v6437
        %v6462 = vunpack.c.l.b16 %v6438
        %v6463 = vunpack.c.l.b16 %v6439
        %v6464 = vunpack.c.l.b16 %v6440
        %v6465 = vunpack.c.l.b16 %v6441
        %v6466 = vunpack.c.l.b16 %v6442
        %v6467 = vunpack.c.l.b16 %v6443
        %v6468 = vunpack.c.l.b16 %v6444
        %v6469 = vpack.c.b16 %v6462, %v6461
        %v6470 = vpack.c.b16 %v6464, %v6463
        %v6471 = vpack.c.b16 %v6466, %v6465
        %v6472 = vpack.c.b16 %v6468, %v6467
        %v6478 = vsel %vm2859, %v6445, 0
        %6480 = vmatprep.subr.bf16.mxu0 0
        %6481 = vmatpush1.bf16.msra.mxu0 %v6469
        %6482 = vmatprep.subr.bf16.mxu0 0
        %6483 = vmatpush1.bf16.msra.mxu0 %v6470
        %6484 = vmatprep.subr.bf16.mxu0 0
        %6485 = vmatpush1.bf16.msra.mxu0 %v6471
        %6486 = vmatprep.subr.bf16.mxu0 0
        %6487 = vmatpush1.bf16.msra.mxu0 %v6472
        %6488 = vmatprep.subr.bf16.mxu0 0
        %6489 = vmatpush1.bf16.msra.mxu0 0
        %6490 = vmatprep.subr.bf16.mxu0 0
        %6491 = vmatpush1.bf16.msra.mxu0 0
        %6492 = vmatprep.subr.bf16.mxu0 0
        %6493 = vmatpush1.bf16.msra.mxu0 0
        %6494 = vmatprep.subr.bf16.mxu0 0
        %6495 = vmatpush1.bf16.msra.mxu0 0
        %6496 = vmatprep.subr.bf16.mxu0 0
        %6497 = vmatpush1.bf16.msra.mxu0 0
        %6498 = vmatprep.subr.bf16.mxu0 0
        %6499 = vmatpush1.bf16.msra.mxu0 0
        %6500 = vmatprep.subr.bf16.mxu0 0
        %6501 = vmatpush1.bf16.msra.mxu0 0
        %6502 = vmatprep.subr.bf16.mxu0 0
        %6503 = vmatpush1.bf16.msra.mxu0 0
        %6504 = vmatprep.subr.bf16.mxu0 0
        %6505 = vmatpush1.bf16.msra.mxu0 0
        %6506 = vmatprep.subr.bf16.mxu0 0
        %6507 = vmatpush1.bf16.msra.mxu0 0
        %6508 = vmatprep.subr.bf16.mxu0 0
        %6509 = vmatpush1.bf16.msra.mxu0 0
        %6510 = vmatprep.subr.bf16.mxu0 0
        %6511 = vmatpush1.bf16.msra.mxu0 0
        %6512 = vmatprep.mubr.bf16.mxu0 0
        %6513 = vmatmul.mubr.bf16.gmra.mrb[0].mxu0 %v6478
        %v6514 = vpop.f32.mrb[0].mxu0
        %v6515 = vadd.f32 %v6451, %v6514
        %v6516 = vpop.f32.mrb[0].mxu0
        %v6517 = vpop.f32.mrb[0].mxu0
        %v6518 = vadd.f32 %v6451, %v6517
        %v6519 = vpop.f32.mrb[0].mxu0
        %6520 = vdwg.mxu0
        %v6521 = vadd.f32 %v5747, %v6515
        %v6522 = vadd.f32 %v5750, %v6518
        %v6523 = vld [vmem:[#allocation19] sm:$0x1]
        %v6524 = vld [vmem:[#allocation20] sm:$0x1]
        %v6525 = vsel %vm2859, %v6521, 0.0
        %6526 = vadd.xlane.f32.xlu0 %v6525
        %v6527 = vpop.xlane.xlu0 %6526
        %v6528 = vsel %vm2859, %v6522, 0.0
        %6529 = vadd.xlane.f32.xlu0 %v6528
        %v6530 = vpop.xlane.xlu0 %6529
        %v6531 = vmul.f32 %v6527, %v5761
        %v6532 = vmul.f32 %v6530, %v5761
        %v6533 = vsub.f32 %v6521, %v6531
        %v6534 = vsub.f32 %v6522, %v6532
        %v6535 = vmul.f32 %v6533, %v6533
        %v6536 = vmul.f32 %v6534, %v6534
        %v6537 = vsel %vm2859, %v6535, 0.0
        %6538 = vadd.xlane.f32.xlu0 %v6537
        %v6539 = vpop.xlane.xlu0 %6538
        %v6540 = vsel %vm2859, %v6536, 0.0
        %6541 = vadd.xlane.f32.xlu0 %v6540
        %v6542 = vpop.xlane.xlu0 %6541
        %v6543 = vmul.f32 %v6539, %v5761
        %v6544 = vmul.f32 %v6542, %v5761
        %v6545 = vadd.f32 %v6543, 1e-05
        %v6546 = vadd.f32 %v6544, 1e-05
        %v6547 = vrsqrt.pop %v6545
        %v6548 = vrsqrt.pop %v6546
        %v6549 = vmul.f32 %v6533, %v6547
        %v6550 = vmul.f32 %v6534, %v6548
        %v6552 = vlaneseq
        %v6553 = vshrl.u32 %v6552, 7
        %v6554 = vsub.s32 0, %v6553
        %v6555 = vrot.slane %v6523, %v6554
        %v6557 = vmul.f32 %v6549, %v6555
        %v6558 = vmul.f32 %v6550, %v6555
        %v6560 = vlaneseq
        %v6561 = vshrl.u32 %v6560, 7
        %v6562 = vsub.s32 0, %v6561
        %v6563 = vrot.slane %v6524, %v6562
        %v6565 = vadd.f32 %v6557, %v6563
        %v6566 = vadd.f32 %v6558, %v6563
        %v6567 = vld [vmem:[%s91] sm:$0xf]
        %v6568 = vld [vmem:[%s91 + $0x4] sm:$0xf]
        %v6569 = vld [vmem:[%s91 + $0x8] sm:$0xf]
        %v6570 = vld [vmem:[%s91 + $0xc] sm:$0xf]
        %v6571 = vld [vmem:[%s91 + $0x10] sm:$0xf]
        %v6572 = vld [vmem:[%s91 + $0x14] sm:$0xf]
        %v6573 = vld [vmem:[%s91 + $0x18] sm:$0xf]
        %v6574 = vld [vmem:[%s91 + $0x1c] sm:$0xf]
        %v6575 = vpack.c.bf16 %v6566, %v6565
        %v6576 = vld [vmem:[#allocation22] sm:$0x1]
        %v6578 = vlaneseq
        %v6579 = vshrl.u32 %v6578, 7
        %v6580 = vsub.s32 0, %v6579
        %v6581 = vrot.slane %v6576, %v6580
        %v6591 = vunpack.c.l.b16 %v6567
        %v6592 = vunpack.c.l.b16 %v6568
        %v6593 = vunpack.c.l.b16 %v6569
        %v6594 = vunpack.c.l.b16 %v6570
        %v6595 = vunpack.c.l.b16 %v6571
        %v6596 = vunpack.c.l.b16 %v6572
        %v6597 = vunpack.c.l.b16 %v6573
        %v6598 = vunpack.c.l.b16 %v6574
        %v6599 = vpack.c.b16 %v6592, %v6591
        %v6600 = vpack.c.b16 %v6594, %v6593
        %v6601 = vpack.c.b16 %v6596, %v6595
        %v6602 = vpack.c.b16 %v6598, %v6597
        %v6608 = vsel %vm2859, %v6575, 0
        %6610 = vmatprep.subr.bf16.mxu0 0
        %6611 = vmatpush1.bf16.msra.mxu0 %v6599
        %6612 = vmatprep.subr.bf16.mxu0 0
        %6613 = vmatpush1.bf16.msra.mxu0 %v6600
        %6614 = vmatprep.subr.bf16.mxu0 0
        %6615 = vmatpush1.bf16.msra.mxu0 %v6601
        %6616 = vmatprep.subr.bf16.mxu0 0
        %6617 = vmatpush1.bf16.msra.mxu0 %v6602
        %6618 = vmatprep.subr.bf16.mxu0 0
        %6619 = vmatpush1.bf16.msra.mxu0 0
        %6620 = vmatprep.subr.bf16.mxu0 0
        %6621 = vmatpush1.bf16.msra.mxu0 0
        %6622 = vmatprep.subr.bf16.mxu0 0
        %6623 = vmatpush1.bf16.msra.mxu0 0
        %6624 = vmatprep.subr.bf16.mxu0 0
        %6625 = vmatpush1.bf16.msra.mxu0 0
        %6626 = vmatprep.subr.bf16.mxu0 0
        %6627 = vmatpush1.bf16.msra.mxu0 0
        %6628 = vmatprep.subr.bf16.mxu0 0
        %6629 = vmatpush1.bf16.msra.mxu0 0
        %6630 = vmatprep.subr.bf16.mxu0 0
        %6631 = vmatpush1.bf16.msra.mxu0 0
        %6632 = vmatprep.subr.bf16.mxu0 0
        %6633 = vmatpush1.bf16.msra.mxu0 0
        %6634 = vmatprep.subr.bf16.mxu0 0
        %6635 = vmatpush1.bf16.msra.mxu0 0
        %6636 = vmatprep.subr.bf16.mxu0 0
        %6637 = vmatpush1.bf16.msra.mxu0 0
        %6638 = vmatprep.subr.bf16.mxu0 0
        %6639 = vmatpush1.bf16.msra.mxu0 0
        %6640 = vmatprep.subr.bf16.mxu0 0
        %6641 = vmatpush1.bf16.msra.mxu0 0
        %6642 = vmatprep.mubr.bf16.mxu0 0
        %6643 = vmatmul.mubr.bf16.gmra.mrb[0].mxu0 %v6608
        %v6644 = vpop.f32.mrb[0].mxu0
        %v6645 = vadd.f32 %v6581, %v6644
        %v6646 = vpop.f32.mrb[0].mxu0
        %v6647 = vpop.f32.mrb[0].mxu0
        %v6648 = vadd.f32 %v6581, %v6647
        %v6649 = vpop.f32.mrb[0].mxu0
        %6650 = vdwg.mxu0
        %v6651 = vmul.f32 %v6645, %v6645
        %v6652 = vmul.f32 %v6648, %v6648
        %v6653 = vmul.f32 %v6645, %v6651
        %v6654 = vmul.f32 %v6648, %v6652
        %v6655 = vmul.f32 %v6653, 0.044715
        %v6656 = vmul.f32 %v6654, 0.044715
        %v6657 = vadd.f32 %v6645, %v6655
        %v6658 = vadd.f32 %v6648, %v6656
        %v6659 = vmul.f32 %v6657, 0.7978846
        %v6660 = vmul.f32 %v6658, 0.7978846
        %v6661 = vtanh.pop %v6659
        %v6662 = vtanh.pop %v6660
        %v6663 = vadd.f32 %v6661, 1.0
        %v6664 = vadd.f32 %v6662, 1.0
        %v6665 = vmul.f32 %v6663, 0.5
        %v6666 = vmul.f32 %v6664, 0.5
        %v6667 = vmul.f32 %v6645, %v6665
        %v6668 = vmul.f32 %v6648, %v6666
        %v6669 = vld [vmem:[%s95] sm:$0xf]
        %v6670 = vld [vmem:[%s95 + $0x4] sm:$0xf]
        %v6671 = vld [vmem:[%s95 + $0x8] sm:$0xf]
        %v6672 = vld [vmem:[%s95 + $0xc] sm:$0xf]
        %v6673 = vld [vmem:[%s95 + $0x10] sm:$0xf]
        %v6674 = vld [vmem:[%s95 + $0x14] sm:$0xf]
        %v6675 = vld [vmem:[%s95 + $0x18] sm:$0xf]
        %v6676 = vld [vmem:[%s95 + $0x1c] sm:$0xf]
        %v6677 = vld [vmem:[%s95 + $0x20] sm:$0xf]
        %v6678 = vld [vmem:[%s95 + $0x24] sm:$0xf]
        %v6679 = vld [vmem:[%s95 + $0x28] sm:$0xf]
        %v6680 = vld [vmem:[%s95 + $0x2c] sm:$0xf]
        %v6681 = vld [vmem:[%s95 + $0x30] sm:$0xf]
        %v6682 = vld [vmem:[%s95 + $0x34] sm:$0xf]
        %v6683 = vld [vmem:[%s95 + $0x38] sm:$0xf]
        %v6684 = vld [vmem:[%s95 + $0x3c] sm:$0xf]
        %v6685 = vpack.c.bf16 %v6668, %v6667
        %v6686 = vld [vmem:[#allocation23] sm:$0x1]
        %v6688 = vlaneseq
        %v6689 = vshrl.u32 %v6688, 7
        %v6690 = vsub.s32 0, %v6689
        %v6691 = vrot.slane %v6686, %v6690
        %v6709 = vunpack.c.l.b16 %v6669
        %v6710 = vunpack.c.l.b16 %v6670
        %v6711 = vunpack.c.l.b16 %v6671
        %v6712 = vunpack.c.l.b16 %v6672
        %v6713 = vunpack.c.l.b16 %v6673
        %v6714 = vunpack.c.l.b16 %v6674
        %v6715 = vunpack.c.l.b16 %v6675
        %v6716 = vunpack.c.l.b16 %v6676
        %v6717 = vunpack.c.l.b16 %v6677
        %v6718 = vunpack.c.l.b16 %v6678
        %v6719 = vunpack.c.l.b16 %v6679
        %v6720 = vunpack.c.l.b16 %v6680
        %v6721 = vunpack.c.l.b16 %v6681
        %v6722 = vunpack.c.l.b16 %v6682
        %v6723 = vunpack.c.l.b16 %v6683
        %v6724 = vunpack.c.l.b16 %v6684
        %v6725 = vpack.c.b16 %v6710, %v6709
        %v6726 = vpack.c.b16 %v6712, %v6711
        %v6727 = vpack.c.b16 %v6714, %v6713
        %v6728 = vpack.c.b16 %v6716, %v6715
        %v6729 = vpack.c.b16 %v6718, %v6717
        %v6730 = vpack.c.b16 %v6720, %v6719
        %v6731 = vpack.c.b16 %v6722, %v6721
        %v6732 = vpack.c.b16 %v6724, %v6723
        %6741 = vmatprep.subr.bf16.mxu0 0
        %6742 = vmatpush1.bf16.msra.mxu0 %v6725
        %6743 = vmatprep.subr.bf16.mxu0 0
        %6744 = vmatpush1.bf16.msra.mxu0 %v6726
        %6745 = vmatprep.subr.bf16.mxu0 0
        %6746 = vmatpush1.bf16.msra.mxu0 %v6727
        %6747 = vmatprep.subr.bf16.mxu0 0
        %6748 = vmatpush1.bf16.msra.mxu0 %v6728
        %6749 = vmatprep.subr.bf16.mxu0 0
        %6750 = vmatpush1.bf16.msra.mxu0 %v6729
        %6751 = vmatprep.subr.bf16.mxu0 0
        %6752 = vmatpush1.bf16.msra.mxu0 %v6730
        %6753 = vmatprep.subr.bf16.mxu0 0
        %6754 = vmatpush1.bf16.msra.mxu0 %v6731
        %6755 = vmatprep.subr.bf16.mxu0 0
        %6756 = vmatpush1.bf16.msra.mxu0 %v6732
        %6757 = vmatprep.subr.bf16.mxu0 0
        %6758 = vmatpush1.bf16.msra.mxu0 0
        %6759 = vmatprep.subr.bf16.mxu0 0
        %6760 = vmatpush1.bf16.msra.mxu0 0
        %6761 = vmatprep.subr.bf16.mxu0 0
        %6762 = vmatpush1.bf16.msra.mxu0 0
        %6763 = vmatprep.subr.bf16.mxu0 0
        %6764 = vmatpush1.bf16.msra.mxu0 0
        %6765 = vmatprep.subr.bf16.mxu0 0
        %6766 = vmatpush1.bf16.msra.mxu0 0
        %6767 = vmatprep.subr.bf16.mxu0 0
        %6768 = vmatpush1.bf16.msra.mxu0 0
        %6769 = vmatprep.subr.bf16.mxu0 0
        %6770 = vmatpush1.bf16.msra.mxu0 0
        %6771 = vmatprep.subr.bf16.mxu0 0
        %6772 = vmatpush1.bf16.msra.mxu0 0
        %6773 = vmatprep.mubr.bf16.mxu0 0
        %6774 = vmatmul.mubr.bf16.gmra.mrb[0].mxu0 %v6685
        %v6775 = vpop.f32.mrb[0].mxu0
        %v6776 = vadd.f32 %v6691, %v6775
        %v6777 = vpop.f32.mrb[0].mxu0
        %v6778 = vpop.f32.mrb[0].mxu0
        %v6779 = vadd.f32 %v6691, %v6778
        %v6780 = vpop.f32.mrb[0].mxu0
        %6781 = vdwg.mxu0
        %v6782 = vadd.f32 %v6521, %v6776
        %v6783 = vadd.f32 %v6522, %v6779
        %v6784 = vld [vmem:[#allocation25] sm:$0x1]
        %v6785 = vld [vmem:[#allocation26] sm:$0x1]
        %v6786 = vsel %vm2859, %v6782, 0.0
        %6787 = vadd.xlane.f32.xlu0 %v6786
        %v6788 = vpop.xlane.xlu0 %6787
        %v6789 = vsel %vm2859, %v6783, 0.0
        %6790 = vadd.xlane.f32.xlu0 %v6789
        %v6791 = vpop.xlane.xlu0 %6790
        %v6792 = vmul.f32 %v6788, %v5761
        %v6793 = vmul.f32 %v6791, %v5761
        %v6794 = vsub.f32 %v6782, %v6792
        %v6795 = vsub.f32 %v6783, %v6793
        %v6796 = vmul.f32 %v6794, %v6794
        %v6797 = vmul.f32 %v6795, %v6795
        %v6798 = vsel %vm2859, %v6796, 0.0
        %6799 = vadd.xlane.f32.xlu0 %v6798
        %v6800 = vpop.xlane.xlu0 %6799
        %v6801 = vsel %vm2859, %v6797, 0.0
        %6802 = vadd.xlane.f32.xlu0 %v6801
        %v6803 = vpop.xlane.xlu0 %6802
        %v6804 = vmul.f32 %v6800, %v5761
        %v6805 = vmul.f32 %v6803, %v5761
        %v6806 = vadd.f32 %v6804, 1e-05
        %v6807 = vadd.f32 %v6805, 1e-05
        %v6808 = vrsqrt.pop %v6806
        %v6809 = vrsqrt.pop %v6807
        %v6810 = vmul.f32 %v6794, %v6808
        %v6811 = vmul.f32 %v6795, %v6809
        %v6813 = vlaneseq
        %v6814 = vshrl.u32 %v6813, 7
        %v6815 = vsub.s32 0, %v6814
        %v6816 = vrot.slane %v6784, %v6815
        %v6818 = vmul.f32 %v6810, %v6816
        %v6819 = vmul.f32 %v6811, %v6816
        %v6821 = vlaneseq
        %v6822 = vshrl.u32 %v6821, 7
        %v6823 = vsub.s32 0, %v6822
        %v6824 = vrot.slane %v6785, %v6823
        %v6826 = vadd.f32 %v6818, %v6824
        %v6827 = vadd.f32 %v6819, %v6824
        %v6828 = vld [vmem:[%s105] sm:$0xff]
        %v6829 = vld [vmem:[%s105 + $0x8] sm:$0xff]
        %v6830 = vld [vmem:[%s105 + $0x10] sm:$0xff]
        %v6831 = vld [vmem:[%s105 + $0x18] sm:$0xff]
        %v6832 = vld [vmem:[%s105 + $0x20] sm:$0xff]
        %v6833 = vld [vmem:[%s105 + $0x28] sm:$0xff]
        %v6834 = vld [vmem:[%s105 + $0x30] sm:$0xff]
        %v6835 = vld [vmem:[%s105 + $0x38] sm:$0xff]
        %v6836 = vpack.c.bf16 %v6827, %v6826
        %v6837 = vld [vmem:[%s107] sm:$0x3]
        %v6839 = vlaneseq
        %v6840 = vshrl.u32 %v6839, 7
        %v6841 = vsub.s32 0, %v6840
        %v6842 = vrot.slane %v6837, %v6841
        %v6843 = vlaneseq
        %v6844 = vshrl.u32 %v6843, 7
        %v6845 = vsub.s32 1, %v6844
        %v6846 = vrot.slane %v6837, %v6845
        %v6857 = vunpack.c.l.b16 %v6828
        %v6858 = vunpack.c.h.b16 %v6828
        %v6859 = vunpack.c.l.b16 %v6829
        %v6860 = vunpack.c.h.b16 %v6829
        %v6861 = vunpack.c.l.b16 %v6830
        %v6862 = vunpack.c.h.b16 %v6830
        %v6863 = vunpack.c.l.b16 %v6831
        %v6864 = vunpack.c.h.b16 %v6831
        %v6865 = vunpack.c.l.b16 %v6832
        %v6866 = vunpack.c.h.b16 %v6832
        %v6867 = vunpack.c.l.b16 %v6833
        %v6868 = vunpack.c.h.b16 %v6833
        %v6869 = vunpack.c.l.b16 %v6834
        %v6870 = vunpack.c.h.b16 %v6834
        %v6871 = vunpack.c.l.b16 %v6835
        %v6872 = vunpack.c.h.b16 %v6835
        %v6873 = vpack.c.b16 %v6859, %v6857
        %v6874 = vpack.c.b16 %v6860, %v6858
        %v6875 = vpack.c.b16 %v6863, %v6861
        %v6876 = vpack.c.b16 %v6864, %v6862
        %v6877 = vpack.c.b16 %v6867, %v6865
        %v6878 = vpack.c.b16 %v6868, %v6866
        %v6879 = vpack.c.b16 %v6871, %v6869
        %v6880 = vpack.c.b16 %v6872, %v6870
        %v6890 = vsel %vm2859, %v6836, 0
        %6892 = vmatprep.subr.bf16.mxu0 %v6874
        %6893 = vmatpush1.bf16.msra.mxu0 %v6873
        %6894 = vmatprep.subr.bf16.mxu0 %v6876
        %6895 = vmatpush1.bf16.msra.mxu0 %v6875
        %6896 = vmatprep.subr.bf16.mxu0 %v6878
        %6897 = vmatpush1.bf16.msra.mxu0 %v6877
        %6898 = vmatprep.subr.bf16.mxu0 %v6880
        %6899 = vmatpush1.bf16.msra.mxu0 %v6879
        %6900 = vmatprep.subr.bf16.mxu0 0
        %6901 = vmatpush1.bf16.msra.mxu0 0
        %6902 = vmatprep.subr.bf16.mxu0 0
        %6903 = vmatpush1.bf16.msra.mxu0 0
        %6904 = vmatprep.subr.bf16.mxu0 0
        %6905 = vmatpush1.bf16.msra.mxu0 0
        %6906 = vmatprep.subr.bf16.mxu0 0
        %6907 = vmatpush1.bf16.msra.mxu0 0
        %6908 = vmatprep.subr.bf16.mxu0 0
        %6909 = vmatpush1.bf16.msra.mxu0 0
        %6910 = vmatprep.subr.bf16.mxu0 0
        %6911 = vmatpush1.bf16.msra.mxu0 0
        %6912 = vmatprep.subr.bf16.mxu0 0
        %6913 = vmatpush1.bf16.msra.mxu0 0
        %6914 = vmatprep.subr.bf16.mxu0 0
        %6915 = vmatpush1.bf16.msra.mxu0 0
        %6916 = vmatprep.subr.bf16.mxu0 0
        %6917 = vmatpush1.bf16.msra.mxu0 0
        %6918 = vmatprep.subr.bf16.mxu0 0
        %6919 = vmatpush1.bf16.msra.mxu0 0
        %6920 = vmatprep.subr.bf16.mxu0 0
        %6921 = vmatpush1.bf16.msra.mxu0 0
        %6922 = vmatprep.subr.bf16.mxu0 0
        %6923 = vmatpush1.bf16.msra.mxu0 0
        %6924 = vmatprep.mubr.bf16.mxu0 0
        %6925 = vmatmul.mubr.bf16.gmra.mrb[0].mxu0 %v6890
        %v6926 = vpop.f32.mrb[0].mxu0
        %v6927 = vadd.f32 %v6842, %v6926
        %v6928 = vpop.f32.mrb[0].mxu0
        %v6929 = vadd.f32 %v6846, %v6928
        %v6930 = vpop.f32.mrb[0].mxu0
        %v6931 = vadd.f32 %v6842, %v6930
        %v6932 = vpop.f32.mrb[0].mxu0
        %v6933 = vadd.f32 %v6846, %v6932
        %6934 = vdwg.mxu0
        %v6935 = vpack.c.bf16 %v6931, %v6927
        %v6936 = vpack.c.bf16 %v6933, %v6929
        %v6937 = vld [vmem:[%s99] sm:$0xf]
        %v6938 = vld [vmem:[%s99 + $0x4] sm:$0xf]
        %v6939 = vunpack.c.l.bf16 %v6937
        %v6940 = vunpack.c.l.bf16 %v6938
        %6942 = vrot.lane.b32.xlu0 %v6935, 64
        %v6943 = vpop.permute.xlu0 %6942
        %v6945 = vsel %vm2769, %v6935, 0
        %v6948 = vsel %vm2769, %v6943, 0
        %6950 = vmatprep.subr.bf16.mxu0 0
        %6951 = vmatpush1.bf16.xpose.msra.mxu0 %v6948
        %6952 = vmatprep.subr.bf16.mxu0 0
        %6953 = vmatpush1.bf16.xpose.msra.mxu0 0
        %6954 = vmatprep.subr.bf16.mxu0 0
        %6955 = vmatpush1.bf16.xpose.msra.mxu0 0
        %6956 = vmatprep.subr.bf16.mxu0 0
        %6957 = vmatpush1.bf16.xpose.msra.mxu0 0
        %6958 = vmatprep.subr.bf16.mxu0 0
        %6959 = vmatpush1.bf16.xpose.msra.mxu0 0
        %6960 = vmatprep.subr.bf16.mxu0 0
        %6961 = vmatpush1.bf16.xpose.msra.mxu0 0
        %6962 = vmatprep.subr.bf16.mxu0 0
        %6963 = vmatpush1.bf16.xpose.msra.mxu0 0
        %6964 = vmatprep.subr.bf16.mxu0 0
        %6965 = vmatpush1.bf16.xpose.msra.mxu0 0
        %6966 = vmatprep.subr.bf16.mxu0 0
        %6967 = vmatpush1.bf16.xpose.msra.mxu0 0
        %6968 = vmatprep.subr.bf16.mxu0 0
        %6969 = vmatpush1.bf16.xpose.msra.mxu0 0
        %6970 = vmatprep.subr.bf16.mxu0 0
        %6971 = vmatpush1.bf16.xpose.msra.mxu0 0
        %6972 = vmatprep.subr.bf16.mxu0 0
        %6973 = vmatpush1.bf16.xpose.msra.mxu0 0
        %6974 = vmatprep.subr.bf16.mxu0 0
        %6975 = vmatpush1.bf16.xpose.msra.mxu0 0
        %6976 = vmatprep.subr.bf16.mxu0 0
        %6977 = vmatpush1.bf16.xpose.msra.mxu0 0
        %6978 = vmatprep.subr.bf16.mxu0 0
        %6979 = vmatpush1.bf16.xpose.msra.mxu0 0
        %6980 = vmatprep.subr.bf16.mxu0 0
        %6981 = vmatpush1.bf16.xpose.msra.mxu0 0
        %6982 = vmatprep.mubr.bf16.mxu0 0
        %6983 = vmatmul.mubr.bf16.gmra.mrb[0].mxu0 %v6945
        %v6984 = vpop.f32.mrb[0].mxu0
        %v6985 = vadd.f32 %v6939, %v6984
        %v6986 = vpop.f32.mrb[0].mxu0
        %v6987 = vpop.f32.mrb[0].mxu0
        %v6988 = vadd.f32 %v6940, %v6987
        %v6989 = vpop.f32.mrb[0].mxu0
        %6990 = vdwg.mxu0
        %v6991 = vsel %vm2769, %v6985, -inf
        %6992 = vmax.xlane.f32.xlu0 %v6991
        %v6993 = vpop.xlane.xlu0 %6992
        %v6994 = vsel %vm2769, %v6988, -inf
        %6995 = vmax.xlane.f32.xlu0 %v6994
        %v6996 = vpop.xlane.xlu0 %6995
        %v6997 = vsub.f32 %v6985, %v6993
        %v6998 = vsub.f32 %v6988, %v6996
        %v6999 = vmul.f32 %v6997, 1.442695
        %v7000 = vpow.pop %v6999
        %v7001 = vmul.f32 %v6998, 1.442695
        %v7002 = vpow.pop %v7001
        %v7003 = vsel %vm2769, %v7000, 0.0
        %7004 = vadd.xlane.f32.xlu0 %v7003
        %v7005 = vpop.xlane.xlu0 %7004
        %v7006 = vsel %vm2769, %v7002, 0.0
        %7007 = vadd.xlane.f32.xlu0 %v7006
        %v7008 = vpop.xlane.xlu0 %7007
        %v7009 = vrcp.pop %v7005
        %v7010 = vrcp.pop %v7008
        %v7011 = vmul.f32 %v7000, %v7009
        %v7012 = vmul.f32 %v7002, %v7010
        %v7013 = vpack.c.bf16 %v7012, %v7011
        %v7015 = vsel %vm2769, %v7013, 0
        %7017 = vmatprep.subr.bf16.mxu0 0
        %7018 = vmatpush1.bf16.msra.mxu0 %v6936
        %7019 = vmatprep.subr.bf16.mxu0 0
        %7020 = vmatpush1.bf16.msra.mxu0 0
        %7021 = vmatprep.subr.bf16.mxu0 0
        %7022 = vmatpush1.bf16.msra.mxu0 0
        %7023 = vmatprep.subr.bf16.mxu0 0
        %7024 = vmatpush1.bf16.msra.mxu0 0
        %7025 = vmatprep.subr.bf16.mxu0 0
        %7026 = vmatpush1.bf16.msra.mxu0 0
        %7027 = vmatprep.subr.bf16.mxu0 0
        %7028 = vmatpush1.bf16.msra.mxu0 0
        %7029 = vmatprep.subr.bf16.mxu0 0
        %7030 = vmatpush1.bf16.msra.mxu0 0
        %7031 = vmatprep.subr.bf16.mxu0 0
        %7032 = vmatpush1.bf16.msra.mxu0 0
        %7033 = vmatprep.subr.bf16.mxu0 0
        %7034 = vmatpush1.bf16.msra.mxu0 0
        %7035 = vmatprep.subr.bf16.mxu0 0
        %7036 = vmatpush1.bf16.msra.mxu0 0
        %7037 = vmatprep.subr.bf16.mxu0 0
        %7038 = vmatpush1.bf16.msra.mxu0 0
        %7039 = vmatprep.subr.bf16.mxu0 0
        %7040 = vmatpush1.bf16.msra.mxu0 0
        %7041 = vmatprep.subr.bf16.mxu0 0
        %7042 = vmatpush1.bf16.msra.mxu0 0
        %7043 = vmatprep.subr.bf16.mxu0 0
        %7044 = vmatpush1.bf16.msra.mxu0 0
        %7045 = vmatprep.subr.bf16.mxu0 0
        %7046 = vmatpush1.bf16.msra.mxu0 0
        %7047 = vmatprep.subr.bf16.mxu0 0
        %7048 = vmatpush1.bf16.msra.mxu0 0
        %7049 = vmatprep.mubr.bf16.mxu0 0
        %7050 = vmatmul.mubr.bf16.gmra.mrb[0].mxu0 %v7015
        %v7051 = vpop.f32.mrb[0].mxu0
        %v7052 = vadd.f32 0.0, %v7051
        %v7053 = vpop.f32.mrb[0].mxu0
        %v7054 = vpop.f32.mrb[0].mxu0
        %v7055 = vadd.f32 0.0, %v7054
        %v7056 = vpop.f32.mrb[0].mxu0
        %7057 = vdwg.mxu0
        %s7058 = scalar_lea.vmem %s99, 8
        %v7059 = vld [vmem:[%s7058] sm:$0xf]
        %v7060 = vld [vmem:[%s7058 + $0x4] sm:$0xf]
        %v7061 = vunpack.c.l.bf16 %v7059
        %v7062 = vunpack.c.l.bf16 %v7060
        %7063 = vrot.lane.b32.xlu0 %v6935, 112
        %v7064 = vpop.permute.xlu0 %7063
        %7065 = vrot.lane.b32.xlu0 %v6935, 48
        %v7066 = vpop.permute.xlu0 %7065
        %v7068 = vsel %vm2769, %v7064, 0
        %v7071 = vsel %vm2769, %v7066, 0
        %7073 = vmatprep.subr.bf16.mxu0 0
        %7074 = vmatpush1.bf16.xpose.msra.mxu0 %v7071
        %7075 = vmatprep.subr.bf16.mxu0 0
        %7076 = vmatpush1.bf16.xpose.msra.mxu0 0
        %7077 = vmatprep.subr.bf16.mxu0 0
        %7078 = vmatpush1.bf16.xpose.msra.mxu0 0
        %7079 = vmatprep.subr.bf16.mxu0 0
        %7080 = vmatpush1.bf16.xpose.msra.mxu0 0
        %7081 = vmatprep.subr.bf16.mxu0 0
        %7082 = vmatpush1.bf16.xpose.msra.mxu0 0
        %7083 = vmatprep.subr.bf16.mxu0 0
        %7084 = vmatpush1.bf16.xpose.msra.mxu0 0
        %7085 = vmatprep.subr.bf16.mxu0 0
        %7086 = vmatpush1.bf16.xpose.msra.mxu0 0
        %7087 = vmatprep.subr.bf16.mxu0 0
        %7088 = vmatpush1.bf16.xpose.msra.mxu0 0
        %7089 = vmatprep.subr.bf16.mxu0 0
        %7090 = vmatpush1.bf16.xpose.msra.mxu0 0
        %7091 = vmatprep.subr.bf16.mxu0 0
        %7092 = vmatpush1.bf16.xpose.msra.mxu0 0
        %7093 = vmatprep.subr.bf16.mxu0 0
        %7094 = vmatpush1.bf16.xpose.msra.mxu0 0
        %7095 = vmatprep.subr.bf16.mxu0 0
        %7096 = vmatpush1.bf16.xpose.msra.mxu0 0
        %7097 = vmatprep.subr.bf16.mxu0 0
        %7098 = vmatpush1.bf16.xpose.msra.mxu0 0
        %7099 = vmatprep.subr.bf16.mxu0 0
        %7100 = vmatpush1.bf16.xpose.msra.mxu0 0
        %7101 = vmatprep.subr.bf16.mxu0 0
        %7102 = vmatpush1.bf16.xpose.msra.mxu0 0
        %7103 = vmatprep.subr.bf16.mxu0 0
        %7104 = vmatpush1.bf16.xpose.msra.mxu0 0
        %7105 = vmatprep.mubr.bf16.mxu0 0
        %7106 = vmatmul.mubr.bf16.gmra.mrb[0].mxu0 %v7068
        %v7107 = vpop.f32.mrb[0].mxu0
        %v7108 = vadd.f32 %v7061, %v7107
        %v7109 = vpop.f32.mrb[0].mxu0
        %v7110 = vpop.f32.mrb[0].mxu0
        %v7111 = vadd.f32 %v7062, %v7110
        %v7112 = vpop.f32.mrb[0].mxu0
        %7113 = vdwg.mxu0
        %v7114 = vsel %vm2769, %v7108, -inf
        %7115 = vmax.xlane.f32.xlu0 %v7114
        %v7116 = vpop.xlane.xlu0 %7115
        %v7117 = vsel %vm2769, %v7111, -inf
        %7118 = vmax.xlane.f32.xlu0 %v7117
        %v7119 = vpop.xlane.xlu0 %7118
        %v7120 = vsub.f32 %v7108, %v7116
        %v7121 = vsub.f32 %v7111, %v7119
        %v7122 = vmul.f32 %v7120, 1.442695
        %v7123 = vpow.pop %v7122
        %v7124 = vmul.f32 %v7121, 1.442695
        %v7125 = vpow.pop %v7124
        %v7126 = vsel %vm2769, %v7123, 0.0
        %7127 = vadd.xlane.f32.xlu0 %v7126
        %v7128 = vpop.xlane.xlu0 %7127
        %v7129 = vsel %vm2769, %v7125, 0.0
        %7130 = vadd.xlane.f32.xlu0 %v7129
        %v7131 = vpop.xlane.xlu0 %7130
        %v7132 = vrcp.pop %v7128
        %v7133 = vrcp.pop %v7131
        %v7134 = vmul.f32 %v7123, %v7132
        %v7135 = vmul.f32 %v7125, %v7133
        %v7136 = vpack.c.bf16 %v7135, %v7134
        %7138 = vrot.lane.b32.xlu0 %v6936, 112
        %v7139 = vpop.permute.xlu0 %7138
        %v7142 = vsel %vm2769, %v7136, 0
        %7144 = vmatprep.subr.bf16.mxu0 0
        %7145 = vmatpush1.bf16.msra.mxu0 %v7139
        %7146 = vmatprep.subr.bf16.mxu0 0
        %7147 = vmatpush1.bf16.msra.mxu0 0
        %7148 = vmatprep.subr.bf16.mxu0 0
        %7149 = vmatpush1.bf16.msra.mxu0 0
        %7150 = vmatprep.subr.bf16.mxu0 0
        %7151 = vmatpush1.bf16.msra.mxu0 0
        %7152 = vmatprep.subr.bf16.mxu0 0
        %7153 = vmatpush1.bf16.msra.mxu0 0
        %7154 = vmatprep.subr.bf16.mxu0 0
        %7155 = vmatpush1.bf16.msra.mxu0 0
        %7156 = vmatprep.subr.bf16.mxu0 0
        %7157 = vmatpush1.bf16.msra.mxu0 0
        %7158 = vmatprep.subr.bf16.mxu0 0
        %7159 = vmatpush1.bf16.msra.mxu0 0
        %7160 = vmatprep.subr.bf16.mxu0 0
        %7161 = vmatpush1.bf16.msra.mxu0 0
        %7162 = vmatprep.subr.bf16.mxu0 0
        %7163 = vmatpush1.bf16.msra.mxu0 0
        %7164 = vmatprep.subr.bf16.mxu0 0
        %7165 = vmatpush1.bf16.msra.mxu0 0
        %7166 = vmatprep.subr.bf16.mxu0 0
        %7167 = vmatpush1.bf16.msra.mxu0 0
        %7168 = vmatprep.subr.bf16.mxu0 0
        %7169 = vmatpush1.bf16.msra.mxu0 0
        %7170 = vmatprep.subr.bf16.mxu0 0
        %7171 = vmatpush1.bf16.msra.mxu0 0
        %7172 = vmatprep.subr.bf16.mxu0 0
        %7173 = vmatpush1.bf16.msra.mxu0 0
        %7174 = vmatprep.subr.bf16.mxu0 0
        %7175 = vmatpush1.bf16.msra.mxu0 0
        %7176 = vmatprep.mubr.bf16.mxu0 0
        %7177 = vmatmul.mubr.bf16.gmra.mrb[0].mxu0 %v7142
        %v7178 = vpop.f32.mrb[0].mxu0
        %v7179 = vadd.f32 0.0, %v7178
        %v7180 = vpop.f32.mrb[0].mxu0
        %v7181 = vpop.f32.mrb[0].mxu0
        %v7182 = vadd.f32 0.0, %v7181
        %v7183 = vpop.f32.mrb[0].mxu0
        %7184 = vdwg.mxu0
        %s7185 = scalar_lea.vmem %s99, 16
        %v7186 = vld [vmem:[%s7185] sm:$0xf]
        %v7187 = vld [vmem:[%s7185 + $0x4] sm:$0xf]
        %v7188 = vunpack.c.l.bf16 %v7186
        %v7189 = vunpack.c.l.bf16 %v7187
        %7190 = vrot.lane.b32.xlu0 %v6935, 96
        %v7191 = vpop.permute.xlu0 %7190
        %7192 = vrot.lane.b32.xlu0 %v6935, 32
        %v7193 = vpop.permute.xlu0 %7192
        %v7195 = vsel %vm2769, %v7191, 0
        %v7198 = vsel %vm2769, %v7193, 0
        %7200 = vmatprep.subr.bf16.mxu0 0
        %7201 = vmatpush1.bf16.xpose.msra.mxu0 %v7198
        %7202 = vmatprep.subr.bf16.mxu0 0
        %7203 = vmatpush1.bf16.xpose.msra.mxu0 0
        %7204 = vmatprep.subr.bf16.mxu0 0
        %7205 = vmatpush1.bf16.xpose.msra.mxu0 0
        %7206 = vmatprep.subr.bf16.mxu0 0
        %7207 = vmatpush1.bf16.xpose.msra.mxu0 0
        %7208 = vmatprep.subr.bf16.mxu0 0
        %7209 = vmatpush1.bf16.xpose.msra.mxu0 0
        %7210 = vmatprep.subr.bf16.mxu0 0
        %7211 = vmatpush1.bf16.xpose.msra.mxu0 0
        %7212 = vmatprep.subr.bf16.mxu0 0
        %7213 = vmatpush1.bf16.xpose.msra.mxu0 0
        %7214 = vmatprep.subr.bf16.mxu0 0
        %7215 = vmatpush1.bf16.xpose.msra.mxu0 0
        %7216 = vmatprep.subr.bf16.mxu0 0
        %7217 = vmatpush1.bf16.xpose.msra.mxu0 0
        %7218 = vmatprep.subr.bf16.mxu0 0
        %7219 = vmatpush1.bf16.xpose.msra.mxu0 0
        %7220 = vmatprep.subr.bf16.mxu0 0
        %7221 = vmatpush1.bf16.xpose.msra.mxu0 0
        %7222 = vmatprep.subr.bf16.mxu0 0
        %7223 = vmatpush1.bf16.xpose.msra.mxu0 0
        %7224 = vmatprep.subr.bf16.mxu0 0
        %7225 = vmatpush1.bf16.xpose.msra.mxu0 0
        %7226 = vmatprep.subr.bf16.mxu0 0
        %7227 = vmatpush1.bf16.xpose.msra.mxu0 0
        %7228 = vmatprep.subr.bf16.mxu0 0
        %7229 = vmatpush1.bf16.xpose.msra.mxu0 0
        %7230 = vmatprep.subr.bf16.mxu0 0
        %7231 = vmatpush1.bf16.xpose.msra.mxu0 0
        %7232 = vmatprep.mubr.bf16.mxu0 0
        %7233 = vmatmul.mubr.bf16.gmra.mrb[0].mxu0 %v7195
        %v7234 = vpop.f32.mrb[0].mxu0
        %v7235 = vadd.f32 %v7188, %v7234
        %v7236 = vpop.f32.mrb[0].mxu0
        %v7237 = vpop.f32.mrb[0].mxu0
        %v7238 = vadd.f32 %v7189, %v7237
        %v7239 = vpop.f32.mrb[0].mxu0
        %7240 = vdwg.mxu0
        %v7241 = vsel %vm2769, %v7235, -inf
        %7242 = vmax.xlane.f32.xlu0 %v7241
        %v7243 = vpop.xlane.xlu0 %7242
        %v7244 = vsel %vm2769, %v7238, -inf
        %7245 = vmax.xlane.f32.xlu0 %v7244
        %v7246 = vpop.xlane.xlu0 %7245
        %v7247 = vsub.f32 %v7235, %v7243
        %v7248 = vsub.f32 %v7238, %v7246
        %v7249 = vmul.f32 %v7247, 1.442695
        %v7250 = vpow.pop %v7249
        %v7251 = vmul.f32 %v7248, 1.442695
        %v7252 = vpow.pop %v7251
        %v7253 = vsel %vm2769, %v7250, 0.0
        %7254 = vadd.xlane.f32.xlu0 %v7253
        %v7255 = vpop.xlane.xlu0 %7254
        %v7256 = vsel %vm2769, %v7252, 0.0
        %7257 = vadd.xlane.f32.xlu0 %v7256
        %v7258 = vpop.xlane.xlu0 %7257
        %v7259 = vrcp.pop %v7255
        %v7260 = vrcp.pop %v7258
        %v7261 = vmul.f32 %v7250, %v7259
        %v7262 = vmul.f32 %v7252, %v7260
        %v7263 = vpack.c.bf16 %v7262, %v7261
        %7264 = vrot.lane.b32.xlu0 %v6936, 96
        %v7265 = vpop.permute.xlu0 %7264
        %v7268 = vsel %vm2769, %v7263, 0
        %7270 = vmatprep.subr.bf16.mxu0 0
        %7271 = vmatpush1.bf16.msra.mxu0 %v7265
        %7272 = vmatprep.subr.bf16.mxu0 0
        %7273 = vmatpush1.bf16.msra.mxu0 0
        %7274 = vmatprep.subr.bf16.mxu0 0
        %7275 = vmatpush1.bf16.msra.mxu0 0
        %7276 = vmatprep.subr.bf16.mxu0 0
        %7277 = vmatpush1.bf16.msra.mxu0 0
        %7278 = vmatprep.subr.bf16.mxu0 0
        %7279 = vmatpush1.bf16.msra.mxu0 0
        %7280 = vmatprep.subr.bf16.mxu0 0
        %7281 = vmatpush1.bf16.msra.mxu0 0
        %7282 = vmatprep.subr.bf16.mxu0 0
        %7283 = vmatpush1.bf16.msra.mxu0 0
        %7284 = vmatprep.subr.bf16.mxu0 0
        %7285 = vmatpush1.bf16.msra.mxu0 0
        %7286 = vmatprep.subr.bf16.mxu0 0
        %7287 = vmatpush1.bf16.msra.mxu0 0
        %7288 = vmatprep.subr.bf16.mxu0 0
        %7289 = vmatpush1.bf16.msra.mxu0 0
        %7290 = vmatprep.subr.bf16.mxu0 0
        %7291 = vmatpush1.bf16.msra.mxu0 0
        %7292 = vmatprep.subr.bf16.mxu0 0
        %7293 = vmatpush1.bf16.msra.mxu0 0
        %7294 = vmatprep.subr.bf16.mxu0 0
        %7295 = vmatpush1.bf16.msra.mxu0 0
        %7296 = vmatprep.subr.bf16.mxu0 0
        %7297 = vmatpush1.bf16.msra.mxu0 0
        %7298 = vmatprep.subr.bf16.mxu0 0
        %7299 = vmatpush1.bf16.msra.mxu0 0
        %7300 = vmatprep.subr.bf16.mxu0 0
        %7301 = vmatpush1.bf16.msra.mxu0 0
        %7302 = vmatprep.mubr.bf16.mxu0 0
        %7303 = vmatmul.mubr.bf16.gmra.mrb[0].mxu0 %v7268
        %v7304 = vpop.f32.mrb[0].mxu0
        %v7305 = vadd.f32 0.0, %v7304
        %v7306 = vpop.f32.mrb[0].mxu0
        %v7307 = vpop.f32.mrb[0].mxu0
        %v7308 = vadd.f32 0.0, %v7307
        %v7309 = vpop.f32.mrb[0].mxu0
        %7310 = vdwg.mxu0
        %s7311 = scalar_lea.vmem %s99, 24
        %v7312 = vld [vmem:[%s7311] sm:$0xf]
        %v7313 = vld [vmem:[%s7311 + $0x4] sm:$0xf]
        %v7314 = vunpack.c.l.bf16 %v7312
        %v7315 = vunpack.c.l.bf16 %v7313
        %7316 = vrot.lane.b32.xlu0 %v6935, 80
        %v7317 = vpop.permute.xlu0 %7316
        %7318 = vrot.lane.b32.xlu0 %v6935, 16
        %v7319 = vpop.permute.xlu0 %7318
        %v7321 = vsel %vm2769, %v7317, 0
        %v7324 = vsel %vm2769, %v7319, 0
        %7326 = vmatprep.subr.bf16.mxu0 0
        %7327 = vmatpush1.bf16.xpose.msra.mxu0 %v7324
        %7328 = vmatprep.subr.bf16.mxu0 0
        %7329 = vmatpush1.bf16.xpose.msra.mxu0 0
        %7330 = vmatprep.subr.bf16.mxu0 0
        %7331 = vmatpush1.bf16.xpose.msra.mxu0 0
        %7332 = vmatprep.subr.bf16.mxu0 0
        %7333 = vmatpush1.bf16.xpose.msra.mxu0 0
        %7334 = vmatprep.subr.bf16.mxu0 0
        %7335 = vmatpush1.bf16.xpose.msra.mxu0 0
        %7336 = vmatprep.subr.bf16.mxu0 0
        %7337 = vmatpush1.bf16.xpose.msra.mxu0 0
        %7338 = vmatprep.subr.bf16.mxu0 0
        %7339 = vmatpush1.bf16.xpose.msra.mxu0 0
        %7340 = vmatprep.subr.bf16.mxu0 0
        %7341 = vmatpush1.bf16.xpose.msra.mxu0 0
        %7342 = vmatprep.subr.bf16.mxu0 0
        %7343 = vmatpush1.bf16.xpose.msra.mxu0 0
        %7344 = vmatprep.subr.bf16.mxu0 0
        %7345 = vmatpush1.bf16.xpose.msra.mxu0 0
        %7346 = vmatprep.subr.bf16.mxu0 0
        %7347 = vmatpush1.bf16.xpose.msra.mxu0 0
        %7348 = vmatprep.subr.bf16.mxu0 0
        %7349 = vmatpush1.bf16.xpose.msra.mxu0 0
        %7350 = vmatprep.subr.bf16.mxu0 0
        %7351 = vmatpush1.bf16.xpose.msra.mxu0 0
        %7352 = vmatprep.subr.bf16.mxu0 0
        %7353 = vmatpush1.bf16.xpose.msra.mxu0 0
        %7354 = vmatprep.subr.bf16.mxu0 0
        %7355 = vmatpush1.bf16.xpose.msra.mxu0 0
        %7356 = vmatprep.subr.bf16.mxu0 0
        %7357 = vmatpush1.bf16.xpose.msra.mxu0 0
        %7358 = vmatprep.mubr.bf16.mxu0 0
        %7359 = vmatmul.mubr.bf16.gmra.mrb[0].mxu0 %v7321
        %v7360 = vpop.f32.mrb[0].mxu0
        %v7361 = vadd.f32 %v7314, %v7360
        %v7362 = vpop.f32.mrb[0].mxu0
        %v7363 = vpop.f32.mrb[0].mxu0
        %v7364 = vadd.f32 %v7315, %v7363
        %v7365 = vpop.f32.mrb[0].mxu0
        %7366 = vdwg.mxu0
        %v7367 = vsel %vm2769, %v7361, -inf
        %7368 = vmax.xlane.f32.xlu0 %v7367
        %v7369 = vpop.xlane.xlu0 %7368
        %v7370 = vsel %vm2769, %v7364, -inf
        %7371 = vmax.xlane.f32.xlu0 %v7370
        %v7372 = vpop.xlane.xlu0 %7371
        %v7373 = vsub.f32 %v7361, %v7369
        %v7374 = vsub.f32 %v7364, %v7372
        %v7375 = vmul.f32 %v7373, 1.442695
        %v7376 = vpow.pop %v7375
        %v7377 = vmul.f32 %v7374, 1.442695
        %v7378 = vpow.pop %v7377
        %v7379 = vsel %vm2769, %v7376, 0.0
        %7380 = vadd.xlane.f32.xlu0 %v7379
        %v7381 = vpop.xlane.xlu0 %7380
        %v7382 = vsel %vm2769, %v7378, 0.0
        %7383 = vadd.xlane.f32.xlu0 %v7382
        %v7384 = vpop.xlane.xlu0 %7383
        %v7385 = vrcp.pop %v7381
        %v7386 = vrcp.pop %v7384
        %v7387 = vmul.f32 %v7376, %v7385
        %v7388 = vmul.f32 %v7378, %v7386
        %v7389 = vpack.c.bf16 %v7388, %v7387
        %7390 = vrot.lane.b32.xlu0 %v6936, 80
        %v7391 = vpop.permute.xlu0 %7390
        %v7394 = vsel %vm2769, %v7389, 0
        %7396 = vmatprep.subr.bf16.mxu0 0
        %7397 = vmatpush1.bf16.msra.mxu0 %v7391
        %7398 = vmatprep.subr.bf16.mxu0 0
        %7399 = vmatpush1.bf16.msra.mxu0 0
        %7400 = vmatprep.subr.bf16.mxu0 0
        %7401 = vmatpush1.bf16.msra.mxu0 0
        %7402 = vmatprep.subr.bf16.mxu0 0
        %7403 = vmatpush1.bf16.msra.mxu0 0
        %7404 = vmatprep.subr.bf16.mxu0 0
        %7405 = vmatpush1.bf16.msra.mxu0 0
        %7406 = vmatprep.subr.bf16.mxu0 0
        %7407 = vmatpush1.bf16.msra.mxu0 0
        %7408 = vmatprep.subr.bf16.mxu0 0
        %7409 = vmatpush1.bf16.msra.mxu0 0
        %7410 = vmatprep.subr.bf16.mxu0 0
        %7411 = vmatpush1.bf16.msra.mxu0 0
        %7412 = vmatprep.subr.bf16.mxu0 0
        %7413 = vmatpush1.bf16.msra.mxu0 0
        %7414 = vmatprep.subr.bf16.mxu0 0
        %7415 = vmatpush1.bf16.msra.mxu0 0
        %7416 = vmatprep.subr.bf16.mxu0 0
        %7417 = vmatpush1.bf16.msra.mxu0 0
        %7418 = vmatprep.subr.bf16.mxu0 0
        %7419 = vmatpush1.bf16.msra.mxu0 0
        %7420 = vmatprep.subr.bf16.mxu0 0
        %7421 = vmatpush1.bf16.msra.mxu0 0
        %7422 = vmatprep.subr.bf16.mxu0 0
        %7423 = vmatpush1.bf16.msra.mxu0 0
        %7424 = vmatprep.subr.bf16.mxu0 0
        %7425 = vmatpush1.bf16.msra.mxu0 0
        %7426 = vmatprep.subr.bf16.mxu0 0
        %7427 = vmatpush1.bf16.msra.mxu0 0
        %7428 = vmatprep.mubr.bf16.mxu0 0
        %7429 = vmatmul.mubr.bf16.gmra.mrb[0].mxu0 %v7394
        %v7430 = vpop.f32.mrb[0].mxu0
        %v7431 = vadd.f32 0.0, %v7430
        %v7432 = vpop.f32.mrb[0].mxu0
        %v7433 = vpop.f32.mrb[0].mxu0
        %v7434 = vadd.f32 0.0, %v7433
        %v7435 = vpop.f32.mrb[0].mxu0
        %7436 = vdwg.mxu0
        %7439 = vrot.lane.b32.xlu0 %v7179, 16
        %v7440 = vpop.permute.xlu0 %7439
        %7441 = vrot.lane.b32.xlu0 %v7182, 16
        %v7442 = vpop.permute.xlu0 %7441
        %7447 = vrot.lane.b32.xlu0 %v7305, 32
        %v7448 = vpop.permute.xlu0 %7447
        %7449 = vrot.lane.b32.xlu0 %v7308, 32
        %v7450 = vpop.permute.xlu0 %7449
        %7455 = vrot.lane.b32.xlu0 %v7431, 48
        %v7456 = vpop.permute.xlu0 %7455
        %7457 = vrot.lane.b32.xlu0 %v7434, 48
        %v7458 = vpop.permute.xlu0 %7457
        %v7461 = vsel %vm2769, %v7052, %v7440
        %v7462 = vsel %vm2769, %v7055, %v7442
        %v7463 = vsel %vm2349, %v7461, %v7448
        %v7464 = vsel %vm2349, %v7462, %v7450
        %v7465 = vsel %vm2269, %v7463, %v7456
        %v7466 = vsel %vm2269, %v7464, %v7458
        %v7467 = vld [vmem:[%s109] sm:$0xf]
        %v7468 = vld [vmem:[%s109 + $0x4] sm:$0xf]
        %v7469 = vld [vmem:[%s109 + $0x8] sm:$0xf]
        %v7470 = vld [vmem:[%s109 + $0xc] sm:$0xf]
        %v7471 = vld [vmem:[%s109 + $0x10] sm:$0xf]
        %v7472 = vld [vmem:[%s109 + $0x14] sm:$0xf]
        %v7473 = vld [vmem:[%s109 + $0x18] sm:$0xf]
        %v7474 = vld [vmem:[%s109 + $0x1c] sm:$0xf]
        %v7475 = vpack.c.bf16 %v7466, %v7465
        %v7476 = vld [vmem:[#allocation28] sm:$0x1]
        %v7478 = vlaneseq
        %v7479 = vshrl.u32 %v7478, 7
        %v7480 = vsub.s32 0, %v7479
        %v7481 = vrot.slane %v7476, %v7480
        %v7491 = vunpack.c.l.b16 %v7467
        %v7492 = vunpack.c.l.b16 %v7468
        %v7493 = vunpack.c.l.b16 %v7469
        %v7494 = vunpack.c.l.b16 %v7470
        %v7495 = vunpack.c.l.b16 %v7471
        %v7496 = vunpack.c.l.b16 %v7472
        %v7497 = vunpack.c.l.b16 %v7473
        %v7498 = vunpack.c.l.b16 %v7474
        %v7499 = vpack.c.b16 %v7492, %v7491
        %v7500 = vpack.c.b16 %v7494, %v7493
        %v7501 = vpack.c.b16 %v7496, %v7495
        %v7502 = vpack.c.b16 %v7498, %v7497
        %v7508 = vsel %vm2859, %v7475, 0
        %7510 = vmatprep.subr.bf16.mxu0 0
        %7511 = vmatpush1.bf16.msra.mxu0 %v7499
        %7512 = vmatprep.subr.bf16.mxu0 0
        %7513 = vmatpush1.bf16.msra.mxu0 %v7500
        %7514 = vmatprep.subr.bf16.mxu0 0
        %7515 = vmatpush1.bf16.msra.mxu0 %v7501
        %7516 = vmatprep.subr.bf16.mxu0 0
        %7517 = vmatpush1.bf16.msra.mxu0 %v7502
        %7518 = vmatprep.subr.bf16.mxu0 0
        %7519 = vmatpush1.bf16.msra.mxu0 0
        %7520 = vmatprep.subr.bf16.mxu0 0
        %7521 = vmatpush1.bf16.msra.mxu0 0
        %7522 = vmatprep.subr.bf16.mxu0 0
        %7523 = vmatpush1.bf16.msra.mxu0 0
        %7524 = vmatprep.subr.bf16.mxu0 0
        %7525 = vmatpush1.bf16.msra.mxu0 0
        %7526 = vmatprep.subr.bf16.mxu0 0
        %7527 = vmatpush1.bf16.msra.mxu0 0
        %7528 = vmatprep.subr.bf16.mxu0 0
        %7529 = vmatpush1.bf16.msra.mxu0 0
        %7530 = vmatprep.subr.bf16.mxu0 0
        %7531 = vmatpush1.bf16.msra.mxu0 0
        %7532 = vmatprep.subr.bf16.mxu0 0
        %7533 = vmatpush1.bf16.msra.mxu0 0
        %7534 = vmatprep.subr.bf16.mxu0 0
        %7535 = vmatpush1.bf16.msra.mxu0 0
        %7536 = vmatprep.subr.bf16.mxu0 0
        %7537 = vmatpush1.bf16.msra.mxu0 0
        %7538 = vmatprep.subr.bf16.mxu0 0
        %7539 = vmatpush1.bf16.msra.mxu0 0
        %7540 = vmatprep.subr.bf16.mxu0 0
        %7541 = vmatpush1.bf16.msra.mxu0 0
        %7542 = vmatprep.mubr.bf16.mxu0 0
        %7543 = vmatmul.mubr.bf16.gmra.mrb[0].mxu0 %v7508
        %v7544 = vpop.f32.mrb[0].mxu0
        %v7545 = vadd.f32 %v7481, %v7544
        %v7546 = vpop.f32.mrb[0].mxu0
        %v7547 = vpop.f32.mrb[0].mxu0
        %v7548 = vadd.f32 %v7481, %v7547
        %v7549 = vpop.f32.mrb[0].mxu0
        %7550 = vdwg.mxu0
        %v7551 = vadd.f32 %v6782, %v7545
        %v7552 = vadd.f32 %v6783, %v7548
        %v7553 = vld [vmem:[#allocation29] sm:$0x1]
        %v7554 = vld [vmem:[#allocation31] sm:$0x1]
        %v7555 = vsel %vm2859, %v7551, 0.0
        %7556 = vadd.xlane.f32.xlu0 %v7555
        %v7557 = vpop.xlane.xlu0 %7556
        %v7558 = vsel %vm2859, %v7552, 0.0
        %7559 = vadd.xlane.f32.xlu0 %v7558
        %v7560 = vpop.xlane.xlu0 %7559
        %v7561 = vmul.f32 %v7557, %v5761
        %v7562 = vmul.f32 %v7560, %v5761
        %v7563 = vsub.f32 %v7551, %v7561
        %v7564 = vsub.f32 %v7552, %v7562
        %v7565 = vmul.f32 %v7563, %v7563
        %v7566 = vmul.f32 %v7564, %v7564
        %v7567 = vsel %vm2859, %v7565, 0.0
        %7568 = vadd.xlane.f32.xlu0 %v7567
        %v7569 = vpop.xlane.xlu0 %7568
        %v7570 = vsel %vm2859, %v7566, 0.0
        %7571 = vadd.xlane.f32.xlu0 %v7570
        %v7572 = vpop.xlane.xlu0 %7571
        %v7573 = vmul.f32 %v7569, %v5761
        %v7574 = vmul.f32 %v7572, %v5761
        %v7575 = vadd.f32 %v7573, 1e-05
        %v7576 = vadd.f32 %v7574, 1e-05
        %v7577 = vrsqrt.pop %v7575
        %v7578 = vrsqrt.pop %v7576
        %v7579 = vmul.f32 %v7563, %v7577
        %v7580 = vmul.f32 %v7564, %v7578
        %v7582 = vlaneseq
        %v7583 = vshrl.u32 %v7582, 7
        %v7584 = vsub.s32 0, %v7583
        %v7585 = vrot.slane %v7553, %v7584
        %v7587 = vmul.f32 %v7579, %v7585
        %v7588 = vmul.f32 %v7580, %v7585
        %v7590 = vlaneseq
        %v7591 = vshrl.u32 %v7590, 7
        %v7592 = vsub.s32 0, %v7591
        %v7593 = vrot.slane %v7554, %v7592
        %v7595 = vadd.f32 %v7587, %v7593
        %v7596 = vadd.f32 %v7588, %v7593
        %v7597 = vld [vmem:[%s117] sm:$0xf]
        %v7598 = vld [vmem:[%s117 + $0x4] sm:$0xf]
        %v7599 = vld [vmem:[%s117 + $0x8] sm:$0xf]
        %v7600 = vld [vmem:[%s117 + $0xc] sm:$0xf]
        %v7601 = vld [vmem:[%s117 + $0x10] sm:$0xf]
        %v7602 = vld [vmem:[%s117 + $0x14] sm:$0xf]
        %v7603 = vld [vmem:[%s117 + $0x18] sm:$0xf]
        %v7604 = vld [vmem:[%s117 + $0x1c] sm:$0xf]
        %v7605 = vpack.c.bf16 %v7596, %v7595
        %v7606 = vld [vmem:[#allocation32] sm:$0x1]
        %v7608 = vlaneseq
        %v7609 = vshrl.u32 %v7608, 7
        %v7610 = vsub.s32 0, %v7609
        %v7611 = vrot.slane %v7606, %v7610
        %v7621 = vunpack.c.l.b16 %v7597
        %v7622 = vunpack.c.l.b16 %v7598
        %v7623 = vunpack.c.l.b16 %v7599
        %v7624 = vunpack.c.l.b16 %v7600
        %v7625 = vunpack.c.l.b16 %v7601
        %v7626 = vunpack.c.l.b16 %v7602
        %v7627 = vunpack.c.l.b16 %v7603
        %v7628 = vunpack.c.l.b16 %v7604
        %v7629 = vpack.c.b16 %v7622, %v7621
        %v7630 = vpack.c.b16 %v7624, %v7623
        %v7631 = vpack.c.b16 %v7626, %v7625
        %v7632 = vpack.c.b16 %v7628, %v7627
        %v7638 = vsel %vm2859, %v7605, 0
        %7640 = vmatprep.subr.bf16.mxu0 0
        %7641 = vmatpush1.bf16.msra.mxu0 %v7629
        %7642 = vmatprep.subr.bf16.mxu0 0
        %7643 = vmatpush1.bf16.msra.mxu0 %v7630
        %7644 = vmatprep.subr.bf16.mxu0 0
        %7645 = vmatpush1.bf16.msra.mxu0 %v7631
        %7646 = vmatprep.subr.bf16.mxu0 0
        %7647 = vmatpush1.bf16.msra.mxu0 %v7632
        %7648 = vmatprep.subr.bf16.mxu0 0
        %7649 = vmatpush1.bf16.msra.mxu0 0
        %7650 = vmatprep.subr.bf16.mxu0 0
        %7651 = vmatpush1.bf16.msra.mxu0 0
        %7652 = vmatprep.subr.bf16.mxu0 0
        %7653 = vmatpush1.bf16.msra.mxu0 0
        %7654 = vmatprep.subr.bf16.mxu0 0
        %7655 = vmatpush1.bf16.msra.mxu0 0
        %7656 = vmatprep.subr.bf16.mxu0 0
        %7657 = vmatpush1.bf16.msra.mxu0 0
        %7658 = vmatprep.subr.bf16.mxu0 0
        %7659 = vmatpush1.bf16.msra.mxu0 0
        %7660 = vmatprep.subr.bf16.mxu0 0
        %7661 = vmatpush1.bf16.msra.mxu0 0
        %7662 = vmatprep.subr.bf16.mxu0 0
        %7663 = vmatpush1.bf16.msra.mxu0 0
        %7664 = vmatprep.subr.bf16.mxu0 0
        %7665 = vmatpush1.bf16.msra.mxu0 0
        %7666 = vmatprep.subr.bf16.mxu0 0
        %7667 = vmatpush1.bf16.msra.mxu0 0
        %7668 = vmatprep.subr.bf16.mxu0 0
        %7669 = vmatpush1.bf16.msra.mxu0 0
        %7670 = vmatprep.subr.bf16.mxu0 0
        %7671 = vmatpush1.bf16.msra.mxu0 0
        %7672 = vmatprep.mubr.bf16.mxu0 0
        %7673 = vmatmul.mubr.bf16.gmra.mrb[0].mxu0 %v7638
        %v7674 = vpop.f32.mrb[0].mxu0
        %v7675 = vadd.f32 %v7611, %v7674
        %v7676 = vpop.f32.mrb[0].mxu0
        %v7677 = vpop.f32.mrb[0].mxu0
        %v7678 = vadd.f32 %v7611, %v7677
        %v7679 = vpop.f32.mrb[0].mxu0
        %7680 = vdwg.mxu0
        %v7681 = vmul.f32 %v7675, %v7675
        %v7682 = vmul.f32 %v7678, %v7678
        %v7683 = vmul.f32 %v7675, %v7681
        %v7684 = vmul.f32 %v7678, %v7682
        %v7685 = vmul.f32 %v7683, 0.044715
        %v7686 = vmul.f32 %v7684, 0.044715
        %v7687 = vadd.f32 %v7675, %v7685
        %v7688 = vadd.f32 %v7678, %v7686
        %v7689 = vmul.f32 %v7687, 0.7978846
        %v7690 = vmul.f32 %v7688, 0.7978846
        %v7691 = vtanh.pop %v7689
        %v7692 = vtanh.pop %v7690
        %v7693 = vadd.f32 %v7691, 1.0
        %v7694 = vadd.f32 %v7692, 1.0
        %v7695 = vmul.f32 %v7693, 0.5
        %v7696 = vmul.f32 %v7694, 0.5
        %v7697 = vmul.f32 %v7675, %v7695
        %v7698 = vmul.f32 %v7678, %v7696
        %v7699 = vld [vmem:[%s121] sm:$0xf]
        %v7700 = vld [vmem:[%s121 + $0x4] sm:$0xf]
        %v7701 = vld [vmem:[%s121 + $0x8] sm:$0xf]
        %v7702 = vld [vmem:[%s121 + $0xc] sm:$0xf]
        %v7703 = vld [vmem:[%s121 + $0x10] sm:$0xf]
        %v7704 = vld [vmem:[%s121 + $0x14] sm:$0xf]
        %v7705 = vld [vmem:[%s121 + $0x18] sm:$0xf]
        %v7706 = vld [vmem:[%s121 + $0x1c] sm:$0xf]
        %v7707 = vld [vmem:[%s121 + $0x20] sm:$0xf]
        %v7708 = vld [vmem:[%s121 + $0x24] sm:$0xf]
        %v7709 = vld [vmem:[%s121 + $0x28] sm:$0xf]
        %v7710 = vld [vmem:[%s121 + $0x2c] sm:$0xf]
        %v7711 = vld [vmem:[%s121 + $0x30] sm:$0xf]
        %v7712 = vld [vmem:[%s121 + $0x34] sm:$0xf]
        %v7713 = vld [vmem:[%s121 + $0x38] sm:$0xf]
        %v7714 = vld [vmem:[%s121 + $0x3c] sm:$0xf]
        %v7715 = vpack.c.bf16 %v7698, %v7697
        %v7716 = vld [vmem:[#allocation34] sm:$0x1]
        %v7718 = vlaneseq
        %v7719 = vshrl.u32 %v7718, 7
        %v7720 = vsub.s32 0, %v7719
        %v7721 = vrot.slane %v7716, %v7720
        %v7739 = vunpack.c.l.b16 %v7699
        %v7740 = vunpack.c.l.b16 %v7700
        %v7741 = vunpack.c.l.b16 %v7701
        %v7742 = vunpack.c.l.b16 %v7702
        %v7743 = vunpack.c.l.b16 %v7703
        %v7744 = vunpack.c.l.b16 %v7704
        %v7745 = vunpack.c.l.b16 %v7705
        %v7746 = vunpack.c.l.b16 %v7706
        %v7747 = vunpack.c.l.b16 %v7707
        %v7748 = vunpack.c.l.b16 %v7708
        %v7749 = vunpack.c.l.b16 %v7709
        %v7750 = vunpack.c.l.b16 %v7710
        %v7751 = vunpack.c.l.b16 %v7711
        %v7752 = vunpack.c.l.b16 %v7712
        %v7753 = vunpack.c.l.b16 %v7713
        %v7754 = vunpack.c.l.b16 %v7714
        %v7755 = vpack.c.b16 %v7740, %v7739
        %v7756 = vpack.c.b16 %v7742, %v7741
        %v7757 = vpack.c.b16 %v7744, %v7743
        %v7758 = vpack.c.b16 %v7746, %v7745
        %v7759 = vpack.c.b16 %v7748, %v7747
        %v7760 = vpack.c.b16 %v7750, %v7749
        %v7761 = vpack.c.b16 %v7752, %v7751
        %v7762 = vpack.c.b16 %v7754, %v7753
        %7771 = vmatprep.subr.bf16.mxu0 0
        %7772 = vmatpush1.bf16.msra.mxu0 %v7755
        %7773 = vmatprep.subr.bf16.mxu0 0
        %7774 = vmatpush1.bf16.msra.mxu0 %v7756
        %7775 = vmatprep.subr.bf16.mxu0 0
        %7776 = vmatpush1.bf16.msra.mxu0 %v7757
        %7777 = vmatprep.subr.bf16.mxu0 0
        %7778 = vmatpush1.bf16.msra.mxu0 %v7758
        %7779 = vmatprep.subr.bf16.mxu0 0
        %7780 = vmatpush1.bf16.msra.mxu0 %v7759
        %7781 = vmatprep.subr.bf16.mxu0 0
        %7782 = vmatpush1.bf16.msra.mxu0 %v7760
        %7783 = vmatprep.subr.bf16.mxu0 0
        %7784 = vmatpush1.bf16.msra.mxu0 %v7761
        %7785 = vmatprep.subr.bf16.mxu0 0
        %7786 = vmatpush1.bf16.msra.mxu0 %v7762
        %7787 = vmatprep.subr.bf16.mxu0 0
        %7788 = vmatpush1.bf16.msra.mxu0 0
        %7789 = vmatprep.subr.bf16.mxu0 0
        %7790 = vmatpush1.bf16.msra.mxu0 0
        %7791 = vmatprep.subr.bf16.mxu0 0
        %7792 = vmatpush1.bf16.msra.mxu0 0
        %7793 = vmatprep.subr.bf16.mxu0 0
        %7794 = vmatpush1.bf16.msra.mxu0 0
        %7795 = vmatprep.subr.bf16.mxu0 0
        %7796 = vmatpush1.bf16.msra.mxu0 0
        %7797 = vmatprep.subr.bf16.mxu0 0
        %7798 = vmatpush1.bf16.msra.mxu0 0
        %7799 = vmatprep.subr.bf16.mxu0 0
        %7800 = vmatpush1.bf16.msra.mxu0 0
        %7801 = vmatprep.subr.bf16.mxu0 0
        %7802 = vmatpush1.bf16.msra.mxu0 0
        %7803 = vmatprep.mubr.bf16.mxu0 0
        %7804 = vmatmul.mubr.bf16.gmra.mrb[0].mxu0 %v7715
        %v7805 = vpop.f32.mrb[0].mxu0
        %v7806 = vadd.f32 %v7721, %v7805
        %v7807 = vpop.f32.mrb[0].mxu0
        %v7808 = vpop.f32.mrb[0].mxu0
        %v7809 = vadd.f32 %v7721, %v7808
        %v7810 = vpop.f32.mrb[0].mxu0
        %7811 = vdwg.mxu0
        %v7812 = vadd.f32 %v7551, %v7806
        %v7813 = vadd.f32 %v7552, %v7809
        %v7814 = vld [vmem:[#allocation35] sm:$0x1]
        %v7815 = vld [vmem:[#allocation37] sm:$0x1]
        %v7816 = vsel %vm2859, %v7812, 0.0
        %7817 = vadd.xlane.f32.xlu0 %v7816
        %v7818 = vpop.xlane.xlu0 %7817
        %v7819 = vsel %vm2859, %v7813, 0.0
        %7820 = vadd.xlane.f32.xlu0 %v7819
        %v7821 = vpop.xlane.xlu0 %7820
        %v7822 = vmul.f32 %v7818, %v5761
        %v7823 = vmul.f32 %v7821, %v5761
        %v7824 = vsub.f32 %v7812, %v7822
        %v7825 = vsub.f32 %v7813, %v7823
        %v7826 = vmul.f32 %v7824, %v7824
        %v7827 = vmul.f32 %v7825, %v7825
        %v7828 = vsel %vm2859, %v7826, 0.0
        %7829 = vadd.xlane.f32.xlu0 %v7828
        %v7830 = vpop.xlane.xlu0 %7829
        %v7831 = vsel %vm2859, %v7827, 0.0
        %7832 = vadd.xlane.f32.xlu0 %v7831
        %v7833 = vpop.xlane.xlu0 %7832
        %v7834 = vmul.f32 %v7830, %v5761
        %v7835 = vmul.f32 %v7833, %v5761
        %v7836 = vadd.f32 %v7834, 1e-05
        %v7837 = vadd.f32 %v7835, 1e-05
        %v7838 = vrsqrt.pop %v7836
        %v7839 = vrsqrt.pop %v7837
        %v7840 = vmul.f32 %v7824, %v7838
        %v7841 = vmul.f32 %v7825, %v7839
        %v7843 = vlaneseq
        %v7844 = vshrl.u32 %v7843, 7
        %v7845 = vsub.s32 0, %v7844
        %v7846 = vrot.slane %v7814, %v7845
        %v7848 = vmul.f32 %v7840, %v7846
        %v7849 = vmul.f32 %v7841, %v7846
        %v7851 = vlaneseq
        %v7852 = vshrl.u32 %v7851, 7
        %v7853 = vsub.s32 0, %v7852
        %v7854 = vrot.slane %v7815, %v7853
        %v7856 = vadd.f32 %v7848, %v7854
        %v7857 = vadd.f32 %v7849, %v7854
        %v7858 = vsel %vm2859, %v7856, 0.0
        %v7859 = vsel %vm2859, %v7857, 0.0
        %v7860 = vadd.f32 %v7858, %v7859
        %v7861 = vrot.slane %v7860, 4
        %v7862 = vadd.f32 %v7860, %v7861
        %v7863 = vrot.slane %v7862, 2
        %v7864 = vadd.f32 %v7862, %v7863
        %v7865 = vrot.slane %v7864, 1
        %v7866 = vadd.f32 %v7864, %v7865
        %v7867 = vrcp.pop 16.0
        %v7868 = vmul.f32 %v7866, %v7867
        %v7869 = vld [vmem:[%s129] sm:$0xf]
        %v7870 = vld [vmem:[%s129 + $0x4] sm:$0xf]
        %v7871 = vld [vmem:[%s129 + $0x8] sm:$0xf]
        %v7872 = vld [vmem:[%s129 + $0xc] sm:$0xf]
        %v7873 = vld [vmem:[%s129 + $0x10] sm:$0xf]
        %v7874 = vld [vmem:[%s129 + $0x14] sm:$0xf]
        %v7875 = vld [vmem:[%s129 + $0x18] sm:$0xf]
        %v7876 = vld [vmem:[%s129 + $0x1c] sm:$0xf]
        %v7877 = vpack.c.bf16 %v7868, %v7868
        %v7878 = vld [vmem:[#allocation2] sm:$0x1]
        %v7887 = vunpack.c.l.b16 %v7869
        %v7888 = vunpack.c.l.b16 %v7870
        %v7889 = vunpack.c.l.b16 %v7871
        %v7890 = vunpack.c.l.b16 %v7872
        %v7891 = vunpack.c.l.b16 %v7873
        %v7892 = vunpack.c.l.b16 %v7874
        %v7893 = vunpack.c.l.b16 %v7875
        %v7894 = vunpack.c.l.b16 %v7876
        %v7895 = vpack.c.b16 %v7888, %v7887
        %v7896 = vpack.c.b16 %v7890, %v7889
        %v7897 = vpack.c.b16 %v7892, %v7891
        %v7898 = vpack.c.b16 %v7894, %v7893
        %v7904 = vsel %vm2859, %v7877, 0
        %7906 = vmatprep.subr.bf16.mxu0 0
        %7907 = vmatpush1.bf16.msra.mxu0 %v7895
        %7908 = vmatprep.subr.bf16.mxu0 0
        %7909 = vmatpush1.bf16.msra.mxu0 %v7896
        %7910 = vmatprep.subr.bf16.mxu0 0
        %7911 = vmatpush1.bf16.msra.mxu0 %v7897
        %7912 = vmatprep.subr.bf16.mxu0 0
        %7913 = vmatpush1.bf16.msra.mxu0 %v7898
        %7914 = vmatprep.subr.bf16.mxu0 0
        %7915 = vmatpush1.bf16.msra.mxu0 0
        %7916 = vmatprep.subr.bf16.mxu0 0
        %7917 = vmatpush1.bf16.msra.mxu0 0
        %7918 = vmatprep.subr.bf16.mxu0 0
        %7919 = vmatpush1.bf16.msra.mxu0 0
        %7920 = vmatprep.subr.bf16.mxu0 0
        %7921 = vmatpush1.bf16.msra.mxu0 0
        %7922 = vmatprep.subr.bf16.mxu0 0
        %7923 = vmatpush1.bf16.msra.mxu0 0
        %7924 = vmatprep.subr.bf16.mxu0 0
        %7925 = vmatpush1.bf16.msra.mxu0 0
        %7926 = vmatprep.subr.bf16.mxu0 0
        %7927 = vmatpush1.bf16.msra.mxu0 0
        %7928 = vmatprep.subr.bf16.mxu0 0
        %7929 = vmatpush1.bf16.msra.mxu0 0
        %7930 = vmatprep.subr.bf16.mxu0 0
        %7931 = vmatpush1.bf16.msra.mxu0 0
        %7932 = vmatprep.subr.bf16.mxu0 0
        %7933 = vmatpush1.bf16.msra.mxu0 0
        %7934 = vmatprep.subr.bf16.mxu0 0
        %7935 = vmatpush1.bf16.msra.mxu0 0
        %7936 = vmatprep.subr.bf16.mxu0 0
        %7937 = vmatpush1.bf16.msra.mxu0 0
        %7938 = vmatprep.mubr.bf16.mxu0 0
        %7939 = vmatmul.mubr.bf16.gmra.mrb[0].mxu0 %v7904
        %v7940 = vpop.f32.mrb[0].mxu0
        %v7941 = vadd.f32 %v7878, %v7940
        %v7942 = vpop.f32.mrb[0].mxu0
        %v7943 = vpop.f32.mrb[0].mxu0
        %v7944 = vpop.f32.mrb[0].mxu0
        %7945 = vdwg.mxu0
        %vm7946 = vcmask 0
        %7947 = vst.msk [vmem:[%s2224] sm:$0x1] %vm7946, %v7941
        %p7948 = scmp.lt.s32.totalorder %s158, 1
        %s7949 = scalar_select %p7948, %s158, 1
        %s7950 = scalar_lea.vmem %s133, %s7949
        // Predicated region
        $region377: #{swin_forward.1} parent=283 // pred_check
          %p7951 = pneg %p1567
        $region378: #{swin_forward.1} parent=283 // pred_check_branch
          %7953 = sbr.rel (%p7951) target = $region380
        $region379: #{swin_forward.1} parent=283 // pred_region
          _
        $region380: #{swin_forward.1} parent=283 // pred_fallthru
          _
      $region284: #{swin_forward.1} parent=5 // pred_fallthru
        _
      %p7954 = scmp.le.s32.totalorder 2, %s153
      // Predicated region
      $region381: #{swin_forward.1} parent=5 // pred_check
        %p7955 = pneg %p7954
      $region382: #{swin_forward.1} parent=5 // pred_check_branch
        %7957 = sbr.rel (%p7955) target = $region384
      $region383: #{swin_forward.1} parent=5 // pred_region
        %s7958 = ssub.s32 %s153, 2
        // Predicated region
        $region385: #{swin_forward.1} parent=383 // pred_check
          %p7959 = pneg %p1573
        $region386: #{swin_forward.1} parent=383 // pred_check_branch
          %7961 = sbr.rel (%p7959) target = $region388
        $region387: #{swin_forward.1} parent=383 // pred_region
          %p7962 = scmp.lt.s32.totalorder %s159, 1
          %s7963 = scalar_select %p7962, %s159, 1
          %s7964 = scalar_lea.vmem %s133, %s7963
        $region388: #{swin_forward.1} parent=383 // pred_fallthru
          _
      $region384: #{swin_forward.1} parent=5 // pred_fallthru
        _
    $region6: #{swin_forward.1} parent=1 // loop_footer
      %s157 = sadd.s32 1, %s153
    $region7: #{swin_forward.1} parent=1 // loop_footer_branch
      %152 = sbr.rel target = $region3
    $region8: #{swin_forward.1} parent=1 // loop_exit
      _
    %7965 = vsyncpa [#allocation4], 1
    %s7966 = scalar_lea.sflag [#allocation4], 1
    %7967 = vsyncpa %s7966, 1
    %7968 = vsyncpa [#allocation6], 1
    %7969 = vsyncpa [#allocation9], 1
    %7970 = vsyncpa [#allocation12], 1
    %7971 = vsyncpa [#allocation15], 1
    %7972 = vsyncpa [#allocation18], 1
    %7973 = vsyncpa [#allocation21], 1
    %7974 = vsyncpa [#allocation24], 1
    %7975 = vsyncpa [#allocation27], 1
    %7976 = vsyncpa [#allocation30], 1
    %7977 = vsyncpa [#allocation33], 1
    %7978 = vsyncpa [#allocation36], 1

</llo_original>
